<compile_context>
chip_gen: v7x
topology: tpu7x:2x2x1
jax: 0.10.0
libtpu: 0.0.40
codegen_flags: <defaults>
</compile_context>

<pallas_src>
import math
import functools

import jax
import jax.numpy as jnp
from jax.experimental import pallas as pl
from jax.experimental.pallas import tpu as pltpu

EPS = 1e-5     # nn.LayerNorm default eps
LANE = 128     # lane width for the padded output block


def _erf(x):
    # Abramowitz & Stegun 7.1.26 rational approximation, |err| ~ 1.5e-7.
    # Exact divide (not approx reciprocal) to keep the stated accuracy.
    a1, a2, a3, a4, a5 = 0.254829592, -0.284496736, 1.421413741, -1.453152027, 1.061405429
    p = 0.3275911
    s = jnp.where(x >= 0.0, 1.0, -1.0)
    ax = jnp.abs(x)
    t = 1.0 / (1.0 + p * ax)
    poly = ((((a5 * t + a4) * t + a3) * t + a2) * t + a1) * t
    return s * (1.0 - poly * jnp.exp(-ax * ax))


def _gelu(x):
    # erf-based GELU (PyTorch F.gelu / nn.GELU default).
    return 0.5 * x * (1.0 + _erf(x * (1.0 / math.sqrt(2.0))))


def _layernorm(x, gamma, beta):
    mu = jnp.mean(x, axis=-1, keepdims=True)
    var = jnp.mean(jnp.square(x - mu), axis=-1, keepdims=True)
    return (x - mu) * jax.lax.rsqrt(var + EPS) * gamma + beta


def personality_transformer_kernel(
    # inputs -----------------------------------------------------------------
    x_ref,            # (TB, S, Din) f32   personality_input slab
    w_qkv_ref,        # (3*nh, H, hd) bf16 per-head Q/K/V weights (Q pre-scaled)
    b_qkv_ref,        # (3*nh, 1, hd) f32  per-head Q/K/V biases  (Q pre-scaled)
    w_ao_ref,         # (nh, hd, H) bf16   per-head out-projection weights
    wp_ref,           # (Din, H) bf16      per_proj Linear
    w_ffn_ref,        # (2, H, H) bf16     feed-forward Linear 1 / Linear 2
    wo1_ref,          # (H, OF) bf16       fc_out Linear 1
    wo2_ref,          # (OF, 128) bf16     fc_out Linear 2 (lane-padded)
    f32h_ref,         # (S + 10, H) f32    [PE rows ; biases / LayerNorm params]
    b_of_ref,         # (3, OF) f32        fc_out bias / LayerNorm params
    b_out2_ref,       # (1, 128) f32       fc_out final bias (lane-padded)
    # outputs ----------------------------------------------------------------
    out_ref,          # (TB, 128) f32      sigmoid(logits), lane-dense
    *, num_heads):
    f32, bf16 = jnp.float32, jnp.bfloat16

    TB, S, Din = x_ref.shape
    H = wp_ref.shape[1]
    nh = num_heads
    hd = H // nh
    rows = TB * S

    row = lambda ref, i: ref[i:i + 1, :]          # static (1, width) row view

    # f32 width-H slab layout (see init_params)
    pe = f32h_ref[0:S, :]                                           # (S, H)
    bp, gp, bpn = row(f32h_ref, S), row(f32h_ref, S + 1), row(f32h_ref, S + 2)
    bo, ga, ba = row(f32h_ref, S + 3), row(f32h_ref, S + 4), row(f32h_ref, S + 5)
    bf1, bf2 = row(f32h_ref, S + 6), row(f32h_ref, S + 7)
    gf, bfn = row(f32h_ref, S + 8), row(f32h_ref, S + 9)
    bo1, go, bon = row(b_of_ref, 0), row(b_of_ref, 1), row(b_of_ref, 2)

    # ---- per_proj: Linear -> LayerNorm (-> Dropout == identity) -------------
    x2 = x_ref[...].reshape(rows, Din).astype(bf16)
    per = jnp.dot(x2, wp_ref[...], preferred_element_type=f32) + bp
    per = _layernorm(per, gp, bpn)                                  # (rows, H)

    # ---- one TransformerEncoderLayer (tr_layer_number = 1) ------------------
    # PositionalEncoding is applied inside the layer to q == k == v.
    q2 = (per.reshape(TB, S, H) + pe).reshape(rows, H)
    q2b = q2.astype(bf16)

    # Self-attention: statically-unrolled heads; the head split lives in the
    # pre-split weights (free leading-axis indexing) so there are no lane
    # slices of activations and no concat.  Out-proj is accumulated per head.
    attn = None
    for h in range(nh):
        q_h = jnp.dot(q2b, w_qkv_ref[h], preferred_element_type=f32) + b_qkv_ref[h]
        k_h = jnp.dot(q2b, w_qkv_ref[nh + h], preferred_element_type=f32) + b_qkv_ref[nh + h]
        v_h = jnp.dot(q2b, w_qkv_ref[2 * nh + h], preferred_element_type=f32) + b_qkv_ref[2 * nh + h]
        q3 = q_h.reshape(TB, S, hd).astype(bf16)
        k3 = k_h.reshape(TB, S, hd).astype(bf16)
        v3 = v_h.reshape(TB, S, hd).astype(bf16)
        s_ = jnp.einsum('bsd,btd->bst', q3, k3, preferred_element_type=f32)
        s_ = s_ - jnp.max(s_, axis=-1, keepdims=True)
        p_ = jnp.exp(s_)
        p_ = p_ * pl.reciprocal(jnp.sum(p_, axis=-1, keepdims=True), approx=True)
        c_ = jnp.einsum('bst,btd->bsd', p_.astype(bf16), v3, preferred_element_type=f32)
        part = jnp.dot(c_.reshape(rows, hd).astype(bf16), w_ao_ref[h],
                       preferred_element_type=f32)
        attn = part if attn is None else attn + part
    attn = attn + bo

    # add & norm after attention (residual is the PE'd query, as in PyTorch)
    x1 = _layernorm(attn + q2, ga, ba)

    # position-wise feed forward: Linear -> GELU -> Linear
    ff = jnp.dot(x1.astype(bf16), w_ffn_ref[0], preferred_element_type=f32) + bf1
    ff = _gelu(ff)
    ff = jnp.dot(ff.astype(bf16), w_ffn_ref[1], preferred_element_type=f32) + bf2

    # add & norm after feed forward
    y = _layernorm(ff + x1, gf, bfn)

    # outer residual: the module does `per += layer(per, per, per)` (pre-PE per)
    per = per + y

    # ---- mean pool over sequence + personality_fc_out -----------------------
    pooled = jnp.mean(per.reshape(TB, S, H), axis=1)                # (TB, H)
    h1 = jnp.dot(pooled.astype(bf16), wo1_ref[...], preferred_element_type=f32) + bo1
    h1 = _gelu(_layernorm(h1, go, bon))
    logits = jnp.dot(h1.astype(bf16), wo2_ref[...], preferred_element_type=f32) + b_out2_ref[...]
    out_ref[...] = 1.0 / (1.0 + jnp.exp(-logits))                   # sigmoid


def _full_spec(a):
    # Whole-array resident block with a constant index map.
    nd = a.ndim
    return pl.BlockSpec(a.shape, lambda b, _nd=nd: (0,) * _nd)


def _pick_batch_block(B):
    # Single grid step: v5e/v6e have one TensorCore (the grid is a serial
    # loop) and at these shapes even v7x is overhead-bound.
    # TODO(synk): for production batches on v7x, return a multiple of 8 that
    # halves B (one slab per TensorCore) and re-derive VMEM against 64 MiB.
    return B


def personality_transformer(personality_input, params, *, num_heads, num_traits):
    """Returns {'personality_scores': (B, num_traits)} like the PyTorch module."""
    B, S, Din = personality_input.shape
    TB = _pick_batch_block(B)
    assert B % TB == 0 and (TB == B or TB % 8 == 0), "output block must obey (8,128)"
    pad_out = params[6].shape[-1]            # lane-padded logits width (128)
    in_specs = [pl.BlockSpec((TB, S, Din), lambda b: (b, 0, 0))]
    in_specs += [_full_spec(a) for a in params]
    out = pl.pallas_call(
        functools.partial(personality_transformer_kernel, num_heads=num_heads),
        out_shape=jax.ShapeDtypeStruct((B, pad_out), jnp.float32),
        grid=(B // TB,),
        in_specs=in_specs,
        out_specs=pl.BlockSpec((TB, pad_out), lambda b: (b, 0)),
        compiler_params=pltpu.CompilerParams(
            dimension_semantics=("parallel",),
            vmem_limit_bytes=32 * 1024 * 1024),
    )(personality_input, *params)
    return {"personality_scores": out[:, :num_traits]}


def init_params(key, *, din, H, OF, NT, nh, S, pad_out=LANE):
    """Deterministic params mirroring the PyTorch module, packed into slabs.

    Matmul weights are pre-transposed to (in, out), per-head attention weights
    get a leading head axis, and 1/sqrt(head_dim) is folded into the Q
    projection.  bf16 for matmul operands; biases / LN params / PE stay f32.
    """
    hd = H // nh
    scale = 1.0 / math.sqrt(hd)
    keys = iter(jax.random.split(key, 16))
    bf16 = jnp.bfloat16

    def lin(fan_in, fan_out):
        kw, kb = jax.random.split(next(keys))
        bound = 1.0 / math.sqrt(fan_in)
        w = jax.random.uniform(kw, (fan_out, fan_in), jnp.float32, -bound, bound)
        b = jax.random.uniform(kb, (fan_out,), jnp.float32, -bound, bound)
        return w, b

    # PositionalEncoding buffer (pe[:S])
    pos = jnp.arange(S, dtype=jnp.float32)[:, None]
    div = jnp.exp(jnp.arange(0, H, 2, dtype=jnp.float32) * (-math.log(10000.0) / H))
    pe = jnp.zeros((S, H), jnp.float32)
    pe = pe.at[:, 0::2].set(jnp.sin(pos * div)).at[:, 1::2].set(jnp.cos(pos * div))

    # per_proj: Linear(din, H) + LayerNorm(H)
    w_proj, b_proj = lin(din, H)

    # MultiheadAttention: packed in_proj (3H, H) xavier_uniform, zero biases,
    # out_proj Linear(H, H) default init, zero out_proj bias.
    k = next(keys)
    bound = math.sqrt(6.0 / (H + 3 * H))
    in_w = jax.random.uniform(k, (3 * H, H), jnp.float32, -bound, bound)
    in_b = jnp.zeros((3 * H,), jnp.float32)
    w_out, _ = lin(H, H)
    b_out = jnp.zeros((H,), jnp.float32)

    wq_io, wk_io, wv_io = in_w[:H].T, in_w[H:2 * H].T, in_w[2 * H:].T   # (H, H) in->out
    bq, bk, bv = in_b[:H], in_b[H:2 * H], in_b[2 * H:]
    wo_io = w_out.T                                                      # (H, H) in->out

    def split_cols(w):   # (H, H) -> (nh, H, hd): per-head output columns
        return jnp.stack([w[:, h * hd:(h + 1) * hd] for h in range(nh)], axis=0)

    w_qkv = jnp.concatenate([
        split_cols(wq_io) * scale,            # fold 1/sqrt(hd) into Q weights
        split_cols(wk_io),
        split_cols(wv_io)], axis=0).astype(bf16)                         # (3nh, H, hd)
    b_qkv = jnp.concatenate([
        (bq * scale).reshape(nh, 1, hd),
        bk.reshape(nh, 1, hd),
        bv.reshape(nh, 1, hd)], axis=0)                                   # (3nh, 1, hd)
    w_attn_out = jnp.stack(
        [wo_io[h * hd:(h + 1) * hd, :] for h in range(nh)], axis=0).astype(bf16)  # (nh, hd, H)

    # PositionWiseFeedForward (H -> H -> H)
    w1, b1 = lin(H, H)
    w2, b2 = lin(H, H)
    w_ffn = jnp.stack([w1.T, w2.T], axis=0).astype(bf16)                 # (2, H, H)

    # personality_fc_out: Linear(H,OF) -> LayerNorm(OF) -> GELU -> Linear(OF,NT)
    wfc1, bfc1 = lin(H, OF)
    wfc2, bfc2 = lin(OF, NT)
    wo1 = wfc1.T.astype(bf16)                                             # (H, OF)
    wo2p = jnp.zeros((OF, pad_out), jnp.float32).at[:, :NT].set(wfc2.T).astype(bf16)
    bo2p = jnp.zeros((1, pad_out), jnp.float32).at[0, :NT].set(bfc2)

    ones_h = jnp.ones((H,), jnp.float32)
    zeros_h = jnp.zeros((H,), jnp.float32)
    # f32 width-H slab: [PE rows; b_proj; gamma_p; beta_p; b_attn_out; gamma_a;
    #                    beta_a; b_ff1; b_ff2; gamma_f; beta_f]
    f32h = jnp.concatenate([
        pe,
        jnp.stack([b_proj, ones_h, zeros_h,
                   b_out, ones_h, zeros_h,
                   b1, b2, ones_h, zeros_h], axis=0)], axis=0)            # (S+10, H)

    b_of = jnp.stack([bfc1,
                      jnp.ones((OF,), jnp.float32),
                      jnp.zeros((OF,), jnp.float32)], axis=0)             # (3, OF)

    return (w_qkv, b_qkv, w_attn_out,
            w_proj.T.astype(bf16), w_ffn, wo1, wo2p,
            f32h, b_of, bo2p)


if __name__ == "__main__":
    # Small shapes consistent with the module (defaults scaled down):
    #   batch=8, seq=8, input_dim_personality=32, hidden_dim=32,
    #   out_features=32, num_transformer_heads=4, num_traits=5
    B, S = 8, 8
    Din, H, OF, NT, NH = 32, 32, 32, 5, 4

    key = jax.random.PRNGKey(0)
    kx, kp = jax.random.split(key)
    personality_input = jax.random.normal(kx, (B, S, Din), jnp.float32)
    params = init_params(kp, din=Din, H=H, OF=OF, NT=NT, nh=NH, S=S)

    out = personality_transformer(personality_input, params,
                                  num_heads=NH, num_traits=NT)
    scores = jax.block_until_ready(out["personality_scores"])
    assert scores.shape == (B, NT)
    assert bool(jnp.all(jnp.isfinite(scores)))
    assert bool(jnp.all((scores >= 0.0) & (scores <= 1.0)))  # sigmoid range
    print("KERNEL_OK")
</pallas_src>

<mosaic_0001>
module attributes {stable_mosaic.version = 11 : i64} {
  func.func @personality_transformer_kernel(%arg0: i32, %arg1: memref<8x8x32xf32, #tpu.memory_space<vmem>>, %arg2: memref<12x32x8xbf16, #tpu.memory_space<vmem>>, %arg3: memref<12x1x8xf32, #tpu.memory_space<vmem>>, %arg4: memref<4x8x32xbf16, #tpu.memory_space<vmem>>, %arg5: memref<32x32xbf16, #tpu.memory_space<vmem>>, %arg6: memref<2x32x32xbf16, #tpu.memory_space<vmem>>, %arg7: memref<32x32xbf16, #tpu.memory_space<vmem>>, %arg8: memref<32x128xbf16, #tpu.memory_space<vmem>>, %arg9: memref<18x32xf32, #tpu.memory_space<vmem>>, %arg10: memref<3x32xf32, #tpu.memory_space<vmem>>, %arg11: memref<1x128xf32, #tpu.memory_space<vmem>>, %arg12: memref<8x128xf32, #tpu.memory_space<vmem>>) attributes {dimension_semantics = [#tpu.dimension_semantics<parallel>], iteration_bounds = array<i64: 1>, scalar_prefetch = 0 : i64, scratch_operands = 0 : i64, tpu.core_type = #tpu.core_type<tc>, window_params = [{transform_indices = @transform_0, window_bounds = array<i64: 8, 8, 32>}, {pipeline_mode = #tpu.pipeline_mode<synchronous>, transform_indices = @transform_1, window_bounds = array<i64: 12, 32, 8>}, {pipeline_mode = #tpu.pipeline_mode<synchronous>, transform_indices = @transform_2, window_bounds = array<i64: 12, 1, 8>}, {pipeline_mode = #tpu.pipeline_mode<synchronous>, transform_indices = @transform_3, window_bounds = array<i64: 4, 8, 32>}, {pipeline_mode = #tpu.pipeline_mode<synchronous>, transform_indices = @transform_4, window_bounds = array<i64: 32, 32>}, {pipeline_mode = #tpu.pipeline_mode<synchronous>, transform_indices = @transform_5, window_bounds = array<i64: 2, 32, 32>}, {pipeline_mode = #tpu.pipeline_mode<synchronous>, transform_indices = @transform_6, window_bounds = array<i64: 32, 32>}, {pipeline_mode = #tpu.pipeline_mode<synchronous>, transform_indices = @transform_7, window_bounds = array<i64: 32, 128>}, {pipeline_mode = #tpu.pipeline_mode<synchronous>, transform_indices = @transform_8, window_bounds = array<i64: 18, 32>}, {pipeline_mode = #tpu.pipeline_mode<synchronous>, transform_indices = @transform_9, window_bounds = array<i64: 3, 32>}, {pipeline_mode = #tpu.pipeline_mode<synchronous>, transform_indices = @transform_10, window_bounds = array<i64: 1, 128>}, {transform_indices = @transform_11, window_bounds = array<i64: 8, 128>}]} {
    %c0 = arith.constant 0 : index
    %c0_0 = arith.constant 0 : index
    %0 = vector.load %arg9[%c0, %c0_0] : memref<18x32xf32, #tpu.memory_space<vmem>>, vector<8x32xf32>
    %c8 = arith.constant 8 : index
    %c0_1 = arith.constant 0 : index
    %1 = vector.load %arg9[%c8, %c0_1] : memref<18x32xf32, #tpu.memory_space<vmem>>, vector<1x32xf32>
    %c9 = arith.constant 9 : index
    %c0_2 = arith.constant 0 : index
    %2 = vector.load %arg9[%c9, %c0_2] : memref<18x32xf32, #tpu.memory_space<vmem>>, vector<1x32xf32>
    %c10 = arith.constant 10 : index
    %c0_3 = arith.constant 0 : index
    %3 = vector.load %arg9[%c10, %c0_3] : memref<18x32xf32, #tpu.memory_space<vmem>>, vector<1x32xf32>
    %c11 = arith.constant 11 : index
    %c0_4 = arith.constant 0 : index
    %4 = vector.load %arg9[%c11, %c0_4] : memref<18x32xf32, #tpu.memory_space<vmem>>, vector<1x32xf32>
    %c12 = arith.constant 12 : index
    %c0_5 = arith.constant 0 : index
    %5 = vector.load %arg9[%c12, %c0_5] : memref<18x32xf32, #tpu.memory_space<vmem>>, vector<1x32xf32>
    %c13 = arith.constant 13 : index
    %c0_6 = arith.constant 0 : index
    %6 = vector.load %arg9[%c13, %c0_6] : memref<18x32xf32, #tpu.memory_space<vmem>>, vector<1x32xf32>
    %c14 = arith.constant 14 : index
    %c0_7 = arith.constant 0 : index
    %7 = vector.load %arg9[%c14, %c0_7] : memref<18x32xf32, #tpu.memory_space<vmem>>, vector<1x32xf32>
    %c15 = arith.constant 15 : index
    %c0_8 = arith.constant 0 : index
    %8 = vector.load %arg9[%c15, %c0_8] : memref<18x32xf32, #tpu.memory_space<vmem>>, vector<1x32xf32>
    %c16 = arith.constant 16 : index
    %c0_9 = arith.constant 0 : index
    %9 = vector.load %arg9[%c16, %c0_9] : memref<18x32xf32, #tpu.memory_space<vmem>>, vector<1x32xf32>
    %c17 = arith.constant 17 : index
    %c0_10 = arith.constant 0 : index
    %10 = vector.load %arg9[%c17, %c0_10] : memref<18x32xf32, #tpu.memory_space<vmem>>, vector<1x32xf32>
    %c0_11 = arith.constant 0 : index
    %c0_12 = arith.constant 0 : index
    %11 = vector.load %arg10[%c0_11, %c0_12] : memref<3x32xf32, #tpu.memory_space<vmem>>, vector<1x32xf32>
    %c1 = arith.constant 1 : index
    %c0_13 = arith.constant 0 : index
    %12 = vector.load %arg10[%c1, %c0_13] : memref<3x32xf32, #tpu.memory_space<vmem>>, vector<1x32xf32>
    %c2 = arith.constant 2 : index
    %c0_14 = arith.constant 0 : index
    %13 = vector.load %arg10[%c2, %c0_14] : memref<3x32xf32, #tpu.memory_space<vmem>>, vector<1x32xf32>
    %c0_15 = arith.constant 0 : index
    %c0_16 = arith.constant 0 : index
    %c0_17 = arith.constant 0 : index
    %14 = vector.load %arg1[%c0_15, %c0_16, %c0_17] : memref<8x8x32xf32, #tpu.memory_space<vmem>>, vector<8x8x32xf32>
    %15 = vector.shape_cast %14 : vector<8x8x32xf32> to vector<64x32xf32>
    %16 = arith.truncf %15 : vector<64x32xf32> to vector<64x32xbf16>
    %c0_18 = arith.constant 0 : index
    %c0_19 = arith.constant 0 : index
    %17 = vector.load %arg5[%c0_18, %c0_19] : memref<32x32xbf16, #tpu.memory_space<vmem>>, vector<32x32xbf16>
    %cst = arith.constant dense<0.000000e+00> : vector<64x32xf32>
    %18 = tpu.matmul %16, %17, %cst {dimension_numbers = #tpu.dot_dimension_numbers<[1], [0], [0], [1], [0, 0, 1, 1], [], []>} : vector<64x32xbf16>, vector<32x32xbf16>, vector<64x32xf32> -> vector<64x32xf32>
    %19 = vector.broadcast %1 : vector<1x32xf32> to vector<64x32xf32>
    %20 = arith.addf %18, %19 : vector<64x32xf32>
    %cst_20 = arith.constant dense<0.000000e+00> : vector<64xf32>
    %21 = vector.multi_reduction <add>, %20, %cst_20 [1] : vector<64x32xf32> to vector<64xf32>
    %22 = vector.shape_cast %21 : vector<64xf32> to vector<64x1xf32>
    %cst_21 = arith.constant 3.200000e+01 : f32
    %23 = vector.broadcast %cst_21 : f32 to vector<64x1xf32>
    %24 = arith.divf %22, %23 : vector<64x1xf32>
    %25 = vector.broadcast %24 : vector<64x1xf32> to vector<64x32xf32>
    %26 = arith.subf %20, %25 : vector<64x32xf32>
    %27 = arith.mulf %26, %26 : vector<64x32xf32>
    %cst_22 = arith.constant dense<0.000000e+00> : vector<64xf32>
    %28 = vector.multi_reduction <add>, %27, %cst_22 [1] : vector<64x32xf32> to vector<64xf32>
    %29 = vector.shape_cast %28 : vector<64xf32> to vector<64x1xf32>
    %cst_23 = arith.constant 3.200000e+01 : f32
    %30 = vector.broadcast %cst_23 : f32 to vector<64x1xf32>
    %31 = arith.divf %29, %30 : vector<64x1xf32>
    %32 = vector.broadcast %24 : vector<64x1xf32> to vector<64x32xf32>
    %33 = arith.subf %20, %32 : vector<64x32xf32>
    %cst_24 = arith.constant 9.99999974E-6 : f32
    %34 = vector.broadcast %cst_24 : f32 to vector<64x1xf32>
    %35 = arith.addf %31, %34 : vector<64x1xf32>
    %36 = math.rsqrt %35 : vector<64x1xf32>
    %37 = vector.broadcast %36 : vector<64x1xf32> to vector<64x32xf32>
    %38 = arith.mulf %33, %37 : vector<64x32xf32>
    %39 = vector.broadcast %2 : vector<1x32xf32> to vector<64x32xf32>
    %40 = arith.mulf %38, %39 : vector<64x32xf32>
    %41 = vector.broadcast %3 : vector<1x32xf32> to vector<64x32xf32>
    %42 = arith.addf %40, %41 : vector<64x32xf32>
    %43 = vector.shape_cast %42 : vector<64x32xf32> to vector<8x8x32xf32>
    %44 = vector.shape_cast %0 : vector<8x32xf32> to vector<1x8x32xf32>
    %45 = vector.broadcast %44 : vector<1x8x32xf32> to vector<8x8x32xf32>
    %46 = arith.addf %43, %45 : vector<8x8x32xf32>
    %47 = vector.shape_cast %46 : vector<8x8x32xf32> to vector<64x32xf32>
    %48 = arith.truncf %47 : vector<64x32xf32> to vector<64x32xbf16>
    %c0_25 = arith.constant 0 : index
    %c0_26 = arith.constant 0 : index
    %c0_27 = arith.constant 0 : index
    %49 = vector.load %arg2[%c0_25, %c0_26, %c0_27] : memref<12x32x8xbf16, #tpu.memory_space<vmem>>, vector<1x32x8xbf16>
    %50 = vector.shape_cast %49 : vector<1x32x8xbf16> to vector<32x8xbf16>
    %cst_28 = arith.constant dense<0.000000e+00> : vector<64x8xf32>
    %51 = tpu.matmul %48, %50, %cst_28 {dimension_numbers = #tpu.dot_dimension_numbers<[1], [0], [0], [1], [0, 0, 1, 1], [], []>} : vector<64x32xbf16>, vector<32x8xbf16>, vector<64x8xf32> -> vector<64x8xf32>
    %c0_29 = arith.constant 0 : index
    %c0_30 = arith.constant 0 : index
    %c0_31 = arith.constant 0 : index
    %52 = vector.load %arg3[%c0_29, %c0_30, %c0_31] : memref<12x1x8xf32, #tpu.memory_space<vmem>>, vector<1x1x8xf32>
    %53 = vector.shape_cast %52 : vector<1x1x8xf32> to vector<1x8xf32>
    %54 = vector.broadcast %53 : vector<1x8xf32> to vector<64x8xf32>
    %55 = arith.addf %51, %54 : vector<64x8xf32>
    %c4 = arith.constant 4 : index
    %c0_32 = arith.constant 0 : index
    %c0_33 = arith.constant 0 : index
    %56 = vector.load %arg2[%c4, %c0_32, %c0_33] : memref<12x32x8xbf16, #tpu.memory_space<vmem>>, vector<1x32x8xbf16>
    %57 = vector.shape_cast %56 : vector<1x32x8xbf16> to vector<32x8xbf16>
    %cst_34 = arith.constant dense<0.000000e+00> : vector<64x8xf32>
    %58 = tpu.matmul %48, %57, %cst_34 {dimension_numbers = #tpu.dot_dimension_numbers<[1], [0], [0], [1], [0, 0, 1, 1], [], []>} : vector<64x32xbf16>, vector<32x8xbf16>, vector<64x8xf32> -> vector<64x8xf32>
    %c4_35 = arith.constant 4 : index
    %c0_36 = arith.constant 0 : index
    %c0_37 = arith.constant 0 : index
    %59 = vector.load %arg3[%c4_35, %c0_36, %c0_37] : memref<12x1x8xf32, #tpu.memory_space<vmem>>, vector<1x1x8xf32>
    %60 = vector.shape_cast %59 : vector<1x1x8xf32> to vector<1x8xf32>
    %61 = vector.broadcast %60 : vector<1x8xf32> to vector<64x8xf32>
    %62 = arith.addf %58, %61 : vector<64x8xf32>
    %c8_38 = arith.constant 8 : index
    %c0_39 = arith.constant 0 : index
    %c0_40 = arith.constant 0 : index
    %63 = vector.load %arg2[%c8_38, %c0_39, %c0_40] : memref<12x32x8xbf16, #tpu.memory_space<vmem>>, vector<1x32x8xbf16>
    %64 = vector.shape_cast %63 : vector<1x32x8xbf16> to vector<32x8xbf16>
    %cst_41 = arith.constant dense<0.000000e+00> : vector<64x8xf32>
    %65 = tpu.matmul %48, %64, %cst_41 {dimension_numbers = #tpu.dot_dimension_numbers<[1], [0], [0], [1], [0, 0, 1, 1], [], []>} : vector<64x32xbf16>, vector<32x8xbf16>, vector<64x8xf32> -> vector<64x8xf32>
    %c8_42 = arith.constant 8 : index
    %c0_43 = arith.constant 0 : index
    %c0_44 = arith.constant 0 : index
    %66 = vector.load %arg3[%c8_42, %c0_43, %c0_44] : memref<12x1x8xf32, #tpu.memory_space<vmem>>, vector<1x1x8xf32>
    %67 = vector.shape_cast %66 : vector<1x1x8xf32> to vector<1x8xf32>
    %68 = vector.broadcast %67 : vector<1x8xf32> to vector<64x8xf32>
    %69 = arith.addf %65, %68 : vector<64x8xf32>
    %70 = vector.shape_cast %55 : vector<64x8xf32> to vector<8x8x8xf32>
    %71 = arith.truncf %70 : vector<8x8x8xf32> to vector<8x8x8xbf16>
    %72 = vector.shape_cast %62 : vector<64x8xf32> to vector<8x8x8xf32>
    %73 = arith.truncf %72 : vector<8x8x8xf32> to vector<8x8x8xbf16>
    %74 = vector.shape_cast %69 : vector<64x8xf32> to vector<8x8x8xf32>
    %75 = arith.truncf %74 : vector<8x8x8xf32> to vector<8x8x8xbf16>
    "tpu.trace_start"() <{level = 10 : i32, message = "bsd,btd->bst"}> : () -> ()
    %cst_45 = arith.constant dense<0.000000e+00> : vector<8x8x8xf32>
    %76 = tpu.matmul %71, %73, %cst_45 {dimension_numbers = #tpu.dot_dimension_numbers<[2], [2], [1], [1], [0, 0, 0, 1, 1, 1], [0], [0]>} : vector<8x8x8xbf16>, vector<8x8x8xbf16>, vector<8x8x8xf32> -> vector<8x8x8xf32>
    "tpu.trace_stop"() : () -> ()
    %cst_46 = arith.constant dense<0xFF800000> : vector<8x8xf32>
    %77 = vector.multi_reduction <maximumf>, %76, %cst_46 [2] : vector<8x8x8xf32> to vector<8x8xf32>
    %78 = vector.shape_cast %77 : vector<8x8xf32> to vector<8x8x1xf32>
    %79 = vector.broadcast %78 : vector<8x8x1xf32> to vector<8x8x8xf32>
    %80 = arith.subf %76, %79 : vector<8x8x8xf32>
    %81 = math.exp %80 : vector<8x8x8xf32>
    %cst_47 = arith.constant dense<0.000000e+00> : vector<8x8xf32>
    %82 = vector.multi_reduction <add>, %81, %cst_47 [2] : vector<8x8x8xf32> to vector<8x8xf32>
    %83 = vector.shape_cast %82 : vector<8x8xf32> to vector<8x8x1xf32>
    %84 = tpu.reciprocal %83 {approx = true} : vector<8x8x1xf32> -> vector<8x8x1xf32>
    %85 = vector.broadcast %84 : vector<8x8x1xf32> to vector<8x8x8xf32>
    %86 = arith.mulf %81, %85 : vector<8x8x8xf32>
    %87 = arith.truncf %86 : vector<8x8x8xf32> to vector<8x8x8xbf16>
    "tpu.trace_start"() <{level = 10 : i32, message = "bst,btd->bsd"}> : () -> ()
    %cst_48 = arith.constant dense<0.000000e+00> : vector<8x8x8xf32>
    %88 = tpu.matmul %87, %75, %cst_48 {dimension_numbers = #tpu.dot_dimension_numbers<[2], [1], [1], [2], [0, 0, 0, 1, 1, 2], [0], [0]>} : vector<8x8x8xbf16>, vector<8x8x8xbf16>, vector<8x8x8xf32> -> vector<8x8x8xf32>
    "tpu.trace_stop"() : () -> ()
    %89 = vector.shape_cast %88 : vector<8x8x8xf32> to vector<64x8xf32>
    %90 = arith.truncf %89 : vector<64x8xf32> to vector<64x8xbf16>
    %c0_49 = arith.constant 0 : index
    %c0_50 = arith.constant 0 : index
    %c0_51 = arith.constant 0 : index
    %91 = vector.load %arg4[%c0_49, %c0_50, %c0_51] : memref<4x8x32xbf16, #tpu.memory_space<vmem>>, vector<1x8x32xbf16>
    %92 = vector.shape_cast %91 : vector<1x8x32xbf16> to vector<8x32xbf16>
    %cst_52 = arith.constant dense<0.000000e+00> : vector<64x32xf32>
    %93 = tpu.matmul %90, %92, %cst_52 {dimension_numbers = #tpu.dot_dimension_numbers<[1], [0], [0], [1], [0, 0, 1, 1], [], []>} : vector<64x8xbf16>, vector<8x32xbf16>, vector<64x32xf32> -> vector<64x32xf32>
    %c1_53 = arith.constant 1 : index
    %c0_54 = arith.constant 0 : index
    %c0_55 = arith.constant 0 : index
    %94 = vector.load %arg2[%c1_53, %c0_54, %c0_55] : memref<12x32x8xbf16, #tpu.memory_space<vmem>>, vector<1x32x8xbf16>
    %95 = vector.shape_cast %94 : vector<1x32x8xbf16> to vector<32x8xbf16>
    %cst_56 = arith.constant dense<0.000000e+00> : vector<64x8xf32>
    %96 = tpu.matmul %48, %95, %cst_56 {dimension_numbers = #tpu.dot_dimension_numbers<[1], [0], [0], [1], [0, 0, 1, 1], [], []>} : vector<64x32xbf16>, vector<32x8xbf16>, vector<64x8xf32> -> vector<64x8xf32>
    %c1_57 = arith.constant 1 : index
    %c0_58 = arith.constant 0 : index
    %c0_59 = arith.constant 0 : index
    %97 = vector.load %arg3[%c1_57, %c0_58, %c0_59] : memref<12x1x8xf32, #tpu.memory_space<vmem>>, vector<1x1x8xf32>
    %98 = vector.shape_cast %97 : vector<1x1x8xf32> to vector<1x8xf32>
    %99 = vector.broadcast %98 : vector<1x8xf32> to vector<64x8xf32>
    %100 = arith.addf %96, %99 : vector<64x8xf32>
    %c5 = arith.constant 5 : index
    %c0_60 = arith.constant 0 : index
    %c0_61 = arith.constant 0 : index
    %101 = vector.load %arg2[%c5, %c0_60, %c0_61] : memref<12x32x8xbf16, #tpu.memory_space<vmem>>, vector<1x32x8xbf16>
    %102 = vector.shape_cast %101 : vector<1x32x8xbf16> to vector<32x8xbf16>
    %cst_62 = arith.constant dense<0.000000e+00> : vector<64x8xf32>
    %103 = tpu.matmul %48, %102, %cst_62 {dimension_numbers = #tpu.dot_dimension_numbers<[1], [0], [0], [1], [0, 0, 1, 1], [], []>} : vector<64x32xbf16>, vector<32x8xbf16>, vector<64x8xf32> -> vector<64x8xf32>
    %c5_63 = arith.constant 5 : index
    %c0_64 = arith.constant 0 : index
    %c0_65 = arith.constant 0 : index
    %104 = vector.load %arg3[%c5_63, %c0_64, %c0_65] : memref<12x1x8xf32, #tpu.memory_space<vmem>>, vector<1x1x8xf32>
    %105 = vector.shape_cast %104 : vector<1x1x8xf32> to vector<1x8xf32>
    %106 = vector.broadcast %105 : vector<1x8xf32> to vector<64x8xf32>
    %107 = arith.addf %103, %106 : vector<64x8xf32>
    %c9_66 = arith.constant 9 : index
    %c0_67 = arith.constant 0 : index
    %c0_68 = arith.constant 0 : index
    %108 = vector.load %arg2[%c9_66, %c0_67, %c0_68] : memref<12x32x8xbf16, #tpu.memory_space<vmem>>, vector<1x32x8xbf16>
    %109 = vector.shape_cast %108 : vector<1x32x8xbf16> to vector<32x8xbf16>
    %cst_69 = arith.constant dense<0.000000e+00> : vector<64x8xf32>
    %110 = tpu.matmul %48, %109, %cst_69 {dimension_numbers = #tpu.dot_dimension_numbers<[1], [0], [0], [1], [0, 0, 1, 1], [], []>} : vector<64x32xbf16>, vector<32x8xbf16>, vector<64x8xf32> -> vector<64x8xf32>
    %c9_70 = arith.constant 9 : index
    %c0_71 = arith.constant 0 : index
    %c0_72 = arith.constant 0 : index
    %111 = vector.load %arg3[%c9_70, %c0_71, %c0_72] : memref<12x1x8xf32, #tpu.memory_space<vmem>>, vector<1x1x8xf32>
    %112 = vector.shape_cast %111 : vector<1x1x8xf32> to vector<1x8xf32>
    %113 = vector.broadcast %112 : vector<1x8xf32> to vector<64x8xf32>
    %114 = arith.addf %110, %113 : vector<64x8xf32>
    %115 = vector.shape_cast %100 : vector<64x8xf32> to vector<8x8x8xf32>
    %116 = arith.truncf %115 : vector<8x8x8xf32> to vector<8x8x8xbf16>
    %117 = vector.shape_cast %107 : vector<64x8xf32> to vector<8x8x8xf32>
    %118 = arith.truncf %117 : vector<8x8x8xf32> to vector<8x8x8xbf16>
    %119 = vector.shape_cast %114 : vector<64x8xf32> to vector<8x8x8xf32>
    %120 = arith.truncf %119 : vector<8x8x8xf32> to vector<8x8x8xbf16>
    "tpu.trace_start"() <{level = 10 : i32, message = "bsd,btd->bst"}> : () -> ()
    %cst_73 = arith.constant dense<0.000000e+00> : vector<8x8x8xf32>
    %121 = tpu.matmul %116, %118, %cst_73 {dimension_numbers = #tpu.dot_dimension_numbers<[2], [2], [1], [1], [0, 0, 0, 1, 1, 1], [0], [0]>} : vector<8x8x8xbf16>, vector<8x8x8xbf16>, vector<8x8x8xf32> -> vector<8x8x8xf32>
    "tpu.trace_stop"() : () -> ()
    %cst_74 = arith.constant dense<0xFF800000> : vector<8x8xf32>
    %122 = vector.multi_reduction <maximumf>, %121, %cst_74 [2] : vector<8x8x8xf32> to vector<8x8xf32>
    %123 = vector.shape_cast %122 : vector<8x8xf32> to vector<8x8x1xf32>
    %124 = vector.broadcast %123 : vector<8x8x1xf32> to vector<8x8x8xf32>
    %125 = arith.subf %121, %124 : vector<8x8x8xf32>
    %126 = math.exp %125 : vector<8x8x8xf32>
    %cst_75 = arith.constant dense<0.000000e+00> : vector<8x8xf32>
    %127 = vector.multi_reduction <add>, %126, %cst_75 [2] : vector<8x8x8xf32> to vector<8x8xf32>
    %128 = vector.shape_cast %127 : vector<8x8xf32> to vector<8x8x1xf32>
    %129 = tpu.reciprocal %128 {approx = true} : vector<8x8x1xf32> -> vector<8x8x1xf32>
    %130 = vector.broadcast %129 : vector<8x8x1xf32> to vector<8x8x8xf32>
    %131 = arith.mulf %126, %130 : vector<8x8x8xf32>
    %132 = arith.truncf %131 : vector<8x8x8xf32> to vector<8x8x8xbf16>
    "tpu.trace_start"() <{level = 10 : i32, message = "bst,btd->bsd"}> : () -> ()
    %cst_76 = arith.constant dense<0.000000e+00> : vector<8x8x8xf32>
    %133 = tpu.matmul %132, %120, %cst_76 {dimension_numbers = #tpu.dot_dimension_numbers<[2], [1], [1], [2], [0, 0, 0, 1, 1, 2], [0], [0]>} : vector<8x8x8xbf16>, vector<8x8x8xbf16>, vector<8x8x8xf32> -> vector<8x8x8xf32>
    "tpu.trace_stop"() : () -> ()
    %134 = vector.shape_cast %133 : vector<8x8x8xf32> to vector<64x8xf32>
    %135 = arith.truncf %134 : vector<64x8xf32> to vector<64x8xbf16>
    %c1_77 = arith.constant 1 : index
    %c0_78 = arith.constant 0 : index
    %c0_79 = arith.constant 0 : index
    %136 = vector.load %arg4[%c1_77, %c0_78, %c0_79] : memref<4x8x32xbf16, #tpu.memory_space<vmem>>, vector<1x8x32xbf16>
    %137 = vector.shape_cast %136 : vector<1x8x32xbf16> to vector<8x32xbf16>
    %cst_80 = arith.constant dense<0.000000e+00> : vector<64x32xf32>
    %138 = tpu.matmul %135, %137, %cst_80 {dimension_numbers = #tpu.dot_dimension_numbers<[1], [0], [0], [1], [0, 0, 1, 1], [], []>} : vector<64x8xbf16>, vector<8x32xbf16>, vector<64x32xf32> -> vector<64x32xf32>
    %139 = arith.addf %93, %138 : vector<64x32xf32>
    %c2_81 = arith.constant 2 : index
    %c0_82 = arith.constant 0 : index
    %c0_83 = arith.constant 0 : index
    %140 = vector.load %arg2[%c2_81, %c0_82, %c0_83] : memref<12x32x8xbf16, #tpu.memory_space<vmem>>, vector<1x32x8xbf16>
    %141 = vector.shape_cast %140 : vector<1x32x8xbf16> to vector<32x8xbf16>
    %cst_84 = arith.constant dense<0.000000e+00> : vector<64x8xf32>
    %142 = tpu.matmul %48, %141, %cst_84 {dimension_numbers = #tpu.dot_dimension_numbers<[1], [0], [0], [1], [0, 0, 1, 1], [], []>} : vector<64x32xbf16>, vector<32x8xbf16>, vector<64x8xf32> -> vector<64x8xf32>
    %c2_85 = arith.constant 2 : index
    %c0_86 = arith.constant 0 : index
    %c0_87 = arith.constant 0 : index
    %143 = vector.load %arg3[%c2_85, %c0_86, %c0_87] : memref<12x1x8xf32, #tpu.memory_space<vmem>>, vector<1x1x8xf32>
    %144 = vector.shape_cast %143 : vector<1x1x8xf32> to vector<1x8xf32>
    %145 = vector.broadcast %144 : vector<1x8xf32> to vector<64x8xf32>
    %146 = arith.addf %142, %145 : vector<64x8xf32>
    %c6 = arith.constant 6 : index
    %c0_88 = arith.constant 0 : index
    %c0_89 = arith.constant 0 : index
    %147 = vector.load %arg2[%c6, %c0_88, %c0_89] : memref<12x32x8xbf16, #tpu.memory_space<vmem>>, vector<1x32x8xbf16>
    %148 = vector.shape_cast %147 : vector<1x32x8xbf16> to vector<32x8xbf16>
    %cst_90 = arith.constant dense<0.000000e+00> : vector<64x8xf32>
    %149 = tpu.matmul %48, %148, %cst_90 {dimension_numbers = #tpu.dot_dimension_numbers<[1], [0], [0], [1], [0, 0, 1, 1], [], []>} : vector<64x32xbf16>, vector<32x8xbf16>, vector<64x8xf32> -> vector<64x8xf32>
    %c6_91 = arith.constant 6 : index
    %c0_92 = arith.constant 0 : index
    %c0_93 = arith.constant 0 : index
    %150 = vector.load %arg3[%c6_91, %c0_92, %c0_93] : memref<12x1x8xf32, #tpu.memory_space<vmem>>, vector<1x1x8xf32>
    %151 = vector.shape_cast %150 : vector<1x1x8xf32> to vector<1x8xf32>
    %152 = vector.broadcast %151 : vector<1x8xf32> to vector<64x8xf32>
    %153 = arith.addf %149, %152 : vector<64x8xf32>
    %c10_94 = arith.constant 10 : index
    %c0_95 = arith.constant 0 : index
    %c0_96 = arith.constant 0 : index
    %154 = vector.load %arg2[%c10_94, %c0_95, %c0_96] : memref<12x32x8xbf16, #tpu.memory_space<vmem>>, vector<1x32x8xbf16>
    %155 = vector.shape_cast %154 : vector<1x32x8xbf16> to vector<32x8xbf16>
    %cst_97 = arith.constant dense<0.000000e+00> : vector<64x8xf32>
    %156 = tpu.matmul %48, %155, %cst_97 {dimension_numbers = #tpu.dot_dimension_numbers<[1], [0], [0], [1], [0, 0, 1, 1], [], []>} : vector<64x32xbf16>, vector<32x8xbf16>, vector<64x8xf32> -> vector<64x8xf32>
    %c10_98 = arith.constant 10 : index
    %c0_99 = arith.constant 0 : index
    %c0_100 = arith.constant 0 : index
    %157 = vector.load %arg3[%c10_98, %c0_99, %c0_100] : memref<12x1x8xf32, #tpu.memory_space<vmem>>, vector<1x1x8xf32>
    %158 = vector.shape_cast %157 : vector<1x1x8xf32> to vector<1x8xf32>
    %159 = vector.broadcast %158 : vector<1x8xf32> to vector<64x8xf32>
    %160 = arith.addf %156, %159 : vector<64x8xf32>
    %161 = vector.shape_cast %146 : vector<64x8xf32> to vector<8x8x8xf32>
    %162 = arith.truncf %161 : vector<8x8x8xf32> to vector<8x8x8xbf16>
    %163 = vector.shape_cast %153 : vector<64x8xf32> to vector<8x8x8xf32>
    %164 = arith.truncf %163 : vector<8x8x8xf32> to vector<8x8x8xbf16>
    %165 = vector.shape_cast %160 : vector<64x8xf32> to vector<8x8x8xf32>
    %166 = arith.truncf %165 : vector<8x8x8xf32> to vector<8x8x8xbf16>
    "tpu.trace_start"() <{level = 10 : i32, message = "bsd,btd->bst"}> : () -> ()
    %cst_101 = arith.constant dense<0.000000e+00> : vector<8x8x8xf32>
    %167 = tpu.matmul %162, %164, %cst_101 {dimension_numbers = #tpu.dot_dimension_numbers<[2], [2], [1], [1], [0, 0, 0, 1, 1, 1], [0], [0]>} : vector<8x8x8xbf16>, vector<8x8x8xbf16>, vector<8x8x8xf32> -> vector<8x8x8xf32>
    "tpu.trace_stop"() : () -> ()
    %cst_102 = arith.constant dense<0xFF800000> : vector<8x8xf32>
    %168 = vector.multi_reduction <maximumf>, %167, %cst_102 [2] : vector<8x8x8xf32> to vector<8x8xf32>
    %169 = vector.shape_cast %168 : vector<8x8xf32> to vector<8x8x1xf32>
    %170 = vector.broadcast %169 : vector<8x8x1xf32> to vector<8x8x8xf32>
    %171 = arith.subf %167, %170 : vector<8x8x8xf32>
    %172 = math.exp %171 : vector<8x8x8xf32>
    %cst_103 = arith.constant dense<0.000000e+00> : vector<8x8xf32>
    %173 = vector.multi_reduction <add>, %172, %cst_103 [2] : vector<8x8x8xf32> to vector<8x8xf32>
    %174 = vector.shape_cast %173 : vector<8x8xf32> to vector<8x8x1xf32>
    %175 = tpu.reciprocal %174 {approx = true} : vector<8x8x1xf32> -> vector<8x8x1xf32>
    %176 = vector.broadcast %175 : vector<8x8x1xf32> to vector<8x8x8xf32>
    %177 = arith.mulf %172, %176 : vector<8x8x8xf32>
    %178 = arith.truncf %177 : vector<8x8x8xf32> to vector<8x8x8xbf16>
    "tpu.trace_start"() <{level = 10 : i32, message = "bst,btd->bsd"}> : () -> ()
    %cst_104 = arith.constant dense<0.000000e+00> : vector<8x8x8xf32>
    %179 = tpu.matmul %178, %166, %cst_104 {dimension_numbers = #tpu.dot_dimension_numbers<[2], [1], [1], [2], [0, 0, 0, 1, 1, 2], [0], [0]>} : vector<8x8x8xbf16>, vector<8x8x8xbf16>, vector<8x8x8xf32> -> vector<8x8x8xf32>
    "tpu.trace_stop"() : () -> ()
    %180 = vector.shape_cast %179 : vector<8x8x8xf32> to vector<64x8xf32>
    %181 = arith.truncf %180 : vector<64x8xf32> to vector<64x8xbf16>
    %c2_105 = arith.constant 2 : index
    %c0_106 = arith.constant 0 : index
    %c0_107 = arith.constant 0 : index
    %182 = vector.load %arg4[%c2_105, %c0_106, %c0_107] : memref<4x8x32xbf16, #tpu.memory_space<vmem>>, vector<1x8x32xbf16>
    %183 = vector.shape_cast %182 : vector<1x8x32xbf16> to vector<8x32xbf16>
    %cst_108 = arith.constant dense<0.000000e+00> : vector<64x32xf32>
    %184 = tpu.matmul %181, %183, %cst_108 {dimension_numbers = #tpu.dot_dimension_numbers<[1], [0], [0], [1], [0, 0, 1, 1], [], []>} : vector<64x8xbf16>, vector<8x32xbf16>, vector<64x32xf32> -> vector<64x32xf32>
    %185 = arith.addf %139, %184 : vector<64x32xf32>
    %c3 = arith.constant 3 : index
    %c0_109 = arith.constant 0 : index
    %c0_110 = arith.constant 0 : index
    %186 = vector.load %arg2[%c3, %c0_109, %c0_110] : memref<12x32x8xbf16, #tpu.memory_space<vmem>>, vector<1x32x8xbf16>
    %187 = vector.shape_cast %186 : vector<1x32x8xbf16> to vector<32x8xbf16>
    %cst_111 = arith.constant dense<0.000000e+00> : vector<64x8xf32>
    %188 = tpu.matmul %48, %187, %cst_111 {dimension_numbers = #tpu.dot_dimension_numbers<[1], [0], [0], [1], [0, 0, 1, 1], [], []>} : vector<64x32xbf16>, vector<32x8xbf16>, vector<64x8xf32> -> vector<64x8xf32>
    %c3_112 = arith.constant 3 : index
    %c0_113 = arith.constant 0 : index
    %c0_114 = arith.constant 0 : index
    %189 = vector.load %arg3[%c3_112, %c0_113, %c0_114] : memref<12x1x8xf32, #tpu.memory_space<vmem>>, vector<1x1x8xf32>
    %190 = vector.shape_cast %189 : vector<1x1x8xf32> to vector<1x8xf32>
    %191 = vector.broadcast %190 : vector<1x8xf32> to vector<64x8xf32>
    %192 = arith.addf %188, %191 : vector<64x8xf32>
    %c7 = arith.constant 7 : index
    %c0_115 = arith.constant 0 : index
    %c0_116 = arith.constant 0 : index
    %193 = vector.load %arg2[%c7, %c0_115, %c0_116] : memref<12x32x8xbf16, #tpu.memory_space<vmem>>, vector<1x32x8xbf16>
    %194 = vector.shape_cast %193 : vector<1x32x8xbf16> to vector<32x8xbf16>
    %cst_117 = arith.constant dense<0.000000e+00> : vector<64x8xf32>
    %195 = tpu.matmul %48, %194, %cst_117 {dimension_numbers = #tpu.dot_dimension_numbers<[1], [0], [0], [1], [0, 0, 1, 1], [], []>} : vector<64x32xbf16>, vector<32x8xbf16>, vector<64x8xf32> -> vector<64x8xf32>
    %c7_118 = arith.constant 7 : index
    %c0_119 = arith.constant 0 : index
    %c0_120 = arith.constant 0 : index
    %196 = vector.load %arg3[%c7_118, %c0_119, %c0_120] : memref<12x1x8xf32, #tpu.memory_space<vmem>>, vector<1x1x8xf32>
    %197 = vector.shape_cast %196 : vector<1x1x8xf32> to vector<1x8xf32>
    %198 = vector.broadcast %197 : vector<1x8xf32> to vector<64x8xf32>
    %199 = arith.addf %195, %198 : vector<64x8xf32>
    %c11_121 = arith.constant 11 : index
    %c0_122 = arith.constant 0 : index
    %c0_123 = arith.constant 0 : index
    %200 = vector.load %arg2[%c11_121, %c0_122, %c0_123] : memref<12x32x8xbf16, #tpu.memory_space<vmem>>, vector<1x32x8xbf16>
    %201 = vector.shape_cast %200 : vector<1x32x8xbf16> to vector<32x8xbf16>
    %cst_124 = arith.constant dense<0.000000e+00> : vector<64x8xf32>
    %202 = tpu.matmul %48, %201, %cst_124 {dimension_numbers = #tpu.dot_dimension_numbers<[1], [0], [0], [1], [0, 0, 1, 1], [], []>} : vector<64x32xbf16>, vector<32x8xbf16>, vector<64x8xf32> -> vector<64x8xf32>
    %c11_125 = arith.constant 11 : index
    %c0_126 = arith.constant 0 : index
    %c0_127 = arith.constant 0 : index
    %203 = vector.load %arg3[%c11_125, %c0_126, %c0_127] : memref<12x1x8xf32, #tpu.memory_space<vmem>>, vector<1x1x8xf32>
    %204 = vector.shape_cast %203 : vector<1x1x8xf32> to vector<1x8xf32>
    %205 = vector.broadcast %204 : vector<1x8xf32> to vector<64x8xf32>
    %206 = arith.addf %202, %205 : vector<64x8xf32>
    %207 = vector.shape_cast %192 : vector<64x8xf32> to vector<8x8x8xf32>
    %208 = arith.truncf %207 : vector<8x8x8xf32> to vector<8x8x8xbf16>
    %209 = vector.shape_cast %199 : vector<64x8xf32> to vector<8x8x8xf32>
    %210 = arith.truncf %209 : vector<8x8x8xf32> to vector<8x8x8xbf16>
    %211 = vector.shape_cast %206 : vector<64x8xf32> to vector<8x8x8xf32>
    %212 = arith.truncf %211 : vector<8x8x8xf32> to vector<8x8x8xbf16>
    "tpu.trace_start"() <{level = 10 : i32, message = "bsd,btd->bst"}> : () -> ()
    %cst_128 = arith.constant dense<0.000000e+00> : vector<8x8x8xf32>
    %213 = tpu.matmul %208, %210, %cst_128 {dimension_numbers = #tpu.dot_dimension_numbers<[2], [2], [1], [1], [0, 0, 0, 1, 1, 1], [0], [0]>} : vector<8x8x8xbf16>, vector<8x8x8xbf16>, vector<8x8x8xf32> -> vector<8x8x8xf32>
    "tpu.trace_stop"() : () -> ()
    %cst_129 = arith.constant dense<0xFF800000> : vector<8x8xf32>
    %214 = vector.multi_reduction <maximumf>, %213, %cst_129 [2] : vector<8x8x8xf32> to vector<8x8xf32>
    %215 = vector.shape_cast %214 : vector<8x8xf32> to vector<8x8x1xf32>
    %216 = vector.broadcast %215 : vector<8x8x1xf32> to vector<8x8x8xf32>
    %217 = arith.subf %213, %216 : vector<8x8x8xf32>
    %218 = math.exp %217 : vector<8x8x8xf32>
    %cst_130 = arith.constant dense<0.000000e+00> : vector<8x8xf32>
    %219 = vector.multi_reduction <add>, %218, %cst_130 [2] : vector<8x8x8xf32> to vector<8x8xf32>
    %220 = vector.shape_cast %219 : vector<8x8xf32> to vector<8x8x1xf32>
    %221 = tpu.reciprocal %220 {approx = true} : vector<8x8x1xf32> -> vector<8x8x1xf32>
    %222 = vector.broadcast %221 : vector<8x8x1xf32> to vector<8x8x8xf32>
    %223 = arith.mulf %218, %222 : vector<8x8x8xf32>
    %224 = arith.truncf %223 : vector<8x8x8xf32> to vector<8x8x8xbf16>
    "tpu.trace_start"() <{level = 10 : i32, message = "bst,btd->bsd"}> : () -> ()
    %cst_131 = arith.constant dense<0.000000e+00> : vector<8x8x8xf32>
    %225 = tpu.matmul %224, %212, %cst_131 {dimension_numbers = #tpu.dot_dimension_numbers<[2], [1], [1], [2], [0, 0, 0, 1, 1, 2], [0], [0]>} : vector<8x8x8xbf16>, vector<8x8x8xbf16>, vector<8x8x8xf32> -> vector<8x8x8xf32>
    "tpu.trace_stop"() : () -> ()
    %226 = vector.shape_cast %225 : vector<8x8x8xf32> to vector<64x8xf32>
    %227 = arith.truncf %226 : vector<64x8xf32> to vector<64x8xbf16>
    %c3_132 = arith.constant 3 : index
    %c0_133 = arith.constant 0 : index
    %c0_134 = arith.constant 0 : index
    %228 = vector.load %arg4[%c3_132, %c0_133, %c0_134] : memref<4x8x32xbf16, #tpu.memory_space<vmem>>, vector<1x8x32xbf16>
    %229 = vector.shape_cast %228 : vector<1x8x32xbf16> to vector<8x32xbf16>
    %cst_135 = arith.constant dense<0.000000e+00> : vector<64x32xf32>
    %230 = tpu.matmul %227, %229, %cst_135 {dimension_numbers = #tpu.dot_dimension_numbers<[1], [0], [0], [1], [0, 0, 1, 1], [], []>} : vector<64x8xbf16>, vector<8x32xbf16>, vector<64x32xf32> -> vector<64x32xf32>
    %231 = arith.addf %185, %230 : vector<64x32xf32>
    %232 = vector.broadcast %4 : vector<1x32xf32> to vector<64x32xf32>
    %233 = arith.addf %231, %232 : vector<64x32xf32>
    %234 = arith.addf %233, %47 : vector<64x32xf32>
    %cst_136 = arith.constant dense<0.000000e+00> : vector<64xf32>
    %235 = vector.multi_reduction <add>, %234, %cst_136 [1] : vector<64x32xf32> to vector<64xf32>
    %236 = vector.shape_cast %235 : vector<64xf32> to vector<64x1xf32>
    %cst_137 = arith.constant 3.200000e+01 : f32
    %237 = vector.broadcast %cst_137 : f32 to vector<64x1xf32>
    %238 = arith.divf %236, %237 : vector<64x1xf32>
    %239 = vector.broadcast %238 : vector<64x1xf32> to vector<64x32xf32>
    %240 = arith.subf %234, %239 : vector<64x32xf32>
    %241 = arith.mulf %240, %240 : vector<64x32xf32>
    %cst_138 = arith.constant dense<0.000000e+00> : vector<64xf32>
    %242 = vector.multi_reduction <add>, %241, %cst_138 [1] : vector<64x32xf32> to vector<64xf32>
    %243 = vector.shape_cast %242 : vector<64xf32> to vector<64x1xf32>
    %cst_139 = arith.constant 3.200000e+01 : f32
    %244 = vector.broadcast %cst_139 : f32 to vector<64x1xf32>
    %245 = arith.divf %243, %244 : vector<64x1xf32>
    %246 = vector.broadcast %238 : vector<64x1xf32> to vector<64x32xf32>
    %247 = arith.subf %234, %246 : vector<64x32xf32>
    %cst_140 = arith.constant 9.99999974E-6 : f32
    %248 = vector.broadcast %cst_140 : f32 to vector<64x1xf32>
    %249 = arith.addf %245, %248 : vector<64x1xf32>
    %250 = math.rsqrt %249 : vector<64x1xf32>
    %251 = vector.broadcast %250 : vector<64x1xf32> to vector<64x32xf32>
    %252 = arith.mulf %247, %251 : vector<64x32xf32>
    %253 = vector.broadcast %5 : vector<1x32xf32> to vector<64x32xf32>
    %254 = arith.mulf %252, %253 : vector<64x32xf32>
    %255 = vector.broadcast %6 : vector<1x32xf32> to vector<64x32xf32>
    %256 = arith.addf %254, %255 : vector<64x32xf32>
    %257 = arith.truncf %256 : vector<64x32xf32> to vector<64x32xbf16>
    %c0_141 = arith.constant 0 : index
    %c0_142 = arith.constant 0 : index
    %c0_143 = arith.constant 0 : index
    %258 = vector.load %arg6[%c0_141, %c0_142, %c0_143] : memref<2x32x32xbf16, #tpu.memory_space<vmem>>, vector<1x32x32xbf16>
    %259 = vector.shape_cast %258 : vector<1x32x32xbf16> to vector<32x32xbf16>
    %cst_144 = arith.constant dense<0.000000e+00> : vector<64x32xf32>
    %260 = tpu.matmul %257, %259, %cst_144 {dimension_numbers = #tpu.dot_dimension_numbers<[1], [0], [0], [1], [0, 0, 1, 1], [], []>} : vector<64x32xbf16>, vector<32x32xbf16>, vector<64x32xf32> -> vector<64x32xf32>
    %261 = vector.broadcast %7 : vector<1x32xf32> to vector<64x32xf32>
    %262 = arith.addf %260, %261 : vector<64x32xf32>
    %cst_145 = arith.constant 5.000000e-01 : f32
    %263 = vector.broadcast %cst_145 : f32 to vector<64x32xf32>
    %264 = arith.mulf %263, %262 : vector<64x32xf32>
    %cst_146 = arith.constant 0.707106769 : f32
    %265 = vector.broadcast %cst_146 : f32 to vector<64x32xf32>
    %266 = arith.mulf %262, %265 : vector<64x32xf32>
    %cst_147 = arith.constant 0.000000e+00 : f32
    %267 = vector.broadcast %cst_147 : f32 to vector<64x32xf32>
    %268 = arith.cmpf oge, %266, %267 : vector<64x32xf32>
    %cst_148 = arith.constant 1.000000e+00 : f32
    %cst_149 = arith.constant -1.000000e+00 : f32
    %269 = vector.broadcast %cst_148 : f32 to vector<64x32xf32>
    %270 = vector.broadcast %cst_149 : f32 to vector<64x32xf32>
    %271 = arith.select %268, %269, %270 : vector<64x32xi1>, vector<64x32xf32>
    %272 = math.absf %266 : vector<64x32xf32>
    %cst_150 = arith.constant 0.327591091 : f32
    %273 = vector.broadcast %cst_150 : f32 to vector<64x32xf32>
    %274 = arith.mulf %273, %272 : vector<64x32xf32>
    %cst_151 = arith.constant 1.000000e+00 : f32
    %275 = vector.broadcast %cst_151 : f32 to vector<64x32xf32>
    %276 = arith.addf %275, %274 : vector<64x32xf32>
    %cst_152 = arith.constant 1.000000e+00 : f32
    %277 = vector.broadcast %cst_152 : f32 to vector<64x32xf32>
    %278 = arith.divf %277, %276 : vector<64x32xf32>
    %cst_153 = arith.constant 1.06140542 : f32
    %279 = vector.broadcast %cst_153 : f32 to vector<64x32xf32>
    %280 = arith.mulf %279, %278 : vector<64x32xf32>
    %cst_154 = arith.constant -1.45315206 : f32
    %281 = vector.broadcast %cst_154 : f32 to vector<64x32xf32>
    %282 = arith.addf %280, %281 : vector<64x32xf32>
    %283 = arith.mulf %282, %278 : vector<64x32xf32>
    %cst_155 = arith.constant 1.42141378 : f32
    %284 = vector.broadcast %cst_155 : f32 to vector<64x32xf32>
    %285 = arith.addf %283, %284 : vector<64x32xf32>
    %286 = arith.mulf %285, %278 : vector<64x32xf32>
    %cst_156 = arith.constant -0.284496725 : f32
    %287 = vector.broadcast %cst_156 : f32 to vector<64x32xf32>
    %288 = arith.addf %286, %287 : vector<64x32xf32>
    %289 = arith.mulf %288, %278 : vector<64x32xf32>
    %cst_157 = arith.constant 0.254829586 : f32
    %290 = vector.broadcast %cst_157 : f32 to vector<64x32xf32>
    %291 = arith.addf %289, %290 : vector<64x32xf32>
    %292 = arith.mulf %291, %278 : vector<64x32xf32>
    %cst_158 = arith.constant 0.000000e+00 : f32
    %293 = vector.broadcast %cst_158 : f32 to vector<64x32xf32>
    %294 = arith.subf %293, %272 : vector<64x32xf32>
    %295 = arith.mulf %294, %272 : vector<64x32xf32>
    %296 = math.exp %295 : vector<64x32xf32>
    %297 = arith.mulf %292, %296 : vector<64x32xf32>
    %cst_159 = arith.constant 1.000000e+00 : f32
    %298 = vector.broadcast %cst_159 : f32 to vector<64x32xf32>
    %299 = arith.subf %298, %297 : vector<64x32xf32>
    %300 = arith.mulf %271, %299 : vector<64x32xf32>
    %cst_160 = arith.constant 1.000000e+00 : f32
    %301 = vector.broadcast %cst_160 : f32 to vector<64x32xf32>
    %302 = arith.addf %301, %300 : vector<64x32xf32>
    %303 = arith.mulf %264, %302 : vector<64x32xf32>
    %304 = arith.truncf %303 : vector<64x32xf32> to vector<64x32xbf16>
    %c1_161 = arith.constant 1 : index
    %c0_162 = arith.constant 0 : index
    %c0_163 = arith.constant 0 : index
    %305 = vector.load %arg6[%c1_161, %c0_162, %c0_163] : memref<2x32x32xbf16, #tpu.memory_space<vmem>>, vector<1x32x32xbf16>
    %306 = vector.shape_cast %305 : vector<1x32x32xbf16> to vector<32x32xbf16>
    %cst_164 = arith.constant dense<0.000000e+00> : vector<64x32xf32>
    %307 = tpu.matmul %304, %306, %cst_164 {dimension_numbers = #tpu.dot_dimension_numbers<[1], [0], [0], [1], [0, 0, 1, 1], [], []>} : vector<64x32xbf16>, vector<32x32xbf16>, vector<64x32xf32> -> vector<64x32xf32>
    %308 = vector.broadcast %8 : vector<1x32xf32> to vector<64x32xf32>
    %309 = arith.addf %307, %308 : vector<64x32xf32>
    %310 = arith.addf %309, %256 : vector<64x32xf32>
    %cst_165 = arith.constant dense<0.000000e+00> : vector<64xf32>
    %311 = vector.multi_reduction <add>, %310, %cst_165 [1] : vector<64x32xf32> to vector<64xf32>
    %312 = vector.shape_cast %311 : vector<64xf32> to vector<64x1xf32>
    %cst_166 = arith.constant 3.200000e+01 : f32
    %313 = vector.broadcast %cst_166 : f32 to vector<64x1xf32>
    %314 = arith.divf %312, %313 : vector<64x1xf32>
    %315 = vector.broadcast %314 : vector<64x1xf32> to vector<64x32xf32>
    %316 = arith.subf %310, %315 : vector<64x32xf32>
    %317 = arith.mulf %316, %316 : vector<64x32xf32>
    %cst_167 = arith.constant dense<0.000000e+00> : vector<64xf32>
    %318 = vector.multi_reduction <add>, %317, %cst_167 [1] : vector<64x32xf32> to vector<64xf32>
    %319 = vector.shape_cast %318 : vector<64xf32> to vector<64x1xf32>
    %cst_168 = arith.constant 3.200000e+01 : f32
    %320 = vector.broadcast %cst_168 : f32 to vector<64x1xf32>
    %321 = arith.divf %319, %320 : vector<64x1xf32>
    %322 = vector.broadcast %314 : vector<64x1xf32> to vector<64x32xf32>
    %323 = arith.subf %310, %322 : vector<64x32xf32>
    %cst_169 = arith.constant 9.99999974E-6 : f32
    %324 = vector.broadcast %cst_169 : f32 to vector<64x1xf32>
    %325 = arith.addf %321, %324 : vector<64x1xf32>
    %326 = math.rsqrt %325 : vector<64x1xf32>
    %327 = vector.broadcast %326 : vector<64x1xf32> to vector<64x32xf32>
    %328 = arith.mulf %323, %327 : vector<64x32xf32>
    %329 = vector.broadcast %9 : vector<1x32xf32> to vector<64x32xf32>
    %330 = arith.mulf %328, %329 : vector<64x32xf32>
    %331 = vector.broadcast %10 : vector<1x32xf32> to vector<64x32xf32>
    %332 = arith.addf %330, %331 : vector<64x32xf32>
    %333 = arith.addf %42, %332 : vector<64x32xf32>
    %334 = vector.shape_cast %333 : vector<64x32xf32> to vector<8x8x32xf32>
    %cst_170 = arith.constant dense<0.000000e+00> : vector<8x32xf32>
    %335 = vector.multi_reduction <add>, %334, %cst_170 [1] : vector<8x8x32xf32> to vector<8x32xf32>
    %cst_171 = arith.constant 8.000000e+00 : f32
    %336 = vector.broadcast %cst_171 : f32 to vector<8x32xf32>
    %337 = arith.divf %335, %336 : vector<8x32xf32>
    %338 = arith.truncf %337 : vector<8x32xf32> to vector<8x32xbf16>
    %c0_172 = arith.constant 0 : index
    %c0_173 = arith.constant 0 : index
    %339 = vector.load %arg7[%c0_172, %c0_173] : memref<32x32xbf16, #tpu.memory_space<vmem>>, vector<32x32xbf16>
    %cst_174 = arith.constant dense<0.000000e+00> : vector<8x32xf32>
    %340 = tpu.matmul %338, %339, %cst_174 {dimension_numbers = #tpu.dot_dimension_numbers<[1], [0], [0], [1], [0, 0, 1, 1], [], []>} : vector<8x32xbf16>, vector<32x32xbf16>, vector<8x32xf32> -> vector<8x32xf32>
    %341 = vector.broadcast %11 : vector<1x32xf32> to vector<8x32xf32>
    %342 = arith.addf %340, %341 : vector<8x32xf32>
    %cst_175 = arith.constant dense<0.000000e+00> : vector<8xf32>
    %343 = vector.multi_reduction <add>, %342, %cst_175 [1] : vector<8x32xf32> to vector<8xf32>
    %344 = vector.shape_cast %343 : vector<8xf32> to vector<8x1xf32>
    %cst_176 = arith.constant 3.200000e+01 : f32
    %345 = vector.broadcast %cst_176 : f32 to vector<8x1xf32>
    %346 = arith.divf %344, %345 : vector<8x1xf32>
    %347 = vector.broadcast %346 : vector<8x1xf32> to vector<8x32xf32>
    %348 = arith.subf %342, %347 : vector<8x32xf32>
    %349 = arith.mulf %348, %348 : vector<8x32xf32>
    %cst_177 = arith.constant dense<0.000000e+00> : vector<8xf32>
    %350 = vector.multi_reduction <add>, %349, %cst_177 [1] : vector<8x32xf32> to vector<8xf32>
    %351 = vector.shape_cast %350 : vector<8xf32> to vector<8x1xf32>
    %cst_178 = arith.constant 3.200000e+01 : f32
    %352 = vector.broadcast %cst_178 : f32 to vector<8x1xf32>
    %353 = arith.divf %351, %352 : vector<8x1xf32>
    %354 = vector.broadcast %346 : vector<8x1xf32> to vector<8x32xf32>
    %355 = arith.subf %342, %354 : vector<8x32xf32>
    %cst_179 = arith.constant 9.99999974E-6 : f32
    %356 = vector.broadcast %cst_179 : f32 to vector<8x1xf32>
    %357 = arith.addf %353, %356 : vector<8x1xf32>
    %358 = math.rsqrt %357 : vector<8x1xf32>
    %359 = vector.broadcast %358 : vector<8x1xf32> to vector<8x32xf32>
    %360 = arith.mulf %355, %359 : vector<8x32xf32>
    %361 = vector.broadcast %12 : vector<1x32xf32> to vector<8x32xf32>
    %362 = arith.mulf %360, %361 : vector<8x32xf32>
    %363 = vector.broadcast %13 : vector<1x32xf32> to vector<8x32xf32>
    %364 = arith.addf %362, %363 : vector<8x32xf32>
    %cst_180 = arith.constant 5.000000e-01 : f32
    %365 = vector.broadcast %cst_180 : f32 to vector<8x32xf32>
    %366 = arith.mulf %365, %364 : vector<8x32xf32>
    %cst_181 = arith.constant 0.707106769 : f32
    %367 = vector.broadcast %cst_181 : f32 to vector<8x32xf32>
    %368 = arith.mulf %364, %367 : vector<8x32xf32>
    %cst_182 = arith.constant 0.000000e+00 : f32
    %369 = vector.broadcast %cst_182 : f32 to vector<8x32xf32>
    %370 = arith.cmpf oge, %368, %369 : vector<8x32xf32>
    %cst_183 = arith.constant 1.000000e+00 : f32
    %cst_184 = arith.constant -1.000000e+00 : f32
    %371 = vector.broadcast %cst_183 : f32 to vector<8x32xf32>
    %372 = vector.broadcast %cst_184 : f32 to vector<8x32xf32>
    %373 = arith.select %370, %371, %372 : vector<8x32xi1>, vector<8x32xf32>
    %374 = math.absf %368 : vector<8x32xf32>
    %cst_185 = arith.constant 0.327591091 : f32
    %375 = vector.broadcast %cst_185 : f32 to vector<8x32xf32>
    %376 = arith.mulf %375, %374 : vector<8x32xf32>
    %cst_186 = arith.constant 1.000000e+00 : f32
    %377 = vector.broadcast %cst_186 : f32 to vector<8x32xf32>
    %378 = arith.addf %377, %376 : vector<8x32xf32>
    %cst_187 = arith.constant 1.000000e+00 : f32
    %379 = vector.broadcast %cst_187 : f32 to vector<8x32xf32>
    %380 = arith.divf %379, %378 : vector<8x32xf32>
    %cst_188 = arith.constant 1.06140542 : f32
    %381 = vector.broadcast %cst_188 : f32 to vector<8x32xf32>
    %382 = arith.mulf %381, %380 : vector<8x32xf32>
    %cst_189 = arith.constant -1.45315206 : f32
    %383 = vector.broadcast %cst_189 : f32 to vector<8x32xf32>
    %384 = arith.addf %382, %383 : vector<8x32xf32>
    %385 = arith.mulf %384, %380 : vector<8x32xf32>
    %cst_190 = arith.constant 1.42141378 : f32
    %386 = vector.broadcast %cst_190 : f32 to vector<8x32xf32>
    %387 = arith.addf %385, %386 : vector<8x32xf32>
    %388 = arith.mulf %387, %380 : vector<8x32xf32>
    %cst_191 = arith.constant -0.284496725 : f32
    %389 = vector.broadcast %cst_191 : f32 to vector<8x32xf32>
    %390 = arith.addf %388, %389 : vector<8x32xf32>
    %391 = arith.mulf %390, %380 : vector<8x32xf32>
    %cst_192 = arith.constant 0.254829586 : f32
    %392 = vector.broadcast %cst_192 : f32 to vector<8x32xf32>
    %393 = arith.addf %391, %392 : vector<8x32xf32>
    %394 = arith.mulf %393, %380 : vector<8x32xf32>
    %cst_193 = arith.constant 0.000000e+00 : f32
    %395 = vector.broadcast %cst_193 : f32 to vector<8x32xf32>
    %396 = arith.subf %395, %374 : vector<8x32xf32>
    %397 = arith.mulf %396, %374 : vector<8x32xf32>
    %398 = math.exp %397 : vector<8x32xf32>
    %399 = arith.mulf %394, %398 : vector<8x32xf32>
    %cst_194 = arith.constant 1.000000e+00 : f32
    %400 = vector.broadcast %cst_194 : f32 to vector<8x32xf32>
    %401 = arith.subf %400, %399 : vector<8x32xf32>
    %402 = arith.mulf %373, %401 : vector<8x32xf32>
    %cst_195 = arith.constant 1.000000e+00 : f32
    %403 = vector.broadcast %cst_195 : f32 to vector<8x32xf32>
    %404 = arith.addf %403, %402 : vector<8x32xf32>
    %405 = arith.mulf %366, %404 : vector<8x32xf32>
    %406 = arith.truncf %405 : vector<8x32xf32> to vector<8x32xbf16>
    %c0_196 = arith.constant 0 : index
    %c0_197 = arith.constant 0 : index
    %407 = vector.load %arg8[%c0_196, %c0_197] : memref<32x128xbf16, #tpu.memory_space<vmem>>, vector<32x128xbf16>
    %cst_198 = arith.constant dense<0.000000e+00> : vector<8x128xf32>
    %408 = tpu.matmul %406, %407, %cst_198 {dimension_numbers = #tpu.dot_dimension_numbers<[1], [0], [0], [1], [0, 0, 1, 1], [], []>} : vector<8x32xbf16>, vector<32x128xbf16>, vector<8x128xf32> -> vector<8x128xf32>
    %c0_199 = arith.constant 0 : index
    %c0_200 = arith.constant 0 : index
    %409 = vector.load %arg11[%c0_199, %c0_200] : memref<1x128xf32, #tpu.memory_space<vmem>>, vector<1x128xf32>
    %410 = vector.broadcast %409 : vector<1x128xf32> to vector<8x128xf32>
    %411 = arith.addf %408, %410 : vector<8x128xf32>
    %cst_201 = arith.constant 0.000000e+00 : f32
    %412 = vector.broadcast %cst_201 : f32 to vector<8x128xf32>
    %413 = arith.subf %412, %411 : vector<8x128xf32>
    %414 = math.exp %413 : vector<8x128xf32>
    %cst_202 = arith.constant 1.000000e+00 : f32
    %415 = vector.broadcast %cst_202 : f32 to vector<8x128xf32>
    %416 = arith.addf %415, %414 : vector<8x128xf32>
    %cst_203 = arith.constant 1.000000e+00 : f32
    %417 = vector.broadcast %cst_203 : f32 to vector<8x128xf32>
    %418 = arith.divf %417, %416 : vector<8x128xf32>
    %c0_204 = arith.constant 0 : index
    %c0_205 = arith.constant 0 : index
    %419 = vector.load %arg12[%c0_204, %c0_205] : memref<8x128xf32, #tpu.memory_space<vmem>>, vector<8x128xf32>
    tpu.vector_store %arg12[%c0_204, %c0_205], %418 {strides = array<i32>} : memref<8x128xf32, #tpu.memory_space<vmem>>, vector<8x128xf32>,
    return
  }
  func.func @transform_0(%arg0: i32) -> (i32, i32, i32) {
    %c0_i32 = arith.constant 0 : i32
    %c0_i32_0 = arith.constant 0 : i32
    %c0_i32_1 = arith.constant 0 : i32
    return %arg0, %c0_i32, %c0_i32_0 : i32, i32, i32
  }
  func.func @transform_1(%arg0: i32) -> (i32, i32, i32) {
    %c0_i32 = arith.constant 0 : i32
    %c0_i32_0 = arith.constant 0 : i32
    %c0_i32_1 = arith.constant 0 : i32
    %c0_i32_2 = arith.constant 0 : i32
    return %c0_i32, %c0_i32_0, %c0_i32_1 : i32, i32, i32
  }
  func.func @transform_2(%arg0: i32) -> (i32, i32, i32) {
    %c0_i32 = arith.constant 0 : i32
    %c0_i32_0 = arith.constant 0 : i32
    %c0_i32_1 = arith.constant 0 : i32
    %c0_i32_2 = arith.constant 0 : i32
    return %c0_i32, %c0_i32_0, %c0_i32_1 : i32, i32, i32
  }
  func.func @transform_3(%arg0: i32) -> (i32, i32, i32) {
    %c0_i32 = arith.constant 0 : i32
    %c0_i32_0 = arith.constant 0 : i32
    %c0_i32_1 = arith.constant 0 : i32
    %c0_i32_2 = arith.constant 0 : i32
    return %c0_i32, %c0_i32_0, %c0_i32_1 : i32, i32, i32
  }
  func.func @transform_4(%arg0: i32) -> (i32, i32) {
    %c0_i32 = arith.constant 0 : i32
    %c0_i32_0 = arith.constant 0 : i32
    %c0_i32_1 = arith.constant 0 : i32
    return %c0_i32, %c0_i32_0 : i32, i32
  }
  func.func @transform_5(%arg0: i32) -> (i32, i32, i32) {
    %c0_i32 = arith.constant 0 : i32
    %c0_i32_0 = arith.constant 0 : i32
    %c0_i32_1 = arith.constant 0 : i32
    %c0_i32_2 = arith.constant 0 : i32
    return %c0_i32, %c0_i32_0, %c0_i32_1 : i32, i32, i32
  }
  func.func @transform_6(%arg0: i32) -> (i32, i32) {
    %c0_i32 = arith.constant 0 : i32
    %c0_i32_0 = arith.constant 0 : i32
    %c0_i32_1 = arith.constant 0 : i32
    return %c0_i32, %c0_i32_0 : i32, i32
  }
  func.func @transform_7(%arg0: i32) -> (i32, i32) {
    %c0_i32 = arith.constant 0 : i32
    %c0_i32_0 = arith.constant 0 : i32
    %c0_i32_1 = arith.constant 0 : i32
    return %c0_i32, %c0_i32_0 : i32, i32
  }
  func.func @transform_8(%arg0: i32) -> (i32, i32) {
    %c0_i32 = arith.constant 0 : i32
    %c0_i32_0 = arith.constant 0 : i32
    %c0_i32_1 = arith.constant 0 : i32
    return %c0_i32, %c0_i32_0 : i32, i32
  }
  func.func @transform_9(%arg0: i32) -> (i32, i32) {
    %c0_i32 = arith.constant 0 : i32
    %c0_i32_0 = arith.constant 0 : i32
    %c0_i32_1 = arith.constant 0 : i32
    return %c0_i32, %c0_i32_0 : i32, i32
  }
  func.func @transform_10(%arg0: i32) -> (i32, i32) {
    %c0_i32 = arith.constant 0 : i32
    %c0_i32_0 = arith.constant 0 : i32
    %c0_i32_1 = arith.constant 0 : i32
    return %c0_i32, %c0_i32_0 : i32, i32
  }
  func.func @transform_11(%arg0: i32) -> (i32, i32) {
    %c0_i32 = arith.constant 0 : i32
    %c0_i32_0 = arith.constant 0 : i32
    return %arg0, %c0_i32 : i32, i32
  }
}

</mosaic_0001>

<llo_original>
// kernel: tpu_custom_call.1
$region0: #{tpu_custom_call.1}
  #allocation0 [shape = 'u32[]', space=smem, size = 0x4, offset = 0x4, fixed_abs, tag = 'smem constant byte address 0x4 - core index']
  #allocation1 [shape = 'u32[144,128]{1,0:T(1,128)}', space=vmem, size = 0x12000, scoped, tag = 'internal scratch']
  %s0 = inlined_call_operand.vmem [shape: f32[8,8,32], index: 0, kind: input, shape index: {}]
  %s1 = inlined_call_operand.vmem [shape: bf16[12,32,8], index: 1, kind: input, shape index: {}]
  %s2 = inlined_call_operand.vmem [shape: f32[12,1,8], index: 2, kind: input, shape index: {}]
  %s3 = inlined_call_operand.vmem [shape: bf16[4,8,32], index: 3, kind: input, shape index: {}]
  %s4 = inlined_call_operand.vmem [shape: bf16[32,32], index: 4, kind: input, shape index: {}]
  %s5 = inlined_call_operand.vmem [shape: bf16[2,32,32], index: 5, kind: input, shape index: {}]
  %s6 = inlined_call_operand.vmem [shape: bf16[32,32], index: 6, kind: input, shape index: {}]
  %s7 = inlined_call_operand.vmem [shape: bf16[32,128], index: 7, kind: input, shape index: {}]
  %s8 = inlined_call_operand.vmem [shape: f32[18,32], index: 8, kind: input, shape index: {}]
  %s9 = inlined_call_operand.vmem [shape: f32[3,32], index: 9, kind: input, shape index: {}]
  %s10 = inlined_call_operand.vmem [shape: f32[1,128], index: 10, kind: input, shape index: {}]
  %s11 = inlined_call_operand.hbm [shape: f32[8,128], index: 11, kind: output, shape index: {}]
  %s12 = sld [smem:[#allocation0]]
  $region54: #{tpu_custom_call.1} parent=0
    _
  %s14 = ssub.s32 1, %s12
  %s15 = scalar_select 0, %s14, %s12
  $region1: #{tpu_custom_call.1} parent=0
    #allocation2 [shape = 'u8[4096]{0}', space=vmem, size = 0x1000, scoped, tag = 'output window, operand 0, single buffered']
    #allocation3 [shape = 's32[1]{0}', space=sflag, size = 0x4, scoped, tag = 'scoped memory for tpu_custom_call.1']
    %16 = vsyncpa [#allocation3], 0
    // Predicated region
    $region2: #{tpu_custom_call.1} parent=1 // pred_check
      _
    $region3: #{tpu_custom_call.1} parent=1 // pred_check_branch
      %18 = sbr.rel (0) target = $region5
    $region4: #{tpu_custom_call.1} parent=1 // pred_region
      _
    $region5: #{tpu_custom_call.1} parent=1 // pred_fallthru
      _
    // Predicated region
    $region6: #{tpu_custom_call.1} parent=1 // pred_check
      _
    $region7: #{tpu_custom_call.1} parent=1 // pred_check_branch
      %20 = sbr.rel (0) target = $region9
    $region8: #{tpu_custom_call.1} parent=1 // pred_region
      _
    $region9: #{tpu_custom_call.1} parent=1 // pred_fallthru
      _
    // Predicated region
    $region10: #{tpu_custom_call.1} parent=1 // pred_check
      _
    $region11: #{tpu_custom_call.1} parent=1 // pred_check_branch
      %22 = sbr.rel (0) target = $region13
    $region12: #{tpu_custom_call.1} parent=1 // pred_region
      _
    $region13: #{tpu_custom_call.1} parent=1 // pred_fallthru
      _
    // Predicated region
    $region14: #{tpu_custom_call.1} parent=1 // pred_check
      _
    $region15: #{tpu_custom_call.1} parent=1 // pred_check_branch
      %24 = sbr.rel (0) target = $region17
    $region16: #{tpu_custom_call.1} parent=1 // pred_region
      _
    $region17: #{tpu_custom_call.1} parent=1 // pred_fallthru
      _
    // Predicated region
    $region18: #{tpu_custom_call.1} parent=1 // pred_check
      _
    $region19: #{tpu_custom_call.1} parent=1 // pred_check_branch
      %26 = sbr.rel (0) target = $region21
    $region20: #{tpu_custom_call.1} parent=1 // pred_region
      _
    $region21: #{tpu_custom_call.1} parent=1 // pred_fallthru
      _
    // Predicated region
    $region22: #{tpu_custom_call.1} parent=1 // pred_check
      _
    $region23: #{tpu_custom_call.1} parent=1 // pred_check_branch
      %28 = sbr.rel (0) target = $region25
    $region24: #{tpu_custom_call.1} parent=1 // pred_region
      _
    $region25: #{tpu_custom_call.1} parent=1 // pred_fallthru
      _
    // Predicated region
    $region26: #{tpu_custom_call.1} parent=1 // pred_check
      _
    $region27: #{tpu_custom_call.1} parent=1 // pred_check_branch
      %30 = sbr.rel (0) target = $region29
    $region28: #{tpu_custom_call.1} parent=1 // pred_region
      _
    $region29: #{tpu_custom_call.1} parent=1 // pred_fallthru
      _
    // Predicated region
    $region30: #{tpu_custom_call.1} parent=1 // pred_check
      _
    $region31: #{tpu_custom_call.1} parent=1 // pred_check_branch
      %32 = sbr.rel (0) target = $region33
    $region32: #{tpu_custom_call.1} parent=1 // pred_region
      _
    $region33: #{tpu_custom_call.1} parent=1 // pred_fallthru
      _
    // Predicated region
    $region34: #{tpu_custom_call.1} parent=1 // pred_check
      _
    $region35: #{tpu_custom_call.1} parent=1 // pred_check_branch
      %34 = sbr.rel (0) target = $region37
    $region36: #{tpu_custom_call.1} parent=1 // pred_region
      _
    $region37: #{tpu_custom_call.1} parent=1 // pred_fallthru
      _
    // Predicated region
    $region38: #{tpu_custom_call.1} parent=1 // pred_check
      _
    $region39: #{tpu_custom_call.1} parent=1 // pred_check_branch
      %36 = sbr.rel (0) target = $region41
    $region40: #{tpu_custom_call.1} parent=1 // pred_region
      _
    $region41: #{tpu_custom_call.1} parent=1 // pred_fallthru
      _
    // Predicated region
    $region42: #{tpu_custom_call.1} parent=1 // pred_check
      _
    $region43: #{tpu_custom_call.1} parent=1 // pred_check_branch
      %38 = sbr.rel (0) target = $region45
    $region44: #{tpu_custom_call.1} parent=1 // pred_region
      _
    $region45: #{tpu_custom_call.1} parent=1 // pred_fallthru
      _
    %v40 = vld [vmem:[%s8] sm:$0xff]
    %v41 = vld [vmem:[%s8 + $0x8] sm:$0x1]
    %v42 = vld [vmem:[%s8 + $0x9] sm:$0x1]
    %v43 = vld [vmem:[%s8 + $0xa] sm:$0x1]
    %v44 = vld [vmem:[%s8 + $0xb] sm:$0x1]
    %v45 = vld [vmem:[%s8 + $0xc] sm:$0x1]
    %v46 = vld [vmem:[%s8 + $0xd] sm:$0x1]
    %v47 = vld [vmem:[%s8 + $0xe] sm:$0x1]
    %v48 = vld [vmem:[%s8 + $0xf] sm:$0x1]
    %v49 = vld [vmem:[%s8 + $0x10] sm:$0x1]
    %v50 = vld [vmem:[%s8 + $0x11] sm:$0x1]
    %v51 = vld [vmem:[%s9] sm:$0x1]
    %v52 = vld [vmem:[%s9 + $0x1] sm:$0x1]
    %v53 = vld [vmem:[%s9 + $0x2] sm:$0x1]
    %v54 = vld [vmem:[%s0] sm:$0xff]
    %v55 = vld [vmem:[%s0 + $0x8] sm:$0xff]
    %v56 = vld [vmem:[%s0 + $0x10] sm:$0xff]
    %v57 = vld [vmem:[%s0 + $0x18] sm:$0xff]
    %v58 = vld [vmem:[%s0 + $0x20] sm:$0xff]
    %v59 = vld [vmem:[%s0 + $0x28] sm:$0xff]
    %v60 = vld [vmem:[%s0 + $0x30] sm:$0xff]
    %v61 = vld [vmem:[%s0 + $0x38] sm:$0xff]
    %v62 = vpack.c.bf16 %v55, %v54
    %v63 = vpack.c.bf16 %v57, %v56
    %v64 = vpack.c.bf16 %v59, %v58
    %v65 = vpack.c.bf16 %v61, %v60
    %v66 = vld [vmem:[%s4] sm:$0xf]
    %v67 = vld [vmem:[%s4 + $0x4] sm:$0xf]
    %v68 = vld [vmem:[%s4 + $0x8] sm:$0xf]
    %v69 = vld [vmem:[%s4 + $0xc] sm:$0xf]
    %v70 = vlaneseq
    %v71 = vshrl.u32 %v70, 7
    %v72 = vsub.s32 0, %v71
    %v73 = vrot.slane %v41, %v72
    %v78 = vunpack.c.l.b16 %v66
    %v79 = vunpack.c.l.b16 %v67
    %v80 = vunpack.c.l.b16 %v68
    %v81 = vunpack.c.l.b16 %v69
    %v82 = vpack.c.b16 %v79, %v78
    %v83 = vpack.c.b16 %v81, %v80
    %vm86 = vcmask 261120
    %v88 = vsel %vm86, %v62, 0
    %v91 = vsel %vm86, %v63, 0
    %v94 = vsel %vm86, %v64, 0
    %v97 = vsel %vm86, %v65, 0
    %99 = vmatprep.subr.bf16.mxu0 0
    %100 = vmatpush1.bf16.msra.mxu0 %v82
    %101 = vmatprep.subr.bf16.mxu0 0
    %102 = vmatpush1.bf16.msra.mxu0 %v83
    %103 = vmatprep.subr.bf16.mxu0 0
    %104 = vmatpush1.bf16.msra.mxu0 0
    %105 = vmatprep.subr.bf16.mxu0 0
    %106 = vmatpush1.bf16.msra.mxu0 0
    %107 = vmatprep.subr.bf16.mxu0 0
    %108 = vmatpush1.bf16.msra.mxu0 0
    %109 = vmatprep.subr.bf16.mxu0 0
    %110 = vmatpush1.bf16.msra.mxu0 0
    %111 = vmatprep.subr.bf16.mxu0 0
    %112 = vmatpush1.bf16.msra.mxu0 0
    %113 = vmatprep.subr.bf16.mxu0 0
    %114 = vmatpush1.bf16.msra.mxu0 0
    %115 = vmatprep.subr.bf16.mxu0 0
    %116 = vmatpush1.bf16.msra.mxu0 0
    %117 = vmatprep.subr.bf16.mxu0 0
    %118 = vmatpush1.bf16.msra.mxu0 0
    %119 = vmatprep.subr.bf16.mxu0 0
    %120 = vmatpush1.bf16.msra.mxu0 0
    %121 = vmatprep.subr.bf16.mxu0 0
    %122 = vmatpush1.bf16.msra.mxu0 0
    %123 = vmatprep.subr.bf16.mxu0 0
    %124 = vmatpush1.bf16.msra.mxu0 0
    %125 = vmatprep.subr.bf16.mxu0 0
    %126 = vmatpush1.bf16.msra.mxu0 0
    %127 = vmatprep.subr.bf16.mxu0 0
    %128 = vmatpush1.bf16.msra.mxu0 0
    %129 = vmatprep.subr.bf16.mxu0 0
    %130 = vmatpush1.bf16.msra.mxu0 0
    %131 = vmatprep.mubr.bf16.mxu0 0
    %132 = vmatmul.mubr.bf16.gmra.mrb[0].mxu0 %v88
    %v133 = vpop.f32.mrb[0].mxu0
    %v134 = vadd.f32 %v73, %v133
    %v135 = vpop.f32.mrb[0].mxu0
    %v136 = vpop.f32.mrb[0].mxu0
    %v137 = vadd.f32 %v73, %v136
    %v138 = vpop.f32.mrb[0].mxu0
    %139 = vmatprep.mubr.bf16.mxu0 0
    %140 = vmatmul.mubr.bf16.gmra.mrb[0].mxu0 %v91
    %v141 = vpop.f32.mrb[0].mxu0
    %v142 = vadd.f32 %v73, %v141
    %v143 = vpop.f32.mrb[0].mxu0
    %v144 = vpop.f32.mrb[0].mxu0
    %v145 = vadd.f32 %v73, %v144
    %v146 = vpop.f32.mrb[0].mxu0
    %147 = vmatprep.mubr.bf16.mxu0 0
    %148 = vmatmul.mubr.bf16.gmra.mrb[0].mxu0 %v94
    %v149 = vpop.f32.mrb[0].mxu0
    %v150 = vadd.f32 %v73, %v149
    %v151 = vpop.f32.mrb[0].mxu0
    %v152 = vpop.f32.mrb[0].mxu0
    %v153 = vadd.f32 %v73, %v152
    %v154 = vpop.f32.mrb[0].mxu0
    %155 = vmatprep.mubr.bf16.mxu0 0
    %156 = vmatmul.mubr.bf16.gmra.mrb[0].mxu0 %v97
    %v157 = vpop.f32.mrb[0].mxu0
    %v158 = vadd.f32 %v73, %v157
    %v159 = vpop.f32.mrb[0].mxu0
    %v160 = vpop.f32.mrb[0].mxu0
    %v161 = vadd.f32 %v73, %v160
    %v162 = vpop.f32.mrb[0].mxu0
    %163 = vdwg.mxu0
    %v164 = vsel %vm86, %v134, 0.0
    %165 = vadd.xlane.f32.xlu0 %v164
    %v166 = vpop.xlane.xlu0 %165
    %v167 = vsel %vm86, %v137, 0.0
    %168 = vadd.xlane.f32.xlu0 %v167
    %v169 = vpop.xlane.xlu0 %168
    %v170 = vsel %vm86, %v142, 0.0
    %171 = vadd.xlane.f32.xlu0 %v170
    %v172 = vpop.xlane.xlu0 %171
    %v173 = vsel %vm86, %v145, 0.0
    %174 = vadd.xlane.f32.xlu0 %v173
    %v175 = vpop.xlane.xlu0 %174
    %v176 = vsel %vm86, %v150, 0.0
    %177 = vadd.xlane.f32.xlu0 %v176
    %v178 = vpop.xlane.xlu0 %177
    %v179 = vsel %vm86, %v153, 0.0
    %180 = vadd.xlane.f32.xlu0 %v179
    %v181 = vpop.xlane.xlu0 %180
    %v182 = vsel %vm86, %v158, 0.0
    %183 = vadd.xlane.f32.xlu0 %v182
    %v184 = vpop.xlane.xlu0 %183
    %v185 = vsel %vm86, %v161, 0.0
    %186 = vadd.xlane.f32.xlu0 %v185
    %v187 = vpop.xlane.xlu0 %186
    %v188 = vrcp.pop 32.0
    %v189 = vmul.f32 %v166, %v188
    %v190 = vmul.f32 %v169, %v188
    %v191 = vmul.f32 %v172, %v188
    %v192 = vmul.f32 %v175, %v188
    %v193 = vmul.f32 %v178, %v188
    %v194 = vmul.f32 %v181, %v188
    %v195 = vmul.f32 %v184, %v188
    %v196 = vmul.f32 %v187, %v188
    %v197 = vsub.f32 %v134, %v189
    %v198 = vsub.f32 %v137, %v190
    %v199 = vsub.f32 %v142, %v191
    %v200 = vsub.f32 %v145, %v192
    %v201 = vsub.f32 %v150, %v193
    %v202 = vsub.f32 %v153, %v194
    %v203 = vsub.f32 %v158, %v195
    %v204 = vsub.f32 %v161, %v196
    %v205 = vmul.f32 %v197, %v197
    %v206 = vmul.f32 %v198, %v198
    %v207 = vmul.f32 %v199, %v199
    %v208 = vmul.f32 %v200, %v200
    %v209 = vmul.f32 %v201, %v201
    %v210 = vmul.f32 %v202, %v202
    %v211 = vmul.f32 %v203, %v203
    %v212 = vmul.f32 %v204, %v204
    %v213 = vsel %vm86, %v205, 0.0
    %214 = vadd.xlane.f32.xlu0 %v213
    %v215 = vpop.xlane.xlu0 %214
    %v216 = vsel %vm86, %v206, 0.0
    %217 = vadd.xlane.f32.xlu0 %v216
    %v218 = vpop.xlane.xlu0 %217
    %v219 = vsel %vm86, %v207, 0.0
    %220 = vadd.xlane.f32.xlu0 %v219
    %v221 = vpop.xlane.xlu0 %220
    %v222 = vsel %vm86, %v208, 0.0
    %223 = vadd.xlane.f32.xlu0 %v222
    %v224 = vpop.xlane.xlu0 %223
    %v225 = vsel %vm86, %v209, 0.0
    %226 = vadd.xlane.f32.xlu0 %v225
    %v227 = vpop.xlane.xlu0 %226
    %v228 = vsel %vm86, %v210, 0.0
    %229 = vadd.xlane.f32.xlu0 %v228
    %v230 = vpop.xlane.xlu0 %229
    %v231 = vsel %vm86, %v211, 0.0
    %232 = vadd.xlane.f32.xlu0 %v231
    %v233 = vpop.xlane.xlu0 %232
    %v234 = vsel %vm86, %v212, 0.0
    %235 = vadd.xlane.f32.xlu0 %v234
    %v236 = vpop.xlane.xlu0 %235
    %v237 = vmul.f32 %v215, %v188
    %v238 = vmul.f32 %v218, %v188
    %v239 = vmul.f32 %v221, %v188
    %v240 = vmul.f32 %v224, %v188
    %v241 = vmul.f32 %v227, %v188
    %v242 = vmul.f32 %v230, %v188
    %v243 = vmul.f32 %v233, %v188
    %v244 = vmul.f32 %v236, %v188
    %v245 = vadd.f32 %v237, 1e-05
    %v246 = vadd.f32 %v238, 1e-05
    %v247 = vadd.f32 %v239, 1e-05
    %v248 = vadd.f32 %v240, 1e-05
    %v249 = vadd.f32 %v241, 1e-05
    %v250 = vadd.f32 %v242, 1e-05
    %v251 = vadd.f32 %v243, 1e-05
    %v252 = vadd.f32 %v244, 1e-05
    %v253 = vrsqrt.pop %v245
    %v254 = vrsqrt.pop %v246
    %v255 = vrsqrt.pop %v247
    %v256 = vrsqrt.pop %v248
    %v257 = vrsqrt.pop %v249
    %v258 = vrsqrt.pop %v250
    %v259 = vrsqrt.pop %v251
    %v260 = vrsqrt.pop %v252
    %v261 = vmul.f32 %v197, %v253
    %v262 = vmul.f32 %v198, %v254
    %v263 = vmul.f32 %v199, %v255
    %v264 = vmul.f32 %v200, %v256
    %v265 = vmul.f32 %v201, %v257
    %v266 = vmul.f32 %v202, %v258
    %v267 = vmul.f32 %v203, %v259
    %v268 = vmul.f32 %v204, %v260
    %v269 = vlaneseq
    %v270 = vshrl.u32 %v269, 7
    %v271 = vsub.s32 0, %v270
    %v272 = vrot.slane %v42, %v271
    %v273 = vmul.f32 %v261, %v272
    %v274 = vmul.f32 %v262, %v272
    %v275 = vmul.f32 %v263, %v272
    %v276 = vmul.f32 %v264, %v272
    %v277 = vmul.f32 %v265, %v272
    %v278 = vmul.f32 %v266, %v272
    %v279 = vmul.f32 %v267, %v272
    %v280 = vmul.f32 %v268, %v272
    %v281 = vlaneseq
    %v282 = vshrl.u32 %v281, 7
    %v283 = vsub.s32 0, %v282
    %v284 = vrot.slane %v43, %v283
    %v285 = vadd.f32 %v273, %v284
    %v286 = vadd.f32 %v274, %v284
    %v287 = vadd.f32 %v275, %v284
    %v288 = vadd.f32 %v276, %v284
    %v289 = vadd.f32 %v277, %v284
    %v290 = vadd.f32 %v278, %v284
    %v291 = vadd.f32 %v279, %v284
    %v292 = vadd.f32 %v280, %v284
    %v293 = vadd.f32 %v285, %v40
    %v294 = vadd.f32 %v286, %v40
    %v295 = vadd.f32 %v287, %v40
    %v296 = vadd.f32 %v288, %v40
    %v297 = vadd.f32 %v289, %v40
    %v298 = vadd.f32 %v290, %v40
    %v299 = vadd.f32 %v291, %v40
    %v300 = vadd.f32 %v292, %v40
    %v301 = vpack.c.bf16 %v294, %v293
    %v302 = vpack.c.bf16 %v296, %v295
    %v303 = vpack.c.bf16 %v298, %v297
    %v304 = vpack.c.bf16 %v300, %v299
    %v305 = vld [vmem:[%s1] sm:$0xf]
    %v306 = vld [vmem:[%s1 + $0x4] sm:$0xf]
    %v307 = vld [vmem:[%s1 + $0x8] sm:$0xf]
    %v308 = vld [vmem:[%s1 + $0xc] sm:$0xf]
    %v309 = vld [vmem:[%s2] sm:$0x1]
    %v311 = vlaneseq
    %v312 = vshrl.u32 %v311, 7
    %v313 = vsub.s32 0, %v312
    %v314 = vrot.slane %v309, %v313
    %v320 = vunpack.c.l.b16 %v305
    %v321 = vunpack.c.l.b16 %v306
    %v322 = vunpack.c.l.b16 %v307
    %v323 = vunpack.c.l.b16 %v308
    %v324 = vpack.c.b16 %v321, %v320
    %v325 = vpack.c.b16 %v323, %v322
    %v329 = vsel %vm86, %v301, 0
    %v332 = vsel %vm86, %v302, 0
    %v335 = vsel %vm86, %v303, 0
    %v338 = vsel %vm86, %v304, 0
    %340 = vmatprep.subr.bf16.mxu0 0
    %341 = vmatpush1.bf16.msra.mxu0 %v324
    %342 = vmatprep.subr.bf16.mxu0 0
    %343 = vmatpush1.bf16.msra.mxu0 %v325
    %344 = vmatprep.subr.bf16.mxu0 0
    %345 = vmatpush1.bf16.msra.mxu0 0
    %346 = vmatprep.subr.bf16.mxu0 0
    %347 = vmatpush1.bf16.msra.mxu0 0
    %348 = vmatprep.subr.bf16.mxu0 0
    %349 = vmatpush1.bf16.msra.mxu0 0
    %350 = vmatprep.subr.bf16.mxu0 0
    %351 = vmatpush1.bf16.msra.mxu0 0
    %352 = vmatprep.subr.bf16.mxu0 0
    %353 = vmatpush1.bf16.msra.mxu0 0
    %354 = vmatprep.subr.bf16.mxu0 0
    %355 = vmatpush1.bf16.msra.mxu0 0
    %356 = vmatprep.subr.bf16.mxu0 0
    %357 = vmatpush1.bf16.msra.mxu0 0
    %358 = vmatprep.subr.bf16.mxu0 0
    %359 = vmatpush1.bf16.msra.mxu0 0
    %360 = vmatprep.subr.bf16.mxu0 0
    %361 = vmatpush1.bf16.msra.mxu0 0
    %362 = vmatprep.subr.bf16.mxu0 0
    %363 = vmatpush1.bf16.msra.mxu0 0
    %364 = vmatprep.subr.bf16.mxu0 0
    %365 = vmatpush1.bf16.msra.mxu0 0
    %366 = vmatprep.subr.bf16.mxu0 0
    %367 = vmatpush1.bf16.msra.mxu0 0
    %368 = vmatprep.subr.bf16.mxu0 0
    %369 = vmatpush1.bf16.msra.mxu0 0
    %370 = vmatprep.subr.bf16.mxu0 0
    %371 = vmatpush1.bf16.msra.mxu0 0
    %372 = vmatprep.mubr.bf16.mxu0 0
    %373 = vmatmul.mubr.bf16.gmra.mrb[0].mxu0 %v329
    %v374 = vpop.f32.mrb[0].mxu0
    %v375 = vadd.f32 %v314, %v374
    %v376 = vpop.f32.mrb[0].mxu0
    %v377 = vpop.f32.mrb[0].mxu0
    %v378 = vadd.f32 %v314, %v377
    %v379 = vpop.f32.mrb[0].mxu0
    %380 = vmatprep.mubr.bf16.mxu0 0
    %381 = vmatmul.mubr.bf16.gmra.mrb[0].mxu0 %v332
    %v382 = vpop.f32.mrb[0].mxu0
    %v383 = vadd.f32 %v314, %v382
    %v384 = vpop.f32.mrb[0].mxu0
    %v385 = vpop.f32.mrb[0].mxu0
    %v386 = vadd.f32 %v314, %v385
    %v387 = vpop.f32.mrb[0].mxu0
    %388 = vmatprep.mubr.bf16.mxu0 0
    %389 = vmatmul.mubr.bf16.gmra.mrb[0].mxu0 %v335
    %v390 = vpop.f32.mrb[0].mxu0
    %v391 = vadd.f32 %v314, %v390
    %v392 = vpop.f32.mrb[0].mxu0
    %v393 = vpop.f32.mrb[0].mxu0
    %v394 = vadd.f32 %v314, %v393
    %v395 = vpop.f32.mrb[0].mxu0
    %396 = vmatprep.mubr.bf16.mxu0 0
    %397 = vmatmul.mubr.bf16.gmra.mrb[0].mxu0 %v338
    %v398 = vpop.f32.mrb[0].mxu0
    %v399 = vadd.f32 %v314, %v398
    %v400 = vpop.f32.mrb[0].mxu0
    %v401 = vpop.f32.mrb[0].mxu0
    %v402 = vadd.f32 %v314, %v401
    %v403 = vpop.f32.mrb[0].mxu0
    %404 = vdwg.mxu0
    %s405 = scalar_lea.vmem %s1, 64
    %v406 = vld [vmem:[%s405] sm:$0xf]
    %v407 = vld [vmem:[%s405 + $0x4] sm:$0xf]
    %v408 = vld [vmem:[%s405 + $0x8] sm:$0xf]
    %v409 = vld [vmem:[%s405 + $0xc] sm:$0xf]
    %s410 = scalar_lea.vmem %s2, 4
    %v411 = vld [vmem:[%s410] sm:$0x1]
    %v413 = vlaneseq
    %v414 = vshrl.u32 %v413, 7
    %v415 = vsub.s32 0, %v414
    %v416 = vrot.slane %v411, %v415
    %v422 = vunpack.c.l.b16 %v406
    %v423 = vunpack.c.l.b16 %v407
    %v424 = vunpack.c.l.b16 %v408
    %v425 = vunpack.c.l.b16 %v409
    %v426 = vpack.c.b16 %v423, %v422
    %v427 = vpack.c.b16 %v425, %v424
    %430 = vmatprep.subr.bf16.mxu0 0
    %431 = vmatpush1.bf16.msra.mxu0 %v426
    %432 = vmatprep.subr.bf16.mxu0 0
    %433 = vmatpush1.bf16.msra.mxu0 %v427
    %434 = vmatprep.subr.bf16.mxu0 0
    %435 = vmatpush1.bf16.msra.mxu0 0
    %436 = vmatprep.subr.bf16.mxu0 0
    %437 = vmatpush1.bf16.msra.mxu0 0
    %438 = vmatprep.subr.bf16.mxu0 0
    %439 = vmatpush1.bf16.msra.mxu0 0
    %440 = vmatprep.subr.bf16.mxu0 0
    %441 = vmatpush1.bf16.msra.mxu0 0
    %442 = vmatprep.subr.bf16.mxu0 0
    %443 = vmatpush1.bf16.msra.mxu0 0
    %444 = vmatprep.subr.bf16.mxu0 0
    %445 = vmatpush1.bf16.msra.mxu0 0
    %446 = vmatprep.subr.bf16.mxu0 0
    %447 = vmatpush1.bf16.msra.mxu0 0
    %448 = vmatprep.subr.bf16.mxu0 0
    %449 = vmatpush1.bf16.msra.mxu0 0
    %450 = vmatprep.subr.bf16.mxu0 0
    %451 = vmatpush1.bf16.msra.mxu0 0
    %452 = vmatprep.subr.bf16.mxu0 0
    %453 = vmatpush1.bf16.msra.mxu0 0
    %454 = vmatprep.subr.bf16.mxu0 0
    %455 = vmatpush1.bf16.msra.mxu0 0
    %456 = vmatprep.subr.bf16.mxu0 0
    %457 = vmatpush1.bf16.msra.mxu0 0
    %458 = vmatprep.subr.bf16.mxu0 0
    %459 = vmatpush1.bf16.msra.mxu0 0
    %460 = vmatprep.subr.bf16.mxu0 0
    %461 = vmatpush1.bf16.msra.mxu0 0
    %462 = vmatprep.mubr.bf16.mxu0 0
    %463 = vmatmul.mubr.bf16.gmra.mrb[0].mxu0 %v329
    %v464 = vpop.f32.mrb[0].mxu0
    %v465 = vadd.f32 %v416, %v464
    %v466 = vpop.f32.mrb[0].mxu0
    %v467 = vpop.f32.mrb[0].mxu0
    %v468 = vadd.f32 %v416, %v467
    %v469 = vpop.f32.mrb[0].mxu0
    %470 = vmatprep.mubr.bf16.mxu0 0
    %471 = vmatmul.mubr.bf16.gmra.mrb[0].mxu0 %v332
    %v472 = vpop.f32.mrb[0].mxu0
    %v473 = vadd.f32 %v416, %v472
    %v474 = vpop.f32.mrb[0].mxu0
    %v475 = vpop.f32.mrb[0].mxu0
    %v476 = vadd.f32 %v416, %v475
    %v477 = vpop.f32.mrb[0].mxu0
    %478 = vmatprep.mubr.bf16.mxu0 0
    %479 = vmatmul.mubr.bf16.gmra.mrb[0].mxu0 %v335
    %v480 = vpop.f32.mrb[0].mxu0
    %v481 = vadd.f32 %v416, %v480
    %v482 = vpop.f32.mrb[0].mxu0
    %v483 = vpop.f32.mrb[0].mxu0
    %v484 = vadd.f32 %v416, %v483
    %v485 = vpop.f32.mrb[0].mxu0
    %486 = vmatprep.mubr.bf16.mxu0 0
    %487 = vmatmul.mubr.bf16.gmra.mrb[0].mxu0 %v338
    %v488 = vpop.f32.mrb[0].mxu0
    %v489 = vadd.f32 %v416, %v488
    %v490 = vpop.f32.mrb[0].mxu0
    %v491 = vpop.f32.mrb[0].mxu0
    %v492 = vadd.f32 %v416, %v491
    %v493 = vpop.f32.mrb[0].mxu0
    %494 = vdwg.mxu0
    %s495 = scalar_lea.vmem %s1, 128
    %v496 = vld [vmem:[%s495] sm:$0xf]
    %v497 = vld [vmem:[%s495 + $0x4] sm:$0xf]
    %v498 = vld [vmem:[%s495 + $0x8] sm:$0xf]
    %v499 = vld [vmem:[%s495 + $0xc] sm:$0xf]
    %s500 = scalar_lea.vmem %s2, 8
    %v501 = vld [vmem:[%s500] sm:$0x1]
    %v503 = vlaneseq
    %v504 = vshrl.u32 %v503, 7
    %v505 = vsub.s32 0, %v504
    %v506 = vrot.slane %v501, %v505
    %v512 = vunpack.c.l.b16 %v496
    %v513 = vunpack.c.l.b16 %v497
    %v514 = vunpack.c.l.b16 %v498
    %v515 = vunpack.c.l.b16 %v499
    %v516 = vpack.c.b16 %v513, %v512
    %v517 = vpack.c.b16 %v515, %v514
    %520 = vmatprep.subr.bf16.mxu0 0
    %521 = vmatpush1.bf16.msra.mxu0 %v516
    %522 = vmatprep.subr.bf16.mxu0 0
    %523 = vmatpush1.bf16.msra.mxu0 %v517
    %524 = vmatprep.subr.bf16.mxu0 0
    %525 = vmatpush1.bf16.msra.mxu0 0
    %526 = vmatprep.subr.bf16.mxu0 0
    %527 = vmatpush1.bf16.msra.mxu0 0
    %528 = vmatprep.subr.bf16.mxu0 0
    %529 = vmatpush1.bf16.msra.mxu0 0
    %530 = vmatprep.subr.bf16.mxu0 0
    %531 = vmatpush1.bf16.msra.mxu0 0
    %532 = vmatprep.subr.bf16.mxu0 0
    %533 = vmatpush1.bf16.msra.mxu0 0
    %534 = vmatprep.subr.bf16.mxu0 0
    %535 = vmatpush1.bf16.msra.mxu0 0
    %536 = vmatprep.subr.bf16.mxu0 0
    %537 = vmatpush1.bf16.msra.mxu0 0
    %538 = vmatprep.subr.bf16.mxu0 0
    %539 = vmatpush1.bf16.msra.mxu0 0
    %540 = vmatprep.subr.bf16.mxu0 0
    %541 = vmatpush1.bf16.msra.mxu0 0
    %542 = vmatprep.subr.bf16.mxu0 0
    %543 = vmatpush1.bf16.msra.mxu0 0
    %544 = vmatprep.subr.bf16.mxu0 0
    %545 = vmatpush1.bf16.msra.mxu0 0
    %546 = vmatprep.subr.bf16.mxu0 0
    %547 = vmatpush1.bf16.msra.mxu0 0
    %548 = vmatprep.subr.bf16.mxu0 0
    %549 = vmatpush1.bf16.msra.mxu0 0
    %550 = vmatprep.subr.bf16.mxu0 0
    %551 = vmatpush1.bf16.msra.mxu0 0
    %552 = vmatprep.mubr.bf16.mxu0 0
    %553 = vmatmul.mubr.bf16.gmra.mrb[0].mxu0 %v329
    %v554 = vpop.f32.mrb[0].mxu0
    %v555 = vadd.f32 %v506, %v554
    %v556 = vpop.f32.mrb[0].mxu0
    %v557 = vpop.f32.mrb[0].mxu0
    %v558 = vadd.f32 %v506, %v557
    %v559 = vpop.f32.mrb[0].mxu0
    %560 = vmatprep.mubr.bf16.mxu0 0
    %561 = vmatmul.mubr.bf16.gmra.mrb[0].mxu0 %v332
    %v562 = vpop.f32.mrb[0].mxu0
    %v563 = vadd.f32 %v506, %v562
    %v564 = vpop.f32.mrb[0].mxu0
    %v565 = vpop.f32.mrb[0].mxu0
    %v566 = vadd.f32 %v506, %v565
    %v567 = vpop.f32.mrb[0].mxu0
    %568 = vmatprep.mubr.bf16.mxu0 0
    %569 = vmatmul.mubr.bf16.gmra.mrb[0].mxu0 %v335
    %v570 = vpop.f32.mrb[0].mxu0
    %v571 = vadd.f32 %v506, %v570
    %v572 = vpop.f32.mrb[0].mxu0
    %v573 = vpop.f32.mrb[0].mxu0
    %v574 = vadd.f32 %v506, %v573
    %v575 = vpop.f32.mrb[0].mxu0
    %576 = vmatprep.mubr.bf16.mxu0 0
    %577 = vmatmul.mubr.bf16.gmra.mrb[0].mxu0 %v338
    %v578 = vpop.f32.mrb[0].mxu0
    %v579 = vadd.f32 %v506, %v578
    %v580 = vpop.f32.mrb[0].mxu0
    %v581 = vpop.f32.mrb[0].mxu0
    %v582 = vadd.f32 %v506, %v581
    %v583 = vpop.f32.mrb[0].mxu0
    %584 = vdwg.mxu0
    %v585 = vpack.c.bf16 %v375, %v375
    %v586 = vpack.c.bf16 %v378, %v378
    %v587 = vpack.c.bf16 %v383, %v383
    %v588 = vpack.c.bf16 %v386, %v386
    %v589 = vpack.c.bf16 %v391, %v391
    %v590 = vpack.c.bf16 %v394, %v394
    %v591 = vpack.c.bf16 %v399, %v399
    %v592 = vpack.c.bf16 %v402, %v402
    %v593 = vpack.c.bf16 %v465, %v465
    %v594 = vpack.c.bf16 %v468, %v468
    %v595 = vpack.c.bf16 %v473, %v473
    %v596 = vpack.c.bf16 %v476, %v476
    %v597 = vpack.c.bf16 %v481, %v481
    %v598 = vpack.c.bf16 %v484, %v484
    %v599 = vpack.c.bf16 %v489, %v489
    %v600 = vpack.c.bf16 %v492, %v492
    %v601 = vpack.c.bf16 %v555, %v555
    %v602 = vpack.c.bf16 %v558, %v558
    %v603 = vpack.c.bf16 %v563, %v563
    %v604 = vpack.c.bf16 %v566, %v566
    %v605 = vpack.c.bf16 %v571, %v571
    %v606 = vpack.c.bf16 %v574, %v574
    %v607 = vpack.c.bf16 %v579, %v579
    %v608 = vpack.c.bf16 %v582, %v582
    %vm609 = vcmask 64512
    %v611 = vsel %vm609, %v585, 0
    %v614 = vsel %vm609, %v593, 0
    %616 = vmatprep.subr.bf16.mxu0 0
    %617 = vmatpush1.bf16.xpose.msra.mxu0 %v614
    %618 = vmatprep.subr.bf16.mxu0 0
    %619 = vmatpush1.bf16.xpose.msra.mxu0 0
    %620 = vmatprep.subr.bf16.mxu0 0
    %621 = vmatpush1.bf16.xpose.msra.mxu0 0
    %622 = vmatprep.subr.bf16.mxu0 0
    %623 = vmatpush1.bf16.xpose.msra.mxu0 0
    %624 = vmatprep.subr.bf16.mxu0 0
    %625 = vmatpush1.bf16.xpose.msra.mxu0 0
    %626 = vmatprep.subr.bf16.mxu0 0
    %627 = vmatpush1.bf16.xpose.msra.mxu0 0
    %628 = vmatprep.subr.bf16.mxu0 0
    %629 = vmatpush1.bf16.xpose.msra.mxu0 0
    %630 = vmatprep.subr.bf16.mxu0 0
    %631 = vmatpush1.bf16.xpose.msra.mxu0 0
    %632 = vmatprep.subr.bf16.mxu0 0
    %633 = vmatpush1.bf16.xpose.msra.mxu0 0
    %634 = vmatprep.subr.bf16.mxu0 0
    %635 = vmatpush1.bf16.xpose.msra.mxu0 0
    %636 = vmatprep.subr.bf16.mxu0 0
    %637 = vmatpush1.bf16.xpose.msra.mxu0 0
    %638 = vmatprep.subr.bf16.mxu0 0
    %639 = vmatpush1.bf16.xpose.msra.mxu0 0
    %640 = vmatprep.subr.bf16.mxu0 0
    %641 = vmatpush1.bf16.xpose.msra.mxu0 0
    %642 = vmatprep.subr.bf16.mxu0 0
    %643 = vmatpush1.bf16.xpose.msra.mxu0 0
    %644 = vmatprep.subr.bf16.mxu0 0
    %645 = vmatpush1.bf16.xpose.msra.mxu0 0
    %646 = vmatprep.subr.bf16.mxu0 0
    %647 = vmatpush1.bf16.xpose.msra.mxu0 0
    %648 = vmatprep.mubr.bf16.mxu0 0
    %649 = vmatmul.mubr.bf16.gmra.mrb[0].mxu0 %v611
    %v650 = vpop.f32.mrb[0].mxu0
    %v651 = vadd.f32 0.0, %v650
    %v652 = vpop.f32.mrb[0].mxu0
    %v653 = vpop.f32.mrb[0].mxu0
    %v654 = vpop.f32.mrb[0].mxu0
    %655 = vdwg.mxu0
    %v657 = vsel %vm609, %v586, 0
    %v660 = vsel %vm609, %v594, 0
    %662 = vmatprep.subr.bf16.mxu0 0
    %663 = vmatpush1.bf16.xpose.msra.mxu0 %v660
    %664 = vmatprep.subr.bf16.mxu0 0
    %665 = vmatpush1.bf16.xpose.msra.mxu0 0
    %666 = vmatprep.subr.bf16.mxu0 0
    %667 = vmatpush1.bf16.xpose.msra.mxu0 0
    %668 = vmatprep.subr.bf16.mxu0 0
    %669 = vmatpush1.bf16.xpose.msra.mxu0 0
    %670 = vmatprep.subr.bf16.mxu0 0
    %671 = vmatpush1.bf16.xpose.msra.mxu0 0
    %672 = vmatprep.subr.bf16.mxu0 0
    %673 = vmatpush1.bf16.xpose.msra.mxu0 0
    %674 = vmatprep.subr.bf16.mxu0 0
    %675 = vmatpush1.bf16.xpose.msra.mxu0 0
    %676 = vmatprep.subr.bf16.mxu0 0
    %677 = vmatpush1.bf16.xpose.msra.mxu0 0
    %678 = vmatprep.subr.bf16.mxu0 0
    %679 = vmatpush1.bf16.xpose.msra.mxu0 0
    %680 = vmatprep.subr.bf16.mxu0 0
    %681 = vmatpush1.bf16.xpose.msra.mxu0 0
    %682 = vmatprep.subr.bf16.mxu0 0
    %683 = vmatpush1.bf16.xpose.msra.mxu0 0
    %684 = vmatprep.subr.bf16.mxu0 0
    %685 = vmatpush1.bf16.xpose.msra.mxu0 0
    %686 = vmatprep.subr.bf16.mxu0 0
    %687 = vmatpush1.bf16.xpose.msra.mxu0 0
    %688 = vmatprep.subr.bf16.mxu0 0
    %689 = vmatpush1.bf16.xpose.msra.mxu0 0
    %690 = vmatprep.subr.bf16.mxu0 0
    %691 = vmatpush1.bf16.xpose.msra.mxu0 0
    %692 = vmatprep.subr.bf16.mxu0 0
    %693 = vmatpush1.bf16.xpose.msra.mxu0 0
    %694 = vmatprep.mubr.bf16.mxu0 0
    %695 = vmatmul.mubr.bf16.gmra.mrb[0].mxu0 %v657
    %v696 = vpop.f32.mrb[0].mxu0
    %v697 = vadd.f32 0.0, %v696
    %v698 = vpop.f32.mrb[0].mxu0
    %v699 = vpop.f32.mrb[0].mxu0
    %v700 = vpop.f32.mrb[0].mxu0
    %701 = vdwg.mxu0
    %v703 = vsel %vm609, %v587, 0
    %v706 = vsel %vm609, %v595, 0
    %708 = vmatprep.subr.bf16.mxu0 0
    %709 = vmatpush1.bf16.xpose.msra.mxu0 %v706
    %710 = vmatprep.subr.bf16.mxu0 0
    %711 = vmatpush1.bf16.xpose.msra.mxu0 0
    %712 = vmatprep.subr.bf16.mxu0 0
    %713 = vmatpush1.bf16.xpose.msra.mxu0 0
    %714 = vmatprep.subr.bf16.mxu0 0
    %715 = vmatpush1.bf16.xpose.msra.mxu0 0
    %716 = vmatprep.subr.bf16.mxu0 0
    %717 = vmatpush1.bf16.xpose.msra.mxu0 0
    %718 = vmatprep.subr.bf16.mxu0 0
    %719 = vmatpush1.bf16.xpose.msra.mxu0 0
    %720 = vmatprep.subr.bf16.mxu0 0
    %721 = vmatpush1.bf16.xpose.msra.mxu0 0
    %722 = vmatprep.subr.bf16.mxu0 0
    %723 = vmatpush1.bf16.xpose.msra.mxu0 0
    %724 = vmatprep.subr.bf16.mxu0 0
    %725 = vmatpush1.bf16.xpose.msra.mxu0 0
    %726 = vmatprep.subr.bf16.mxu0 0
    %727 = vmatpush1.bf16.xpose.msra.mxu0 0
    %728 = vmatprep.subr.bf16.mxu0 0
    %729 = vmatpush1.bf16.xpose.msra.mxu0 0
    %730 = vmatprep.subr.bf16.mxu0 0
    %731 = vmatpush1.bf16.xpose.msra.mxu0 0
    %732 = vmatprep.subr.bf16.mxu0 0
    %733 = vmatpush1.bf16.xpose.msra.mxu0 0
    %734 = vmatprep.subr.bf16.mxu0 0
    %735 = vmatpush1.bf16.xpose.msra.mxu0 0
    %736 = vmatprep.subr.bf16.mxu0 0
    %737 = vmatpush1.bf16.xpose.msra.mxu0 0
    %738 = vmatprep.subr.bf16.mxu0 0
    %739 = vmatpush1.bf16.xpose.msra.mxu0 0
    %740 = vmatprep.mubr.bf16.mxu0 0
    %741 = vmatmul.mubr.bf16.gmra.mrb[0].mxu0 %v703
    %v742 = vpop.f32.mrb[0].mxu0
    %v743 = vadd.f32 0.0, %v742
    %v744 = vpop.f32.mrb[0].mxu0
    %v745 = vpop.f32.mrb[0].mxu0
    %v746 = vpop.f32.mrb[0].mxu0
    %747 = vdwg.mxu0
    %v749 = vsel %vm609, %v588, 0
    %v752 = vsel %vm609, %v596, 0
    %754 = vmatprep.subr.bf16.mxu0 0
    %755 = vmatpush1.bf16.xpose.msra.mxu0 %v752
    %756 = vmatprep.subr.bf16.mxu0 0
    %757 = vmatpush1.bf16.xpose.msra.mxu0 0
    %758 = vmatprep.subr.bf16.mxu0 0
    %759 = vmatpush1.bf16.xpose.msra.mxu0 0
    %760 = vmatprep.subr.bf16.mxu0 0
    %761 = vmatpush1.bf16.xpose.msra.mxu0 0
    %762 = vmatprep.subr.bf16.mxu0 0
    %763 = vmatpush1.bf16.xpose.msra.mxu0 0
    %764 = vmatprep.subr.bf16.mxu0 0
    %765 = vmatpush1.bf16.xpose.msra.mxu0 0
    %766 = vmatprep.subr.bf16.mxu0 0
    %767 = vmatpush1.bf16.xpose.msra.mxu0 0
    %768 = vmatprep.subr.bf16.mxu0 0
    %769 = vmatpush1.bf16.xpose.msra.mxu0 0
    %770 = vmatprep.subr.bf16.mxu0 0
    %771 = vmatpush1.bf16.xpose.msra.mxu0 0
    %772 = vmatprep.subr.bf16.mxu0 0
    %773 = vmatpush1.bf16.xpose.msra.mxu0 0
    %774 = vmatprep.subr.bf16.mxu0 0
    %775 = vmatpush1.bf16.xpose.msra.mxu0 0
    %776 = vmatprep.subr.bf16.mxu0 0
    %777 = vmatpush1.bf16.xpose.msra.mxu0 0
    %778 = vmatprep.subr.bf16.mxu0 0
    %779 = vmatpush1.bf16.xpose.msra.mxu0 0
    %780 = vmatprep.subr.bf16.mxu0 0
    %781 = vmatpush1.bf16.xpose.msra.mxu0 0
    %782 = vmatprep.subr.bf16.mxu0 0
    %783 = vmatpush1.bf16.xpose.msra.mxu0 0
    %784 = vmatprep.subr.bf16.mxu0 0
    %785 = vmatpush1.bf16.xpose.msra.mxu0 0
    %786 = vmatprep.mubr.bf16.mxu0 0
    %787 = vmatmul.mubr.bf16.gmra.mrb[0].mxu0 %v749
    %v788 = vpop.f32.mrb[0].mxu0
    %v789 = vadd.f32 0.0, %v788
    %v790 = vpop.f32.mrb[0].mxu0
    %v791 = vpop.f32.mrb[0].mxu0
    %v792 = vpop.f32.mrb[0].mxu0
    %793 = vdwg.mxu0
    %v795 = vsel %vm609, %v589, 0
    %v798 = vsel %vm609, %v597, 0
    %800 = vmatprep.subr.bf16.mxu0 0
    %801 = vmatpush1.bf16.xpose.msra.mxu0 %v798
    %802 = vmatprep.subr.bf16.mxu0 0
    %803 = vmatpush1.bf16.xpose.msra.mxu0 0
    %804 = vmatprep.subr.bf16.mxu0 0
    %805 = vmatpush1.bf16.xpose.msra.mxu0 0
    %806 = vmatprep.subr.bf16.mxu0 0
    %807 = vmatpush1.bf16.xpose.msra.mxu0 0
    %808 = vmatprep.subr.bf16.mxu0 0
    %809 = vmatpush1.bf16.xpose.msra.mxu0 0
    %810 = vmatprep.subr.bf16.mxu0 0
    %811 = vmatpush1.bf16.xpose.msra.mxu0 0
    %812 = vmatprep.subr.bf16.mxu0 0
    %813 = vmatpush1.bf16.xpose.msra.mxu0 0
    %814 = vmatprep.subr.bf16.mxu0 0
    %815 = vmatpush1.bf16.xpose.msra.mxu0 0
    %816 = vmatprep.subr.bf16.mxu0 0
    %817 = vmatpush1.bf16.xpose.msra.mxu0 0
    %818 = vmatprep.subr.bf16.mxu0 0
    %819 = vmatpush1.bf16.xpose.msra.mxu0 0
    %820 = vmatprep.subr.bf16.mxu0 0
    %821 = vmatpush1.bf16.xpose.msra.mxu0 0
    %822 = vmatprep.subr.bf16.mxu0 0
    %823 = vmatpush1.bf16.xpose.msra.mxu0 0
    %824 = vmatprep.subr.bf16.mxu0 0
    %825 = vmatpush1.bf16.xpose.msra.mxu0 0
    %826 = vmatprep.subr.bf16.mxu0 0
    %827 = vmatpush1.bf16.xpose.msra.mxu0 0
    %828 = vmatprep.subr.bf16.mxu0 0
    %829 = vmatpush1.bf16.xpose.msra.mxu0 0
    %830 = vmatprep.subr.bf16.mxu0 0
    %831 = vmatpush1.bf16.xpose.msra.mxu0 0
    %832 = vmatprep.mubr.bf16.mxu0 0
    %833 = vmatmul.mubr.bf16.gmra.mrb[0].mxu0 %v795
    %v834 = vpop.f32.mrb[0].mxu0
    %v835 = vadd.f32 0.0, %v834
    %v836 = vpop.f32.mrb[0].mxu0
    %v837 = vpop.f32.mrb[0].mxu0
    %v838 = vpop.f32.mrb[0].mxu0
    %839 = vdwg.mxu0
    %v841 = vsel %vm609, %v590, 0
    %v844 = vsel %vm609, %v598, 0
    %846 = vmatprep.subr.bf16.mxu0 0
    %847 = vmatpush1.bf16.xpose.msra.mxu0 %v844
    %848 = vmatprep.subr.bf16.mxu0 0
    %849 = vmatpush1.bf16.xpose.msra.mxu0 0
    %850 = vmatprep.subr.bf16.mxu0 0
    %851 = vmatpush1.bf16.xpose.msra.mxu0 0
    %852 = vmatprep.subr.bf16.mxu0 0
    %853 = vmatpush1.bf16.xpose.msra.mxu0 0
    %854 = vmatprep.subr.bf16.mxu0 0
    %855 = vmatpush1.bf16.xpose.msra.mxu0 0
    %856 = vmatprep.subr.bf16.mxu0 0
    %857 = vmatpush1.bf16.xpose.msra.mxu0 0
    %858 = vmatprep.subr.bf16.mxu0 0
    %859 = vmatpush1.bf16.xpose.msra.mxu0 0
    %860 = vmatprep.subr.bf16.mxu0 0
    %861 = vmatpush1.bf16.xpose.msra.mxu0 0
    %862 = vmatprep.subr.bf16.mxu0 0
    %863 = vmatpush1.bf16.xpose.msra.mxu0 0
    %864 = vmatprep.subr.bf16.mxu0 0
    %865 = vmatpush1.bf16.xpose.msra.mxu0 0
    %866 = vmatprep.subr.bf16.mxu0 0
    %867 = vmatpush1.bf16.xpose.msra.mxu0 0
    %868 = vmatprep.subr.bf16.mxu0 0
    %869 = vmatpush1.bf16.xpose.msra.mxu0 0
    %870 = vmatprep.subr.bf16.mxu0 0
    %871 = vmatpush1.bf16.xpose.msra.mxu0 0
    %872 = vmatprep.subr.bf16.mxu0 0
    %873 = vmatpush1.bf16.xpose.msra.mxu0 0
    %874 = vmatprep.subr.bf16.mxu0 0
    %875 = vmatpush1.bf16.xpose.msra.mxu0 0
    %876 = vmatprep.subr.bf16.mxu0 0
    %877 = vmatpush1.bf16.xpose.msra.mxu0 0
    %878 = vmatprep.mubr.bf16.mxu0 0
    %879 = vmatmul.mubr.bf16.gmra.mrb[0].mxu0 %v841
    %v880 = vpop.f32.mrb[0].mxu0
    %v881 = vadd.f32 0.0, %v880
    %v882 = vpop.f32.mrb[0].mxu0
    %v883 = vpop.f32.mrb[0].mxu0
    %v884 = vpop.f32.mrb[0].mxu0
    %885 = vdwg.mxu0
    %v887 = vsel %vm609, %v591, 0
    %v890 = vsel %vm609, %v599, 0
    %892 = vmatprep.subr.bf16.mxu0 0
    %893 = vmatpush1.bf16.xpose.msra.mxu0 %v890
    %894 = vmatprep.subr.bf16.mxu0 0
    %895 = vmatpush1.bf16.xpose.msra.mxu0 0
    %896 = vmatprep.subr.bf16.mxu0 0
    %897 = vmatpush1.bf16.xpose.msra.mxu0 0
    %898 = vmatprep.subr.bf16.mxu0 0
    %899 = vmatpush1.bf16.xpose.msra.mxu0 0
    %900 = vmatprep.subr.bf16.mxu0 0
    %901 = vmatpush1.bf16.xpose.msra.mxu0 0
    %902 = vmatprep.subr.bf16.mxu0 0
    %903 = vmatpush1.bf16.xpose.msra.mxu0 0
    %904 = vmatprep.subr.bf16.mxu0 0
    %905 = vmatpush1.bf16.xpose.msra.mxu0 0
    %906 = vmatprep.subr.bf16.mxu0 0
    %907 = vmatpush1.bf16.xpose.msra.mxu0 0
    %908 = vmatprep.subr.bf16.mxu0 0
    %909 = vmatpush1.bf16.xpose.msra.mxu0 0
    %910 = vmatprep.subr.bf16.mxu0 0
    %911 = vmatpush1.bf16.xpose.msra.mxu0 0
    %912 = vmatprep.subr.bf16.mxu0 0
    %913 = vmatpush1.bf16.xpose.msra.mxu0 0
    %914 = vmatprep.subr.bf16.mxu0 0
    %915 = vmatpush1.bf16.xpose.msra.mxu0 0
    %916 = vmatprep.subr.bf16.mxu0 0
    %917 = vmatpush1.bf16.xpose.msra.mxu0 0
    %918 = vmatprep.subr.bf16.mxu0 0
    %919 = vmatpush1.bf16.xpose.msra.mxu0 0
    %920 = vmatprep.subr.bf16.mxu0 0
    %921 = vmatpush1.bf16.xpose.msra.mxu0 0
    %922 = vmatprep.subr.bf16.mxu0 0
    %923 = vmatpush1.bf16.xpose.msra.mxu0 0
    %924 = vmatprep.mubr.bf16.mxu0 0
    %925 = vmatmul.mubr.bf16.gmra.mrb[0].mxu0 %v887
    %v926 = vpop.f32.mrb[0].mxu0
    %v927 = vadd.f32 0.0, %v926
    %v928 = vpop.f32.mrb[0].mxu0
    %v929 = vpop.f32.mrb[0].mxu0
    %v930 = vpop.f32.mrb[0].mxu0
    %931 = vdwg.mxu0
    %v933 = vsel %vm609, %v592, 0
    %v936 = vsel %vm609, %v600, 0
    %938 = vmatprep.subr.bf16.mxu0 0
    %939 = vmatpush1.bf16.xpose.msra.mxu0 %v936
    %940 = vmatprep.subr.bf16.mxu0 0
    %941 = vmatpush1.bf16.xpose.msra.mxu0 0
    %942 = vmatprep.subr.bf16.mxu0 0
    %943 = vmatpush1.bf16.xpose.msra.mxu0 0
    %944 = vmatprep.subr.bf16.mxu0 0
    %945 = vmatpush1.bf16.xpose.msra.mxu0 0
    %946 = vmatprep.subr.bf16.mxu0 0
    %947 = vmatpush1.bf16.xpose.msra.mxu0 0
    %948 = vmatprep.subr.bf16.mxu0 0
    %949 = vmatpush1.bf16.xpose.msra.mxu0 0
    %950 = vmatprep.subr.bf16.mxu0 0
    %951 = vmatpush1.bf16.xpose.msra.mxu0 0
    %952 = vmatprep.subr.bf16.mxu0 0
    %953 = vmatpush1.bf16.xpose.msra.mxu0 0
    %954 = vmatprep.subr.bf16.mxu0 0
    %955 = vmatpush1.bf16.xpose.msra.mxu0 0
    %956 = vmatprep.subr.bf16.mxu0 0
    %957 = vmatpush1.bf16.xpose.msra.mxu0 0
    %958 = vmatprep.subr.bf16.mxu0 0
    %959 = vmatpush1.bf16.xpose.msra.mxu0 0
    %960 = vmatprep.subr.bf16.mxu0 0
    %961 = vmatpush1.bf16.xpose.msra.mxu0 0
    %962 = vmatprep.subr.bf16.mxu0 0
    %963 = vmatpush1.bf16.xpose.msra.mxu0 0
    %964 = vmatprep.subr.bf16.mxu0 0
    %965 = vmatpush1.bf16.xpose.msra.mxu0 0
    %966 = vmatprep.subr.bf16.mxu0 0
    %967 = vmatpush1.bf16.xpose.msra.mxu0 0
    %968 = vmatprep.subr.bf16.mxu0 0
    %969 = vmatpush1.bf16.xpose.msra.mxu0 0
    %970 = vmatprep.mubr.bf16.mxu0 0
    %971 = vmatmul.mubr.bf16.gmra.mrb[0].mxu0 %v933
    %v972 = vpop.f32.mrb[0].mxu0
    %v973 = vadd.f32 0.0, %v972
    %v974 = vpop.f32.mrb[0].mxu0
    %v975 = vpop.f32.mrb[0].mxu0
    %v976 = vpop.f32.mrb[0].mxu0
    %977 = vdwg.mxu0
    %v978 = vsel %vm609, %v651, -inf
    %979 = vmax.xlane.f32.xlu0 %v978
    %v980 = vpop.xlane.xlu0 %979
    %v981 = vsel %vm609, %v697, -inf
    %982 = vmax.xlane.f32.xlu0 %v981
    %v983 = vpop.xlane.xlu0 %982
    %v984 = vsel %vm609, %v743, -inf
    %985 = vmax.xlane.f32.xlu0 %v984
    %v986 = vpop.xlane.xlu0 %985
    %v987 = vsel %vm609, %v789, -inf
    %988 = vmax.xlane.f32.xlu0 %v987
    %v989 = vpop.xlane.xlu0 %988
    %v990 = vsel %vm609, %v835, -inf
    %991 = vmax.xlane.f32.xlu0 %v990
    %v992 = vpop.xlane.xlu0 %991
    %v993 = vsel %vm609, %v881, -inf
    %994 = vmax.xlane.f32.xlu0 %v993
    %v995 = vpop.xlane.xlu0 %994
    %v996 = vsel %vm609, %v927, -inf
    %997 = vmax.xlane.f32.xlu0 %v996
    %v998 = vpop.xlane.xlu0 %997
    %v999 = vsel %vm609, %v973, -inf
    %1000 = vmax.xlane.f32.xlu0 %v999
    %v1001 = vpop.xlane.xlu0 %1000
    %v1002 = vsub.f32 %v651, %v980
    %v1003 = vsub.f32 %v697, %v983
    %v1004 = vsub.f32 %v743, %v986
    %v1005 = vsub.f32 %v789, %v989
    %v1006 = vsub.f32 %v835, %v992
    %v1007 = vsub.f32 %v881, %v995
    %v1008 = vsub.f32 %v927, %v998
    %v1009 = vsub.f32 %v973, %v1001
    %v1010 = vmul.f32 %v1002, 1.442695
    %v1011 = vpow.pop %v1010
    %v1012 = vmul.f32 %v1003, 1.442695
    %v1013 = vpow.pop %v1012
    %v1014 = vmul.f32 %v1004, 1.442695
    %v1015 = vpow.pop %v1014
    %v1016 = vmul.f32 %v1005, 1.442695
    %v1017 = vpow.pop %v1016
    %v1018 = vmul.f32 %v1006, 1.442695
    %v1019 = vpow.pop %v1018
    %v1020 = vmul.f32 %v1007, 1.442695
    %v1021 = vpow.pop %v1020
    %v1022 = vmul.f32 %v1008, 1.442695
    %v1023 = vpow.pop %v1022
    %v1024 = vmul.f32 %v1009, 1.442695
    %v1025 = vpow.pop %v1024
    %v1026 = vsel %vm609, %v1011, 0.0
    %1027 = vadd.xlane.f32.xlu0 %v1026
    %v1028 = vpop.xlane.xlu0 %1027
    %v1029 = vsel %vm609, %v1013, 0.0
    %1030 = vadd.xlane.f32.xlu0 %v1029
    %v1031 = vpop.xlane.xlu0 %1030
    %v1032 = vsel %vm609, %v1015, 0.0
    %1033 = vadd.xlane.f32.xlu0 %v1032
    %v1034 = vpop.xlane.xlu0 %1033
    %v1035 = vsel %vm609, %v1017, 0.0
    %1036 = vadd.xlane.f32.xlu0 %v1035
    %v1037 = vpop.xlane.xlu0 %1036
    %v1038 = vsel %vm609, %v1019, 0.0
    %1039 = vadd.xlane.f32.xlu0 %v1038
    %v1040 = vpop.xlane.xlu0 %1039
    %v1041 = vsel %vm609, %v1021, 0.0
    %1042 = vadd.xlane.f32.xlu0 %v1041
    %v1043 = vpop.xlane.xlu0 %1042
    %v1044 = vsel %vm609, %v1023, 0.0
    %1045 = vadd.xlane.f32.xlu0 %v1044
    %v1046 = vpop.xlane.xlu0 %1045
    %v1047 = vsel %vm609, %v1025, 0.0
    %1048 = vadd.xlane.f32.xlu0 %v1047
    %v1049 = vpop.xlane.xlu0 %1048
    %v1050 = vrcp.pop %v1028
    %v1051 = vrcp.pop %v1031
    %v1052 = vrcp.pop %v1034
    %v1053 = vrcp.pop %v1037
    %v1054 = vrcp.pop %v1040
    %v1055 = vrcp.pop %v1043
    %v1056 = vrcp.pop %v1046
    %v1057 = vrcp.pop %v1049
    %v1058 = vmul.f32 %v1011, %v1050
    %v1059 = vmul.f32 %v1013, %v1051
    %v1060 = vmul.f32 %v1015, %v1052
    %v1061 = vmul.f32 %v1017, %v1053
    %v1062 = vmul.f32 %v1019, %v1054
    %v1063 = vmul.f32 %v1021, %v1055
    %v1064 = vmul.f32 %v1023, %v1056
    %v1065 = vmul.f32 %v1025, %v1057
    %v1066 = vpack.c.bf16 %v1058, %v1058
    %v1067 = vpack.c.bf16 %v1059, %v1059
    %v1068 = vpack.c.bf16 %v1060, %v1060
    %v1069 = vpack.c.bf16 %v1061, %v1061
    %v1070 = vpack.c.bf16 %v1062, %v1062
    %v1071 = vpack.c.bf16 %v1063, %v1063
    %v1072 = vpack.c.bf16 %v1064, %v1064
    %v1073 = vpack.c.bf16 %v1065, %v1065
    %v1075 = vsel %vm609, %v1066, 0
    %vm1077 = vcmask 1043456
    %v1079 = vsel %vm1077, %v601, 0
    %1081 = vmatprep.subr.bf16.mxu0 0
    %1082 = vmatpush1.bf16.msra.mxu0 %v1079
    %1083 = vmatprep.subr.bf16.mxu0 0
    %1084 = vmatpush1.bf16.msra.mxu0 0
    %1085 = vmatprep.subr.bf16.mxu0 0
    %1086 = vmatpush1.bf16.msra.mxu0 0
    %1087 = vmatprep.subr.bf16.mxu0 0
    %1088 = vmatpush1.bf16.msra.mxu0 0
    %1089 = vmatprep.subr.bf16.mxu0 0
    %1090 = vmatpush1.bf16.msra.mxu0 0
    %1091 = vmatprep.subr.bf16.mxu0 0
    %1092 = vmatpush1.bf16.msra.mxu0 0
    %1093 = vmatprep.subr.bf16.mxu0 0
    %1094 = vmatpush1.bf16.msra.mxu0 0
    %1095 = vmatprep.subr.bf16.mxu0 0
    %1096 = vmatpush1.bf16.msra.mxu0 0
    %1097 = vmatprep.subr.bf16.mxu0 0
    %1098 = vmatpush1.bf16.msra.mxu0 0
    %1099 = vmatprep.subr.bf16.mxu0 0
    %1100 = vmatpush1.bf16.msra.mxu0 0
    %1101 = vmatprep.subr.bf16.mxu0 0
    %1102 = vmatpush1.bf16.msra.mxu0 0
    %1103 = vmatprep.subr.bf16.mxu0 0
    %1104 = vmatpush1.bf16.msra.mxu0 0
    %1105 = vmatprep.subr.bf16.mxu0 0
    %1106 = vmatpush1.bf16.msra.mxu0 0
    %1107 = vmatprep.subr.bf16.mxu0 0
    %1108 = vmatpush1.bf16.msra.mxu0 0
    %1109 = vmatprep.subr.bf16.mxu0 0
    %1110 = vmatpush1.bf16.msra.mxu0 0
    %1111 = vmatprep.subr.bf16.mxu0 0
    %1112 = vmatpush1.bf16.msra.mxu0 0
    %1113 = vmatprep.mubr.bf16.mxu0 0
    %1114 = vmatmul.mubr.bf16.gmra.mrb[0].mxu0 %v1075
    %v1115 = vpop.f32.mrb[0].mxu0
    %v1116 = vadd.f32 0.0, %v1115
    %v1117 = vpop.f32.mrb[0].mxu0
    %v1118 = vpop.f32.mrb[0].mxu0
    %v1119 = vpop.f32.mrb[0].mxu0
    %1120 = vdwg.mxu0
    %v1122 = vsel %vm609, %v1067, 0
    %v1125 = vsel %vm1077, %v602, 0
    %1127 = vmatprep.subr.bf16.mxu0 0
    %1128 = vmatpush1.bf16.msra.mxu0 %v1125
    %1129 = vmatprep.subr.bf16.mxu0 0
    %1130 = vmatpush1.bf16.msra.mxu0 0
    %1131 = vmatprep.subr.bf16.mxu0 0
    %1132 = vmatpush1.bf16.msra.mxu0 0
    %1133 = vmatprep.subr.bf16.mxu0 0
    %1134 = vmatpush1.bf16.msra.mxu0 0
    %1135 = vmatprep.subr.bf16.mxu0 0
    %1136 = vmatpush1.bf16.msra.mxu0 0
    %1137 = vmatprep.subr.bf16.mxu0 0
    %1138 = vmatpush1.bf16.msra.mxu0 0
    %1139 = vmatprep.subr.bf16.mxu0 0
    %1140 = vmatpush1.bf16.msra.mxu0 0
    %1141 = vmatprep.subr.bf16.mxu0 0
    %1142 = vmatpush1.bf16.msra.mxu0 0
    %1143 = vmatprep.subr.bf16.mxu0 0
    %1144 = vmatpush1.bf16.msra.mxu0 0
    %1145 = vmatprep.subr.bf16.mxu0 0
    %1146 = vmatpush1.bf16.msra.mxu0 0
    %1147 = vmatprep.subr.bf16.mxu0 0
    %1148 = vmatpush1.bf16.msra.mxu0 0
    %1149 = vmatprep.subr.bf16.mxu0 0
    %1150 = vmatpush1.bf16.msra.mxu0 0
    %1151 = vmatprep.subr.bf16.mxu0 0
    %1152 = vmatpush1.bf16.msra.mxu0 0
    %1153 = vmatprep.subr.bf16.mxu0 0
    %1154 = vmatpush1.bf16.msra.mxu0 0
    %1155 = vmatprep.subr.bf16.mxu0 0
    %1156 = vmatpush1.bf16.msra.mxu0 0
    %1157 = vmatprep.subr.bf16.mxu0 0
    %1158 = vmatpush1.bf16.msra.mxu0 0
    %1159 = vmatprep.mubr.bf16.mxu0 0
    %1160 = vmatmul.mubr.bf16.gmra.mrb[0].mxu0 %v1122
    %v1161 = vpop.f32.mrb[0].mxu0
    %v1162 = vadd.f32 0.0, %v1161
    %v1163 = vpop.f32.mrb[0].mxu0
    %v1164 = vpop.f32.mrb[0].mxu0
    %v1165 = vpop.f32.mrb[0].mxu0
    %1166 = vdwg.mxu0
    %v1168 = vsel %vm609, %v1068, 0
    %v1171 = vsel %vm1077, %v603, 0
    %1173 = vmatprep.subr.bf16.mxu0 0
    %1174 = vmatpush1.bf16.msra.mxu0 %v1171
    %1175 = vmatprep.subr.bf16.mxu0 0
    %1176 = vmatpush1.bf16.msra.mxu0 0
    %1177 = vmatprep.subr.bf16.mxu0 0
    %1178 = vmatpush1.bf16.msra.mxu0 0
    %1179 = vmatprep.subr.bf16.mxu0 0
    %1180 = vmatpush1.bf16.msra.mxu0 0
    %1181 = vmatprep.subr.bf16.mxu0 0
    %1182 = vmatpush1.bf16.msra.mxu0 0
    %1183 = vmatprep.subr.bf16.mxu0 0
    %1184 = vmatpush1.bf16.msra.mxu0 0
    %1185 = vmatprep.subr.bf16.mxu0 0
    %1186 = vmatpush1.bf16.msra.mxu0 0
    %1187 = vmatprep.subr.bf16.mxu0 0
    %1188 = vmatpush1.bf16.msra.mxu0 0
    %1189 = vmatprep.subr.bf16.mxu0 0
    %1190 = vmatpush1.bf16.msra.mxu0 0
    %1191 = vmatprep.subr.bf16.mxu0 0
    %1192 = vmatpush1.bf16.msra.mxu0 0
    %1193 = vmatprep.subr.bf16.mxu0 0
    %1194 = vmatpush1.bf16.msra.mxu0 0
    %1195 = vmatprep.subr.bf16.mxu0 0
    %1196 = vmatpush1.bf16.msra.mxu0 0
    %1197 = vmatprep.subr.bf16.mxu0 0
    %1198 = vmatpush1.bf16.msra.mxu0 0
    %1199 = vmatprep.subr.bf16.mxu0 0
    %1200 = vmatpush1.bf16.msra.mxu0 0
    %1201 = vmatprep.subr.bf16.mxu0 0
    %1202 = vmatpush1.bf16.msra.mxu0 0
    %1203 = vmatprep.subr.bf16.mxu0 0
    %1204 = vmatpush1.bf16.msra.mxu0 0
    %1205 = vmatprep.mubr.bf16.mxu0 0
    %1206 = vmatmul.mubr.bf16.gmra.mrb[0].mxu0 %v1168
    %v1207 = vpop.f32.mrb[0].mxu0
    %v1208 = vadd.f32 0.0, %v1207
    %v1209 = vpop.f32.mrb[0].mxu0
    %v1210 = vpop.f32.mrb[0].mxu0
    %v1211 = vpop.f32.mrb[0].mxu0
    %1212 = vdwg.mxu0
    %v1214 = vsel %vm609, %v1069, 0
    %v1217 = vsel %vm1077, %v604, 0
    %1219 = vmatprep.subr.bf16.mxu0 0
    %1220 = vmatpush1.bf16.msra.mxu0 %v1217
    %1221 = vmatprep.subr.bf16.mxu0 0
    %1222 = vmatpush1.bf16.msra.mxu0 0
    %1223 = vmatprep.subr.bf16.mxu0 0
    %1224 = vmatpush1.bf16.msra.mxu0 0
    %1225 = vmatprep.subr.bf16.mxu0 0
    %1226 = vmatpush1.bf16.msra.mxu0 0
    %1227 = vmatprep.subr.bf16.mxu0 0
    %1228 = vmatpush1.bf16.msra.mxu0 0
    %1229 = vmatprep.subr.bf16.mxu0 0
    %1230 = vmatpush1.bf16.msra.mxu0 0
    %1231 = vmatprep.subr.bf16.mxu0 0
    %1232 = vmatpush1.bf16.msra.mxu0 0
    %1233 = vmatprep.subr.bf16.mxu0 0
    %1234 = vmatpush1.bf16.msra.mxu0 0
    %1235 = vmatprep.subr.bf16.mxu0 0
    %1236 = vmatpush1.bf16.msra.mxu0 0
    %1237 = vmatprep.subr.bf16.mxu0 0
    %1238 = vmatpush1.bf16.msra.mxu0 0
    %1239 = vmatprep.subr.bf16.mxu0 0
    %1240 = vmatpush1.bf16.msra.mxu0 0
    %1241 = vmatprep.subr.bf16.mxu0 0
    %1242 = vmatpush1.bf16.msra.mxu0 0
    %1243 = vmatprep.subr.bf16.mxu0 0
    %1244 = vmatpush1.bf16.msra.mxu0 0
    %1245 = vmatprep.subr.bf16.mxu0 0
    %1246 = vmatpush1.bf16.msra.mxu0 0
    %1247 = vmatprep.subr.bf16.mxu0 0
    %1248 = vmatpush1.bf16.msra.mxu0 0
    %1249 = vmatprep.subr.bf16.mxu0 0
    %1250 = vmatpush1.bf16.msra.mxu0 0
    %1251 = vmatprep.mubr.bf16.mxu0 0
    %1252 = vmatmul.mubr.bf16.gmra.mrb[0].mxu0 %v1214
    %v1253 = vpop.f32.mrb[0].mxu0
    %v1254 = vadd.f32 0.0, %v1253
    %v1255 = vpop.f32.mrb[0].mxu0
    %v1256 = vpop.f32.mrb[0].mxu0
    %v1257 = vpop.f32.mrb[0].mxu0
    %1258 = vdwg.mxu0
    %v1260 = vsel %vm609, %v1070, 0
    %v1263 = vsel %vm1077, %v605, 0
    %1265 = vmatprep.subr.bf16.mxu0 0
    %1266 = vmatpush1.bf16.msra.mxu0 %v1263
    %1267 = vmatprep.subr.bf16.mxu0 0
    %1268 = vmatpush1.bf16.msra.mxu0 0
    %1269 = vmatprep.subr.bf16.mxu0 0
    %1270 = vmatpush1.bf16.msra.mxu0 0
    %1271 = vmatprep.subr.bf16.mxu0 0
    %1272 = vmatpush1.bf16.msra.mxu0 0
    %1273 = vmatprep.subr.bf16.mxu0 0
    %1274 = vmatpush1.bf16.msra.mxu0 0
    %1275 = vmatprep.subr.bf16.mxu0 0
    %1276 = vmatpush1.bf16.msra.mxu0 0
    %1277 = vmatprep.subr.bf16.mxu0 0
    %1278 = vmatpush1.bf16.msra.mxu0 0
    %1279 = vmatprep.subr.bf16.mxu0 0
    %1280 = vmatpush1.bf16.msra.mxu0 0
    %1281 = vmatprep.subr.bf16.mxu0 0
    %1282 = vmatpush1.bf16.msra.mxu0 0
    %1283 = vmatprep.subr.bf16.mxu0 0
    %1284 = vmatpush1.bf16.msra.mxu0 0
    %1285 = vmatprep.subr.bf16.mxu0 0
    %1286 = vmatpush1.bf16.msra.mxu0 0
    %1287 = vmatprep.subr.bf16.mxu0 0
    %1288 = vmatpush1.bf16.msra.mxu0 0
    %1289 = vmatprep.subr.bf16.mxu0 0
    %1290 = vmatpush1.bf16.msra.mxu0 0
    %1291 = vmatprep.subr.bf16.mxu0 0
    %1292 = vmatpush1.bf16.msra.mxu0 0
    %1293 = vmatprep.subr.bf16.mxu0 0
    %1294 = vmatpush1.bf16.msra.mxu0 0
    %1295 = vmatprep.subr.bf16.mxu0 0
    %1296 = vmatpush1.bf16.msra.mxu0 0
    %1297 = vmatprep.mubr.bf16.mxu0 0
    %1298 = vmatmul.mubr.bf16.gmra.mrb[0].mxu0 %v1260
    %v1299 = vpop.f32.mrb[0].mxu0
    %v1300 = vadd.f32 0.0, %v1299
    %v1301 = vpop.f32.mrb[0].mxu0
    %v1302 = vpop.f32.mrb[0].mxu0
    %v1303 = vpop.f32.mrb[0].mxu0
    %1304 = vdwg.mxu0
    %v1306 = vsel %vm609, %v1071, 0
    %v1309 = vsel %vm1077, %v606, 0
    %1311 = vmatprep.subr.bf16.mxu0 0
    %1312 = vmatpush1.bf16.msra.mxu0 %v1309
    %1313 = vmatprep.subr.bf16.mxu0 0
    %1314 = vmatpush1.bf16.msra.mxu0 0
    %1315 = vmatprep.subr.bf16.mxu0 0
    %1316 = vmatpush1.bf16.msra.mxu0 0
    %1317 = vmatprep.subr.bf16.mxu0 0
    %1318 = vmatpush1.bf16.msra.mxu0 0
    %1319 = vmatprep.subr.bf16.mxu0 0
    %1320 = vmatpush1.bf16.msra.mxu0 0
    %1321 = vmatprep.subr.bf16.mxu0 0
    %1322 = vmatpush1.bf16.msra.mxu0 0
    %1323 = vmatprep.subr.bf16.mxu0 0
    %1324 = vmatpush1.bf16.msra.mxu0 0
    %1325 = vmatprep.subr.bf16.mxu0 0
    %1326 = vmatpush1.bf16.msra.mxu0 0
    %1327 = vmatprep.subr.bf16.mxu0 0
    %1328 = vmatpush1.bf16.msra.mxu0 0
    %1329 = vmatprep.subr.bf16.mxu0 0
    %1330 = vmatpush1.bf16.msra.mxu0 0
    %1331 = vmatprep.subr.bf16.mxu0 0
    %1332 = vmatpush1.bf16.msra.mxu0 0
    %1333 = vmatprep.subr.bf16.mxu0 0
    %1334 = vmatpush1.bf16.msra.mxu0 0
    %1335 = vmatprep.subr.bf16.mxu0 0
    %1336 = vmatpush1.bf16.msra.mxu0 0
    %1337 = vmatprep.subr.bf16.mxu0 0
    %1338 = vmatpush1.bf16.msra.mxu0 0
    %1339 = vmatprep.subr.bf16.mxu0 0
    %1340 = vmatpush1.bf16.msra.mxu0 0
    %1341 = vmatprep.subr.bf16.mxu0 0
    %1342 = vmatpush1.bf16.msra.mxu0 0
    %1343 = vmatprep.mubr.bf16.mxu0 0
    %1344 = vmatmul.mubr.bf16.gmra.mrb[0].mxu0 %v1306
    %v1345 = vpop.f32.mrb[0].mxu0
    %v1346 = vadd.f32 0.0, %v1345
    %v1347 = vpop.f32.mrb[0].mxu0
    %v1348 = vpop.f32.mrb[0].mxu0
    %v1349 = vpop.f32.mrb[0].mxu0
    %1350 = vdwg.mxu0
    %v1352 = vsel %vm609, %v1072, 0
    %v1355 = vsel %vm1077, %v607, 0
    %1357 = vmatprep.subr.bf16.mxu0 0
    %1358 = vmatpush1.bf16.msra.mxu0 %v1355
    %1359 = vmatprep.subr.bf16.mxu0 0
    %1360 = vmatpush1.bf16.msra.mxu0 0
    %1361 = vmatprep.subr.bf16.mxu0 0
    %1362 = vmatpush1.bf16.msra.mxu0 0
    %1363 = vmatprep.subr.bf16.mxu0 0
    %1364 = vmatpush1.bf16.msra.mxu0 0
    %1365 = vmatprep.subr.bf16.mxu0 0
    %1366 = vmatpush1.bf16.msra.mxu0 0
    %1367 = vmatprep.subr.bf16.mxu0 0
    %1368 = vmatpush1.bf16.msra.mxu0 0
    %1369 = vmatprep.subr.bf16.mxu0 0
    %1370 = vmatpush1.bf16.msra.mxu0 0
    %1371 = vmatprep.subr.bf16.mxu0 0
    %1372 = vmatpush1.bf16.msra.mxu0 0
    %1373 = vmatprep.subr.bf16.mxu0 0
    %1374 = vmatpush1.bf16.msra.mxu0 0
    %1375 = vmatprep.subr.bf16.mxu0 0
    %1376 = vmatpush1.bf16.msra.mxu0 0
    %1377 = vmatprep.subr.bf16.mxu0 0
    %1378 = vmatpush1.bf16.msra.mxu0 0
    %1379 = vmatprep.subr.bf16.mxu0 0
    %1380 = vmatpush1.bf16.msra.mxu0 0
    %1381 = vmatprep.subr.bf16.mxu0 0
    %1382 = vmatpush1.bf16.msra.mxu0 0
    %1383 = vmatprep.subr.bf16.mxu0 0
    %1384 = vmatpush1.bf16.msra.mxu0 0
    %1385 = vmatprep.subr.bf16.mxu0 0
    %1386 = vmatpush1.bf16.msra.mxu0 0
    %1387 = vmatprep.subr.bf16.mxu0 0
    %1388 = vmatpush1.bf16.msra.mxu0 0
    %1389 = vmatprep.mubr.bf16.mxu0 0
    %1390 = vmatmul.mubr.bf16.gmra.mrb[0].mxu0 %v1352
    %v1391 = vpop.f32.mrb[0].mxu0
    %v1392 = vadd.f32 0.0, %v1391
    %v1393 = vpop.f32.mrb[0].mxu0
    %v1394 = vpop.f32.mrb[0].mxu0
    %v1395 = vpop.f32.mrb[0].mxu0
    %1396 = vdwg.mxu0
    %v1398 = vsel %vm609, %v1073, 0
    %v1401 = vsel %vm1077, %v608, 0
    %1403 = vmatprep.subr.bf16.mxu0 0
    %1404 = vmatpush1.bf16.msra.mxu0 %v1401
    %1405 = vmatprep.subr.bf16.mxu0 0
    %1406 = vmatpush1.bf16.msra.mxu0 0
    %1407 = vmatprep.subr.bf16.mxu0 0
    %1408 = vmatpush1.bf16.msra.mxu0 0
    %1409 = vmatprep.subr.bf16.mxu0 0
    %1410 = vmatpush1.bf16.msra.mxu0 0
    %1411 = vmatprep.subr.bf16.mxu0 0
    %1412 = vmatpush1.bf16.msra.mxu0 0
    %1413 = vmatprep.subr.bf16.mxu0 0
    %1414 = vmatpush1.bf16.msra.mxu0 0
    %1415 = vmatprep.subr.bf16.mxu0 0
    %1416 = vmatpush1.bf16.msra.mxu0 0
    %1417 = vmatprep.subr.bf16.mxu0 0
    %1418 = vmatpush1.bf16.msra.mxu0 0
    %1419 = vmatprep.subr.bf16.mxu0 0
    %1420 = vmatpush1.bf16.msra.mxu0 0
    %1421 = vmatprep.subr.bf16.mxu0 0
    %1422 = vmatpush1.bf16.msra.mxu0 0
    %1423 = vmatprep.subr.bf16.mxu0 0
    %1424 = vmatpush1.bf16.msra.mxu0 0
    %1425 = vmatprep.subr.bf16.mxu0 0
    %1426 = vmatpush1.bf16.msra.mxu0 0
    %1427 = vmatprep.subr.bf16.mxu0 0
    %1428 = vmatpush1.bf16.msra.mxu0 0
    %1429 = vmatprep.subr.bf16.mxu0 0
    %1430 = vmatpush1.bf16.msra.mxu0 0
    %1431 = vmatprep.subr.bf16.mxu0 0
    %1432 = vmatpush1.bf16.msra.mxu0 0
    %1433 = vmatprep.subr.bf16.mxu0 0
    %1434 = vmatpush1.bf16.msra.mxu0 0
    %1435 = vmatprep.mubr.bf16.mxu0 0
    %1436 = vmatmul.mubr.bf16.gmra.mrb[0].mxu0 %v1398
    %v1437 = vpop.f32.mrb[0].mxu0
    %v1438 = vadd.f32 0.0, %v1437
    %v1439 = vpop.f32.mrb[0].mxu0
    %v1440 = vpop.f32.mrb[0].mxu0
    %v1441 = vpop.f32.mrb[0].mxu0
    %1442 = vdwg.mxu0
    %v1443 = vpack.c.bf16 %v1162, %v1116
    %v1444 = vpack.c.bf16 %v1254, %v1208
    %v1445 = vpack.c.bf16 %v1346, %v1300
    %v1446 = vpack.c.bf16 %v1438, %v1392
    %v1447 = vld [vmem:[%s3] sm:$0xf]
    %s1448 = scalar_lea.vmem %s1, 16
    %v1449 = vld [vmem:[%s1448] sm:$0xf]
    %v1450 = vld [vmem:[%s1448 + $0x4] sm:$0xf]
    %v1451 = vld [vmem:[%s1448 + $0x8] sm:$0xf]
    %v1452 = vld [vmem:[%s1448 + $0xc] sm:$0xf]
    %s1453 = scalar_lea.vmem %s2, 1
    %v1454 = vld [vmem:[%s1453] sm:$0x1]
    %v1456 = vlaneseq
    %v1457 = vshrl.u32 %v1456, 7
    %v1458 = vsub.s32 0, %v1457
    %v1459 = vrot.slane %v1454, %v1458
    %v1465 = vunpack.c.l.b16 %v1449
    %v1466 = vunpack.c.l.b16 %v1450
    %v1467 = vunpack.c.l.b16 %v1451
    %v1468 = vunpack.c.l.b16 %v1452
    %v1469 = vpack.c.b16 %v1466, %v1465
    %v1470 = vpack.c.b16 %v1468, %v1467
    %1473 = vmatprep.subr.bf16.mxu0 0
    %1474 = vmatpush1.bf16.msra.mxu0 %v1469
    %1475 = vmatprep.subr.bf16.mxu0 0
    %1476 = vmatpush1.bf16.msra.mxu0 %v1470
    %1477 = vmatprep.subr.bf16.mxu0 0
    %1478 = vmatpush1.bf16.msra.mxu0 0
    %1479 = vmatprep.subr.bf16.mxu0 0
    %1480 = vmatpush1.bf16.msra.mxu0 0
    %1481 = vmatprep.subr.bf16.mxu0 0
    %1482 = vmatpush1.bf16.msra.mxu0 0
    %1483 = vmatprep.subr.bf16.mxu0 0
    %1484 = vmatpush1.bf16.msra.mxu0 0
    %1485 = vmatprep.subr.bf16.mxu0 0
    %1486 = vmatpush1.bf16.msra.mxu0 0
    %1487 = vmatprep.subr.bf16.mxu0 0
    %1488 = vmatpush1.bf16.msra.mxu0 0
    %1489 = vmatprep.subr.bf16.mxu0 0
    %1490 = vmatpush1.bf16.msra.mxu0 0
    %1491 = vmatprep.subr.bf16.mxu0 0
    %1492 = vmatpush1.bf16.msra.mxu0 0
    %1493 = vmatprep.subr.bf16.mxu0 0
    %1494 = vmatpush1.bf16.msra.mxu0 0
    %1495 = vmatprep.subr.bf16.mxu0 0
    %1496 = vmatpush1.bf16.msra.mxu0 0
    %1497 = vmatprep.subr.bf16.mxu0 0
    %1498 = vmatpush1.bf16.msra.mxu0 0
    %1499 = vmatprep.subr.bf16.mxu0 0
    %1500 = vmatpush1.bf16.msra.mxu0 0
    %1501 = vmatprep.subr.bf16.mxu0 0
    %1502 = vmatpush1.bf16.msra.mxu0 0
    %1503 = vmatprep.subr.bf16.mxu0 0
    %1504 = vmatpush1.bf16.msra.mxu0 0
    %1505 = vmatprep.mubr.bf16.mxu0 0
    %1506 = vmatmul.mubr.bf16.gmra.mrb[0].mxu0 %v329
    %v1507 = vpop.f32.mrb[0].mxu0
    %v1508 = vadd.f32 %v1459, %v1507
    %v1509 = vpop.f32.mrb[0].mxu0
    %v1510 = vpop.f32.mrb[0].mxu0
    %v1511 = vadd.f32 %v1459, %v1510
    %v1512 = vpop.f32.mrb[0].mxu0
    %1513 = vmatprep.mubr.bf16.mxu0 0
    %1514 = vmatmul.mubr.bf16.gmra.mrb[0].mxu0 %v332
    %v1515 = vpop.f32.mrb[0].mxu0
    %v1516 = vadd.f32 %v1459, %v1515
    %v1517 = vpop.f32.mrb[0].mxu0
    %v1518 = vpop.f32.mrb[0].mxu0
    %v1519 = vadd.f32 %v1459, %v1518
    %v1520 = vpop.f32.mrb[0].mxu0
    %1521 = vmatprep.mubr.bf16.mxu0 0
    %1522 = vmatmul.mubr.bf16.gmra.mrb[0].mxu0 %v335
    %v1523 = vpop.f32.mrb[0].mxu0
    %v1524 = vadd.f32 %v1459, %v1523
    %v1525 = vpop.f32.mrb[0].mxu0
    %v1526 = vpop.f32.mrb[0].mxu0
    %v1527 = vadd.f32 %v1459, %v1526
    %v1528 = vpop.f32.mrb[0].mxu0
    %1529 = vmatprep.mubr.bf16.mxu0 0
    %1530 = vmatmul.mubr.bf16.gmra.mrb[0].mxu0 %v338
    %v1531 = vpop.f32.mrb[0].mxu0
    %v1532 = vadd.f32 %v1459, %v1531
    %v1533 = vpop.f32.mrb[0].mxu0
    %v1534 = vpop.f32.mrb[0].mxu0
    %v1535 = vadd.f32 %v1459, %v1534
    %v1536 = vpop.f32.mrb[0].mxu0
    %1537 = vdwg.mxu0
    %s1538 = scalar_lea.vmem %s1, 80
    %v1539 = vld [vmem:[%s1538] sm:$0xf]
    %v1540 = vld [vmem:[%s1538 + $0x4] sm:$0xf]
    %v1541 = vld [vmem:[%s1538 + $0x8] sm:$0xf]
    %v1542 = vld [vmem:[%s1538 + $0xc] sm:$0xf]
    %s1543 = scalar_lea.vmem %s2, 5
    %v1544 = vld [vmem:[%s1543] sm:$0x1]
    %v1546 = vlaneseq
    %v1547 = vshrl.u32 %v1546, 7
    %v1548 = vsub.s32 0, %v1547
    %v1549 = vrot.slane %v1544, %v1548
    %v1555 = vunpack.c.l.b16 %v1539
    %v1556 = vunpack.c.l.b16 %v1540
    %v1557 = vunpack.c.l.b16 %v1541
    %v1558 = vunpack.c.l.b16 %v1542
    %v1559 = vpack.c.b16 %v1556, %v1555
    %v1560 = vpack.c.b16 %v1558, %v1557
    %1563 = vmatprep.subr.bf16.mxu0 0
    %1564 = vmatpush1.bf16.msra.mxu0 %v1559
    %1565 = vmatprep.subr.bf16.mxu0 0
    %1566 = vmatpush1.bf16.msra.mxu0 %v1560
    %1567 = vmatprep.subr.bf16.mxu0 0
    %1568 = vmatpush1.bf16.msra.mxu0 0
    %1569 = vmatprep.subr.bf16.mxu0 0
    %1570 = vmatpush1.bf16.msra.mxu0 0
    %1571 = vmatprep.subr.bf16.mxu0 0
    %1572 = vmatpush1.bf16.msra.mxu0 0
    %1573 = vmatprep.subr.bf16.mxu0 0
    %1574 = vmatpush1.bf16.msra.mxu0 0
    %1575 = vmatprep.subr.bf16.mxu0 0
    %1576 = vmatpush1.bf16.msra.mxu0 0
    %1577 = vmatprep.subr.bf16.mxu0 0
    %1578 = vmatpush1.bf16.msra.mxu0 0
    %1579 = vmatprep.subr.bf16.mxu0 0
    %1580 = vmatpush1.bf16.msra.mxu0 0
    %1581 = vmatprep.subr.bf16.mxu0 0
    %1582 = vmatpush1.bf16.msra.mxu0 0
    %1583 = vmatprep.subr.bf16.mxu0 0
    %1584 = vmatpush1.bf16.msra.mxu0 0
    %1585 = vmatprep.subr.bf16.mxu0 0
    %1586 = vmatpush1.bf16.msra.mxu0 0
    %1587 = vmatprep.subr.bf16.mxu0 0
    %1588 = vmatpush1.bf16.msra.mxu0 0
    %1589 = vmatprep.subr.bf16.mxu0 0
    %1590 = vmatpush1.bf16.msra.mxu0 0
    %1591 = vmatprep.subr.bf16.mxu0 0
    %1592 = vmatpush1.bf16.msra.mxu0 0
    %1593 = vmatprep.subr.bf16.mxu0 0
    %1594 = vmatpush1.bf16.msra.mxu0 0
    %1595 = vmatprep.mubr.bf16.mxu0 0
    %1596 = vmatmul.mubr.bf16.gmra.mrb[0].mxu0 %v329
    %v1597 = vpop.f32.mrb[0].mxu0
    %v1598 = vadd.f32 %v1549, %v1597
    %v1599 = vpop.f32.mrb[0].mxu0
    %v1600 = vpop.f32.mrb[0].mxu0
    %v1601 = vadd.f32 %v1549, %v1600
    %v1602 = vpop.f32.mrb[0].mxu0
    %1603 = vmatprep.mubr.bf16.mxu0 0
    %1604 = vmatmul.mubr.bf16.gmra.mrb[0].mxu0 %v332
    %v1605 = vpop.f32.mrb[0].mxu0
    %v1606 = vadd.f32 %v1549, %v1605
    %v1607 = vpop.f32.mrb[0].mxu0
    %v1608 = vpop.f32.mrb[0].mxu0
    %v1609 = vadd.f32 %v1549, %v1608
    %v1610 = vpop.f32.mrb[0].mxu0
    %1611 = vmatprep.mubr.bf16.mxu0 0
    %1612 = vmatmul.mubr.bf16.gmra.mrb[0].mxu0 %v335
    %v1613 = vpop.f32.mrb[0].mxu0
    %v1614 = vadd.f32 %v1549, %v1613
    %v1615 = vpop.f32.mrb[0].mxu0
    %v1616 = vpop.f32.mrb[0].mxu0
    %v1617 = vadd.f32 %v1549, %v1616
    %v1618 = vpop.f32.mrb[0].mxu0
    %1619 = vmatprep.mubr.bf16.mxu0 0
    %1620 = vmatmul.mubr.bf16.gmra.mrb[0].mxu0 %v338
    %v1621 = vpop.f32.mrb[0].mxu0
    %v1622 = vadd.f32 %v1549, %v1621
    %v1623 = vpop.f32.mrb[0].mxu0
    %v1624 = vpop.f32.mrb[0].mxu0
    %v1625 = vadd.f32 %v1549, %v1624
    %v1626 = vpop.f32.mrb[0].mxu0
    %1627 = vdwg.mxu0
    %s1628 = scalar_lea.vmem %s1, 144
    %v1629 = vld [vmem:[%s1628] sm:$0xf]
    %v1630 = vld [vmem:[%s1628 + $0x4] sm:$0xf]
    %v1631 = vld [vmem:[%s1628 + $0x8] sm:$0xf]
    %v1632 = vld [vmem:[%s1628 + $0xc] sm:$0xf]
    %s1633 = scalar_lea.vmem %s2, 9
    %v1634 = vld [vmem:[%s1633] sm:$0x1]
    %v1636 = vlaneseq
    %v1637 = vshrl.u32 %v1636, 7
    %v1638 = vsub.s32 0, %v1637
    %v1639 = vrot.slane %v1634, %v1638
    %v1645 = vunpack.c.l.b16 %v1629
    %v1646 = vunpack.c.l.b16 %v1630
    %v1647 = vunpack.c.l.b16 %v1631
    %v1648 = vunpack.c.l.b16 %v1632
    %v1649 = vpack.c.b16 %v1646, %v1645
    %v1650 = vpack.c.b16 %v1648, %v1647
    %1653 = vmatprep.subr.bf16.mxu0 0
    %1654 = vmatpush1.bf16.msra.mxu0 %v1649
    %1655 = vmatprep.subr.bf16.mxu0 0
    %1656 = vmatpush1.bf16.msra.mxu0 %v1650
    %1657 = vmatprep.subr.bf16.mxu0 0
    %1658 = vmatpush1.bf16.msra.mxu0 0
    %1659 = vmatprep.subr.bf16.mxu0 0
    %1660 = vmatpush1.bf16.msra.mxu0 0
    %1661 = vmatprep.subr.bf16.mxu0 0
    %1662 = vmatpush1.bf16.msra.mxu0 0
    %1663 = vmatprep.subr.bf16.mxu0 0
    %1664 = vmatpush1.bf16.msra.mxu0 0
    %1665 = vmatprep.subr.bf16.mxu0 0
    %1666 = vmatpush1.bf16.msra.mxu0 0
    %1667 = vmatprep.subr.bf16.mxu0 0
    %1668 = vmatpush1.bf16.msra.mxu0 0
    %1669 = vmatprep.subr.bf16.mxu0 0
    %1670 = vmatpush1.bf16.msra.mxu0 0
    %1671 = vmatprep.subr.bf16.mxu0 0
    %1672 = vmatpush1.bf16.msra.mxu0 0
    %1673 = vmatprep.subr.bf16.mxu0 0
    %1674 = vmatpush1.bf16.msra.mxu0 0
    %1675 = vmatprep.subr.bf16.mxu0 0
    %1676 = vmatpush1.bf16.msra.mxu0 0
    %1677 = vmatprep.subr.bf16.mxu0 0
    %1678 = vmatpush1.bf16.msra.mxu0 0
    %1679 = vmatprep.subr.bf16.mxu0 0
    %1680 = vmatpush1.bf16.msra.mxu0 0
    %1681 = vmatprep.subr.bf16.mxu0 0
    %1682 = vmatpush1.bf16.msra.mxu0 0
    %1683 = vmatprep.subr.bf16.mxu0 0
    %1684 = vmatpush1.bf16.msra.mxu0 0
    %1685 = vmatprep.mubr.bf16.mxu0 0
    %1686 = vmatmul.mubr.bf16.gmra.mrb[0].mxu0 %v329
    %v1687 = vpop.f32.mrb[0].mxu0
    %v1688 = vadd.f32 %v1639, %v1687
    %v1689 = vpop.f32.mrb[0].mxu0
    %v1690 = vpop.f32.mrb[0].mxu0
    %v1691 = vadd.f32 %v1639, %v1690
    %v1692 = vpop.f32.mrb[0].mxu0
    %1693 = vmatprep.mubr.bf16.mxu0 0
    %1694 = vmatmul.mubr.bf16.gmra.mrb[0].mxu0 %v332
    %v1695 = vpop.f32.mrb[0].mxu0
    %v1696 = vadd.f32 %v1639, %v1695
    %v1697 = vpop.f32.mrb[0].mxu0
    %v1698 = vpop.f32.mrb[0].mxu0
    %v1699 = vadd.f32 %v1639, %v1698
    %v1700 = vpop.f32.mrb[0].mxu0
    %1701 = vmatprep.mubr.bf16.mxu0 0
    %1702 = vmatmul.mubr.bf16.gmra.mrb[0].mxu0 %v335
    %v1703 = vpop.f32.mrb[0].mxu0
    %v1704 = vadd.f32 %v1639, %v1703
    %v1705 = vpop.f32.mrb[0].mxu0
    %v1706 = vpop.f32.mrb[0].mxu0
    %v1707 = vadd.f32 %v1639, %v1706
    %v1708 = vpop.f32.mrb[0].mxu0
    %1709 = vmatprep.mubr.bf16.mxu0 0
    %1710 = vmatmul.mubr.bf16.gmra.mrb[0].mxu0 %v338
    %v1711 = vpop.f32.mrb[0].mxu0
    %v1712 = vadd.f32 %v1639, %v1711
    %v1713 = vpop.f32.mrb[0].mxu0
    %v1714 = vpop.f32.mrb[0].mxu0
    %v1715 = vadd.f32 %v1639, %v1714
    %v1716 = vpop.f32.mrb[0].mxu0
    %1717 = vdwg.mxu0
    %v1718 = vpack.c.bf16 %v1508, %v1508
    %v1719 = vpack.c.bf16 %v1511, %v1511
    %v1720 = vpack.c.bf16 %v1516, %v1516
    %v1721 = vpack.c.bf16 %v1519, %v1519
    %v1722 = vpack.c.bf16 %v1524, %v1524
    %v1723 = vpack.c.bf16 %v1527, %v1527
    %v1724 = vpack.c.bf16 %v1532, %v1532
    %v1725 = vpack.c.bf16 %v1535, %v1535
    %v1726 = vpack.c.bf16 %v1598, %v1598
    %v1727 = vpack.c.bf16 %v1601, %v1601
    %v1728 = vpack.c.bf16 %v1606, %v1606
    %v1729 = vpack.c.bf16 %v1609, %v1609
    %v1730 = vpack.c.bf16 %v1614, %v1614
    %v1731 = vpack.c.bf16 %v1617, %v1617
    %v1732 = vpack.c.bf16 %v1622, %v1622
    %v1733 = vpack.c.bf16 %v1625, %v1625
    %v1734 = vpack.c.bf16 %v1688, %v1688
    %v1735 = vpack.c.bf16 %v1691, %v1691
    %v1736 = vpack.c.bf16 %v1696, %v1696
    %v1737 = vpack.c.bf16 %v1699, %v1699
    %v1738 = vpack.c.bf16 %v1704, %v1704
    %v1739 = vpack.c.bf16 %v1707, %v1707
    %v1740 = vpack.c.bf16 %v1712, %v1712
    %v1741 = vpack.c.bf16 %v1715, %v1715
    %v1743 = vsel %vm609, %v1718, 0
    %v1746 = vsel %vm609, %v1726, 0
    %1748 = vmatprep.subr.bf16.mxu0 0
    %1749 = vmatpush1.bf16.xpose.msra.mxu0 %v1746
    %1750 = vmatprep.subr.bf16.mxu0 0
    %1751 = vmatpush1.bf16.xpose.msra.mxu0 0
    %1752 = vmatprep.subr.bf16.mxu0 0
    %1753 = vmatpush1.bf16.xpose.msra.mxu0 0
    %1754 = vmatprep.subr.bf16.mxu0 0
    %1755 = vmatpush1.bf16.xpose.msra.mxu0 0
    %1756 = vmatprep.subr.bf16.mxu0 0
    %1757 = vmatpush1.bf16.xpose.msra.mxu0 0
    %1758 = vmatprep.subr.bf16.mxu0 0
    %1759 = vmatpush1.bf16.xpose.msra.mxu0 0
    %1760 = vmatprep.subr.bf16.mxu0 0
    %1761 = vmatpush1.bf16.xpose.msra.mxu0 0
    %1762 = vmatprep.subr.bf16.mxu0 0
    %1763 = vmatpush1.bf16.xpose.msra.mxu0 0
    %1764 = vmatprep.subr.bf16.mxu0 0
    %1765 = vmatpush1.bf16.xpose.msra.mxu0 0
    %1766 = vmatprep.subr.bf16.mxu0 0
    %1767 = vmatpush1.bf16.xpose.msra.mxu0 0
    %1768 = vmatprep.subr.bf16.mxu0 0
    %1769 = vmatpush1.bf16.xpose.msra.mxu0 0
    %1770 = vmatprep.subr.bf16.mxu0 0
    %1771 = vmatpush1.bf16.xpose.msra.mxu0 0
    %1772 = vmatprep.subr.bf16.mxu0 0
    %1773 = vmatpush1.bf16.xpose.msra.mxu0 0
    %1774 = vmatprep.subr.bf16.mxu0 0
    %1775 = vmatpush1.bf16.xpose.msra.mxu0 0
    %1776 = vmatprep.subr.bf16.mxu0 0
    %1777 = vmatpush1.bf16.xpose.msra.mxu0 0
    %1778 = vmatprep.subr.bf16.mxu0 0
    %1779 = vmatpush1.bf16.xpose.msra.mxu0 0
    %1780 = vmatprep.mubr.bf16.mxu0 0
    %1781 = vmatmul.mubr.bf16.gmra.mrb[0].mxu0 %v1743
    %v1782 = vpop.f32.mrb[0].mxu0
    %v1783 = vadd.f32 0.0, %v1782
    %v1784 = vpop.f32.mrb[0].mxu0
    %v1785 = vpop.f32.mrb[0].mxu0
    %v1786 = vpop.f32.mrb[0].mxu0
    %1787 = vdwg.mxu0
    %v1789 = vsel %vm609, %v1719, 0
    %v1792 = vsel %vm609, %v1727, 0
    %1794 = vmatprep.subr.bf16.mxu0 0
    %1795 = vmatpush1.bf16.xpose.msra.mxu0 %v1792
    %1796 = vmatprep.subr.bf16.mxu0 0
    %1797 = vmatpush1.bf16.xpose.msra.mxu0 0
    %1798 = vmatprep.subr.bf16.mxu0 0
    %1799 = vmatpush1.bf16.xpose.msra.mxu0 0
    %1800 = vmatprep.subr.bf16.mxu0 0
    %1801 = vmatpush1.bf16.xpose.msra.mxu0 0
    %1802 = vmatprep.subr.bf16.mxu0 0
    %1803 = vmatpush1.bf16.xpose.msra.mxu0 0
    %1804 = vmatprep.subr.bf16.mxu0 0
    %1805 = vmatpush1.bf16.xpose.msra.mxu0 0
    %1806 = vmatprep.subr.bf16.mxu0 0
    %1807 = vmatpush1.bf16.xpose.msra.mxu0 0
    %1808 = vmatprep.subr.bf16.mxu0 0
    %1809 = vmatpush1.bf16.xpose.msra.mxu0 0
    %1810 = vmatprep.subr.bf16.mxu0 0
    %1811 = vmatpush1.bf16.xpose.msra.mxu0 0
    %1812 = vmatprep.subr.bf16.mxu0 0
    %1813 = vmatpush1.bf16.xpose.msra.mxu0 0
    %1814 = vmatprep.subr.bf16.mxu0 0
    %1815 = vmatpush1.bf16.xpose.msra.mxu0 0
    %1816 = vmatprep.subr.bf16.mxu0 0
    %1817 = vmatpush1.bf16.xpose.msra.mxu0 0
    %1818 = vmatprep.subr.bf16.mxu0 0
    %1819 = vmatpush1.bf16.xpose.msra.mxu0 0
    %1820 = vmatprep.subr.bf16.mxu0 0
    %1821 = vmatpush1.bf16.xpose.msra.mxu0 0
    %1822 = vmatprep.subr.bf16.mxu0 0
    %1823 = vmatpush1.bf16.xpose.msra.mxu0 0
    %1824 = vmatprep.subr.bf16.mxu0 0
    %1825 = vmatpush1.bf16.xpose.msra.mxu0 0
    %1826 = vmatprep.mubr.bf16.mxu0 0
    %1827 = vmatmul.mubr.bf16.gmra.mrb[0].mxu0 %v1789
    %v1828 = vpop.f32.mrb[0].mxu0
    %v1829 = vadd.f32 0.0, %v1828
    %v1830 = vpop.f32.mrb[0].mxu0
    %v1831 = vpop.f32.mrb[0].mxu0
    %v1832 = vpop.f32.mrb[0].mxu0
    %1833 = vdwg.mxu0
    %v1835 = vsel %vm609, %v1720, 0
    %v1838 = vsel %vm609, %v1728, 0
    %1840 = vmatprep.subr.bf16.mxu0 0
    %1841 = vmatpush1.bf16.xpose.msra.mxu0 %v1838
    %1842 = vmatprep.subr.bf16.mxu0 0
    %1843 = vmatpush1.bf16.xpose.msra.mxu0 0
    %1844 = vmatprep.subr.bf16.mxu0 0
    %1845 = vmatpush1.bf16.xpose.msra.mxu0 0
    %1846 = vmatprep.subr.bf16.mxu0 0
    %1847 = vmatpush1.bf16.xpose.msra.mxu0 0
    %1848 = vmatprep.subr.bf16.mxu0 0
    %1849 = vmatpush1.bf16.xpose.msra.mxu0 0
    %1850 = vmatprep.subr.bf16.mxu0 0
    %1851 = vmatpush1.bf16.xpose.msra.mxu0 0
    %1852 = vmatprep.subr.bf16.mxu0 0
    %1853 = vmatpush1.bf16.xpose.msra.mxu0 0
    %1854 = vmatprep.subr.bf16.mxu0 0
    %1855 = vmatpush1.bf16.xpose.msra.mxu0 0
    %1856 = vmatprep.subr.bf16.mxu0 0
    %1857 = vmatpush1.bf16.xpose.msra.mxu0 0
    %1858 = vmatprep.subr.bf16.mxu0 0
    %1859 = vmatpush1.bf16.xpose.msra.mxu0 0
    %1860 = vmatprep.subr.bf16.mxu0 0
    %1861 = vmatpush1.bf16.xpose.msra.mxu0 0
    %1862 = vmatprep.subr.bf16.mxu0 0
    %1863 = vmatpush1.bf16.xpose.msra.mxu0 0
    %1864 = vmatprep.subr.bf16.mxu0 0
    %1865 = vmatpush1.bf16.xpose.msra.mxu0 0
    %1866 = vmatprep.subr.bf16.mxu0 0
    %1867 = vmatpush1.bf16.xpose.msra.mxu0 0
    %1868 = vmatprep.subr.bf16.mxu0 0
    %1869 = vmatpush1.bf16.xpose.msra.mxu0 0
    %1870 = vmatprep.subr.bf16.mxu0 0
    %1871 = vmatpush1.bf16.xpose.msra.mxu0 0
    %1872 = vmatprep.mubr.bf16.mxu0 0
    %1873 = vmatmul.mubr.bf16.gmra.mrb[0].mxu0 %v1835
    %v1874 = vpop.f32.mrb[0].mxu0
    %v1875 = vadd.f32 0.0, %v1874
    %v1876 = vpop.f32.mrb[0].mxu0
    %v1877 = vpop.f32.mrb[0].mxu0
    %v1878 = vpop.f32.mrb[0].mxu0
    %1879 = vdwg.mxu0
    %v1881 = vsel %vm609, %v1721, 0
    %v1884 = vsel %vm609, %v1729, 0
    %1886 = vmatprep.subr.bf16.mxu0 0
    %1887 = vmatpush1.bf16.xpose.msra.mxu0 %v1884
    %1888 = vmatprep.subr.bf16.mxu0 0
    %1889 = vmatpush1.bf16.xpose.msra.mxu0 0
    %1890 = vmatprep.subr.bf16.mxu0 0
    %1891 = vmatpush1.bf16.xpose.msra.mxu0 0
    %1892 = vmatprep.subr.bf16.mxu0 0
    %1893 = vmatpush1.bf16.xpose.msra.mxu0 0
    %1894 = vmatprep.subr.bf16.mxu0 0
    %1895 = vmatpush1.bf16.xpose.msra.mxu0 0
    %1896 = vmatprep.subr.bf16.mxu0 0
    %1897 = vmatpush1.bf16.xpose.msra.mxu0 0
    %1898 = vmatprep.subr.bf16.mxu0 0
    %1899 = vmatpush1.bf16.xpose.msra.mxu0 0
    %1900 = vmatprep.subr.bf16.mxu0 0
    %1901 = vmatpush1.bf16.xpose.msra.mxu0 0
    %1902 = vmatprep.subr.bf16.mxu0 0
    %1903 = vmatpush1.bf16.xpose.msra.mxu0 0
    %1904 = vmatprep.subr.bf16.mxu0 0
    %1905 = vmatpush1.bf16.xpose.msra.mxu0 0
    %1906 = vmatprep.subr.bf16.mxu0 0
    %1907 = vmatpush1.bf16.xpose.msra.mxu0 0
    %1908 = vmatprep.subr.bf16.mxu0 0
    %1909 = vmatpush1.bf16.xpose.msra.mxu0 0
    %1910 = vmatprep.subr.bf16.mxu0 0
    %1911 = vmatpush1.bf16.xpose.msra.mxu0 0
    %1912 = vmatprep.subr.bf16.mxu0 0
    %1913 = vmatpush1.bf16.xpose.msra.mxu0 0
    %1914 = vmatprep.subr.bf16.mxu0 0
    %1915 = vmatpush1.bf16.xpose.msra.mxu0 0
    %1916 = vmatprep.subr.bf16.mxu0 0
    %1917 = vmatpush1.bf16.xpose.msra.mxu0 0
    %1918 = vmatprep.mubr.bf16.mxu0 0
    %1919 = vmatmul.mubr.bf16.gmra.mrb[0].mxu0 %v1881
    %v1920 = vpop.f32.mrb[0].mxu0
    %v1921 = vadd.f32 0.0, %v1920
    %v1922 = vpop.f32.mrb[0].mxu0
    %v1923 = vpop.f32.mrb[0].mxu0
    %v1924 = vpop.f32.mrb[0].mxu0
    %1925 = vdwg.mxu0
    %v1927 = vsel %vm609, %v1722, 0
    %v1930 = vsel %vm609, %v1730, 0
    %1932 = vmatprep.subr.bf16.mxu0 0
    %1933 = vmatpush1.bf16.xpose.msra.mxu0 %v1930
    %1934 = vmatprep.subr.bf16.mxu0 0
    %1935 = vmatpush1.bf16.xpose.msra.mxu0 0
    %1936 = vmatprep.subr.bf16.mxu0 0
    %1937 = vmatpush1.bf16.xpose.msra.mxu0 0
    %1938 = vmatprep.subr.bf16.mxu0 0
    %1939 = vmatpush1.bf16.xpose.msra.mxu0 0
    %1940 = vmatprep.subr.bf16.mxu0 0
    %1941 = vmatpush1.bf16.xpose.msra.mxu0 0
    %1942 = vmatprep.subr.bf16.mxu0 0
    %1943 = vmatpush1.bf16.xpose.msra.mxu0 0
    %1944 = vmatprep.subr.bf16.mxu0 0
    %1945 = vmatpush1.bf16.xpose.msra.mxu0 0
    %1946 = vmatprep.subr.bf16.mxu0 0
    %1947 = vmatpush1.bf16.xpose.msra.mxu0 0
    %1948 = vmatprep.subr.bf16.mxu0 0
    %1949 = vmatpush1.bf16.xpose.msra.mxu0 0
    %1950 = vmatprep.subr.bf16.mxu0 0
    %1951 = vmatpush1.bf16.xpose.msra.mxu0 0
    %1952 = vmatprep.subr.bf16.mxu0 0
    %1953 = vmatpush1.bf16.xpose.msra.mxu0 0
    %1954 = vmatprep.subr.bf16.mxu0 0
    %1955 = vmatpush1.bf16.xpose.msra.mxu0 0
    %1956 = vmatprep.subr.bf16.mxu0 0
    %1957 = vmatpush1.bf16.xpose.msra.mxu0 0
    %1958 = vmatprep.subr.bf16.mxu0 0
    %1959 = vmatpush1.bf16.xpose.msra.mxu0 0
    %1960 = vmatprep.subr.bf16.mxu0 0
    %1961 = vmatpush1.bf16.xpose.msra.mxu0 0
    %1962 = vmatprep.subr.bf16.mxu0 0
    %1963 = vmatpush1.bf16.xpose.msra.mxu0 0
    %1964 = vmatprep.mubr.bf16.mxu0 0
    %1965 = vmatmul.mubr.bf16.gmra.mrb[0].mxu0 %v1927
    %v1966 = vpop.f32.mrb[0].mxu0
    %v1967 = vadd.f32 0.0, %v1966
    %v1968 = vpop.f32.mrb[0].mxu0
    %v1969 = vpop.f32.mrb[0].mxu0
    %v1970 = vpop.f32.mrb[0].mxu0
    %1971 = vdwg.mxu0
    %v1973 = vsel %vm609, %v1723, 0
    %v1976 = vsel %vm609, %v1731, 0
    %1978 = vmatprep.subr.bf16.mxu0 0
    %1979 = vmatpush1.bf16.xpose.msra.mxu0 %v1976
    %1980 = vmatprep.subr.bf16.mxu0 0
    %1981 = vmatpush1.bf16.xpose.msra.mxu0 0
    %1982 = vmatprep.subr.bf16.mxu0 0
    %1983 = vmatpush1.bf16.xpose.msra.mxu0 0
    %1984 = vmatprep.subr.bf16.mxu0 0
    %1985 = vmatpush1.bf16.xpose.msra.mxu0 0
    %1986 = vmatprep.subr.bf16.mxu0 0
    %1987 = vmatpush1.bf16.xpose.msra.mxu0 0
    %1988 = vmatprep.subr.bf16.mxu0 0
    %1989 = vmatpush1.bf16.xpose.msra.mxu0 0
    %1990 = vmatprep.subr.bf16.mxu0 0
    %1991 = vmatpush1.bf16.xpose.msra.mxu0 0
    %1992 = vmatprep.subr.bf16.mxu0 0
    %1993 = vmatpush1.bf16.xpose.msra.mxu0 0
    %1994 = vmatprep.subr.bf16.mxu0 0
    %1995 = vmatpush1.bf16.xpose.msra.mxu0 0
    %1996 = vmatprep.subr.bf16.mxu0 0
    %1997 = vmatpush1.bf16.xpose.msra.mxu0 0
    %1998 = vmatprep.subr.bf16.mxu0 0
    %1999 = vmatpush1.bf16.xpose.msra.mxu0 0
    %2000 = vmatprep.subr.bf16.mxu0 0
    %2001 = vmatpush1.bf16.xpose.msra.mxu0 0
    %2002 = vmatprep.subr.bf16.mxu0 0
    %2003 = vmatpush1.bf16.xpose.msra.mxu0 0
    %2004 = vmatprep.subr.bf16.mxu0 0
    %2005 = vmatpush1.bf16.xpose.msra.mxu0 0
    %2006 = vmatprep.subr.bf16.mxu0 0
    %2007 = vmatpush1.bf16.xpose.msra.mxu0 0
    %2008 = vmatprep.subr.bf16.mxu0 0
    %2009 = vmatpush1.bf16.xpose.msra.mxu0 0
    %2010 = vmatprep.mubr.bf16.mxu0 0
    %2011 = vmatmul.mubr.bf16.gmra.mrb[0].mxu0 %v1973
    %v2012 = vpop.f32.mrb[0].mxu0
    %v2013 = vadd.f32 0.0, %v2012
    %v2014 = vpop.f32.mrb[0].mxu0
    %v2015 = vpop.f32.mrb[0].mxu0
    %v2016 = vpop.f32.mrb[0].mxu0
    %2017 = vdwg.mxu0
    %v2019 = vsel %vm609, %v1724, 0
    %v2022 = vsel %vm609, %v1732, 0
    %2024 = vmatprep.subr.bf16.mxu0 0
    %2025 = vmatpush1.bf16.xpose.msra.mxu0 %v2022
    %2026 = vmatprep.subr.bf16.mxu0 0
    %2027 = vmatpush1.bf16.xpose.msra.mxu0 0
    %2028 = vmatprep.subr.bf16.mxu0 0
    %2029 = vmatpush1.bf16.xpose.msra.mxu0 0
    %2030 = vmatprep.subr.bf16.mxu0 0
    %2031 = vmatpush1.bf16.xpose.msra.mxu0 0
    %2032 = vmatprep.subr.bf16.mxu0 0
    %2033 = vmatpush1.bf16.xpose.msra.mxu0 0
    %2034 = vmatprep.subr.bf16.mxu0 0
    %2035 = vmatpush1.bf16.xpose.msra.mxu0 0
    %2036 = vmatprep.subr.bf16.mxu0 0
    %2037 = vmatpush1.bf16.xpose.msra.mxu0 0
    %2038 = vmatprep.subr.bf16.mxu0 0
    %2039 = vmatpush1.bf16.xpose.msra.mxu0 0
    %2040 = vmatprep.subr.bf16.mxu0 0
    %2041 = vmatpush1.bf16.xpose.msra.mxu0 0
    %2042 = vmatprep.subr.bf16.mxu0 0
    %2043 = vmatpush1.bf16.xpose.msra.mxu0 0
    %2044 = vmatprep.subr.bf16.mxu0 0
    %2045 = vmatpush1.bf16.xpose.msra.mxu0 0
    %2046 = vmatprep.subr.bf16.mxu0 0
    %2047 = vmatpush1.bf16.xpose.msra.mxu0 0
    %2048 = vmatprep.subr.bf16.mxu0 0
    %2049 = vmatpush1.bf16.xpose.msra.mxu0 0
    %2050 = vmatprep.subr.bf16.mxu0 0
    %2051 = vmatpush1.bf16.xpose.msra.mxu0 0
    %2052 = vmatprep.subr.bf16.mxu0 0
    %2053 = vmatpush1.bf16.xpose.msra.mxu0 0
    %2054 = vmatprep.subr.bf16.mxu0 0
    %2055 = vmatpush1.bf16.xpose.msra.mxu0 0
    %2056 = vmatprep.mubr.bf16.mxu0 0
    %2057 = vmatmul.mubr.bf16.gmra.mrb[0].mxu0 %v2019
    %v2058 = vpop.f32.mrb[0].mxu0
    %v2059 = vadd.f32 0.0, %v2058
    %v2060 = vpop.f32.mrb[0].mxu0
    %v2061 = vpop.f32.mrb[0].mxu0
    %v2062 = vpop.f32.mrb[0].mxu0
    %2063 = vdwg.mxu0
    %v2065 = vsel %vm609, %v1725, 0
    %v2068 = vsel %vm609, %v1733, 0
    %2070 = vmatprep.subr.bf16.mxu0 0
    %2071 = vmatpush1.bf16.xpose.msra.mxu0 %v2068
    %2072 = vmatprep.subr.bf16.mxu0 0
    %2073 = vmatpush1.bf16.xpose.msra.mxu0 0
    %2074 = vmatprep.subr.bf16.mxu0 0
    %2075 = vmatpush1.bf16.xpose.msra.mxu0 0
    %2076 = vmatprep.subr.bf16.mxu0 0
    %2077 = vmatpush1.bf16.xpose.msra.mxu0 0
    %2078 = vmatprep.subr.bf16.mxu0 0
    %2079 = vmatpush1.bf16.xpose.msra.mxu0 0
    %2080 = vmatprep.subr.bf16.mxu0 0
    %2081 = vmatpush1.bf16.xpose.msra.mxu0 0
    %2082 = vmatprep.subr.bf16.mxu0 0
    %2083 = vmatpush1.bf16.xpose.msra.mxu0 0
    %2084 = vmatprep.subr.bf16.mxu0 0
    %2085 = vmatpush1.bf16.xpose.msra.mxu0 0
    %2086 = vmatprep.subr.bf16.mxu0 0
    %2087 = vmatpush1.bf16.xpose.msra.mxu0 0
    %2088 = vmatprep.subr.bf16.mxu0 0
    %2089 = vmatpush1.bf16.xpose.msra.mxu0 0
    %2090 = vmatprep.subr.bf16.mxu0 0
    %2091 = vmatpush1.bf16.xpose.msra.mxu0 0
    %2092 = vmatprep.subr.bf16.mxu0 0
    %2093 = vmatpush1.bf16.xpose.msra.mxu0 0
    %2094 = vmatprep.subr.bf16.mxu0 0
    %2095 = vmatpush1.bf16.xpose.msra.mxu0 0
    %2096 = vmatprep.subr.bf16.mxu0 0
    %2097 = vmatpush1.bf16.xpose.msra.mxu0 0
    %2098 = vmatprep.subr.bf16.mxu0 0
    %2099 = vmatpush1.bf16.xpose.msra.mxu0 0
    %2100 = vmatprep.subr.bf16.mxu0 0
    %2101 = vmatpush1.bf16.xpose.msra.mxu0 0
    %2102 = vmatprep.mubr.bf16.mxu0 0
    %2103 = vmatmul.mubr.bf16.gmra.mrb[0].mxu0 %v2065
    %v2104 = vpop.f32.mrb[0].mxu0
    %v2105 = vadd.f32 0.0, %v2104
    %v2106 = vpop.f32.mrb[0].mxu0
    %v2107 = vpop.f32.mrb[0].mxu0
    %v2108 = vpop.f32.mrb[0].mxu0
    %2109 = vdwg.mxu0
    %v2110 = vsel %vm609, %v1783, -inf
    %2111 = vmax.xlane.f32.xlu0 %v2110
    %v2112 = vpop.xlane.xlu0 %2111
    %v2113 = vsel %vm609, %v1829, -inf
    %2114 = vmax.xlane.f32.xlu0 %v2113
    %v2115 = vpop.xlane.xlu0 %2114
    %v2116 = vsel %vm609, %v1875, -inf
    %2117 = vmax.xlane.f32.xlu0 %v2116
    %v2118 = vpop.xlane.xlu0 %2117
    %v2119 = vsel %vm609, %v1921, -inf
    %2120 = vmax.xlane.f32.xlu0 %v2119
    %v2121 = vpop.xlane.xlu0 %2120
    %v2122 = vsel %vm609, %v1967, -inf
    %2123 = vmax.xlane.f32.xlu0 %v2122
    %v2124 = vpop.xlane.xlu0 %2123
    %v2125 = vsel %vm609, %v2013, -inf
    %2126 = vmax.xlane.f32.xlu0 %v2125
    %v2127 = vpop.xlane.xlu0 %2126
    %v2128 = vsel %vm609, %v2059, -inf
    %2129 = vmax.xlane.f32.xlu0 %v2128
    %v2130 = vpop.xlane.xlu0 %2129
    %v2131 = vsel %vm609, %v2105, -inf
    %2132 = vmax.xlane.f32.xlu0 %v2131
    %v2133 = vpop.xlane.xlu0 %2132
    %v2134 = vsub.f32 %v1783, %v2112
    %v2135 = vsub.f32 %v1829, %v2115
    %v2136 = vsub.f32 %v1875, %v2118
    %v2137 = vsub.f32 %v1921, %v2121
    %v2138 = vsub.f32 %v1967, %v2124
    %v2139 = vsub.f32 %v2013, %v2127
    %v2140 = vsub.f32 %v2059, %v2130
    %v2141 = vsub.f32 %v2105, %v2133
    %v2142 = vmul.f32 %v2134, 1.442695
    %v2143 = vpow.pop %v2142
    %v2144 = vmul.f32 %v2135, 1.442695
    %v2145 = vpow.pop %v2144
    %v2146 = vmul.f32 %v2136, 1.442695
    %v2147 = vpow.pop %v2146
    %v2148 = vmul.f32 %v2137, 1.442695
    %v2149 = vpow.pop %v2148
    %v2150 = vmul.f32 %v2138, 1.442695
    %v2151 = vpow.pop %v2150
    %v2152 = vmul.f32 %v2139, 1.442695
    %v2153 = vpow.pop %v2152
    %v2154 = vmul.f32 %v2140, 1.442695
    %v2155 = vpow.pop %v2154
    %v2156 = vmul.f32 %v2141, 1.442695
    %v2157 = vpow.pop %v2156
    %v2158 = vsel %vm609, %v2143, 0.0
    %2159 = vadd.xlane.f32.xlu0 %v2158
    %v2160 = vpop.xlane.xlu0 %2159
    %v2161 = vsel %vm609, %v2145, 0.0
    %2162 = vadd.xlane.f32.xlu0 %v2161
    %v2163 = vpop.xlane.xlu0 %2162
    %v2164 = vsel %vm609, %v2147, 0.0
    %2165 = vadd.xlane.f32.xlu0 %v2164
    %v2166 = vpop.xlane.xlu0 %2165
    %v2167 = vsel %vm609, %v2149, 0.0
    %2168 = vadd.xlane.f32.xlu0 %v2167
    %v2169 = vpop.xlane.xlu0 %2168
    %v2170 = vsel %vm609, %v2151, 0.0
    %2171 = vadd.xlane.f32.xlu0 %v2170
    %v2172 = vpop.xlane.xlu0 %2171
    %v2173 = vsel %vm609, %v2153, 0.0
    %2174 = vadd.xlane.f32.xlu0 %v2173
    %v2175 = vpop.xlane.xlu0 %2174
    %v2176 = vsel %vm609, %v2155, 0.0
    %2177 = vadd.xlane.f32.xlu0 %v2176
    %v2178 = vpop.xlane.xlu0 %2177
    %v2179 = vsel %vm609, %v2157, 0.0
    %2180 = vadd.xlane.f32.xlu0 %v2179
    %v2181 = vpop.xlane.xlu0 %2180
    %v2182 = vrcp.pop %v2160
    %v2183 = vrcp.pop %v2163
    %v2184 = vrcp.pop %v2166
    %v2185 = vrcp.pop %v2169
    %v2186 = vrcp.pop %v2172
    %v2187 = vrcp.pop %v2175
    %v2188 = vrcp.pop %v2178
    %v2189 = vrcp.pop %v2181
    %v2190 = vmul.f32 %v2143, %v2182
    %v2191 = vmul.f32 %v2145, %v2183
    %v2192 = vmul.f32 %v2147, %v2184
    %v2193 = vmul.f32 %v2149, %v2185
    %v2194 = vmul.f32 %v2151, %v2186
    %v2195 = vmul.f32 %v2153, %v2187
    %v2196 = vmul.f32 %v2155, %v2188
    %v2197 = vmul.f32 %v2157, %v2189
    %v2198 = vpack.c.bf16 %v2190, %v2190
    %v2199 = vpack.c.bf16 %v2191, %v2191
    %v2200 = vpack.c.bf16 %v2192, %v2192
    %v2201 = vpack.c.bf16 %v2193, %v2193
    %v2202 = vpack.c.bf16 %v2194, %v2194
    %v2203 = vpack.c.bf16 %v2195, %v2195
    %v2204 = vpack.c.bf16 %v2196, %v2196
    %v2205 = vpack.c.bf16 %v2197, %v2197
    %v2207 = vsel %vm609, %v2198, 0
    %v2210 = vsel %vm1077, %v1734, 0
    %2212 = vmatprep.subr.bf16.mxu0 0
    %2213 = vmatpush1.bf16.msra.mxu0 %v2210
    %2214 = vmatprep.subr.bf16.mxu0 0
    %2215 = vmatpush1.bf16.msra.mxu0 0
    %2216 = vmatprep.subr.bf16.mxu0 0
    %2217 = vmatpush1.bf16.msra.mxu0 0
    %2218 = vmatprep.subr.bf16.mxu0 0
    %2219 = vmatpush1.bf16.msra.mxu0 0
    %2220 = vmatprep.subr.bf16.mxu0 0
    %2221 = vmatpush1.bf16.msra.mxu0 0
    %2222 = vmatprep.subr.bf16.mxu0 0
    %2223 = vmatpush1.bf16.msra.mxu0 0
    %2224 = vmatprep.subr.bf16.mxu0 0
    %2225 = vmatpush1.bf16.msra.mxu0 0
    %2226 = vmatprep.subr.bf16.mxu0 0
    %2227 = vmatpush1.bf16.msra.mxu0 0
    %2228 = vmatprep.subr.bf16.mxu0 0
    %2229 = vmatpush1.bf16.msra.mxu0 0
    %2230 = vmatprep.subr.bf16.mxu0 0
    %2231 = vmatpush1.bf16.msra.mxu0 0
    %2232 = vmatprep.subr.bf16.mxu0 0
    %2233 = vmatpush1.bf16.msra.mxu0 0
    %2234 = vmatprep.subr.bf16.mxu0 0
    %2235 = vmatpush1.bf16.msra.mxu0 0
    %2236 = vmatprep.subr.bf16.mxu0 0
    %2237 = vmatpush1.bf16.msra.mxu0 0
    %2238 = vmatprep.subr.bf16.mxu0 0
    %2239 = vmatpush1.bf16.msra.mxu0 0
    %2240 = vmatprep.subr.bf16.mxu0 0
    %2241 = vmatpush1.bf16.msra.mxu0 0
    %2242 = vmatprep.subr.bf16.mxu0 0
    %2243 = vmatpush1.bf16.msra.mxu0 0
    %2244 = vmatprep.mubr.bf16.mxu0 0
    %2245 = vmatmul.mubr.bf16.gmra.mrb[0].mxu0 %v2207
    %v2246 = vpop.f32.mrb[0].mxu0
    %v2247 = vadd.f32 0.0, %v2246
    %v2248 = vpop.f32.mrb[0].mxu0
    %v2249 = vpop.f32.mrb[0].mxu0
    %v2250 = vpop.f32.mrb[0].mxu0
    %2251 = vdwg.mxu0
    %v2253 = vsel %vm609, %v2199, 0
    %v2256 = vsel %vm1077, %v1735, 0
    %2258 = vmatprep.subr.bf16.mxu0 0
    %2259 = vmatpush1.bf16.msra.mxu0 %v2256
    %2260 = vmatprep.subr.bf16.mxu0 0
    %2261 = vmatpush1.bf16.msra.mxu0 0
    %2262 = vmatprep.subr.bf16.mxu0 0
    %2263 = vmatpush1.bf16.msra.mxu0 0
    %2264 = vmatprep.subr.bf16.mxu0 0
    %2265 = vmatpush1.bf16.msra.mxu0 0
    %2266 = vmatprep.subr.bf16.mxu0 0
    %2267 = vmatpush1.bf16.msra.mxu0 0
    %2268 = vmatprep.subr.bf16.mxu0 0
    %2269 = vmatpush1.bf16.msra.mxu0 0
    %2270 = vmatprep.subr.bf16.mxu0 0
    %2271 = vmatpush1.bf16.msra.mxu0 0
    %2272 = vmatprep.subr.bf16.mxu0 0
    %2273 = vmatpush1.bf16.msra.mxu0 0
    %2274 = vmatprep.subr.bf16.mxu0 0
    %2275 = vmatpush1.bf16.msra.mxu0 0
    %2276 = vmatprep.subr.bf16.mxu0 0
    %2277 = vmatpush1.bf16.msra.mxu0 0
    %2278 = vmatprep.subr.bf16.mxu0 0
    %2279 = vmatpush1.bf16.msra.mxu0 0
    %2280 = vmatprep.subr.bf16.mxu0 0
    %2281 = vmatpush1.bf16.msra.mxu0 0
    %2282 = vmatprep.subr.bf16.mxu0 0
    %2283 = vmatpush1.bf16.msra.mxu0 0
    %2284 = vmatprep.subr.bf16.mxu0 0
    %2285 = vmatpush1.bf16.msra.mxu0 0
    %2286 = vmatprep.subr.bf16.mxu0 0
    %2287 = vmatpush1.bf16.msra.mxu0 0
    %2288 = vmatprep.subr.bf16.mxu0 0
    %2289 = vmatpush1.bf16.msra.mxu0 0
    %2290 = vmatprep.mubr.bf16.mxu0 0
    %2291 = vmatmul.mubr.bf16.gmra.mrb[0].mxu0 %v2253
    %v2292 = vpop.f32.mrb[0].mxu0
    %v2293 = vadd.f32 0.0, %v2292
    %v2294 = vpop.f32.mrb[0].mxu0
    %v2295 = vpop.f32.mrb[0].mxu0
    %v2296 = vpop.f32.mrb[0].mxu0
    %2297 = vdwg.mxu0
    %v2299 = vsel %vm609, %v2200, 0
    %v2302 = vsel %vm1077, %v1736, 0
    %2304 = vmatprep.subr.bf16.mxu0 0
    %2305 = vmatpush1.bf16.msra.mxu0 %v2302
    %2306 = vmatprep.subr.bf16.mxu0 0
    %2307 = vmatpush1.bf16.msra.mxu0 0
    %2308 = vmatprep.subr.bf16.mxu0 0
    %2309 = vmatpush1.bf16.msra.mxu0 0
    %2310 = vmatprep.subr.bf16.mxu0 0
    %2311 = vmatpush1.bf16.msra.mxu0 0
    %2312 = vmatprep.subr.bf16.mxu0 0
    %2313 = vmatpush1.bf16.msra.mxu0 0
    %2314 = vmatprep.subr.bf16.mxu0 0
    %2315 = vmatpush1.bf16.msra.mxu0 0
    %2316 = vmatprep.subr.bf16.mxu0 0
    %2317 = vmatpush1.bf16.msra.mxu0 0
    %2318 = vmatprep.subr.bf16.mxu0 0
    %2319 = vmatpush1.bf16.msra.mxu0 0
    %2320 = vmatprep.subr.bf16.mxu0 0
    %2321 = vmatpush1.bf16.msra.mxu0 0
    %2322 = vmatprep.subr.bf16.mxu0 0
    %2323 = vmatpush1.bf16.msra.mxu0 0
    %2324 = vmatprep.subr.bf16.mxu0 0
    %2325 = vmatpush1.bf16.msra.mxu0 0
    %2326 = vmatprep.subr.bf16.mxu0 0
    %2327 = vmatpush1.bf16.msra.mxu0 0
    %2328 = vmatprep.subr.bf16.mxu0 0
    %2329 = vmatpush1.bf16.msra.mxu0 0
    %2330 = vmatprep.subr.bf16.mxu0 0
    %2331 = vmatpush1.bf16.msra.mxu0 0
    %2332 = vmatprep.subr.bf16.mxu0 0
    %2333 = vmatpush1.bf16.msra.mxu0 0
    %2334 = vmatprep.subr.bf16.mxu0 0
    %2335 = vmatpush1.bf16.msra.mxu0 0
    %2336 = vmatprep.mubr.bf16.mxu0 0
    %2337 = vmatmul.mubr.bf16.gmra.mrb[0].mxu0 %v2299
    %v2338 = vpop.f32.mrb[0].mxu0
    %v2339 = vadd.f32 0.0, %v2338
    %v2340 = vpop.f32.mrb[0].mxu0
    %v2341 = vpop.f32.mrb[0].mxu0
    %v2342 = vpop.f32.mrb[0].mxu0
    %2343 = vdwg.mxu0
    %v2345 = vsel %vm609, %v2201, 0
    %v2348 = vsel %vm1077, %v1737, 0
    %2350 = vmatprep.subr.bf16.mxu0 0
    %2351 = vmatpush1.bf16.msra.mxu0 %v2348
    %2352 = vmatprep.subr.bf16.mxu0 0
    %2353 = vmatpush1.bf16.msra.mxu0 0
    %2354 = vmatprep.subr.bf16.mxu0 0
    %2355 = vmatpush1.bf16.msra.mxu0 0
    %2356 = vmatprep.subr.bf16.mxu0 0
    %2357 = vmatpush1.bf16.msra.mxu0 0
    %2358 = vmatprep.subr.bf16.mxu0 0
    %2359 = vmatpush1.bf16.msra.mxu0 0
    %2360 = vmatprep.subr.bf16.mxu0 0
    %2361 = vmatpush1.bf16.msra.mxu0 0
    %2362 = vmatprep.subr.bf16.mxu0 0
    %2363 = vmatpush1.bf16.msra.mxu0 0
    %2364 = vmatprep.subr.bf16.mxu0 0
    %2365 = vmatpush1.bf16.msra.mxu0 0
    %2366 = vmatprep.subr.bf16.mxu0 0
    %2367 = vmatpush1.bf16.msra.mxu0 0
    %2368 = vmatprep.subr.bf16.mxu0 0
    %2369 = vmatpush1.bf16.msra.mxu0 0
    %2370 = vmatprep.subr.bf16.mxu0 0
    %2371 = vmatpush1.bf16.msra.mxu0 0
    %2372 = vmatprep.subr.bf16.mxu0 0
    %2373 = vmatpush1.bf16.msra.mxu0 0
    %2374 = vmatprep.subr.bf16.mxu0 0
    %2375 = vmatpush1.bf16.msra.mxu0 0
    %2376 = vmatprep.subr.bf16.mxu0 0
    %2377 = vmatpush1.bf16.msra.mxu0 0
    %2378 = vmatprep.subr.bf16.mxu0 0
    %2379 = vmatpush1.bf16.msra.mxu0 0
    %2380 = vmatprep.subr.bf16.mxu0 0
    %2381 = vmatpush1.bf16.msra.mxu0 0
    %2382 = vmatprep.mubr.bf16.mxu0 0
    %2383 = vmatmul.mubr.bf16.gmra.mrb[0].mxu0 %v2345
    %v2384 = vpop.f32.mrb[0].mxu0
    %v2385 = vadd.f32 0.0, %v2384
    %v2386 = vpop.f32.mrb[0].mxu0
    %v2387 = vpop.f32.mrb[0].mxu0
    %v2388 = vpop.f32.mrb[0].mxu0
    %2389 = vdwg.mxu0
    %v2391 = vsel %vm609, %v2202, 0
    %v2394 = vsel %vm1077, %v1738, 0
    %2396 = vmatprep.subr.bf16.mxu0 0
    %2397 = vmatpush1.bf16.msra.mxu0 %v2394
    %2398 = vmatprep.subr.bf16.mxu0 0
    %2399 = vmatpush1.bf16.msra.mxu0 0
    %2400 = vmatprep.subr.bf16.mxu0 0
    %2401 = vmatpush1.bf16.msra.mxu0 0
    %2402 = vmatprep.subr.bf16.mxu0 0
    %2403 = vmatpush1.bf16.msra.mxu0 0
    %2404 = vmatprep.subr.bf16.mxu0 0
    %2405 = vmatpush1.bf16.msra.mxu0 0
    %2406 = vmatprep.subr.bf16.mxu0 0
    %2407 = vmatpush1.bf16.msra.mxu0 0
    %2408 = vmatprep.subr.bf16.mxu0 0
    %2409 = vmatpush1.bf16.msra.mxu0 0
    %2410 = vmatprep.subr.bf16.mxu0 0
    %2411 = vmatpush1.bf16.msra.mxu0 0
    %2412 = vmatprep.subr.bf16.mxu0 0
    %2413 = vmatpush1.bf16.msra.mxu0 0
    %2414 = vmatprep.subr.bf16.mxu0 0
    %2415 = vmatpush1.bf16.msra.mxu0 0
    %2416 = vmatprep.subr.bf16.mxu0 0
    %2417 = vmatpush1.bf16.msra.mxu0 0
    %2418 = vmatprep.subr.bf16.mxu0 0
    %2419 = vmatpush1.bf16.msra.mxu0 0
    %2420 = vmatprep.subr.bf16.mxu0 0
    %2421 = vmatpush1.bf16.msra.mxu0 0
    %2422 = vmatprep.subr.bf16.mxu0 0
    %2423 = vmatpush1.bf16.msra.mxu0 0
    %2424 = vmatprep.subr.bf16.mxu0 0
    %2425 = vmatpush1.bf16.msra.mxu0 0
    %2426 = vmatprep.subr.bf16.mxu0 0
    %2427 = vmatpush1.bf16.msra.mxu0 0
    %2428 = vmatprep.mubr.bf16.mxu0 0
    %2429 = vmatmul.mubr.bf16.gmra.mrb[0].mxu0 %v2391
    %v2430 = vpop.f32.mrb[0].mxu0
    %v2431 = vadd.f32 0.0, %v2430
    %v2432 = vpop.f32.mrb[0].mxu0
    %v2433 = vpop.f32.mrb[0].mxu0
    %v2434 = vpop.f32.mrb[0].mxu0
    %2435 = vdwg.mxu0
    %v2437 = vsel %vm609, %v2203, 0
    %v2440 = vsel %vm1077, %v1739, 0
    %2442 = vmatprep.subr.bf16.mxu0 0
    %2443 = vmatpush1.bf16.msra.mxu0 %v2440
    %2444 = vmatprep.subr.bf16.mxu0 0
    %2445 = vmatpush1.bf16.msra.mxu0 0
    %2446 = vmatprep.subr.bf16.mxu0 0
    %2447 = vmatpush1.bf16.msra.mxu0 0
    %2448 = vmatprep.subr.bf16.mxu0 0
    %2449 = vmatpush1.bf16.msra.mxu0 0
    %2450 = vmatprep.subr.bf16.mxu0 0
    %2451 = vmatpush1.bf16.msra.mxu0 0
    %2452 = vmatprep.subr.bf16.mxu0 0
    %2453 = vmatpush1.bf16.msra.mxu0 0
    %2454 = vmatprep.subr.bf16.mxu0 0
    %2455 = vmatpush1.bf16.msra.mxu0 0
    %2456 = vmatprep.subr.bf16.mxu0 0
    %2457 = vmatpush1.bf16.msra.mxu0 0
    %2458 = vmatprep.subr.bf16.mxu0 0
    %2459 = vmatpush1.bf16.msra.mxu0 0
    %2460 = vmatprep.subr.bf16.mxu0 0
    %2461 = vmatpush1.bf16.msra.mxu0 0
    %2462 = vmatprep.subr.bf16.mxu0 0
    %2463 = vmatpush1.bf16.msra.mxu0 0
    %2464 = vmatprep.subr.bf16.mxu0 0
    %2465 = vmatpush1.bf16.msra.mxu0 0
    %2466 = vmatprep.subr.bf16.mxu0 0
    %2467 = vmatpush1.bf16.msra.mxu0 0
    %2468 = vmatprep.subr.bf16.mxu0 0
    %2469 = vmatpush1.bf16.msra.mxu0 0
    %2470 = vmatprep.subr.bf16.mxu0 0
    %2471 = vmatpush1.bf16.msra.mxu0 0
    %2472 = vmatprep.subr.bf16.mxu0 0
    %2473 = vmatpush1.bf16.msra.mxu0 0
    %2474 = vmatprep.mubr.bf16.mxu0 0
    %2475 = vmatmul.mubr.bf16.gmra.mrb[0].mxu0 %v2437
    %v2476 = vpop.f32.mrb[0].mxu0
    %v2477 = vadd.f32 0.0, %v2476
    %v2478 = vpop.f32.mrb[0].mxu0
    %v2479 = vpop.f32.mrb[0].mxu0
    %v2480 = vpop.f32.mrb[0].mxu0
    %2481 = vdwg.mxu0
    %v2483 = vsel %vm609, %v2204, 0
    %v2486 = vsel %vm1077, %v1740, 0
    %2488 = vmatprep.subr.bf16.mxu0 0
    %2489 = vmatpush1.bf16.msra.mxu0 %v2486
    %2490 = vmatprep.subr.bf16.mxu0 0
    %2491 = vmatpush1.bf16.msra.mxu0 0
    %2492 = vmatprep.subr.bf16.mxu0 0
    %2493 = vmatpush1.bf16.msra.mxu0 0
    %2494 = vmatprep.subr.bf16.mxu0 0
    %2495 = vmatpush1.bf16.msra.mxu0 0
    %2496 = vmatprep.subr.bf16.mxu0 0
    %2497 = vmatpush1.bf16.msra.mxu0 0
    %2498 = vmatprep.subr.bf16.mxu0 0
    %2499 = vmatpush1.bf16.msra.mxu0 0
    %2500 = vmatprep.subr.bf16.mxu0 0
    %2501 = vmatpush1.bf16.msra.mxu0 0
    %2502 = vmatprep.subr.bf16.mxu0 0
    %2503 = vmatpush1.bf16.msra.mxu0 0
    %2504 = vmatprep.subr.bf16.mxu0 0
    %2505 = vmatpush1.bf16.msra.mxu0 0
    %2506 = vmatprep.subr.bf16.mxu0 0
    %2507 = vmatpush1.bf16.msra.mxu0 0
    %2508 = vmatprep.subr.bf16.mxu0 0
    %2509 = vmatpush1.bf16.msra.mxu0 0
    %2510 = vmatprep.subr.bf16.mxu0 0
    %2511 = vmatpush1.bf16.msra.mxu0 0
    %2512 = vmatprep.subr.bf16.mxu0 0
    %2513 = vmatpush1.bf16.msra.mxu0 0
    %2514 = vmatprep.subr.bf16.mxu0 0
    %2515 = vmatpush1.bf16.msra.mxu0 0
    %2516 = vmatprep.subr.bf16.mxu0 0
    %2517 = vmatpush1.bf16.msra.mxu0 0
    %2518 = vmatprep.subr.bf16.mxu0 0
    %2519 = vmatpush1.bf16.msra.mxu0 0
    %2520 = vmatprep.mubr.bf16.mxu0 0
    %2521 = vmatmul.mubr.bf16.gmra.mrb[0].mxu0 %v2483
    %v2522 = vpop.f32.mrb[0].mxu0
    %v2523 = vadd.f32 0.0, %v2522
    %v2524 = vpop.f32.mrb[0].mxu0
    %v2525 = vpop.f32.mrb[0].mxu0
    %v2526 = vpop.f32.mrb[0].mxu0
    %2527 = vdwg.mxu0
    %v2529 = vsel %vm609, %v2205, 0
    %v2532 = vsel %vm1077, %v1741, 0
    %2534 = vmatprep.subr.bf16.mxu0 0
    %2535 = vmatpush1.bf16.msra.mxu0 %v2532
    %2536 = vmatprep.subr.bf16.mxu0 0
    %2537 = vmatpush1.bf16.msra.mxu0 0
    %2538 = vmatprep.subr.bf16.mxu0 0
    %2539 = vmatpush1.bf16.msra.mxu0 0
    %2540 = vmatprep.subr.bf16.mxu0 0
    %2541 = vmatpush1.bf16.msra.mxu0 0
    %2542 = vmatprep.subr.bf16.mxu0 0
    %2543 = vmatpush1.bf16.msra.mxu0 0
    %2544 = vmatprep.subr.bf16.mxu0 0
    %2545 = vmatpush1.bf16.msra.mxu0 0
    %2546 = vmatprep.subr.bf16.mxu0 0
    %2547 = vmatpush1.bf16.msra.mxu0 0
    %2548 = vmatprep.subr.bf16.mxu0 0
    %2549 = vmatpush1.bf16.msra.mxu0 0
    %2550 = vmatprep.subr.bf16.mxu0 0
    %2551 = vmatpush1.bf16.msra.mxu0 0
    %2552 = vmatprep.subr.bf16.mxu0 0
    %2553 = vmatpush1.bf16.msra.mxu0 0
    %2554 = vmatprep.subr.bf16.mxu0 0
    %2555 = vmatpush1.bf16.msra.mxu0 0
    %2556 = vmatprep.subr.bf16.mxu0 0
    %2557 = vmatpush1.bf16.msra.mxu0 0
    %2558 = vmatprep.subr.bf16.mxu0 0
    %2559 = vmatpush1.bf16.msra.mxu0 0
    %2560 = vmatprep.subr.bf16.mxu0 0
    %2561 = vmatpush1.bf16.msra.mxu0 0
    %2562 = vmatprep.subr.bf16.mxu0 0
    %2563 = vmatpush1.bf16.msra.mxu0 0
    %2564 = vmatprep.subr.bf16.mxu0 0
    %2565 = vmatpush1.bf16.msra.mxu0 0
    %2566 = vmatprep.mubr.bf16.mxu0 0
    %2567 = vmatmul.mubr.bf16.gmra.mrb[0].mxu0 %v2529
    %v2568 = vpop.f32.mrb[0].mxu0
    %v2569 = vadd.f32 0.0, %v2568
    %v2570 = vpop.f32.mrb[0].mxu0
    %v2571 = vpop.f32.mrb[0].mxu0
    %v2572 = vpop.f32.mrb[0].mxu0
    %2573 = vdwg.mxu0
    %v2574 = vpack.c.bf16 %v2293, %v2247
    %v2575 = vpack.c.bf16 %v2385, %v2339
    %v2576 = vpack.c.bf16 %v2477, %v2431
    %v2577 = vpack.c.bf16 %v2569, %v2523
    %s2578 = scalar_lea.vmem %s3, 4
    %v2579 = vld [vmem:[%s2578] sm:$0xf]
    %v2581 = vsel %vm609, %v2574, 0
    %v2584 = vsel %vm609, %v2575, 0
    %v2587 = vsel %vm609, %v2576, 0
    %v2590 = vsel %vm609, %v2577, 0
    %v2593 = vsel %vm1077, %v2579, 0
    %2595 = vmatprep.subr.bf16.mxu0 0
    %2596 = vmatpush1.bf16.msra.mxu0 %v2593
    %2597 = vmatprep.subr.bf16.mxu0 0
    %2598 = vmatpush1.bf16.msra.mxu0 0
    %2599 = vmatprep.subr.bf16.mxu0 0
    %2600 = vmatpush1.bf16.msra.mxu0 0
    %2601 = vmatprep.subr.bf16.mxu0 0
    %2602 = vmatpush1.bf16.msra.mxu0 0
    %2603 = vmatprep.subr.bf16.mxu0 0
    %2604 = vmatpush1.bf16.msra.mxu0 0
    %2605 = vmatprep.subr.bf16.mxu0 0
    %2606 = vmatpush1.bf16.msra.mxu0 0
    %2607 = vmatprep.subr.bf16.mxu0 0
    %2608 = vmatpush1.bf16.msra.mxu0 0
    %2609 = vmatprep.subr.bf16.mxu0 0
    %2610 = vmatpush1.bf16.msra.mxu0 0
    %2611 = vmatprep.subr.bf16.mxu0 0
    %2612 = vmatpush1.bf16.msra.mxu0 0
    %2613 = vmatprep.subr.bf16.mxu0 0
    %2614 = vmatpush1.bf16.msra.mxu0 0
    %2615 = vmatprep.subr.bf16.mxu0 0
    %2616 = vmatpush1.bf16.msra.mxu0 0
    %2617 = vmatprep.subr.bf16.mxu0 0
    %2618 = vmatpush1.bf16.msra.mxu0 0
    %2619 = vmatprep.subr.bf16.mxu0 0
    %2620 = vmatpush1.bf16.msra.mxu0 0
    %2621 = vmatprep.subr.bf16.mxu0 0
    %2622 = vmatpush1.bf16.msra.mxu0 0
    %2623 = vmatprep.subr.bf16.mxu0 0
    %2624 = vmatpush1.bf16.msra.mxu0 0
    %2625 = vmatprep.subr.bf16.mxu0 0
    %2626 = vmatpush1.bf16.msra.mxu0 0
    %2627 = vmatprep.mubr.bf16.mxu0 0
    %2628 = vmatmul.mubr.bf16.gmra.mrb[0].mxu0 %v2581
    %v2629 = vpop.f32.mrb[0].mxu0
    %v2630 = vadd.f32 0.0, %v2629
    %v2631 = vpop.f32.mrb[0].mxu0
    %v2632 = vpop.f32.mrb[0].mxu0
    %v2633 = vadd.f32 0.0, %v2632
    %v2634 = vpop.f32.mrb[0].mxu0
    %2635 = vmatprep.mubr.bf16.mxu0 0
    %2636 = vmatmul.mubr.bf16.gmra.mrb[0].mxu0 %v2584
    %v2637 = vpop.f32.mrb[0].mxu0
    %v2638 = vadd.f32 0.0, %v2637
    %v2639 = vpop.f32.mrb[0].mxu0
    %v2640 = vpop.f32.mrb[0].mxu0
    %v2641 = vadd.f32 0.0, %v2640
    %v2642 = vpop.f32.mrb[0].mxu0
    %2643 = vmatprep.mubr.bf16.mxu0 0
    %2644 = vmatmul.mubr.bf16.gmra.mrb[0].mxu0 %v2587
    %v2645 = vpop.f32.mrb[0].mxu0
    %v2646 = vadd.f32 0.0, %v2645
    %v2647 = vpop.f32.mrb[0].mxu0
    %v2648 = vpop.f32.mrb[0].mxu0
    %v2649 = vadd.f32 0.0, %v2648
    %v2650 = vpop.f32.mrb[0].mxu0
    %2651 = vmatprep.mubr.bf16.mxu0 0
    %2652 = vmatmul.mubr.bf16.gmra.mrb[0].mxu0 %v2590
    %v2653 = vpop.f32.mrb[0].mxu0
    %v2654 = vadd.f32 0.0, %v2653
    %v2655 = vpop.f32.mrb[0].mxu0
    %v2656 = vpop.f32.mrb[0].mxu0
    %v2657 = vadd.f32 0.0, %v2656
    %v2658 = vpop.f32.mrb[0].mxu0
    %2659 = vdwg.mxu0
    %v2661 = vsel %vm609, %v1443, 0
    %v2664 = vsel %vm609, %v1444, 0
    %v2667 = vsel %vm609, %v1445, 0
    %v2670 = vsel %vm609, %v1446, 0
    %v2673 = vsel %vm1077, %v1447, 0
    %2675 = vmatprep.subr.bf16.mxu0 0
    %2676 = vmatpush1.bf16.msra.mxu0 %v2673
    %2677 = vmatprep.subr.bf16.mxu0 0
    %2678 = vmatpush1.bf16.msra.mxu0 0
    %2679 = vmatprep.subr.bf16.mxu0 0
    %2680 = vmatpush1.bf16.msra.mxu0 0
    %2681 = vmatprep.subr.bf16.mxu0 0
    %2682 = vmatpush1.bf16.msra.mxu0 0
    %2683 = vmatprep.subr.bf16.mxu0 0
    %2684 = vmatpush1.bf16.msra.mxu0 0
    %2685 = vmatprep.subr.bf16.mxu0 0
    %2686 = vmatpush1.bf16.msra.mxu0 0
    %2687 = vmatprep.subr.bf16.mxu0 0
    %2688 = vmatpush1.bf16.msra.mxu0 0
    %2689 = vmatprep.subr.bf16.mxu0 0
    %2690 = vmatpush1.bf16.msra.mxu0 0
    %2691 = vmatprep.subr.bf16.mxu0 0
    %2692 = vmatpush1.bf16.msra.mxu0 0
    %2693 = vmatprep.subr.bf16.mxu0 0
    %2694 = vmatpush1.bf16.msra.mxu0 0
    %2695 = vmatprep.subr.bf16.mxu0 0
    %2696 = vmatpush1.bf16.msra.mxu0 0
    %2697 = vmatprep.subr.bf16.mxu0 0
    %2698 = vmatpush1.bf16.msra.mxu0 0
    %2699 = vmatprep.subr.bf16.mxu0 0
    %2700 = vmatpush1.bf16.msra.mxu0 0
    %2701 = vmatprep.subr.bf16.mxu0 0
    %2702 = vmatpush1.bf16.msra.mxu0 0
    %2703 = vmatprep.subr.bf16.mxu0 0
    %2704 = vmatpush1.bf16.msra.mxu0 0
    %2705 = vmatprep.subr.bf16.mxu0 0
    %2706 = vmatpush1.bf16.msra.mxu0 0
    %2707 = vmatprep.mubr.bf16.mxu0 0
    %2708 = vmatmul.mubr.bf16.gmra.mrb[0].mxu0 %v2661
    %v2709 = vpop.f32.mrb[0].mxu0
    %v2710 = vadd.f32 %v2630, %v2709
    %v2711 = vpop.f32.mrb[0].mxu0
    %v2712 = vpop.f32.mrb[0].mxu0
    %v2713 = vadd.f32 %v2633, %v2712
    %v2714 = vpop.f32.mrb[0].mxu0
    %2715 = vmatprep.mubr.bf16.mxu0 0
    %2716 = vmatmul.mubr.bf16.gmra.mrb[0].mxu0 %v2664
    %v2717 = vpop.f32.mrb[0].mxu0
    %v2718 = vadd.f32 %v2638, %v2717
    %v2719 = vpop.f32.mrb[0].mxu0
    %v2720 = vpop.f32.mrb[0].mxu0
    %v2721 = vadd.f32 %v2641, %v2720
    %v2722 = vpop.f32.mrb[0].mxu0
    %2723 = vmatprep.mubr.bf16.mxu0 0
    %2724 = vmatmul.mubr.bf16.gmra.mrb[0].mxu0 %v2667
    %v2725 = vpop.f32.mrb[0].mxu0
    %v2726 = vadd.f32 %v2646, %v2725
    %v2727 = vpop.f32.mrb[0].mxu0
    %v2728 = vpop.f32.mrb[0].mxu0
    %v2729 = vadd.f32 %v2649, %v2728
    %v2730 = vpop.f32.mrb[0].mxu0
    %2731 = vmatprep.mubr.bf16.mxu0 0
    %2732 = vmatmul.mubr.bf16.gmra.mrb[0].mxu0 %v2670
    %v2733 = vpop.f32.mrb[0].mxu0
    %v2734 = vadd.f32 %v2654, %v2733
    %v2735 = vpop.f32.mrb[0].mxu0
    %v2736 = vpop.f32.mrb[0].mxu0
    %v2737 = vadd.f32 %v2657, %v2736
    %v2738 = vpop.f32.mrb[0].mxu0
    %2739 = vdwg.mxu0
    %s2740 = scalar_lea.vmem %s1, 32
    %v2741 = vld [vmem:[%s2740] sm:$0xf]
    %v2742 = vld [vmem:[%s2740 + $0x4] sm:$0xf]
    %v2743 = vld [vmem:[%s2740 + $0x8] sm:$0xf]
    %v2744 = vld [vmem:[%s2740 + $0xc] sm:$0xf]
    %s2745 = scalar_lea.vmem %s2, 2
    %v2746 = vld [vmem:[%s2745] sm:$0x1]
    %v2748 = vlaneseq
    %v2749 = vshrl.u32 %v2748, 7
    %v2750 = vsub.s32 0, %v2749
    %v2751 = vrot.slane %v2746, %v2750
    %v2757 = vunpack.c.l.b16 %v2741
    %v2758 = vunpack.c.l.b16 %v2742
    %v2759 = vunpack.c.l.b16 %v2743
    %v2760 = vunpack.c.l.b16 %v2744
    %v2761 = vpack.c.b16 %v2758, %v2757
    %v2762 = vpack.c.b16 %v2760, %v2759
    %2765 = vmatprep.subr.bf16.mxu0 0
    %2766 = vmatpush1.bf16.msra.mxu0 %v2761
    %2767 = vmatprep.subr.bf16.mxu0 0
    %2768 = vmatpush1.bf16.msra.mxu0 %v2762
    %2769 = vmatprep.subr.bf16.mxu0 0
    %2770 = vmatpush1.bf16.msra.mxu0 0
    %2771 = vmatprep.subr.bf16.mxu0 0
    %2772 = vmatpush1.bf16.msra.mxu0 0
    %2773 = vmatprep.subr.bf16.mxu0 0
    %2774 = vmatpush1.bf16.msra.mxu0 0
    %2775 = vmatprep.subr.bf16.mxu0 0
    %2776 = vmatpush1.bf16.msra.mxu0 0
    %2777 = vmatprep.subr.bf16.mxu0 0
    %2778 = vmatpush1.bf16.msra.mxu0 0
    %2779 = vmatprep.subr.bf16.mxu0 0
    %2780 = vmatpush1.bf16.msra.mxu0 0
    %2781 = vmatprep.subr.bf16.mxu0 0
    %2782 = vmatpush1.bf16.msra.mxu0 0
    %2783 = vmatprep.subr.bf16.mxu0 0
    %2784 = vmatpush1.bf16.msra.mxu0 0
    %2785 = vmatprep.subr.bf16.mxu0 0
    %2786 = vmatpush1.bf16.msra.mxu0 0
    %2787 = vmatprep.subr.bf16.mxu0 0
    %2788 = vmatpush1.bf16.msra.mxu0 0
    %2789 = vmatprep.subr.bf16.mxu0 0
    %2790 = vmatpush1.bf16.msra.mxu0 0
    %2791 = vmatprep.subr.bf16.mxu0 0
    %2792 = vmatpush1.bf16.msra.mxu0 0
    %2793 = vmatprep.subr.bf16.mxu0 0
    %2794 = vmatpush1.bf16.msra.mxu0 0
    %2795 = vmatprep.subr.bf16.mxu0 0
    %2796 = vmatpush1.bf16.msra.mxu0 0
    %2797 = vmatprep.mubr.bf16.mxu0 0
    %2798 = vmatmul.mubr.bf16.gmra.mrb[0].mxu0 %v329
    %v2799 = vpop.f32.mrb[0].mxu0
    %v2800 = vadd.f32 %v2751, %v2799
    %v2801 = vpop.f32.mrb[0].mxu0
    %v2802 = vpop.f32.mrb[0].mxu0
    %v2803 = vadd.f32 %v2751, %v2802
    %v2804 = vpop.f32.mrb[0].mxu0
    %2805 = vmatprep.mubr.bf16.mxu0 0
    %2806 = vmatmul.mubr.bf16.gmra.mrb[0].mxu0 %v332
    %v2807 = vpop.f32.mrb[0].mxu0
    %v2808 = vadd.f32 %v2751, %v2807
    %v2809 = vpop.f32.mrb[0].mxu0
    %v2810 = vpop.f32.mrb[0].mxu0
    %v2811 = vadd.f32 %v2751, %v2810
    %v2812 = vpop.f32.mrb[0].mxu0
    %2813 = vmatprep.mubr.bf16.mxu0 0
    %2814 = vmatmul.mubr.bf16.gmra.mrb[0].mxu0 %v335
    %v2815 = vpop.f32.mrb[0].mxu0
    %v2816 = vadd.f32 %v2751, %v2815
    %v2817 = vpop.f32.mrb[0].mxu0
    %v2818 = vpop.f32.mrb[0].mxu0
    %v2819 = vadd.f32 %v2751, %v2818
    %v2820 = vpop.f32.mrb[0].mxu0
    %2821 = vmatprep.mubr.bf16.mxu0 0
    %2822 = vmatmul.mubr.bf16.gmra.mrb[0].mxu0 %v338
    %v2823 = vpop.f32.mrb[0].mxu0
    %v2824 = vadd.f32 %v2751, %v2823
    %v2825 = vpop.f32.mrb[0].mxu0
    %v2826 = vpop.f32.mrb[0].mxu0
    %v2827 = vadd.f32 %v2751, %v2826
    %v2828 = vpop.f32.mrb[0].mxu0
    %2829 = vdwg.mxu0
    %s2830 = scalar_lea.vmem %s1, 96
    %v2831 = vld [vmem:[%s2830] sm:$0xf]
    %v2832 = vld [vmem:[%s2830 + $0x4] sm:$0xf]
    %v2833 = vld [vmem:[%s2830 + $0x8] sm:$0xf]
    %v2834 = vld [vmem:[%s2830 + $0xc] sm:$0xf]
    %s2835 = scalar_lea.vmem %s2, 6
    %v2836 = vld [vmem:[%s2835] sm:$0x1]
    %v2838 = vlaneseq
    %v2839 = vshrl.u32 %v2838, 7
    %v2840 = vsub.s32 0, %v2839
    %v2841 = vrot.slane %v2836, %v2840
    %v2847 = vunpack.c.l.b16 %v2831
    %v2848 = vunpack.c.l.b16 %v2832
    %v2849 = vunpack.c.l.b16 %v2833
    %v2850 = vunpack.c.l.b16 %v2834
    %v2851 = vpack.c.b16 %v2848, %v2847
    %v2852 = vpack.c.b16 %v2850, %v2849
    %2855 = vmatprep.subr.bf16.mxu0 0
    %2856 = vmatpush1.bf16.msra.mxu0 %v2851
    %2857 = vmatprep.subr.bf16.mxu0 0
    %2858 = vmatpush1.bf16.msra.mxu0 %v2852
    %2859 = vmatprep.subr.bf16.mxu0 0
    %2860 = vmatpush1.bf16.msra.mxu0 0
    %2861 = vmatprep.subr.bf16.mxu0 0
    %2862 = vmatpush1.bf16.msra.mxu0 0
    %2863 = vmatprep.subr.bf16.mxu0 0
    %2864 = vmatpush1.bf16.msra.mxu0 0
    %2865 = vmatprep.subr.bf16.mxu0 0
    %2866 = vmatpush1.bf16.msra.mxu0 0
    %2867 = vmatprep.subr.bf16.mxu0 0
    %2868 = vmatpush1.bf16.msra.mxu0 0
    %2869 = vmatprep.subr.bf16.mxu0 0
    %2870 = vmatpush1.bf16.msra.mxu0 0
    %2871 = vmatprep.subr.bf16.mxu0 0
    %2872 = vmatpush1.bf16.msra.mxu0 0
    %2873 = vmatprep.subr.bf16.mxu0 0
    %2874 = vmatpush1.bf16.msra.mxu0 0
    %2875 = vmatprep.subr.bf16.mxu0 0
    %2876 = vmatpush1.bf16.msra.mxu0 0
    %2877 = vmatprep.subr.bf16.mxu0 0
    %2878 = vmatpush1.bf16.msra.mxu0 0
    %2879 = vmatprep.subr.bf16.mxu0 0
    %2880 = vmatpush1.bf16.msra.mxu0 0
    %2881 = vmatprep.subr.bf16.mxu0 0
    %2882 = vmatpush1.bf16.msra.mxu0 0
    %2883 = vmatprep.subr.bf16.mxu0 0
    %2884 = vmatpush1.bf16.msra.mxu0 0
    %2885 = vmatprep.subr.bf16.mxu0 0
    %2886 = vmatpush1.bf16.msra.mxu0 0
    %2887 = vmatprep.mubr.bf16.mxu0 0
    %2888 = vmatmul.mubr.bf16.gmra.mrb[0].mxu0 %v329
    %v2889 = vpop.f32.mrb[0].mxu0
    %v2890 = vadd.f32 %v2841, %v2889
    %v2891 = vpop.f32.mrb[0].mxu0
    %v2892 = vpop.f32.mrb[0].mxu0
    %v2893 = vadd.f32 %v2841, %v2892
    %v2894 = vpop.f32.mrb[0].mxu0
    %2895 = vmatprep.mubr.bf16.mxu0 0
    %2896 = vmatmul.mubr.bf16.gmra.mrb[0].mxu0 %v332
    %v2897 = vpop.f32.mrb[0].mxu0
    %v2898 = vadd.f32 %v2841, %v2897
    %v2899 = vpop.f32.mrb[0].mxu0
    %v2900 = vpop.f32.mrb[0].mxu0
    %v2901 = vadd.f32 %v2841, %v2900
    %v2902 = vpop.f32.mrb[0].mxu0
    %2903 = vmatprep.mubr.bf16.mxu0 0
    %2904 = vmatmul.mubr.bf16.gmra.mrb[0].mxu0 %v335
    %v2905 = vpop.f32.mrb[0].mxu0
    %v2906 = vadd.f32 %v2841, %v2905
    %v2907 = vpop.f32.mrb[0].mxu0
    %v2908 = vpop.f32.mrb[0].mxu0
    %v2909 = vadd.f32 %v2841, %v2908
    %v2910 = vpop.f32.mrb[0].mxu0
    %2911 = vmatprep.mubr.bf16.mxu0 0
    %2912 = vmatmul.mubr.bf16.gmra.mrb[0].mxu0 %v338
    %v2913 = vpop.f32.mrb[0].mxu0
    %v2914 = vadd.f32 %v2841, %v2913
    %v2915 = vpop.f32.mrb[0].mxu0
    %v2916 = vpop.f32.mrb[0].mxu0
    %v2917 = vadd.f32 %v2841, %v2916
    %v2918 = vpop.f32.mrb[0].mxu0
    %2919 = vdwg.mxu0
    %s2920 = scalar_lea.vmem %s1, 160
    %v2921 = vld [vmem:[%s2920] sm:$0xf]
    %v2922 = vld [vmem:[%s2920 + $0x4] sm:$0xf]
    %v2923 = vld [vmem:[%s2920 + $0x8] sm:$0xf]
    %v2924 = vld [vmem:[%s2920 + $0xc] sm:$0xf]
    %s2925 = scalar_lea.vmem %s2, 10
    %v2926 = vld [vmem:[%s2925] sm:$0x1]
    %v2928 = vlaneseq
    %v2929 = vshrl.u32 %v2928, 7
    %v2930 = vsub.s32 0, %v2929
    %v2931 = vrot.slane %v2926, %v2930
    %v2937 = vunpack.c.l.b16 %v2921
    %v2938 = vunpack.c.l.b16 %v2922
    %v2939 = vunpack.c.l.b16 %v2923
    %v2940 = vunpack.c.l.b16 %v2924
    %v2941 = vpack.c.b16 %v2938, %v2937
    %v2942 = vpack.c.b16 %v2940, %v2939
    %2945 = vmatprep.subr.bf16.mxu0 0
    %2946 = vmatpush1.bf16.msra.mxu0 %v2941
    %2947 = vmatprep.subr.bf16.mxu0 0
    %2948 = vmatpush1.bf16.msra.mxu0 %v2942
    %2949 = vmatprep.subr.bf16.mxu0 0
    %2950 = vmatpush1.bf16.msra.mxu0 0
    %2951 = vmatprep.subr.bf16.mxu0 0
    %2952 = vmatpush1.bf16.msra.mxu0 0
    %2953 = vmatprep.subr.bf16.mxu0 0
    %2954 = vmatpush1.bf16.msra.mxu0 0
    %2955 = vmatprep.subr.bf16.mxu0 0
    %2956 = vmatpush1.bf16.msra.mxu0 0
    %2957 = vmatprep.subr.bf16.mxu0 0
    %2958 = vmatpush1.bf16.msra.mxu0 0
    %2959 = vmatprep.subr.bf16.mxu0 0
    %2960 = vmatpush1.bf16.msra.mxu0 0
    %2961 = vmatprep.subr.bf16.mxu0 0
    %2962 = vmatpush1.bf16.msra.mxu0 0
    %2963 = vmatprep.subr.bf16.mxu0 0
    %2964 = vmatpush1.bf16.msra.mxu0 0
    %2965 = vmatprep.subr.bf16.mxu0 0
    %2966 = vmatpush1.bf16.msra.mxu0 0
    %2967 = vmatprep.subr.bf16.mxu0 0
    %2968 = vmatpush1.bf16.msra.mxu0 0
    %2969 = vmatprep.subr.bf16.mxu0 0
    %2970 = vmatpush1.bf16.msra.mxu0 0
    %2971 = vmatprep.subr.bf16.mxu0 0
    %2972 = vmatpush1.bf16.msra.mxu0 0
    %2973 = vmatprep.subr.bf16.mxu0 0
    %2974 = vmatpush1.bf16.msra.mxu0 0
    %2975 = vmatprep.subr.bf16.mxu0 0
    %2976 = vmatpush1.bf16.msra.mxu0 0
    %2977 = vmatprep.mubr.bf16.mxu0 0
    %2978 = vmatmul.mubr.bf16.gmra.mrb[0].mxu0 %v329
    %v2979 = vpop.f32.mrb[0].mxu0
    %v2980 = vadd.f32 %v2931, %v2979
    %v2981 = vpop.f32.mrb[0].mxu0
    %v2982 = vpop.f32.mrb[0].mxu0
    %v2983 = vadd.f32 %v2931, %v2982
    %v2984 = vpop.f32.mrb[0].mxu0
    %2985 = vmatprep.mubr.bf16.mxu0 0
    %2986 = vmatmul.mubr.bf16.gmra.mrb[0].mxu0 %v332
    %v2987 = vpop.f32.mrb[0].mxu0
    %v2988 = vadd.f32 %v2931, %v2987
    %v2989 = vpop.f32.mrb[0].mxu0
    %v2990 = vpop.f32.mrb[0].mxu0
    %v2991 = vadd.f32 %v2931, %v2990
    %v2992 = vpop.f32.mrb[0].mxu0
    %2993 = vmatprep.mubr.bf16.mxu0 0
    %2994 = vmatmul.mubr.bf16.gmra.mrb[0].mxu0 %v335
    %v2995 = vpop.f32.mrb[0].mxu0
    %v2996 = vadd.f32 %v2931, %v2995
    %v2997 = vpop.f32.mrb[0].mxu0
    %v2998 = vpop.f32.mrb[0].mxu0
    %v2999 = vadd.f32 %v2931, %v2998
    %v3000 = vpop.f32.mrb[0].mxu0
    %3001 = vmatprep.mubr.bf16.mxu0 0
    %3002 = vmatmul.mubr.bf16.gmra.mrb[0].mxu0 %v338
    %v3003 = vpop.f32.mrb[0].mxu0
    %v3004 = vadd.f32 %v2931, %v3003
    %v3005 = vpop.f32.mrb[0].mxu0
    %v3006 = vpop.f32.mrb[0].mxu0
    %v3007 = vadd.f32 %v2931, %v3006
    %v3008 = vpop.f32.mrb[0].mxu0
    %3009 = vdwg.mxu0
    %v3010 = vpack.c.bf16 %v2800, %v2800
    %v3011 = vpack.c.bf16 %v2803, %v2803
    %v3012 = vpack.c.bf16 %v2808, %v2808
    %v3013 = vpack.c.bf16 %v2811, %v2811
    %v3014 = vpack.c.bf16 %v2816, %v2816
    %v3015 = vpack.c.bf16 %v2819, %v2819
    %v3016 = vpack.c.bf16 %v2824, %v2824
    %v3017 = vpack.c.bf16 %v2827, %v2827
    %v3018 = vpack.c.bf16 %v2890, %v2890
    %v3019 = vpack.c.bf16 %v2893, %v2893
    %v3020 = vpack.c.bf16 %v2898, %v2898
    %v3021 = vpack.c.bf16 %v2901, %v2901
    %v3022 = vpack.c.bf16 %v2906, %v2906
    %v3023 = vpack.c.bf16 %v2909, %v2909
    %v3024 = vpack.c.bf16 %v2914, %v2914
    %v3025 = vpack.c.bf16 %v2917, %v2917
    %v3026 = vpack.c.bf16 %v2980, %v2980
    %v3027 = vpack.c.bf16 %v2983, %v2983
    %v3028 = vpack.c.bf16 %v2988, %v2988
    %v3029 = vpack.c.bf16 %v2991, %v2991
    %v3030 = vpack.c.bf16 %v2996, %v2996
    %v3031 = vpack.c.bf16 %v2999, %v2999
    %v3032 = vpack.c.bf16 %v3004, %v3004
    %v3033 = vpack.c.bf16 %v3007, %v3007
    %v3035 = vsel %vm609, %v3010, 0
    %v3038 = vsel %vm609, %v3018, 0
    %3040 = vmatprep.subr.bf16.mxu0 0
    %3041 = vmatpush1.bf16.xpose.msra.mxu0 %v3038
    %3042 = vmatprep.subr.bf16.mxu0 0
    %3043 = vmatpush1.bf16.xpose.msra.mxu0 0
    %3044 = vmatprep.subr.bf16.mxu0 0
    %3045 = vmatpush1.bf16.xpose.msra.mxu0 0
    %3046 = vmatprep.subr.bf16.mxu0 0
    %3047 = vmatpush1.bf16.xpose.msra.mxu0 0
    %3048 = vmatprep.subr.bf16.mxu0 0
    %3049 = vmatpush1.bf16.xpose.msra.mxu0 0
    %3050 = vmatprep.subr.bf16.mxu0 0
    %3051 = vmatpush1.bf16.xpose.msra.mxu0 0
    %3052 = vmatprep.subr.bf16.mxu0 0
    %3053 = vmatpush1.bf16.xpose.msra.mxu0 0
    %3054 = vmatprep.subr.bf16.mxu0 0
    %3055 = vmatpush1.bf16.xpose.msra.mxu0 0
    %3056 = vmatprep.subr.bf16.mxu0 0
    %3057 = vmatpush1.bf16.xpose.msra.mxu0 0
    %3058 = vmatprep.subr.bf16.mxu0 0
    %3059 = vmatpush1.bf16.xpose.msra.mxu0 0
    %3060 = vmatprep.subr.bf16.mxu0 0
    %3061 = vmatpush1.bf16.xpose.msra.mxu0 0
    %3062 = vmatprep.subr.bf16.mxu0 0
    %3063 = vmatpush1.bf16.xpose.msra.mxu0 0
    %3064 = vmatprep.subr.bf16.mxu0 0
    %3065 = vmatpush1.bf16.xpose.msra.mxu0 0
    %3066 = vmatprep.subr.bf16.mxu0 0
    %3067 = vmatpush1.bf16.xpose.msra.mxu0 0
    %3068 = vmatprep.subr.bf16.mxu0 0
    %3069 = vmatpush1.bf16.xpose.msra.mxu0 0
    %3070 = vmatprep.subr.bf16.mxu0 0
    %3071 = vmatpush1.bf16.xpose.msra.mxu0 0
    %3072 = vmatprep.mubr.bf16.mxu0 0
    %3073 = vmatmul.mubr.bf16.gmra.mrb[0].mxu0 %v3035
    %v3074 = vpop.f32.mrb[0].mxu0
    %v3075 = vadd.f32 0.0, %v3074
    %v3076 = vpop.f32.mrb[0].mxu0
    %v3077 = vpop.f32.mrb[0].mxu0
    %v3078 = vpop.f32.mrb[0].mxu0
    %3079 = vdwg.mxu0
    %v3081 = vsel %vm609, %v3011, 0
    %v3084 = vsel %vm609, %v3019, 0
    %3086 = vmatprep.subr.bf16.mxu0 0
    %3087 = vmatpush1.bf16.xpose.msra.mxu0 %v3084
    %3088 = vmatprep.subr.bf16.mxu0 0
    %3089 = vmatpush1.bf16.xpose.msra.mxu0 0
    %3090 = vmatprep.subr.bf16.mxu0 0
    %3091 = vmatpush1.bf16.xpose.msra.mxu0 0
    %3092 = vmatprep.subr.bf16.mxu0 0
    %3093 = vmatpush1.bf16.xpose.msra.mxu0 0
    %3094 = vmatprep.subr.bf16.mxu0 0
    %3095 = vmatpush1.bf16.xpose.msra.mxu0 0
    %3096 = vmatprep.subr.bf16.mxu0 0
    %3097 = vmatpush1.bf16.xpose.msra.mxu0 0
    %3098 = vmatprep.subr.bf16.mxu0 0
    %3099 = vmatpush1.bf16.xpose.msra.mxu0 0
    %3100 = vmatprep.subr.bf16.mxu0 0
    %3101 = vmatpush1.bf16.xpose.msra.mxu0 0
    %3102 = vmatprep.subr.bf16.mxu0 0
    %3103 = vmatpush1.bf16.xpose.msra.mxu0 0
    %3104 = vmatprep.subr.bf16.mxu0 0
    %3105 = vmatpush1.bf16.xpose.msra.mxu0 0
    %3106 = vmatprep.subr.bf16.mxu0 0
    %3107 = vmatpush1.bf16.xpose.msra.mxu0 0
    %3108 = vmatprep.subr.bf16.mxu0 0
    %3109 = vmatpush1.bf16.xpose.msra.mxu0 0
    %3110 = vmatprep.subr.bf16.mxu0 0
    %3111 = vmatpush1.bf16.xpose.msra.mxu0 0
    %3112 = vmatprep.subr.bf16.mxu0 0
    %3113 = vmatpush1.bf16.xpose.msra.mxu0 0
    %3114 = vmatprep.subr.bf16.mxu0 0
    %3115 = vmatpush1.bf16.xpose.msra.mxu0 0
    %3116 = vmatprep.subr.bf16.mxu0 0
    %3117 = vmatpush1.bf16.xpose.msra.mxu0 0
    %3118 = vmatprep.mubr.bf16.mxu0 0
    %3119 = vmatmul.mubr.bf16.gmra.mrb[0].mxu0 %v3081
    %v3120 = vpop.f32.mrb[0].mxu0
    %v3121 = vadd.f32 0.0, %v3120
    %v3122 = vpop.f32.mrb[0].mxu0
    %v3123 = vpop.f32.mrb[0].mxu0
    %v3124 = vpop.f32.mrb[0].mxu0
    %3125 = vdwg.mxu0
    %v3127 = vsel %vm609, %v3012, 0
    %v3130 = vsel %vm609, %v3020, 0
    %3132 = vmatprep.subr.bf16.mxu0 0
    %3133 = vmatpush1.bf16.xpose.msra.mxu0 %v3130
    %3134 = vmatprep.subr.bf16.mxu0 0
    %3135 = vmatpush1.bf16.xpose.msra.mxu0 0
    %3136 = vmatprep.subr.bf16.mxu0 0
    %3137 = vmatpush1.bf16.xpose.msra.mxu0 0
    %3138 = vmatprep.subr.bf16.mxu0 0
    %3139 = vmatpush1.bf16.xpose.msra.mxu0 0
    %3140 = vmatprep.subr.bf16.mxu0 0
    %3141 = vmatpush1.bf16.xpose.msra.mxu0 0
    %3142 = vmatprep.subr.bf16.mxu0 0
    %3143 = vmatpush1.bf16.xpose.msra.mxu0 0
    %3144 = vmatprep.subr.bf16.mxu0 0
    %3145 = vmatpush1.bf16.xpose.msra.mxu0 0
    %3146 = vmatprep.subr.bf16.mxu0 0
    %3147 = vmatpush1.bf16.xpose.msra.mxu0 0
    %3148 = vmatprep.subr.bf16.mxu0 0
    %3149 = vmatpush1.bf16.xpose.msra.mxu0 0
    %3150 = vmatprep.subr.bf16.mxu0 0
    %3151 = vmatpush1.bf16.xpose.msra.mxu0 0
    %3152 = vmatprep.subr.bf16.mxu0 0
    %3153 = vmatpush1.bf16.xpose.msra.mxu0 0
    %3154 = vmatprep.subr.bf16.mxu0 0
    %3155 = vmatpush1.bf16.xpose.msra.mxu0 0
    %3156 = vmatprep.subr.bf16.mxu0 0
    %3157 = vmatpush1.bf16.xpose.msra.mxu0 0
    %3158 = vmatprep.subr.bf16.mxu0 0
    %3159 = vmatpush1.bf16.xpose.msra.mxu0 0
    %3160 = vmatprep.subr.bf16.mxu0 0
    %3161 = vmatpush1.bf16.xpose.msra.mxu0 0
    %3162 = vmatprep.subr.bf16.mxu0 0
    %3163 = vmatpush1.bf16.xpose.msra.mxu0 0
    %3164 = vmatprep.mubr.bf16.mxu0 0
    %3165 = vmatmul.mubr.bf16.gmra.mrb[0].mxu0 %v3127
    %v3166 = vpop.f32.mrb[0].mxu0
    %v3167 = vadd.f32 0.0, %v3166
    %v3168 = vpop.f32.mrb[0].mxu0
    %v3169 = vpop.f32.mrb[0].mxu0
    %v3170 = vpop.f32.mrb[0].mxu0
    %3171 = vdwg.mxu0
    %v3173 = vsel %vm609, %v3013, 0
    %v3176 = vsel %vm609, %v3021, 0
    %3178 = vmatprep.subr.bf16.mxu0 0
    %3179 = vmatpush1.bf16.xpose.msra.mxu0 %v3176
    %3180 = vmatprep.subr.bf16.mxu0 0
    %3181 = vmatpush1.bf16.xpose.msra.mxu0 0
    %3182 = vmatprep.subr.bf16.mxu0 0
    %3183 = vmatpush1.bf16.xpose.msra.mxu0 0
    %3184 = vmatprep.subr.bf16.mxu0 0
    %3185 = vmatpush1.bf16.xpose.msra.mxu0 0
    %3186 = vmatprep.subr.bf16.mxu0 0
    %3187 = vmatpush1.bf16.xpose.msra.mxu0 0
    %3188 = vmatprep.subr.bf16.mxu0 0
    %3189 = vmatpush1.bf16.xpose.msra.mxu0 0
    %3190 = vmatprep.subr.bf16.mxu0 0
    %3191 = vmatpush1.bf16.xpose.msra.mxu0 0
    %3192 = vmatprep.subr.bf16.mxu0 0
    %3193 = vmatpush1.bf16.xpose.msra.mxu0 0
    %3194 = vmatprep.subr.bf16.mxu0 0
    %3195 = vmatpush1.bf16.xpose.msra.mxu0 0
    %3196 = vmatprep.subr.bf16.mxu0 0
    %3197 = vmatpush1.bf16.xpose.msra.mxu0 0
    %3198 = vmatprep.subr.bf16.mxu0 0
    %3199 = vmatpush1.bf16.xpose.msra.mxu0 0
    %3200 = vmatprep.subr.bf16.mxu0 0
    %3201 = vmatpush1.bf16.xpose.msra.mxu0 0
    %3202 = vmatprep.subr.bf16.mxu0 0
    %3203 = vmatpush1.bf16.xpose.msra.mxu0 0
    %3204 = vmatprep.subr.bf16.mxu0 0
    %3205 = vmatpush1.bf16.xpose.msra.mxu0 0
    %3206 = vmatprep.subr.bf16.mxu0 0
    %3207 = vmatpush1.bf16.xpose.msra.mxu0 0
    %3208 = vmatprep.subr.bf16.mxu0 0
    %3209 = vmatpush1.bf16.xpose.msra.mxu0 0
    %3210 = vmatprep.mubr.bf16.mxu0 0
    %3211 = vmatmul.mubr.bf16.gmra.mrb[0].mxu0 %v3173
    %v3212 = vpop.f32.mrb[0].mxu0
    %v3213 = vadd.f32 0.0, %v3212
    %v3214 = vpop.f32.mrb[0].mxu0
    %v3215 = vpop.f32.mrb[0].mxu0
    %v3216 = vpop.f32.mrb[0].mxu0
    %3217 = vdwg.mxu0
    %v3219 = vsel %vm609, %v3014, 0
    %v3222 = vsel %vm609, %v3022, 0
    %3224 = vmatprep.subr.bf16.mxu0 0
    %3225 = vmatpush1.bf16.xpose.msra.mxu0 %v3222
    %3226 = vmatprep.subr.bf16.mxu0 0
    %3227 = vmatpush1.bf16.xpose.msra.mxu0 0
    %3228 = vmatprep.subr.bf16.mxu0 0
    %3229 = vmatpush1.bf16.xpose.msra.mxu0 0
    %3230 = vmatprep.subr.bf16.mxu0 0
    %3231 = vmatpush1.bf16.xpose.msra.mxu0 0
    %3232 = vmatprep.subr.bf16.mxu0 0
    %3233 = vmatpush1.bf16.xpose.msra.mxu0 0
    %3234 = vmatprep.subr.bf16.mxu0 0
    %3235 = vmatpush1.bf16.xpose.msra.mxu0 0
    %3236 = vmatprep.subr.bf16.mxu0 0
    %3237 = vmatpush1.bf16.xpose.msra.mxu0 0
    %3238 = vmatprep.subr.bf16.mxu0 0
    %3239 = vmatpush1.bf16.xpose.msra.mxu0 0
    %3240 = vmatprep.subr.bf16.mxu0 0
    %3241 = vmatpush1.bf16.xpose.msra.mxu0 0
    %3242 = vmatprep.subr.bf16.mxu0 0
    %3243 = vmatpush1.bf16.xpose.msra.mxu0 0
    %3244 = vmatprep.subr.bf16.mxu0 0
    %3245 = vmatpush1.bf16.xpose.msra.mxu0 0
    %3246 = vmatprep.subr.bf16.mxu0 0
    %3247 = vmatpush1.bf16.xpose.msra.mxu0 0
    %3248 = vmatprep.subr.bf16.mxu0 0
    %3249 = vmatpush1.bf16.xpose.msra.mxu0 0
    %3250 = vmatprep.subr.bf16.mxu0 0
    %3251 = vmatpush1.bf16.xpose.msra.mxu0 0
    %3252 = vmatprep.subr.bf16.mxu0 0
    %3253 = vmatpush1.bf16.xpose.msra.mxu0 0
    %3254 = vmatprep.subr.bf16.mxu0 0
    %3255 = vmatpush1.bf16.xpose.msra.mxu0 0
    %3256 = vmatprep.mubr.bf16.mxu0 0
    %3257 = vmatmul.mubr.bf16.gmra.mrb[0].mxu0 %v3219
    %v3258 = vpop.f32.mrb[0].mxu0
    %v3259 = vadd.f32 0.0, %v3258
    %v3260 = vpop.f32.mrb[0].mxu0
    %v3261 = vpop.f32.mrb[0].mxu0
    %v3262 = vpop.f32.mrb[0].mxu0
    %3263 = vdwg.mxu0
    %v3265 = vsel %vm609, %v3015, 0
    %v3268 = vsel %vm609, %v3023, 0
    %3270 = vmatprep.subr.bf16.mxu0 0
    %3271 = vmatpush1.bf16.xpose.msra.mxu0 %v3268
    %3272 = vmatprep.subr.bf16.mxu0 0
    %3273 = vmatpush1.bf16.xpose.msra.mxu0 0
    %3274 = vmatprep.subr.bf16.mxu0 0
    %3275 = vmatpush1.bf16.xpose.msra.mxu0 0
    %3276 = vmatprep.subr.bf16.mxu0 0
    %3277 = vmatpush1.bf16.xpose.msra.mxu0 0
    %3278 = vmatprep.subr.bf16.mxu0 0
    %3279 = vmatpush1.bf16.xpose.msra.mxu0 0
    %3280 = vmatprep.subr.bf16.mxu0 0
    %3281 = vmatpush1.bf16.xpose.msra.mxu0 0
    %3282 = vmatprep.subr.bf16.mxu0 0
    %3283 = vmatpush1.bf16.xpose.msra.mxu0 0
    %3284 = vmatprep.subr.bf16.mxu0 0
    %3285 = vmatpush1.bf16.xpose.msra.mxu0 0
    %3286 = vmatprep.subr.bf16.mxu0 0
    %3287 = vmatpush1.bf16.xpose.msra.mxu0 0
    %3288 = vmatprep.subr.bf16.mxu0 0
    %3289 = vmatpush1.bf16.xpose.msra.mxu0 0
    %3290 = vmatprep.subr.bf16.mxu0 0
    %3291 = vmatpush1.bf16.xpose.msra.mxu0 0
    %3292 = vmatprep.subr.bf16.mxu0 0
    %3293 = vmatpush1.bf16.xpose.msra.mxu0 0
    %3294 = vmatprep.subr.bf16.mxu0 0
    %3295 = vmatpush1.bf16.xpose.msra.mxu0 0
    %3296 = vmatprep.subr.bf16.mxu0 0
    %3297 = vmatpush1.bf16.xpose.msra.mxu0 0
    %3298 = vmatprep.subr.bf16.mxu0 0
    %3299 = vmatpush1.bf16.xpose.msra.mxu0 0
    %3300 = vmatprep.subr.bf16.mxu0 0
    %3301 = vmatpush1.bf16.xpose.msra.mxu0 0
    %3302 = vmatprep.mubr.bf16.mxu0 0
    %3303 = vmatmul.mubr.bf16.gmra.mrb[0].mxu0 %v3265
    %v3304 = vpop.f32.mrb[0].mxu0
    %v3305 = vadd.f32 0.0, %v3304
    %v3306 = vpop.f32.mrb[0].mxu0
    %v3307 = vpop.f32.mrb[0].mxu0
    %v3308 = vpop.f32.mrb[0].mxu0
    %3309 = vdwg.mxu0
    %v3311 = vsel %vm609, %v3016, 0
    %v3314 = vsel %vm609, %v3024, 0
    %3316 = vmatprep.subr.bf16.mxu0 0
    %3317 = vmatpush1.bf16.xpose.msra.mxu0 %v3314
    %3318 = vmatprep.subr.bf16.mxu0 0
    %3319 = vmatpush1.bf16.xpose.msra.mxu0 0
    %3320 = vmatprep.subr.bf16.mxu0 0
    %3321 = vmatpush1.bf16.xpose.msra.mxu0 0
    %3322 = vmatprep.subr.bf16.mxu0 0
    %3323 = vmatpush1.bf16.xpose.msra.mxu0 0
    %3324 = vmatprep.subr.bf16.mxu0 0
    %3325 = vmatpush1.bf16.xpose.msra.mxu0 0
    %3326 = vmatprep.subr.bf16.mxu0 0
    %3327 = vmatpush1.bf16.xpose.msra.mxu0 0
    %3328 = vmatprep.subr.bf16.mxu0 0
    %3329 = vmatpush1.bf16.xpose.msra.mxu0 0
    %3330 = vmatprep.subr.bf16.mxu0 0
    %3331 = vmatpush1.bf16.xpose.msra.mxu0 0
    %3332 = vmatprep.subr.bf16.mxu0 0
    %3333 = vmatpush1.bf16.xpose.msra.mxu0 0
    %3334 = vmatprep.subr.bf16.mxu0 0
    %3335 = vmatpush1.bf16.xpose.msra.mxu0 0
    %3336 = vmatprep.subr.bf16.mxu0 0
    %3337 = vmatpush1.bf16.xpose.msra.mxu0 0
    %3338 = vmatprep.subr.bf16.mxu0 0
    %3339 = vmatpush1.bf16.xpose.msra.mxu0 0
    %3340 = vmatprep.subr.bf16.mxu0 0
    %3341 = vmatpush1.bf16.xpose.msra.mxu0 0
    %3342 = vmatprep.subr.bf16.mxu0 0
    %3343 = vmatpush1.bf16.xpose.msra.mxu0 0
    %3344 = vmatprep.subr.bf16.mxu0 0
    %3345 = vmatpush1.bf16.xpose.msra.mxu0 0
    %3346 = vmatprep.subr.bf16.mxu0 0
    %3347 = vmatpush1.bf16.xpose.msra.mxu0 0
    %3348 = vmatprep.mubr.bf16.mxu0 0
    %3349 = vmatmul.mubr.bf16.gmra.mrb[0].mxu0 %v3311
    %v3350 = vpop.f32.mrb[0].mxu0
    %v3351 = vadd.f32 0.0, %v3350
    %v3352 = vpop.f32.mrb[0].mxu0
    %v3353 = vpop.f32.mrb[0].mxu0
    %v3354 = vpop.f32.mrb[0].mxu0
    %3355 = vdwg.mxu0
    %v3357 = vsel %vm609, %v3017, 0
    %v3360 = vsel %vm609, %v3025, 0
    %3362 = vmatprep.subr.bf16.mxu0 0
    %3363 = vmatpush1.bf16.xpose.msra.mxu0 %v3360
    %3364 = vmatprep.subr.bf16.mxu0 0
    %3365 = vmatpush1.bf16.xpose.msra.mxu0 0
    %3366 = vmatprep.subr.bf16.mxu0 0
    %3367 = vmatpush1.bf16.xpose.msra.mxu0 0
    %3368 = vmatprep.subr.bf16.mxu0 0
    %3369 = vmatpush1.bf16.xpose.msra.mxu0 0
    %3370 = vmatprep.subr.bf16.mxu0 0
    %3371 = vmatpush1.bf16.xpose.msra.mxu0 0
    %3372 = vmatprep.subr.bf16.mxu0 0
    %3373 = vmatpush1.bf16.xpose.msra.mxu0 0
    %3374 = vmatprep.subr.bf16.mxu0 0
    %3375 = vmatpush1.bf16.xpose.msra.mxu0 0
    %3376 = vmatprep.subr.bf16.mxu0 0
    %3377 = vmatpush1.bf16.xpose.msra.mxu0 0
    %3378 = vmatprep.subr.bf16.mxu0 0
    %3379 = vmatpush1.bf16.xpose.msra.mxu0 0
    %3380 = vmatprep.subr.bf16.mxu0 0
    %3381 = vmatpush1.bf16.xpose.msra.mxu0 0
    %3382 = vmatprep.subr.bf16.mxu0 0
    %3383 = vmatpush1.bf16.xpose.msra.mxu0 0
    %3384 = vmatprep.subr.bf16.mxu0 0
    %3385 = vmatpush1.bf16.xpose.msra.mxu0 0
    %3386 = vmatprep.subr.bf16.mxu0 0
    %3387 = vmatpush1.bf16.xpose.msra.mxu0 0
    %3388 = vmatprep.subr.bf16.mxu0 0
    %3389 = vmatpush1.bf16.xpose.msra.mxu0 0
    %3390 = vmatprep.subr.bf16.mxu0 0
    %3391 = vmatpush1.bf16.xpose.msra.mxu0 0
    %3392 = vmatprep.subr.bf16.mxu0 0
    %3393 = vmatpush1.bf16.xpose.msra.mxu0 0
    %3394 = vmatprep.mubr.bf16.mxu0 0
    %3395 = vmatmul.mubr.bf16.gmra.mrb[0].mxu0 %v3357
    %v3396 = vpop.f32.mrb[0].mxu0
    %v3397 = vadd.f32 0.0, %v3396
    %v3398 = vpop.f32.mrb[0].mxu0
    %v3399 = vpop.f32.mrb[0].mxu0
    %v3400 = vpop.f32.mrb[0].mxu0
    %3401 = vdwg.mxu0
    %v3402 = vsel %vm609, %v3075, -inf
    %3403 = vmax.xlane.f32.xlu0 %v3402
    %v3404 = vpop.xlane.xlu0 %3403
    %v3405 = vsel %vm609, %v3121, -inf
    %3406 = vmax.xlane.f32.xlu0 %v3405
    %v3407 = vpop.xlane.xlu0 %3406
    %v3408 = vsel %vm609, %v3167, -inf
    %3409 = vmax.xlane.f32.xlu0 %v3408
    %v3410 = vpop.xlane.xlu0 %3409
    %v3411 = vsel %vm609, %v3213, -inf
    %3412 = vmax.xlane.f32.xlu0 %v3411
    %v3413 = vpop.xlane.xlu0 %3412
    %v3414 = vsel %vm609, %v3259, -inf
    %3415 = vmax.xlane.f32.xlu0 %v3414
    %v3416 = vpop.xlane.xlu0 %3415
    %v3417 = vsel %vm609, %v3305, -inf
    %3418 = vmax.xlane.f32.xlu0 %v3417
    %v3419 = vpop.xlane.xlu0 %3418
    %v3420 = vsel %vm609, %v3351, -inf
    %3421 = vmax.xlane.f32.xlu0 %v3420
    %v3422 = vpop.xlane.xlu0 %3421
    %v3423 = vsel %vm609, %v3397, -inf
    %3424 = vmax.xlane.f32.xlu0 %v3423
    %v3425 = vpop.xlane.xlu0 %3424
    %v3426 = vsub.f32 %v3075, %v3404
    %v3427 = vsub.f32 %v3121, %v3407
    %v3428 = vsub.f32 %v3167, %v3410
    %v3429 = vsub.f32 %v3213, %v3413
    %v3430 = vsub.f32 %v3259, %v3416
    %v3431 = vsub.f32 %v3305, %v3419
    %v3432 = vsub.f32 %v3351, %v3422
    %v3433 = vsub.f32 %v3397, %v3425
    %v3434 = vmul.f32 %v3426, 1.442695
    %v3435 = vpow.pop %v3434
    %v3436 = vmul.f32 %v3427, 1.442695
    %v3437 = vpow.pop %v3436
    %v3438 = vmul.f32 %v3428, 1.442695
    %v3439 = vpow.pop %v3438
    %v3440 = vmul.f32 %v3429, 1.442695
    %v3441 = vpow.pop %v3440
    %v3442 = vmul.f32 %v3430, 1.442695
    %v3443 = vpow.pop %v3442
    %v3444 = vmul.f32 %v3431, 1.442695
    %v3445 = vpow.pop %v3444
    %v3446 = vmul.f32 %v3432, 1.442695
    %v3447 = vpow.pop %v3446
    %v3448 = vmul.f32 %v3433, 1.442695
    %v3449 = vpow.pop %v3448
    %v3450 = vsel %vm609, %v3435, 0.0
    %3451 = vadd.xlane.f32.xlu0 %v3450
    %v3452 = vpop.xlane.xlu0 %3451
    %v3453 = vsel %vm609, %v3437, 0.0
    %3454 = vadd.xlane.f32.xlu0 %v3453
    %v3455 = vpop.xlane.xlu0 %3454
    %v3456 = vsel %vm609, %v3439, 0.0
    %3457 = vadd.xlane.f32.xlu0 %v3456
    %v3458 = vpop.xlane.xlu0 %3457
    %v3459 = vsel %vm609, %v3441, 0.0
    %3460 = vadd.xlane.f32.xlu0 %v3459
    %v3461 = vpop.xlane.xlu0 %3460
    %v3462 = vsel %vm609, %v3443, 0.0
    %3463 = vadd.xlane.f32.xlu0 %v3462
    %v3464 = vpop.xlane.xlu0 %3463
    %v3465 = vsel %vm609, %v3445, 0.0
    %3466 = vadd.xlane.f32.xlu0 %v3465
    %v3467 = vpop.xlane.xlu0 %3466
    %v3468 = vsel %vm609, %v3447, 0.0
    %3469 = vadd.xlane.f32.xlu0 %v3468
    %v3470 = vpop.xlane.xlu0 %3469
    %v3471 = vsel %vm609, %v3449, 0.0
    %3472 = vadd.xlane.f32.xlu0 %v3471
    %v3473 = vpop.xlane.xlu0 %3472
    %v3474 = vrcp.pop %v3452
    %v3475 = vrcp.pop %v3455
    %v3476 = vrcp.pop %v3458
    %v3477 = vrcp.pop %v3461
    %v3478 = vrcp.pop %v3464
    %v3479 = vrcp.pop %v3467
    %v3480 = vrcp.pop %v3470
    %v3481 = vrcp.pop %v3473
    %v3482 = vmul.f32 %v3435, %v3474
    %v3483 = vmul.f32 %v3437, %v3475
    %v3484 = vmul.f32 %v3439, %v3476
    %v3485 = vmul.f32 %v3441, %v3477
    %v3486 = vmul.f32 %v3443, %v3478
    %v3487 = vmul.f32 %v3445, %v3479
    %v3488 = vmul.f32 %v3447, %v3480
    %v3489 = vmul.f32 %v3449, %v3481
    %v3490 = vpack.c.bf16 %v3482, %v3482
    %v3491 = vpack.c.bf16 %v3483, %v3483
    %v3492 = vpack.c.bf16 %v3484, %v3484
    %v3493 = vpack.c.bf16 %v3485, %v3485
    %v3494 = vpack.c.bf16 %v3486, %v3486
    %v3495 = vpack.c.bf16 %v3487, %v3487
    %v3496 = vpack.c.bf16 %v3488, %v3488
    %v3497 = vpack.c.bf16 %v3489, %v3489
    %v3499 = vsel %vm609, %v3490, 0
    %v3502 = vsel %vm1077, %v3026, 0
    %3504 = vmatprep.subr.bf16.mxu0 0
    %3505 = vmatpush1.bf16.msra.mxu0 %v3502
    %3506 = vmatprep.subr.bf16.mxu0 0
    %3507 = vmatpush1.bf16.msra.mxu0 0
    %3508 = vmatprep.subr.bf16.mxu0 0
    %3509 = vmatpush1.bf16.msra.mxu0 0
    %3510 = vmatprep.subr.bf16.mxu0 0
    %3511 = vmatpush1.bf16.msra.mxu0 0
    %3512 = vmatprep.subr.bf16.mxu0 0
    %3513 = vmatpush1.bf16.msra.mxu0 0
    %3514 = vmatprep.subr.bf16.mxu0 0
    %3515 = vmatpush1.bf16.msra.mxu0 0
    %3516 = vmatprep.subr.bf16.mxu0 0
    %3517 = vmatpush1.bf16.msra.mxu0 0
    %3518 = vmatprep.subr.bf16.mxu0 0
    %3519 = vmatpush1.bf16.msra.mxu0 0
    %3520 = vmatprep.subr.bf16.mxu0 0
    %3521 = vmatpush1.bf16.msra.mxu0 0
    %3522 = vmatprep.subr.bf16.mxu0 0
    %3523 = vmatpush1.bf16.msra.mxu0 0
    %3524 = vmatprep.subr.bf16.mxu0 0
    %3525 = vmatpush1.bf16.msra.mxu0 0
    %3526 = vmatprep.subr.bf16.mxu0 0
    %3527 = vmatpush1.bf16.msra.mxu0 0
    %3528 = vmatprep.subr.bf16.mxu0 0
    %3529 = vmatpush1.bf16.msra.mxu0 0
    %3530 = vmatprep.subr.bf16.mxu0 0
    %3531 = vmatpush1.bf16.msra.mxu0 0
    %3532 = vmatprep.subr.bf16.mxu0 0
    %3533 = vmatpush1.bf16.msra.mxu0 0
    %3534 = vmatprep.subr.bf16.mxu0 0
    %3535 = vmatpush1.bf16.msra.mxu0 0
    %3536 = vmatprep.mubr.bf16.mxu0 0
    %3537 = vmatmul.mubr.bf16.gmra.mrb[0].mxu0 %v3499
    %v3538 = vpop.f32.mrb[0].mxu0
    %v3539 = vadd.f32 0.0, %v3538
    %v3540 = vpop.f32.mrb[0].mxu0
    %v3541 = vpop.f32.mrb[0].mxu0
    %v3542 = vpop.f32.mrb[0].mxu0
    %3543 = vdwg.mxu0
    %v3545 = vsel %vm609, %v3491, 0
    %v3548 = vsel %vm1077, %v3027, 0
    %3550 = vmatprep.subr.bf16.mxu0 0
    %3551 = vmatpush1.bf16.msra.mxu0 %v3548
    %3552 = vmatprep.subr.bf16.mxu0 0
    %3553 = vmatpush1.bf16.msra.mxu0 0
    %3554 = vmatprep.subr.bf16.mxu0 0
    %3555 = vmatpush1.bf16.msra.mxu0 0
    %3556 = vmatprep.subr.bf16.mxu0 0
    %3557 = vmatpush1.bf16.msra.mxu0 0
    %3558 = vmatprep.subr.bf16.mxu0 0
    %3559 = vmatpush1.bf16.msra.mxu0 0
    %3560 = vmatprep.subr.bf16.mxu0 0
    %3561 = vmatpush1.bf16.msra.mxu0 0
    %3562 = vmatprep.subr.bf16.mxu0 0
    %3563 = vmatpush1.bf16.msra.mxu0 0
    %3564 = vmatprep.subr.bf16.mxu0 0
    %3565 = vmatpush1.bf16.msra.mxu0 0
    %3566 = vmatprep.subr.bf16.mxu0 0
    %3567 = vmatpush1.bf16.msra.mxu0 0
    %3568 = vmatprep.subr.bf16.mxu0 0
    %3569 = vmatpush1.bf16.msra.mxu0 0
    %3570 = vmatprep.subr.bf16.mxu0 0
    %3571 = vmatpush1.bf16.msra.mxu0 0
    %3572 = vmatprep.subr.bf16.mxu0 0
    %3573 = vmatpush1.bf16.msra.mxu0 0
    %3574 = vmatprep.subr.bf16.mxu0 0
    %3575 = vmatpush1.bf16.msra.mxu0 0
    %3576 = vmatprep.subr.bf16.mxu0 0
    %3577 = vmatpush1.bf16.msra.mxu0 0
    %3578 = vmatprep.subr.bf16.mxu0 0
    %3579 = vmatpush1.bf16.msra.mxu0 0
    %3580 = vmatprep.subr.bf16.mxu0 0
    %3581 = vmatpush1.bf16.msra.mxu0 0
    %3582 = vmatprep.mubr.bf16.mxu0 0
    %3583 = vmatmul.mubr.bf16.gmra.mrb[0].mxu0 %v3545
    %v3584 = vpop.f32.mrb[0].mxu0
    %v3585 = vadd.f32 0.0, %v3584
    %v3586 = vpop.f32.mrb[0].mxu0
    %v3587 = vpop.f32.mrb[0].mxu0
    %v3588 = vpop.f32.mrb[0].mxu0
    %3589 = vdwg.mxu0
    %v3591 = vsel %vm609, %v3492, 0
    %v3594 = vsel %vm1077, %v3028, 0
    %3596 = vmatprep.subr.bf16.mxu0 0
    %3597 = vmatpush1.bf16.msra.mxu0 %v3594
    %3598 = vmatprep.subr.bf16.mxu0 0
    %3599 = vmatpush1.bf16.msra.mxu0 0
    %3600 = vmatprep.subr.bf16.mxu0 0
    %3601 = vmatpush1.bf16.msra.mxu0 0
    %3602 = vmatprep.subr.bf16.mxu0 0
    %3603 = vmatpush1.bf16.msra.mxu0 0
    %3604 = vmatprep.subr.bf16.mxu0 0
    %3605 = vmatpush1.bf16.msra.mxu0 0
    %3606 = vmatprep.subr.bf16.mxu0 0
    %3607 = vmatpush1.bf16.msra.mxu0 0
    %3608 = vmatprep.subr.bf16.mxu0 0
    %3609 = vmatpush1.bf16.msra.mxu0 0
    %3610 = vmatprep.subr.bf16.mxu0 0
    %3611 = vmatpush1.bf16.msra.mxu0 0
    %3612 = vmatprep.subr.bf16.mxu0 0
    %3613 = vmatpush1.bf16.msra.mxu0 0
    %3614 = vmatprep.subr.bf16.mxu0 0
    %3615 = vmatpush1.bf16.msra.mxu0 0
    %3616 = vmatprep.subr.bf16.mxu0 0
    %3617 = vmatpush1.bf16.msra.mxu0 0
    %3618 = vmatprep.subr.bf16.mxu0 0
    %3619 = vmatpush1.bf16.msra.mxu0 0
    %3620 = vmatprep.subr.bf16.mxu0 0
    %3621 = vmatpush1.bf16.msra.mxu0 0
    %3622 = vmatprep.subr.bf16.mxu0 0
    %3623 = vmatpush1.bf16.msra.mxu0 0
    %3624 = vmatprep.subr.bf16.mxu0 0
    %3625 = vmatpush1.bf16.msra.mxu0 0
    %3626 = vmatprep.subr.bf16.mxu0 0
    %3627 = vmatpush1.bf16.msra.mxu0 0
    %3628 = vmatprep.mubr.bf16.mxu0 0
    %3629 = vmatmul.mubr.bf16.gmra.mrb[0].mxu0 %v3591
    %v3630 = vpop.f32.mrb[0].mxu0
    %v3631 = vadd.f32 0.0, %v3630
    %v3632 = vpop.f32.mrb[0].mxu0
    %v3633 = vpop.f32.mrb[0].mxu0
    %v3634 = vpop.f32.mrb[0].mxu0
    %3635 = vdwg.mxu0
    %v3637 = vsel %vm609, %v3493, 0
    %v3640 = vsel %vm1077, %v3029, 0
    %3642 = vmatprep.subr.bf16.mxu0 0
    %3643 = vmatpush1.bf16.msra.mxu0 %v3640
    %3644 = vmatprep.subr.bf16.mxu0 0
    %3645 = vmatpush1.bf16.msra.mxu0 0
    %3646 = vmatprep.subr.bf16.mxu0 0
    %3647 = vmatpush1.bf16.msra.mxu0 0
    %3648 = vmatprep.subr.bf16.mxu0 0
    %3649 = vmatpush1.bf16.msra.mxu0 0
    %3650 = vmatprep.subr.bf16.mxu0 0
    %3651 = vmatpush1.bf16.msra.mxu0 0
    %3652 = vmatprep.subr.bf16.mxu0 0
    %3653 = vmatpush1.bf16.msra.mxu0 0
    %3654 = vmatprep.subr.bf16.mxu0 0
    %3655 = vmatpush1.bf16.msra.mxu0 0
    %3656 = vmatprep.subr.bf16.mxu0 0
    %3657 = vmatpush1.bf16.msra.mxu0 0
    %3658 = vmatprep.subr.bf16.mxu0 0
    %3659 = vmatpush1.bf16.msra.mxu0 0
    %3660 = vmatprep.subr.bf16.mxu0 0
    %3661 = vmatpush1.bf16.msra.mxu0 0
    %3662 = vmatprep.subr.bf16.mxu0 0
    %3663 = vmatpush1.bf16.msra.mxu0 0
    %3664 = vmatprep.subr.bf16.mxu0 0
    %3665 = vmatpush1.bf16.msra.mxu0 0
    %3666 = vmatprep.subr.bf16.mxu0 0
    %3667 = vmatpush1.bf16.msra.mxu0 0
    %3668 = vmatprep.subr.bf16.mxu0 0
    %3669 = vmatpush1.bf16.msra.mxu0 0
    %3670 = vmatprep.subr.bf16.mxu0 0
    %3671 = vmatpush1.bf16.msra.mxu0 0
    %3672 = vmatprep.subr.bf16.mxu0 0
    %3673 = vmatpush1.bf16.msra.mxu0 0
    %3674 = vmatprep.mubr.bf16.mxu0 0
    %3675 = vmatmul.mubr.bf16.gmra.mrb[0].mxu0 %v3637
    %v3676 = vpop.f32.mrb[0].mxu0
    %v3677 = vadd.f32 0.0, %v3676
    %v3678 = vpop.f32.mrb[0].mxu0
    %v3679 = vpop.f32.mrb[0].mxu0
    %v3680 = vpop.f32.mrb[0].mxu0
    %3681 = vdwg.mxu0
    %v3683 = vsel %vm609, %v3494, 0
    %v3686 = vsel %vm1077, %v3030, 0
    %3688 = vmatprep.subr.bf16.mxu0 0
    %3689 = vmatpush1.bf16.msra.mxu0 %v3686
    %3690 = vmatprep.subr.bf16.mxu0 0
    %3691 = vmatpush1.bf16.msra.mxu0 0
    %3692 = vmatprep.subr.bf16.mxu0 0
    %3693 = vmatpush1.bf16.msra.mxu0 0
    %3694 = vmatprep.subr.bf16.mxu0 0
    %3695 = vmatpush1.bf16.msra.mxu0 0
    %3696 = vmatprep.subr.bf16.mxu0 0
    %3697 = vmatpush1.bf16.msra.mxu0 0
    %3698 = vmatprep.subr.bf16.mxu0 0
    %3699 = vmatpush1.bf16.msra.mxu0 0
    %3700 = vmatprep.subr.bf16.mxu0 0
    %3701 = vmatpush1.bf16.msra.mxu0 0
    %3702 = vmatprep.subr.bf16.mxu0 0
    %3703 = vmatpush1.bf16.msra.mxu0 0
    %3704 = vmatprep.subr.bf16.mxu0 0
    %3705 = vmatpush1.bf16.msra.mxu0 0
    %3706 = vmatprep.subr.bf16.mxu0 0
    %3707 = vmatpush1.bf16.msra.mxu0 0
    %3708 = vmatprep.subr.bf16.mxu0 0
    %3709 = vmatpush1.bf16.msra.mxu0 0
    %3710 = vmatprep.subr.bf16.mxu0 0
    %3711 = vmatpush1.bf16.msra.mxu0 0
    %3712 = vmatprep.subr.bf16.mxu0 0
    %3713 = vmatpush1.bf16.msra.mxu0 0
    %3714 = vmatprep.subr.bf16.mxu0 0
    %3715 = vmatpush1.bf16.msra.mxu0 0
    %3716 = vmatprep.subr.bf16.mxu0 0
    %3717 = vmatpush1.bf16.msra.mxu0 0
    %3718 = vmatprep.subr.bf16.mxu0 0
    %3719 = vmatpush1.bf16.msra.mxu0 0
    %3720 = vmatprep.mubr.bf16.mxu0 0
    %3721 = vmatmul.mubr.bf16.gmra.mrb[0].mxu0 %v3683
    %v3722 = vpop.f32.mrb[0].mxu0
    %v3723 = vadd.f32 0.0, %v3722
    %v3724 = vpop.f32.mrb[0].mxu0
    %v3725 = vpop.f32.mrb[0].mxu0
    %v3726 = vpop.f32.mrb[0].mxu0
    %3727 = vdwg.mxu0
    %v3729 = vsel %vm609, %v3495, 0
    %v3732 = vsel %vm1077, %v3031, 0
    %3734 = vmatprep.subr.bf16.mxu0 0
    %3735 = vmatpush1.bf16.msra.mxu0 %v3732
    %3736 = vmatprep.subr.bf16.mxu0 0
    %3737 = vmatpush1.bf16.msra.mxu0 0
    %3738 = vmatprep.subr.bf16.mxu0 0
    %3739 = vmatpush1.bf16.msra.mxu0 0
    %3740 = vmatprep.subr.bf16.mxu0 0
    %3741 = vmatpush1.bf16.msra.mxu0 0
    %3742 = vmatprep.subr.bf16.mxu0 0
    %3743 = vmatpush1.bf16.msra.mxu0 0
    %3744 = vmatprep.subr.bf16.mxu0 0
    %3745 = vmatpush1.bf16.msra.mxu0 0
    %3746 = vmatprep.subr.bf16.mxu0 0
    %3747 = vmatpush1.bf16.msra.mxu0 0
    %3748 = vmatprep.subr.bf16.mxu0 0
    %3749 = vmatpush1.bf16.msra.mxu0 0
    %3750 = vmatprep.subr.bf16.mxu0 0
    %3751 = vmatpush1.bf16.msra.mxu0 0
    %3752 = vmatprep.subr.bf16.mxu0 0
    %3753 = vmatpush1.bf16.msra.mxu0 0
    %3754 = vmatprep.subr.bf16.mxu0 0
    %3755 = vmatpush1.bf16.msra.mxu0 0
    %3756 = vmatprep.subr.bf16.mxu0 0
    %3757 = vmatpush1.bf16.msra.mxu0 0
    %3758 = vmatprep.subr.bf16.mxu0 0
    %3759 = vmatpush1.bf16.msra.mxu0 0
    %3760 = vmatprep.subr.bf16.mxu0 0
    %3761 = vmatpush1.bf16.msra.mxu0 0
    %3762 = vmatprep.subr.bf16.mxu0 0
    %3763 = vmatpush1.bf16.msra.mxu0 0
    %3764 = vmatprep.subr.bf16.mxu0 0
    %3765 = vmatpush1.bf16.msra.mxu0 0
    %3766 = vmatprep.mubr.bf16.mxu0 0
    %3767 = vmatmul.mubr.bf16.gmra.mrb[0].mxu0 %v3729
    %v3768 = vpop.f32.mrb[0].mxu0
    %v3769 = vadd.f32 0.0, %v3768
    %v3770 = vpop.f32.mrb[0].mxu0
    %v3771 = vpop.f32.mrb[0].mxu0
    %v3772 = vpop.f32.mrb[0].mxu0
    %3773 = vdwg.mxu0
    %v3775 = vsel %vm609, %v3496, 0
    %v3778 = vsel %vm1077, %v3032, 0
    %3780 = vmatprep.subr.bf16.mxu0 0
    %3781 = vmatpush1.bf16.msra.mxu0 %v3778
    %3782 = vmatprep.subr.bf16.mxu0 0
    %3783 = vmatpush1.bf16.msra.mxu0 0
    %3784 = vmatprep.subr.bf16.mxu0 0
    %3785 = vmatpush1.bf16.msra.mxu0 0
    %3786 = vmatprep.subr.bf16.mxu0 0
    %3787 = vmatpush1.bf16.msra.mxu0 0
    %3788 = vmatprep.subr.bf16.mxu0 0
    %3789 = vmatpush1.bf16.msra.mxu0 0
    %3790 = vmatprep.subr.bf16.mxu0 0
    %3791 = vmatpush1.bf16.msra.mxu0 0
    %3792 = vmatprep.subr.bf16.mxu0 0
    %3793 = vmatpush1.bf16.msra.mxu0 0
    %3794 = vmatprep.subr.bf16.mxu0 0
    %3795 = vmatpush1.bf16.msra.mxu0 0
    %3796 = vmatprep.subr.bf16.mxu0 0
    %3797 = vmatpush1.bf16.msra.mxu0 0
    %3798 = vmatprep.subr.bf16.mxu0 0
    %3799 = vmatpush1.bf16.msra.mxu0 0
    %3800 = vmatprep.subr.bf16.mxu0 0
    %3801 = vmatpush1.bf16.msra.mxu0 0
    %3802 = vmatprep.subr.bf16.mxu0 0
    %3803 = vmatpush1.bf16.msra.mxu0 0
    %3804 = vmatprep.subr.bf16.mxu0 0
    %3805 = vmatpush1.bf16.msra.mxu0 0
    %3806 = vmatprep.subr.bf16.mxu0 0
    %3807 = vmatpush1.bf16.msra.mxu0 0
    %3808 = vmatprep.subr.bf16.mxu0 0
    %3809 = vmatpush1.bf16.msra.mxu0 0
    %3810 = vmatprep.subr.bf16.mxu0 0
    %3811 = vmatpush1.bf16.msra.mxu0 0
    %3812 = vmatprep.mubr.bf16.mxu0 0
    %3813 = vmatmul.mubr.bf16.gmra.mrb[0].mxu0 %v3775
    %v3814 = vpop.f32.mrb[0].mxu0
    %v3815 = vadd.f32 0.0, %v3814
    %v3816 = vpop.f32.mrb[0].mxu0
    %v3817 = vpop.f32.mrb[0].mxu0
    %v3818 = vpop.f32.mrb[0].mxu0
    %3819 = vdwg.mxu0
    %v3821 = vsel %vm609, %v3497, 0
    %v3824 = vsel %vm1077, %v3033, 0
    %3826 = vmatprep.subr.bf16.mxu0 0
    %3827 = vmatpush1.bf16.msra.mxu0 %v3824
    %3828 = vmatprep.subr.bf16.mxu0 0
    %3829 = vmatpush1.bf16.msra.mxu0 0
    %3830 = vmatprep.subr.bf16.mxu0 0
    %3831 = vmatpush1.bf16.msra.mxu0 0
    %3832 = vmatprep.subr.bf16.mxu0 0
    %3833 = vmatpush1.bf16.msra.mxu0 0
    %3834 = vmatprep.subr.bf16.mxu0 0
    %3835 = vmatpush1.bf16.msra.mxu0 0
    %3836 = vmatprep.subr.bf16.mxu0 0
    %3837 = vmatpush1.bf16.msra.mxu0 0
    %3838 = vmatprep.subr.bf16.mxu0 0
    %3839 = vmatpush1.bf16.msra.mxu0 0
    %3840 = vmatprep.subr.bf16.mxu0 0
    %3841 = vmatpush1.bf16.msra.mxu0 0
    %3842 = vmatprep.subr.bf16.mxu0 0
    %3843 = vmatpush1.bf16.msra.mxu0 0
    %3844 = vmatprep.subr.bf16.mxu0 0
    %3845 = vmatpush1.bf16.msra.mxu0 0
    %3846 = vmatprep.subr.bf16.mxu0 0
    %3847 = vmatpush1.bf16.msra.mxu0 0
    %3848 = vmatprep.subr.bf16.mxu0 0
    %3849 = vmatpush1.bf16.msra.mxu0 0
    %3850 = vmatprep.subr.bf16.mxu0 0
    %3851 = vmatpush1.bf16.msra.mxu0 0
    %3852 = vmatprep.subr.bf16.mxu0 0
    %3853 = vmatpush1.bf16.msra.mxu0 0
    %3854 = vmatprep.subr.bf16.mxu0 0
    %3855 = vmatpush1.bf16.msra.mxu0 0
    %3856 = vmatprep.subr.bf16.mxu0 0
    %3857 = vmatpush1.bf16.msra.mxu0 0
    %3858 = vmatprep.mubr.bf16.mxu0 0
    %3859 = vmatmul.mubr.bf16.gmra.mrb[0].mxu0 %v3821
    %v3860 = vpop.f32.mrb[0].mxu0
    %v3861 = vadd.f32 0.0, %v3860
    %v3862 = vpop.f32.mrb[0].mxu0
    %v3863 = vpop.f32.mrb[0].mxu0
    %v3864 = vpop.f32.mrb[0].mxu0
    %3865 = vdwg.mxu0
    %v3866 = vpack.c.bf16 %v3585, %v3539
    %v3867 = vpack.c.bf16 %v3677, %v3631
    %v3868 = vpack.c.bf16 %v3769, %v3723
    %v3869 = vpack.c.bf16 %v3861, %v3815
    %s3870 = scalar_lea.vmem %s3, 8
    %v3871 = vld [vmem:[%s3870] sm:$0xf]
    %v3873 = vsel %vm609, %v3866, 0
    %v3876 = vsel %vm609, %v3867, 0
    %v3879 = vsel %vm609, %v3868, 0
    %v3882 = vsel %vm609, %v3869, 0
    %v3885 = vsel %vm1077, %v3871, 0
    %3887 = vmatprep.subr.bf16.mxu0 0
    %3888 = vmatpush1.bf16.msra.mxu0 %v3885
    %3889 = vmatprep.subr.bf16.mxu0 0
    %3890 = vmatpush1.bf16.msra.mxu0 0
    %3891 = vmatprep.subr.bf16.mxu0 0
    %3892 = vmatpush1.bf16.msra.mxu0 0
    %3893 = vmatprep.subr.bf16.mxu0 0
    %3894 = vmatpush1.bf16.msra.mxu0 0
    %3895 = vmatprep.subr.bf16.mxu0 0
    %3896 = vmatpush1.bf16.msra.mxu0 0
    %3897 = vmatprep.subr.bf16.mxu0 0
    %3898 = vmatpush1.bf16.msra.mxu0 0
    %3899 = vmatprep.subr.bf16.mxu0 0
    %3900 = vmatpush1.bf16.msra.mxu0 0
    %3901 = vmatprep.subr.bf16.mxu0 0
    %3902 = vmatpush1.bf16.msra.mxu0 0
    %3903 = vmatprep.subr.bf16.mxu0 0
    %3904 = vmatpush1.bf16.msra.mxu0 0
    %3905 = vmatprep.subr.bf16.mxu0 0
    %3906 = vmatpush1.bf16.msra.mxu0 0
    %3907 = vmatprep.subr.bf16.mxu0 0
    %3908 = vmatpush1.bf16.msra.mxu0 0
    %3909 = vmatprep.subr.bf16.mxu0 0
    %3910 = vmatpush1.bf16.msra.mxu0 0
    %3911 = vmatprep.subr.bf16.mxu0 0
    %3912 = vmatpush1.bf16.msra.mxu0 0
    %3913 = vmatprep.subr.bf16.mxu0 0
    %3914 = vmatpush1.bf16.msra.mxu0 0
    %3915 = vmatprep.subr.bf16.mxu0 0
    %3916 = vmatpush1.bf16.msra.mxu0 0
    %3917 = vmatprep.subr.bf16.mxu0 0
    %3918 = vmatpush1.bf16.msra.mxu0 0
    %3919 = vmatprep.mubr.bf16.mxu0 0
    %3920 = vmatmul.mubr.bf16.gmra.mrb[0].mxu0 %v3873
    %v3921 = vpop.f32.mrb[0].mxu0
    %v3922 = vadd.f32 0.0, %v3921
    %v3923 = vpop.f32.mrb[0].mxu0
    %v3924 = vpop.f32.mrb[0].mxu0
    %v3925 = vadd.f32 0.0, %v3924
    %v3926 = vpop.f32.mrb[0].mxu0
    %3927 = vmatprep.mubr.bf16.mxu0 0
    %3928 = vmatmul.mubr.bf16.gmra.mrb[0].mxu0 %v3876
    %v3929 = vpop.f32.mrb[0].mxu0
    %v3930 = vadd.f32 0.0, %v3929
    %v3931 = vpop.f32.mrb[0].mxu0
    %v3932 = vpop.f32.mrb[0].mxu0
    %v3933 = vadd.f32 0.0, %v3932
    %v3934 = vpop.f32.mrb[0].mxu0
    %3935 = vmatprep.mubr.bf16.mxu0 0
    %3936 = vmatmul.mubr.bf16.gmra.mrb[0].mxu0 %v3879
    %v3937 = vpop.f32.mrb[0].mxu0
    %v3938 = vadd.f32 0.0, %v3937
    %v3939 = vpop.f32.mrb[0].mxu0
    %v3940 = vpop.f32.mrb[0].mxu0
    %v3941 = vadd.f32 0.0, %v3940
    %v3942 = vpop.f32.mrb[0].mxu0
    %3943 = vmatprep.mubr.bf16.mxu0 0
    %3944 = vmatmul.mubr.bf16.gmra.mrb[0].mxu0 %v3882
    %v3945 = vpop.f32.mrb[0].mxu0
    %v3946 = vadd.f32 0.0, %v3945
    %v3947 = vpop.f32.mrb[0].mxu0
    %v3948 = vpop.f32.mrb[0].mxu0
    %v3949 = vadd.f32 0.0, %v3948
    %v3950 = vpop.f32.mrb[0].mxu0
    %3951 = vdwg.mxu0
    %v3952 = vadd.f32 %v2710, %v3922
    %v3953 = vadd.f32 %v2713, %v3925
    %v3954 = vadd.f32 %v2718, %v3930
    %v3955 = vadd.f32 %v2721, %v3933
    %v3956 = vadd.f32 %v2726, %v3938
    %v3957 = vadd.f32 %v2729, %v3941
    %v3958 = vadd.f32 %v2734, %v3946
    %v3959 = vadd.f32 %v2737, %v3949
    %s3960 = scalar_lea.vmem %s1, 48
    %v3961 = vld [vmem:[%s3960] sm:$0xf]
    %v3962 = vld [vmem:[%s3960 + $0x4] sm:$0xf]
    %v3963 = vld [vmem:[%s3960 + $0x8] sm:$0xf]
    %v3964 = vld [vmem:[%s3960 + $0xc] sm:$0xf]
    %s3965 = scalar_lea.vmem %s2, 3
    %v3966 = vld [vmem:[%s3965] sm:$0x1]
    %v3968 = vlaneseq
    %v3969 = vshrl.u32 %v3968, 7
    %v3970 = vsub.s32 0, %v3969
    %v3971 = vrot.slane %v3966, %v3970
    %v3977 = vunpack.c.l.b16 %v3961
    %v3978 = vunpack.c.l.b16 %v3962
    %v3979 = vunpack.c.l.b16 %v3963
    %v3980 = vunpack.c.l.b16 %v3964
    %v3981 = vpack.c.b16 %v3978, %v3977
    %v3982 = vpack.c.b16 %v3980, %v3979
    %3985 = vmatprep.subr.bf16.mxu0 0
    %3986 = vmatpush1.bf16.msra.mxu0 %v3981
    %3987 = vmatprep.subr.bf16.mxu0 0
    %3988 = vmatpush1.bf16.msra.mxu0 %v3982
    %3989 = vmatprep.subr.bf16.mxu0 0
    %3990 = vmatpush1.bf16.msra.mxu0 0
    %3991 = vmatprep.subr.bf16.mxu0 0
    %3992 = vmatpush1.bf16.msra.mxu0 0
    %3993 = vmatprep.subr.bf16.mxu0 0
    %3994 = vmatpush1.bf16.msra.mxu0 0
    %3995 = vmatprep.subr.bf16.mxu0 0
    %3996 = vmatpush1.bf16.msra.mxu0 0
    %3997 = vmatprep.subr.bf16.mxu0 0
    %3998 = vmatpush1.bf16.msra.mxu0 0
    %3999 = vmatprep.subr.bf16.mxu0 0
    %4000 = vmatpush1.bf16.msra.mxu0 0
    %4001 = vmatprep.subr.bf16.mxu0 0
    %4002 = vmatpush1.bf16.msra.mxu0 0
    %4003 = vmatprep.subr.bf16.mxu0 0
    %4004 = vmatpush1.bf16.msra.mxu0 0
    %4005 = vmatprep.subr.bf16.mxu0 0
    %4006 = vmatpush1.bf16.msra.mxu0 0
    %4007 = vmatprep.subr.bf16.mxu0 0
    %4008 = vmatpush1.bf16.msra.mxu0 0
    %4009 = vmatprep.subr.bf16.mxu0 0
    %4010 = vmatpush1.bf16.msra.mxu0 0
    %4011 = vmatprep.subr.bf16.mxu0 0
    %4012 = vmatpush1.bf16.msra.mxu0 0
    %4013 = vmatprep.subr.bf16.mxu0 0
    %4014 = vmatpush1.bf16.msra.mxu0 0
    %4015 = vmatprep.subr.bf16.mxu0 0
    %4016 = vmatpush1.bf16.msra.mxu0 0
    %4017 = vmatprep.mubr.bf16.mxu0 0
    %4018 = vmatmul.mubr.bf16.gmra.mrb[0].mxu0 %v329
    %v4019 = vpop.f32.mrb[0].mxu0
    %v4020 = vadd.f32 %v3971, %v4019
    %v4021 = vpop.f32.mrb[0].mxu0
    %v4022 = vpop.f32.mrb[0].mxu0
    %v4023 = vadd.f32 %v3971, %v4022
    %v4024 = vpop.f32.mrb[0].mxu0
    %4025 = vmatprep.mubr.bf16.mxu0 0
    %4026 = vmatmul.mubr.bf16.gmra.mrb[0].mxu0 %v332
    %v4027 = vpop.f32.mrb[0].mxu0
    %v4028 = vadd.f32 %v3971, %v4027
    %v4029 = vpop.f32.mrb[0].mxu0
    %v4030 = vpop.f32.mrb[0].mxu0
    %v4031 = vadd.f32 %v3971, %v4030
    %v4032 = vpop.f32.mrb[0].mxu0
    %4033 = vmatprep.mubr.bf16.mxu0 0
    %4034 = vmatmul.mubr.bf16.gmra.mrb[0].mxu0 %v335
    %v4035 = vpop.f32.mrb[0].mxu0
    %v4036 = vadd.f32 %v3971, %v4035
    %v4037 = vpop.f32.mrb[0].mxu0
    %v4038 = vpop.f32.mrb[0].mxu0
    %v4039 = vadd.f32 %v3971, %v4038
    %v4040 = vpop.f32.mrb[0].mxu0
    %4041 = vmatprep.mubr.bf16.mxu0 0
    %4042 = vmatmul.mubr.bf16.gmra.mrb[0].mxu0 %v338
    %v4043 = vpop.f32.mrb[0].mxu0
    %v4044 = vadd.f32 %v3971, %v4043
    %v4045 = vpop.f32.mrb[0].mxu0
    %v4046 = vpop.f32.mrb[0].mxu0
    %v4047 = vadd.f32 %v3971, %v4046
    %v4048 = vpop.f32.mrb[0].mxu0
    %4049 = vdwg.mxu0
    %s4050 = scalar_lea.vmem %s1, 112
    %v4051 = vld [vmem:[%s4050] sm:$0xf]
    %v4052 = vld [vmem:[%s4050 + $0x4] sm:$0xf]
    %v4053 = vld [vmem:[%s4050 + $0x8] sm:$0xf]
    %v4054 = vld [vmem:[%s4050 + $0xc] sm:$0xf]
    %s4055 = scalar_lea.vmem %s2, 7
    %v4056 = vld [vmem:[%s4055] sm:$0x1]
    %v4058 = vlaneseq
    %v4059 = vshrl.u32 %v4058, 7
    %v4060 = vsub.s32 0, %v4059
    %v4061 = vrot.slane %v4056, %v4060
    %v4067 = vunpack.c.l.b16 %v4051
    %v4068 = vunpack.c.l.b16 %v4052
    %v4069 = vunpack.c.l.b16 %v4053
    %v4070 = vunpack.c.l.b16 %v4054
    %v4071 = vpack.c.b16 %v4068, %v4067
    %v4072 = vpack.c.b16 %v4070, %v4069
    %4075 = vmatprep.subr.bf16.mxu0 0
    %4076 = vmatpush1.bf16.msra.mxu0 %v4071
    %4077 = vmatprep.subr.bf16.mxu0 0
    %4078 = vmatpush1.bf16.msra.mxu0 %v4072
    %4079 = vmatprep.subr.bf16.mxu0 0
    %4080 = vmatpush1.bf16.msra.mxu0 0
    %4081 = vmatprep.subr.bf16.mxu0 0
    %4082 = vmatpush1.bf16.msra.mxu0 0
    %4083 = vmatprep.subr.bf16.mxu0 0
    %4084 = vmatpush1.bf16.msra.mxu0 0
    %4085 = vmatprep.subr.bf16.mxu0 0
    %4086 = vmatpush1.bf16.msra.mxu0 0
    %4087 = vmatprep.subr.bf16.mxu0 0
    %4088 = vmatpush1.bf16.msra.mxu0 0
    %4089 = vmatprep.subr.bf16.mxu0 0
    %4090 = vmatpush1.bf16.msra.mxu0 0
    %4091 = vmatprep.subr.bf16.mxu0 0
    %4092 = vmatpush1.bf16.msra.mxu0 0
    %4093 = vmatprep.subr.bf16.mxu0 0
    %4094 = vmatpush1.bf16.msra.mxu0 0
    %4095 = vmatprep.subr.bf16.mxu0 0
    %4096 = vmatpush1.bf16.msra.mxu0 0
    %4097 = vmatprep.subr.bf16.mxu0 0
    %4098 = vmatpush1.bf16.msra.mxu0 0
    %4099 = vmatprep.subr.bf16.mxu0 0
    %4100 = vmatpush1.bf16.msra.mxu0 0
    %4101 = vmatprep.subr.bf16.mxu0 0
    %4102 = vmatpush1.bf16.msra.mxu0 0
    %4103 = vmatprep.subr.bf16.mxu0 0
    %4104 = vmatpush1.bf16.msra.mxu0 0
    %4105 = vmatprep.subr.bf16.mxu0 0
    %4106 = vmatpush1.bf16.msra.mxu0 0
    %4107 = vmatprep.mubr.bf16.mxu0 0
    %4108 = vmatmul.mubr.bf16.gmra.mrb[0].mxu0 %v329
    %v4109 = vpop.f32.mrb[0].mxu0
    %v4110 = vadd.f32 %v4061, %v4109
    %v4111 = vpop.f32.mrb[0].mxu0
    %v4112 = vpop.f32.mrb[0].mxu0
    %v4113 = vadd.f32 %v4061, %v4112
    %v4114 = vpop.f32.mrb[0].mxu0
    %4115 = vmatprep.mubr.bf16.mxu0 0
    %4116 = vmatmul.mubr.bf16.gmra.mrb[0].mxu0 %v332
    %v4117 = vpop.f32.mrb[0].mxu0
    %v4118 = vadd.f32 %v4061, %v4117
    %v4119 = vpop.f32.mrb[0].mxu0
    %v4120 = vpop.f32.mrb[0].mxu0
    %v4121 = vadd.f32 %v4061, %v4120
    %v4122 = vpop.f32.mrb[0].mxu0
    %4123 = vmatprep.mubr.bf16.mxu0 0
    %4124 = vmatmul.mubr.bf16.gmra.mrb[0].mxu0 %v335
    %v4125 = vpop.f32.mrb[0].mxu0
    %v4126 = vadd.f32 %v4061, %v4125
    %v4127 = vpop.f32.mrb[0].mxu0
    %v4128 = vpop.f32.mrb[0].mxu0
    %v4129 = vadd.f32 %v4061, %v4128
    %v4130 = vpop.f32.mrb[0].mxu0
    %4131 = vmatprep.mubr.bf16.mxu0 0
    %4132 = vmatmul.mubr.bf16.gmra.mrb[0].mxu0 %v338
    %v4133 = vpop.f32.mrb[0].mxu0
    %v4134 = vadd.f32 %v4061, %v4133
    %v4135 = vpop.f32.mrb[0].mxu0
    %v4136 = vpop.f32.mrb[0].mxu0
    %v4137 = vadd.f32 %v4061, %v4136
    %v4138 = vpop.f32.mrb[0].mxu0
    %4139 = vdwg.mxu0
    %s4140 = scalar_lea.vmem %s1, 176
    %v4141 = vld [vmem:[%s4140] sm:$0xf]
    %v4142 = vld [vmem:[%s4140 + $0x4] sm:$0xf]
    %v4143 = vld [vmem:[%s4140 + $0x8] sm:$0xf]
    %v4144 = vld [vmem:[%s4140 + $0xc] sm:$0xf]
    %s4145 = scalar_lea.vmem %s2, 11
    %v4146 = vld [vmem:[%s4145] sm:$0x1]
    %v4148 = vlaneseq
    %v4149 = vshrl.u32 %v4148, 7
    %v4150 = vsub.s32 0, %v4149
    %v4151 = vrot.slane %v4146, %v4150
    %v4157 = vunpack.c.l.b16 %v4141
    %v4158 = vunpack.c.l.b16 %v4142
    %v4159 = vunpack.c.l.b16 %v4143
    %v4160 = vunpack.c.l.b16 %v4144
    %v4161 = vpack.c.b16 %v4158, %v4157
    %v4162 = vpack.c.b16 %v4160, %v4159
    %4165 = vmatprep.subr.bf16.mxu0 0
    %4166 = vmatpush1.bf16.msra.mxu0 %v4161
    %4167 = vmatprep.subr.bf16.mxu0 0
    %4168 = vmatpush1.bf16.msra.mxu0 %v4162
    %4169 = vmatprep.subr.bf16.mxu0 0
    %4170 = vmatpush1.bf16.msra.mxu0 0
    %4171 = vmatprep.subr.bf16.mxu0 0
    %4172 = vmatpush1.bf16.msra.mxu0 0
    %4173 = vmatprep.subr.bf16.mxu0 0
    %4174 = vmatpush1.bf16.msra.mxu0 0
    %4175 = vmatprep.subr.bf16.mxu0 0
    %4176 = vmatpush1.bf16.msra.mxu0 0
    %4177 = vmatprep.subr.bf16.mxu0 0
    %4178 = vmatpush1.bf16.msra.mxu0 0
    %4179 = vmatprep.subr.bf16.mxu0 0
    %4180 = vmatpush1.bf16.msra.mxu0 0
    %4181 = vmatprep.subr.bf16.mxu0 0
    %4182 = vmatpush1.bf16.msra.mxu0 0
    %4183 = vmatprep.subr.bf16.mxu0 0
    %4184 = vmatpush1.bf16.msra.mxu0 0
    %4185 = vmatprep.subr.bf16.mxu0 0
    %4186 = vmatpush1.bf16.msra.mxu0 0
    %4187 = vmatprep.subr.bf16.mxu0 0
    %4188 = vmatpush1.bf16.msra.mxu0 0
    %4189 = vmatprep.subr.bf16.mxu0 0
    %4190 = vmatpush1.bf16.msra.mxu0 0
    %4191 = vmatprep.subr.bf16.mxu0 0
    %4192 = vmatpush1.bf16.msra.mxu0 0
    %4193 = vmatprep.subr.bf16.mxu0 0
    %4194 = vmatpush1.bf16.msra.mxu0 0
    %4195 = vmatprep.subr.bf16.mxu0 0
    %4196 = vmatpush1.bf16.msra.mxu0 0
    %4197 = vmatprep.mubr.bf16.mxu0 0
    %4198 = vmatmul.mubr.bf16.gmra.mrb[0].mxu0 %v329
    %v4199 = vpop.f32.mrb[0].mxu0
    %v4200 = vadd.f32 %v4151, %v4199
    %v4201 = vpop.f32.mrb[0].mxu0
    %v4202 = vpop.f32.mrb[0].mxu0
    %v4203 = vadd.f32 %v4151, %v4202
    %v4204 = vpop.f32.mrb[0].mxu0
    %4205 = vmatprep.mubr.bf16.mxu0 0
    %4206 = vmatmul.mubr.bf16.gmra.mrb[0].mxu0 %v332
    %v4207 = vpop.f32.mrb[0].mxu0
    %v4208 = vadd.f32 %v4151, %v4207
    %v4209 = vpop.f32.mrb[0].mxu0
    %v4210 = vpop.f32.mrb[0].mxu0
    %v4211 = vadd.f32 %v4151, %v4210
    %v4212 = vpop.f32.mrb[0].mxu0
    %4213 = vmatprep.mubr.bf16.mxu0 0
    %4214 = vmatmul.mubr.bf16.gmra.mrb[0].mxu0 %v335
    %v4215 = vpop.f32.mrb[0].mxu0
    %v4216 = vadd.f32 %v4151, %v4215
    %v4217 = vpop.f32.mrb[0].mxu0
    %v4218 = vpop.f32.mrb[0].mxu0
    %v4219 = vadd.f32 %v4151, %v4218
    %v4220 = vpop.f32.mrb[0].mxu0
    %4221 = vmatprep.mubr.bf16.mxu0 0
    %4222 = vmatmul.mubr.bf16.gmra.mrb[0].mxu0 %v338
    %v4223 = vpop.f32.mrb[0].mxu0
    %v4224 = vadd.f32 %v4151, %v4223
    %v4225 = vpop.f32.mrb[0].mxu0
    %v4226 = vpop.f32.mrb[0].mxu0
    %v4227 = vadd.f32 %v4151, %v4226
    %v4228 = vpop.f32.mrb[0].mxu0
    %4229 = vdwg.mxu0
    %v4230 = vpack.c.bf16 %v4020, %v4020
    %v4231 = vpack.c.bf16 %v4023, %v4023
    %v4232 = vpack.c.bf16 %v4028, %v4028
    %v4233 = vpack.c.bf16 %v4031, %v4031
    %v4234 = vpack.c.bf16 %v4036, %v4036
    %v4235 = vpack.c.bf16 %v4039, %v4039
    %v4236 = vpack.c.bf16 %v4044, %v4044
    %v4237 = vpack.c.bf16 %v4047, %v4047
    %v4238 = vpack.c.bf16 %v4110, %v4110
    %v4239 = vpack.c.bf16 %v4113, %v4113
    %v4240 = vpack.c.bf16 %v4118, %v4118
    %v4241 = vpack.c.bf16 %v4121, %v4121
    %v4242 = vpack.c.bf16 %v4126, %v4126
    %v4243 = vpack.c.bf16 %v4129, %v4129
    %v4244 = vpack.c.bf16 %v4134, %v4134
    %v4245 = vpack.c.bf16 %v4137, %v4137
    %v4246 = vpack.c.bf16 %v4200, %v4200
    %v4247 = vpack.c.bf16 %v4203, %v4203
    %v4248 = vpack.c.bf16 %v4208, %v4208
    %v4249 = vpack.c.bf16 %v4211, %v4211
    %v4250 = vpack.c.bf16 %v4216, %v4216
    %v4251 = vpack.c.bf16 %v4219, %v4219
    %v4252 = vpack.c.bf16 %v4224, %v4224
    %v4253 = vpack.c.bf16 %v4227, %v4227
    %v4255 = vsel %vm609, %v4230, 0
    %v4258 = vsel %vm609, %v4238, 0
    %4260 = vmatprep.subr.bf16.mxu0 0
    %4261 = vmatpush1.bf16.xpose.msra.mxu0 %v4258
    %4262 = vmatprep.subr.bf16.mxu0 0
    %4263 = vmatpush1.bf16.xpose.msra.mxu0 0
    %4264 = vmatprep.subr.bf16.mxu0 0
    %4265 = vmatpush1.bf16.xpose.msra.mxu0 0
    %4266 = vmatprep.subr.bf16.mxu0 0
    %4267 = vmatpush1.bf16.xpose.msra.mxu0 0
    %4268 = vmatprep.subr.bf16.mxu0 0
    %4269 = vmatpush1.bf16.xpose.msra.mxu0 0
    %4270 = vmatprep.subr.bf16.mxu0 0
    %4271 = vmatpush1.bf16.xpose.msra.mxu0 0
    %4272 = vmatprep.subr.bf16.mxu0 0
    %4273 = vmatpush1.bf16.xpose.msra.mxu0 0
    %4274 = vmatprep.subr.bf16.mxu0 0
    %4275 = vmatpush1.bf16.xpose.msra.mxu0 0
    %4276 = vmatprep.subr.bf16.mxu0 0
    %4277 = vmatpush1.bf16.xpose.msra.mxu0 0
    %4278 = vmatprep.subr.bf16.mxu0 0
    %4279 = vmatpush1.bf16.xpose.msra.mxu0 0
    %4280 = vmatprep.subr.bf16.mxu0 0
    %4281 = vmatpush1.bf16.xpose.msra.mxu0 0
    %4282 = vmatprep.subr.bf16.mxu0 0
    %4283 = vmatpush1.bf16.xpose.msra.mxu0 0
    %4284 = vmatprep.subr.bf16.mxu0 0
    %4285 = vmatpush1.bf16.xpose.msra.mxu0 0
    %4286 = vmatprep.subr.bf16.mxu0 0
    %4287 = vmatpush1.bf16.xpose.msra.mxu0 0
    %4288 = vmatprep.subr.bf16.mxu0 0
    %4289 = vmatpush1.bf16.xpose.msra.mxu0 0
    %4290 = vmatprep.subr.bf16.mxu0 0
    %4291 = vmatpush1.bf16.xpose.msra.mxu0 0
    %4292 = vmatprep.mubr.bf16.mxu0 0
    %4293 = vmatmul.mubr.bf16.gmra.mrb[0].mxu0 %v4255
    %v4294 = vpop.f32.mrb[0].mxu0
    %v4295 = vadd.f32 0.0, %v4294
    %v4296 = vpop.f32.mrb[0].mxu0
    %v4297 = vpop.f32.mrb[0].mxu0
    %v4298 = vpop.f32.mrb[0].mxu0
    %4299 = vdwg.mxu0
    %v4301 = vsel %vm609, %v4231, 0
    %v4304 = vsel %vm609, %v4239, 0
    %4306 = vmatprep.subr.bf16.mxu0 0
    %4307 = vmatpush1.bf16.xpose.msra.mxu0 %v4304
    %4308 = vmatprep.subr.bf16.mxu0 0
    %4309 = vmatpush1.bf16.xpose.msra.mxu0 0
    %4310 = vmatprep.subr.bf16.mxu0 0
    %4311 = vmatpush1.bf16.xpose.msra.mxu0 0
    %4312 = vmatprep.subr.bf16.mxu0 0
    %4313 = vmatpush1.bf16.xpose.msra.mxu0 0
    %4314 = vmatprep.subr.bf16.mxu0 0
    %4315 = vmatpush1.bf16.xpose.msra.mxu0 0
    %4316 = vmatprep.subr.bf16.mxu0 0
    %4317 = vmatpush1.bf16.xpose.msra.mxu0 0
    %4318 = vmatprep.subr.bf16.mxu0 0
    %4319 = vmatpush1.bf16.xpose.msra.mxu0 0
    %4320 = vmatprep.subr.bf16.mxu0 0
    %4321 = vmatpush1.bf16.xpose.msra.mxu0 0
    %4322 = vmatprep.subr.bf16.mxu0 0
    %4323 = vmatpush1.bf16.xpose.msra.mxu0 0
    %4324 = vmatprep.subr.bf16.mxu0 0
    %4325 = vmatpush1.bf16.xpose.msra.mxu0 0
    %4326 = vmatprep.subr.bf16.mxu0 0
    %4327 = vmatpush1.bf16.xpose.msra.mxu0 0
    %4328 = vmatprep.subr.bf16.mxu0 0
    %4329 = vmatpush1.bf16.xpose.msra.mxu0 0
    %4330 = vmatprep.subr.bf16.mxu0 0
    %4331 = vmatpush1.bf16.xpose.msra.mxu0 0
    %4332 = vmatprep.subr.bf16.mxu0 0
    %4333 = vmatpush1.bf16.xpose.msra.mxu0 0
    %4334 = vmatprep.subr.bf16.mxu0 0
    %4335 = vmatpush1.bf16.xpose.msra.mxu0 0
    %4336 = vmatprep.subr.bf16.mxu0 0
    %4337 = vmatpush1.bf16.xpose.msra.mxu0 0
    %4338 = vmatprep.mubr.bf16.mxu0 0
    %4339 = vmatmul.mubr.bf16.gmra.mrb[0].mxu0 %v4301
    %v4340 = vpop.f32.mrb[0].mxu0
    %v4341 = vadd.f32 0.0, %v4340
    %v4342 = vpop.f32.mrb[0].mxu0
    %v4343 = vpop.f32.mrb[0].mxu0
    %v4344 = vpop.f32.mrb[0].mxu0
    %4345 = vdwg.mxu0
    %v4347 = vsel %vm609, %v4232, 0
    %v4350 = vsel %vm609, %v4240, 0
    %4352 = vmatprep.subr.bf16.mxu0 0
    %4353 = vmatpush1.bf16.xpose.msra.mxu0 %v4350
    %4354 = vmatprep.subr.bf16.mxu0 0
    %4355 = vmatpush1.bf16.xpose.msra.mxu0 0
    %4356 = vmatprep.subr.bf16.mxu0 0
    %4357 = vmatpush1.bf16.xpose.msra.mxu0 0
    %4358 = vmatprep.subr.bf16.mxu0 0
    %4359 = vmatpush1.bf16.xpose.msra.mxu0 0
    %4360 = vmatprep.subr.bf16.mxu0 0
    %4361 = vmatpush1.bf16.xpose.msra.mxu0 0
    %4362 = vmatprep.subr.bf16.mxu0 0
    %4363 = vmatpush1.bf16.xpose.msra.mxu0 0
    %4364 = vmatprep.subr.bf16.mxu0 0
    %4365 = vmatpush1.bf16.xpose.msra.mxu0 0
    %4366 = vmatprep.subr.bf16.mxu0 0
    %4367 = vmatpush1.bf16.xpose.msra.mxu0 0
    %4368 = vmatprep.subr.bf16.mxu0 0
    %4369 = vmatpush1.bf16.xpose.msra.mxu0 0
    %4370 = vmatprep.subr.bf16.mxu0 0
    %4371 = vmatpush1.bf16.xpose.msra.mxu0 0
    %4372 = vmatprep.subr.bf16.mxu0 0
    %4373 = vmatpush1.bf16.xpose.msra.mxu0 0
    %4374 = vmatprep.subr.bf16.mxu0 0
    %4375 = vmatpush1.bf16.xpose.msra.mxu0 0
    %4376 = vmatprep.subr.bf16.mxu0 0
    %4377 = vmatpush1.bf16.xpose.msra.mxu0 0
    %4378 = vmatprep.subr.bf16.mxu0 0
    %4379 = vmatpush1.bf16.xpose.msra.mxu0 0
    %4380 = vmatprep.subr.bf16.mxu0 0
    %4381 = vmatpush1.bf16.xpose.msra.mxu0 0
    %4382 = vmatprep.subr.bf16.mxu0 0
    %4383 = vmatpush1.bf16.xpose.msra.mxu0 0
    %4384 = vmatprep.mubr.bf16.mxu0 0
    %4385 = vmatmul.mubr.bf16.gmra.mrb[0].mxu0 %v4347
    %v4386 = vpop.f32.mrb[0].mxu0
    %v4387 = vadd.f32 0.0, %v4386
    %v4388 = vpop.f32.mrb[0].mxu0
    %v4389 = vpop.f32.mrb[0].mxu0
    %v4390 = vpop.f32.mrb[0].mxu0
    %4391 = vdwg.mxu0
    %v4393 = vsel %vm609, %v4233, 0
    %v4396 = vsel %vm609, %v4241, 0
    %4398 = vmatprep.subr.bf16.mxu0 0
    %4399 = vmatpush1.bf16.xpose.msra.mxu0 %v4396
    %4400 = vmatprep.subr.bf16.mxu0 0
    %4401 = vmatpush1.bf16.xpose.msra.mxu0 0
    %4402 = vmatprep.subr.bf16.mxu0 0
    %4403 = vmatpush1.bf16.xpose.msra.mxu0 0
    %4404 = vmatprep.subr.bf16.mxu0 0
    %4405 = vmatpush1.bf16.xpose.msra.mxu0 0
    %4406 = vmatprep.subr.bf16.mxu0 0
    %4407 = vmatpush1.bf16.xpose.msra.mxu0 0
    %4408 = vmatprep.subr.bf16.mxu0 0
    %4409 = vmatpush1.bf16.xpose.msra.mxu0 0
    %4410 = vmatprep.subr.bf16.mxu0 0
    %4411 = vmatpush1.bf16.xpose.msra.mxu0 0
    %4412 = vmatprep.subr.bf16.mxu0 0
    %4413 = vmatpush1.bf16.xpose.msra.mxu0 0
    %4414 = vmatprep.subr.bf16.mxu0 0
    %4415 = vmatpush1.bf16.xpose.msra.mxu0 0
    %4416 = vmatprep.subr.bf16.mxu0 0
    %4417 = vmatpush1.bf16.xpose.msra.mxu0 0
    %4418 = vmatprep.subr.bf16.mxu0 0
    %4419 = vmatpush1.bf16.xpose.msra.mxu0 0
    %4420 = vmatprep.subr.bf16.mxu0 0
    %4421 = vmatpush1.bf16.xpose.msra.mxu0 0
    %4422 = vmatprep.subr.bf16.mxu0 0
    %4423 = vmatpush1.bf16.xpose.msra.mxu0 0
    %4424 = vmatprep.subr.bf16.mxu0 0
    %4425 = vmatpush1.bf16.xpose.msra.mxu0 0
    %4426 = vmatprep.subr.bf16.mxu0 0
    %4427 = vmatpush1.bf16.xpose.msra.mxu0 0
    %4428 = vmatprep.subr.bf16.mxu0 0
    %4429 = vmatpush1.bf16.xpose.msra.mxu0 0
    %4430 = vmatprep.mubr.bf16.mxu0 0
    %4431 = vmatmul.mubr.bf16.gmra.mrb[0].mxu0 %v4393
    %v4432 = vpop.f32.mrb[0].mxu0
    %v4433 = vadd.f32 0.0, %v4432
    %v4434 = vpop.f32.mrb[0].mxu0
    %v4435 = vpop.f32.mrb[0].mxu0
    %v4436 = vpop.f32.mrb[0].mxu0
    %4437 = vdwg.mxu0
    %v4439 = vsel %vm609, %v4234, 0
    %v4442 = vsel %vm609, %v4242, 0
    %4444 = vmatprep.subr.bf16.mxu0 0
    %4445 = vmatpush1.bf16.xpose.msra.mxu0 %v4442
    %4446 = vmatprep.subr.bf16.mxu0 0
    %4447 = vmatpush1.bf16.xpose.msra.mxu0 0
    %4448 = vmatprep.subr.bf16.mxu0 0
    %4449 = vmatpush1.bf16.xpose.msra.mxu0 0
    %4450 = vmatprep.subr.bf16.mxu0 0
    %4451 = vmatpush1.bf16.xpose.msra.mxu0 0
    %4452 = vmatprep.subr.bf16.mxu0 0
    %4453 = vmatpush1.bf16.xpose.msra.mxu0 0
    %4454 = vmatprep.subr.bf16.mxu0 0
    %4455 = vmatpush1.bf16.xpose.msra.mxu0 0
    %4456 = vmatprep.subr.bf16.mxu0 0
    %4457 = vmatpush1.bf16.xpose.msra.mxu0 0
    %4458 = vmatprep.subr.bf16.mxu0 0
    %4459 = vmatpush1.bf16.xpose.msra.mxu0 0
    %4460 = vmatprep.subr.bf16.mxu0 0
    %4461 = vmatpush1.bf16.xpose.msra.mxu0 0
    %4462 = vmatprep.subr.bf16.mxu0 0
    %4463 = vmatpush1.bf16.xpose.msra.mxu0 0
    %4464 = vmatprep.subr.bf16.mxu0 0
    %4465 = vmatpush1.bf16.xpose.msra.mxu0 0
    %4466 = vmatprep.subr.bf16.mxu0 0
    %4467 = vmatpush1.bf16.xpose.msra.mxu0 0
    %4468 = vmatprep.subr.bf16.mxu0 0
    %4469 = vmatpush1.bf16.xpose.msra.mxu0 0
    %4470 = vmatprep.subr.bf16.mxu0 0
    %4471 = vmatpush1.bf16.xpose.msra.mxu0 0
    %4472 = vmatprep.subr.bf16.mxu0 0
    %4473 = vmatpush1.bf16.xpose.msra.mxu0 0
    %4474 = vmatprep.subr.bf16.mxu0 0
    %4475 = vmatpush1.bf16.xpose.msra.mxu0 0
    %4476 = vmatprep.mubr.bf16.mxu0 0
    %4477 = vmatmul.mubr.bf16.gmra.mrb[0].mxu0 %v4439
    %v4478 = vpop.f32.mrb[0].mxu0
    %v4479 = vadd.f32 0.0, %v4478
    %v4480 = vpop.f32.mrb[0].mxu0
    %v4481 = vpop.f32.mrb[0].mxu0
    %v4482 = vpop.f32.mrb[0].mxu0
    %4483 = vdwg.mxu0
    %v4485 = vsel %vm609, %v4235, 0
    %v4488 = vsel %vm609, %v4243, 0
    %4490 = vmatprep.subr.bf16.mxu0 0
    %4491 = vmatpush1.bf16.xpose.msra.mxu0 %v4488
    %4492 = vmatprep.subr.bf16.mxu0 0
    %4493 = vmatpush1.bf16.xpose.msra.mxu0 0
    %4494 = vmatprep.subr.bf16.mxu0 0
    %4495 = vmatpush1.bf16.xpose.msra.mxu0 0
    %4496 = vmatprep.subr.bf16.mxu0 0
    %4497 = vmatpush1.bf16.xpose.msra.mxu0 0
    %4498 = vmatprep.subr.bf16.mxu0 0
    %4499 = vmatpush1.bf16.xpose.msra.mxu0 0
    %4500 = vmatprep.subr.bf16.mxu0 0
    %4501 = vmatpush1.bf16.xpose.msra.mxu0 0
    %4502 = vmatprep.subr.bf16.mxu0 0
    %4503 = vmatpush1.bf16.xpose.msra.mxu0 0
    %4504 = vmatprep.subr.bf16.mxu0 0
    %4505 = vmatpush1.bf16.xpose.msra.mxu0 0
    %4506 = vmatprep.subr.bf16.mxu0 0
    %4507 = vmatpush1.bf16.xpose.msra.mxu0 0
    %4508 = vmatprep.subr.bf16.mxu0 0
    %4509 = vmatpush1.bf16.xpose.msra.mxu0 0
    %4510 = vmatprep.subr.bf16.mxu0 0
    %4511 = vmatpush1.bf16.xpose.msra.mxu0 0
    %4512 = vmatprep.subr.bf16.mxu0 0
    %4513 = vmatpush1.bf16.xpose.msra.mxu0 0
    %4514 = vmatprep.subr.bf16.mxu0 0
    %4515 = vmatpush1.bf16.xpose.msra.mxu0 0
    %4516 = vmatprep.subr.bf16.mxu0 0
    %4517 = vmatpush1.bf16.xpose.msra.mxu0 0
    %4518 = vmatprep.subr.bf16.mxu0 0
    %4519 = vmatpush1.bf16.xpose.msra.mxu0 0
    %4520 = vmatprep.subr.bf16.mxu0 0
    %4521 = vmatpush1.bf16.xpose.msra.mxu0 0
    %4522 = vmatprep.mubr.bf16.mxu0 0
    %4523 = vmatmul.mubr.bf16.gmra.mrb[0].mxu0 %v4485
    %v4524 = vpop.f32.mrb[0].mxu0
    %v4525 = vadd.f32 0.0, %v4524
    %v4526 = vpop.f32.mrb[0].mxu0
    %v4527 = vpop.f32.mrb[0].mxu0
    %v4528 = vpop.f32.mrb[0].mxu0
    %4529 = vdwg.mxu0
    %v4531 = vsel %vm609, %v4236, 0
    %v4534 = vsel %vm609, %v4244, 0
    %4536 = vmatprep.subr.bf16.mxu0 0
    %4537 = vmatpush1.bf16.xpose.msra.mxu0 %v4534
    %4538 = vmatprep.subr.bf16.mxu0 0
    %4539 = vmatpush1.bf16.xpose.msra.mxu0 0
    %4540 = vmatprep.subr.bf16.mxu0 0
    %4541 = vmatpush1.bf16.xpose.msra.mxu0 0
    %4542 = vmatprep.subr.bf16.mxu0 0
    %4543 = vmatpush1.bf16.xpose.msra.mxu0 0
    %4544 = vmatprep.subr.bf16.mxu0 0
    %4545 = vmatpush1.bf16.xpose.msra.mxu0 0
    %4546 = vmatprep.subr.bf16.mxu0 0
    %4547 = vmatpush1.bf16.xpose.msra.mxu0 0
    %4548 = vmatprep.subr.bf16.mxu0 0
    %4549 = vmatpush1.bf16.xpose.msra.mxu0 0
    %4550 = vmatprep.subr.bf16.mxu0 0
    %4551 = vmatpush1.bf16.xpose.msra.mxu0 0
    %4552 = vmatprep.subr.bf16.mxu0 0
    %4553 = vmatpush1.bf16.xpose.msra.mxu0 0
    %4554 = vmatprep.subr.bf16.mxu0 0
    %4555 = vmatpush1.bf16.xpose.msra.mxu0 0
    %4556 = vmatprep.subr.bf16.mxu0 0
    %4557 = vmatpush1.bf16.xpose.msra.mxu0 0
    %4558 = vmatprep.subr.bf16.mxu0 0
    %4559 = vmatpush1.bf16.xpose.msra.mxu0 0
    %4560 = vmatprep.subr.bf16.mxu0 0
    %4561 = vmatpush1.bf16.xpose.msra.mxu0 0
    %4562 = vmatprep.subr.bf16.mxu0 0
    %4563 = vmatpush1.bf16.xpose.msra.mxu0 0
    %4564 = vmatprep.subr.bf16.mxu0 0
    %4565 = vmatpush1.bf16.xpose.msra.mxu0 0
    %4566 = vmatprep.subr.bf16.mxu0 0
    %4567 = vmatpush1.bf16.xpose.msra.mxu0 0
    %4568 = vmatprep.mubr.bf16.mxu0 0
    %4569 = vmatmul.mubr.bf16.gmra.mrb[0].mxu0 %v4531
    %v4570 = vpop.f32.mrb[0].mxu0
    %v4571 = vadd.f32 0.0, %v4570
    %v4572 = vpop.f32.mrb[0].mxu0
    %v4573 = vpop.f32.mrb[0].mxu0
    %v4574 = vpop.f32.mrb[0].mxu0
    %4575 = vdwg.mxu0
    %v4577 = vsel %vm609, %v4237, 0
    %v4580 = vsel %vm609, %v4245, 0
    %4582 = vmatprep.subr.bf16.mxu0 0
    %4583 = vmatpush1.bf16.xpose.msra.mxu0 %v4580
    %4584 = vmatprep.subr.bf16.mxu0 0
    %4585 = vmatpush1.bf16.xpose.msra.mxu0 0
    %4586 = vmatprep.subr.bf16.mxu0 0
    %4587 = vmatpush1.bf16.xpose.msra.mxu0 0
    %4588 = vmatprep.subr.bf16.mxu0 0
    %4589 = vmatpush1.bf16.xpose.msra.mxu0 0
    %4590 = vmatprep.subr.bf16.mxu0 0
    %4591 = vmatpush1.bf16.xpose.msra.mxu0 0
    %4592 = vmatprep.subr.bf16.mxu0 0
    %4593 = vmatpush1.bf16.xpose.msra.mxu0 0
    %4594 = vmatprep.subr.bf16.mxu0 0
    %4595 = vmatpush1.bf16.xpose.msra.mxu0 0
    %4596 = vmatprep.subr.bf16.mxu0 0
    %4597 = vmatpush1.bf16.xpose.msra.mxu0 0
    %4598 = vmatprep.subr.bf16.mxu0 0
    %4599 = vmatpush1.bf16.xpose.msra.mxu0 0
    %4600 = vmatprep.subr.bf16.mxu0 0
    %4601 = vmatpush1.bf16.xpose.msra.mxu0 0
    %4602 = vmatprep.subr.bf16.mxu0 0
    %4603 = vmatpush1.bf16.xpose.msra.mxu0 0
    %4604 = vmatprep.subr.bf16.mxu0 0
    %4605 = vmatpush1.bf16.xpose.msra.mxu0 0
    %4606 = vmatprep.subr.bf16.mxu0 0
    %4607 = vmatpush1.bf16.xpose.msra.mxu0 0
    %4608 = vmatprep.subr.bf16.mxu0 0
    %4609 = vmatpush1.bf16.xpose.msra.mxu0 0
    %4610 = vmatprep.subr.bf16.mxu0 0
    %4611 = vmatpush1.bf16.xpose.msra.mxu0 0
    %4612 = vmatprep.subr.bf16.mxu0 0
    %4613 = vmatpush1.bf16.xpose.msra.mxu0 0
    %4614 = vmatprep.mubr.bf16.mxu0 0
    %4615 = vmatmul.mubr.bf16.gmra.mrb[0].mxu0 %v4577
    %v4616 = vpop.f32.mrb[0].mxu0
    %v4617 = vadd.f32 0.0, %v4616
    %v4618 = vpop.f32.mrb[0].mxu0
    %v4619 = vpop.f32.mrb[0].mxu0
    %v4620 = vpop.f32.mrb[0].mxu0
    %4621 = vdwg.mxu0
    %v4622 = vsel %vm609, %v4295, -inf
    %4623 = vmax.xlane.f32.xlu0 %v4622
    %v4624 = vpop.xlane.xlu0 %4623
    %v4625 = vsel %vm609, %v4341, -inf
    %4626 = vmax.xlane.f32.xlu0 %v4625
    %v4627 = vpop.xlane.xlu0 %4626
    %v4628 = vsel %vm609, %v4387, -inf
    %4629 = vmax.xlane.f32.xlu0 %v4628
    %v4630 = vpop.xlane.xlu0 %4629
    %v4631 = vsel %vm609, %v4433, -inf
    %4632 = vmax.xlane.f32.xlu0 %v4631
    %v4633 = vpop.xlane.xlu0 %4632
    %v4634 = vsel %vm609, %v4479, -inf
    %4635 = vmax.xlane.f32.xlu0 %v4634
    %v4636 = vpop.xlane.xlu0 %4635
    %v4637 = vsel %vm609, %v4525, -inf
    %4638 = vmax.xlane.f32.xlu0 %v4637
    %v4639 = vpop.xlane.xlu0 %4638
    %v4640 = vsel %vm609, %v4571, -inf
    %4641 = vmax.xlane.f32.xlu0 %v4640
    %v4642 = vpop.xlane.xlu0 %4641
    %v4643 = vsel %vm609, %v4617, -inf
    %4644 = vmax.xlane.f32.xlu0 %v4643
    %v4645 = vpop.xlane.xlu0 %4644
    %v4646 = vsub.f32 %v4295, %v4624
    %v4647 = vsub.f32 %v4341, %v4627
    %v4648 = vsub.f32 %v4387, %v4630
    %v4649 = vsub.f32 %v4433, %v4633
    %v4650 = vsub.f32 %v4479, %v4636
    %v4651 = vsub.f32 %v4525, %v4639
    %v4652 = vsub.f32 %v4571, %v4642
    %v4653 = vsub.f32 %v4617, %v4645
    %v4654 = vmul.f32 %v4646, 1.442695
    %v4655 = vpow.pop %v4654
    %v4656 = vmul.f32 %v4647, 1.442695
    %v4657 = vpow.pop %v4656
    %v4658 = vmul.f32 %v4648, 1.442695
    %v4659 = vpow.pop %v4658
    %v4660 = vmul.f32 %v4649, 1.442695
    %v4661 = vpow.pop %v4660
    %v4662 = vmul.f32 %v4650, 1.442695
    %v4663 = vpow.pop %v4662
    %v4664 = vmul.f32 %v4651, 1.442695
    %v4665 = vpow.pop %v4664
    %v4666 = vmul.f32 %v4652, 1.442695
    %v4667 = vpow.pop %v4666
    %v4668 = vmul.f32 %v4653, 1.442695
    %v4669 = vpow.pop %v4668
    %v4670 = vsel %vm609, %v4655, 0.0
    %4671 = vadd.xlane.f32.xlu0 %v4670
    %v4672 = vpop.xlane.xlu0 %4671
    %v4673 = vsel %vm609, %v4657, 0.0
    %4674 = vadd.xlane.f32.xlu0 %v4673
    %v4675 = vpop.xlane.xlu0 %4674
    %v4676 = vsel %vm609, %v4659, 0.0
    %4677 = vadd.xlane.f32.xlu0 %v4676
    %v4678 = vpop.xlane.xlu0 %4677
    %v4679 = vsel %vm609, %v4661, 0.0
    %4680 = vadd.xlane.f32.xlu0 %v4679
    %v4681 = vpop.xlane.xlu0 %4680
    %v4682 = vsel %vm609, %v4663, 0.0
    %4683 = vadd.xlane.f32.xlu0 %v4682
    %v4684 = vpop.xlane.xlu0 %4683
    %v4685 = vsel %vm609, %v4665, 0.0
    %4686 = vadd.xlane.f32.xlu0 %v4685
    %v4687 = vpop.xlane.xlu0 %4686
    %v4688 = vsel %vm609, %v4667, 0.0
    %4689 = vadd.xlane.f32.xlu0 %v4688
    %v4690 = vpop.xlane.xlu0 %4689
    %v4691 = vsel %vm609, %v4669, 0.0
    %4692 = vadd.xlane.f32.xlu0 %v4691
    %v4693 = vpop.xlane.xlu0 %4692
    %v4694 = vrcp.pop %v4672
    %v4695 = vrcp.pop %v4675
    %v4696 = vrcp.pop %v4678
    %v4697 = vrcp.pop %v4681
    %v4698 = vrcp.pop %v4684
    %v4699 = vrcp.pop %v4687
    %v4700 = vrcp.pop %v4690
    %v4701 = vrcp.pop %v4693
    %v4702 = vmul.f32 %v4655, %v4694
    %v4703 = vmul.f32 %v4657, %v4695
    %v4704 = vmul.f32 %v4659, %v4696
    %v4705 = vmul.f32 %v4661, %v4697
    %v4706 = vmul.f32 %v4663, %v4698
    %v4707 = vmul.f32 %v4665, %v4699
    %v4708 = vmul.f32 %v4667, %v4700
    %v4709 = vmul.f32 %v4669, %v4701
    %v4710 = vpack.c.bf16 %v4702, %v4702
    %v4711 = vpack.c.bf16 %v4703, %v4703
    %v4712 = vpack.c.bf16 %v4704, %v4704
    %v4713 = vpack.c.bf16 %v4705, %v4705
    %v4714 = vpack.c.bf16 %v4706, %v4706
    %v4715 = vpack.c.bf16 %v4707, %v4707
    %v4716 = vpack.c.bf16 %v4708, %v4708
    %v4717 = vpack.c.bf16 %v4709, %v4709
    %v4719 = vsel %vm609, %v4710, 0
    %v4722 = vsel %vm1077, %v4246, 0
    %4724 = vmatprep.subr.bf16.mxu0 0
    %4725 = vmatpush1.bf16.msra.mxu0 %v4722
    %4726 = vmatprep.subr.bf16.mxu0 0
    %4727 = vmatpush1.bf16.msra.mxu0 0
    %4728 = vmatprep.subr.bf16.mxu0 0
    %4729 = vmatpush1.bf16.msra.mxu0 0
    %4730 = vmatprep.subr.bf16.mxu0 0
    %4731 = vmatpush1.bf16.msra.mxu0 0
    %4732 = vmatprep.subr.bf16.mxu0 0
    %4733 = vmatpush1.bf16.msra.mxu0 0
    %4734 = vmatprep.subr.bf16.mxu0 0
    %4735 = vmatpush1.bf16.msra.mxu0 0
    %4736 = vmatprep.subr.bf16.mxu0 0
    %4737 = vmatpush1.bf16.msra.mxu0 0
    %4738 = vmatprep.subr.bf16.mxu0 0
    %4739 = vmatpush1.bf16.msra.mxu0 0
    %4740 = vmatprep.subr.bf16.mxu0 0
    %4741 = vmatpush1.bf16.msra.mxu0 0
    %4742 = vmatprep.subr.bf16.mxu0 0
    %4743 = vmatpush1.bf16.msra.mxu0 0
    %4744 = vmatprep.subr.bf16.mxu0 0
    %4745 = vmatpush1.bf16.msra.mxu0 0
    %4746 = vmatprep.subr.bf16.mxu0 0
    %4747 = vmatpush1.bf16.msra.mxu0 0
    %4748 = vmatprep.subr.bf16.mxu0 0
    %4749 = vmatpush1.bf16.msra.mxu0 0
    %4750 = vmatprep.subr.bf16.mxu0 0
    %4751 = vmatpush1.bf16.msra.mxu0 0
    %4752 = vmatprep.subr.bf16.mxu0 0
    %4753 = vmatpush1.bf16.msra.mxu0 0
    %4754 = vmatprep.subr.bf16.mxu0 0
    %4755 = vmatpush1.bf16.msra.mxu0 0
    %4756 = vmatprep.mubr.bf16.mxu0 0
    %4757 = vmatmul.mubr.bf16.gmra.mrb[0].mxu0 %v4719
    %v4758 = vpop.f32.mrb[0].mxu0
    %v4759 = vadd.f32 0.0, %v4758
    %v4760 = vpop.f32.mrb[0].mxu0
    %v4761 = vpop.f32.mrb[0].mxu0
    %v4762 = vpop.f32.mrb[0].mxu0
    %4763 = vdwg.mxu0
    %v4765 = vsel %vm609, %v4711, 0
    %v4768 = vsel %vm1077, %v4247, 0
    %4770 = vmatprep.subr.bf16.mxu0 0
    %4771 = vmatpush1.bf16.msra.mxu0 %v4768
    %4772 = vmatprep.subr.bf16.mxu0 0
    %4773 = vmatpush1.bf16.msra.mxu0 0
    %4774 = vmatprep.subr.bf16.mxu0 0
    %4775 = vmatpush1.bf16.msra.mxu0 0
    %4776 = vmatprep.subr.bf16.mxu0 0
    %4777 = vmatpush1.bf16.msra.mxu0 0
    %4778 = vmatprep.subr.bf16.mxu0 0
    %4779 = vmatpush1.bf16.msra.mxu0 0
    %4780 = vmatprep.subr.bf16.mxu0 0
    %4781 = vmatpush1.bf16.msra.mxu0 0
    %4782 = vmatprep.subr.bf16.mxu0 0
    %4783 = vmatpush1.bf16.msra.mxu0 0
    %4784 = vmatprep.subr.bf16.mxu0 0
    %4785 = vmatpush1.bf16.msra.mxu0 0
    %4786 = vmatprep.subr.bf16.mxu0 0
    %4787 = vmatpush1.bf16.msra.mxu0 0
    %4788 = vmatprep.subr.bf16.mxu0 0
    %4789 = vmatpush1.bf16.msra.mxu0 0
    %4790 = vmatprep.subr.bf16.mxu0 0
    %4791 = vmatpush1.bf16.msra.mxu0 0
    %4792 = vmatprep.subr.bf16.mxu0 0
    %4793 = vmatpush1.bf16.msra.mxu0 0
    %4794 = vmatprep.subr.bf16.mxu0 0
    %4795 = vmatpush1.bf16.msra.mxu0 0
    %4796 = vmatprep.subr.bf16.mxu0 0
    %4797 = vmatpush1.bf16.msra.mxu0 0
    %4798 = vmatprep.subr.bf16.mxu0 0
    %4799 = vmatpush1.bf16.msra.mxu0 0
    %4800 = vmatprep.subr.bf16.mxu0 0
    %4801 = vmatpush1.bf16.msra.mxu0 0
    %4802 = vmatprep.mubr.bf16.mxu0 0
    %4803 = vmatmul.mubr.bf16.gmra.mrb[0].mxu0 %v4765
    %v4804 = vpop.f32.mrb[0].mxu0
    %v4805 = vadd.f32 0.0, %v4804
    %v4806 = vpop.f32.mrb[0].mxu0
    %v4807 = vpop.f32.mrb[0].mxu0
    %v4808 = vpop.f32.mrb[0].mxu0
    %4809 = vdwg.mxu0
    %v4811 = vsel %vm609, %v4712, 0
    %v4814 = vsel %vm1077, %v4248, 0
    %4816 = vmatprep.subr.bf16.mxu0 0
    %4817 = vmatpush1.bf16.msra.mxu0 %v4814
    %4818 = vmatprep.subr.bf16.mxu0 0
    %4819 = vmatpush1.bf16.msra.mxu0 0
    %4820 = vmatprep.subr.bf16.mxu0 0
    %4821 = vmatpush1.bf16.msra.mxu0 0
    %4822 = vmatprep.subr.bf16.mxu0 0
    %4823 = vmatpush1.bf16.msra.mxu0 0
    %4824 = vmatprep.subr.bf16.mxu0 0
    %4825 = vmatpush1.bf16.msra.mxu0 0
    %4826 = vmatprep.subr.bf16.mxu0 0
    %4827 = vmatpush1.bf16.msra.mxu0 0
    %4828 = vmatprep.subr.bf16.mxu0 0
    %4829 = vmatpush1.bf16.msra.mxu0 0
    %4830 = vmatprep.subr.bf16.mxu0 0
    %4831 = vmatpush1.bf16.msra.mxu0 0
    %4832 = vmatprep.subr.bf16.mxu0 0
    %4833 = vmatpush1.bf16.msra.mxu0 0
    %4834 = vmatprep.subr.bf16.mxu0 0
    %4835 = vmatpush1.bf16.msra.mxu0 0
    %4836 = vmatprep.subr.bf16.mxu0 0
    %4837 = vmatpush1.bf16.msra.mxu0 0
    %4838 = vmatprep.subr.bf16.mxu0 0
    %4839 = vmatpush1.bf16.msra.mxu0 0
    %4840 = vmatprep.subr.bf16.mxu0 0
    %4841 = vmatpush1.bf16.msra.mxu0 0
    %4842 = vmatprep.subr.bf16.mxu0 0
    %4843 = vmatpush1.bf16.msra.mxu0 0
    %4844 = vmatprep.subr.bf16.mxu0 0
    %4845 = vmatpush1.bf16.msra.mxu0 0
    %4846 = vmatprep.subr.bf16.mxu0 0
    %4847 = vmatpush1.bf16.msra.mxu0 0
    %4848 = vmatprep.mubr.bf16.mxu0 0
    %4849 = vmatmul.mubr.bf16.gmra.mrb[0].mxu0 %v4811
    %v4850 = vpop.f32.mrb[0].mxu0
    %v4851 = vadd.f32 0.0, %v4850
    %v4852 = vpop.f32.mrb[0].mxu0
    %v4853 = vpop.f32.mrb[0].mxu0
    %v4854 = vpop.f32.mrb[0].mxu0
    %4855 = vdwg.mxu0
    %v4857 = vsel %vm609, %v4713, 0
    %v4860 = vsel %vm1077, %v4249, 0
    %4862 = vmatprep.subr.bf16.mxu0 0
    %4863 = vmatpush1.bf16.msra.mxu0 %v4860
    %4864 = vmatprep.subr.bf16.mxu0 0
    %4865 = vmatpush1.bf16.msra.mxu0 0
    %4866 = vmatprep.subr.bf16.mxu0 0
    %4867 = vmatpush1.bf16.msra.mxu0 0
    %4868 = vmatprep.subr.bf16.mxu0 0
    %4869 = vmatpush1.bf16.msra.mxu0 0
    %4870 = vmatprep.subr.bf16.mxu0 0
    %4871 = vmatpush1.bf16.msra.mxu0 0
    %4872 = vmatprep.subr.bf16.mxu0 0
    %4873 = vmatpush1.bf16.msra.mxu0 0
    %4874 = vmatprep.subr.bf16.mxu0 0
    %4875 = vmatpush1.bf16.msra.mxu0 0
    %4876 = vmatprep.subr.bf16.mxu0 0
    %4877 = vmatpush1.bf16.msra.mxu0 0
    %4878 = vmatprep.subr.bf16.mxu0 0
    %4879 = vmatpush1.bf16.msra.mxu0 0
    %4880 = vmatprep.subr.bf16.mxu0 0
    %4881 = vmatpush1.bf16.msra.mxu0 0
    %4882 = vmatprep.subr.bf16.mxu0 0
    %4883 = vmatpush1.bf16.msra.mxu0 0
    %4884 = vmatprep.subr.bf16.mxu0 0
    %4885 = vmatpush1.bf16.msra.mxu0 0
    %4886 = vmatprep.subr.bf16.mxu0 0
    %4887 = vmatpush1.bf16.msra.mxu0 0
    %4888 = vmatprep.subr.bf16.mxu0 0
    %4889 = vmatpush1.bf16.msra.mxu0 0
    %4890 = vmatprep.subr.bf16.mxu0 0
    %4891 = vmatpush1.bf16.msra.mxu0 0
    %4892 = vmatprep.subr.bf16.mxu0 0
    %4893 = vmatpush1.bf16.msra.mxu0 0
    %4894 = vmatprep.mubr.bf16.mxu0 0
    %4895 = vmatmul.mubr.bf16.gmra.mrb[0].mxu0 %v4857
    %v4896 = vpop.f32.mrb[0].mxu0
    %v4897 = vadd.f32 0.0, %v4896
    %v4898 = vpop.f32.mrb[0].mxu0
    %v4899 = vpop.f32.mrb[0].mxu0
    %v4900 = vpop.f32.mrb[0].mxu0
    %4901 = vdwg.mxu0
    %v4903 = vsel %vm609, %v4714, 0
    %v4906 = vsel %vm1077, %v4250, 0
    %4908 = vmatprep.subr.bf16.mxu0 0
    %4909 = vmatpush1.bf16.msra.mxu0 %v4906
    %4910 = vmatprep.subr.bf16.mxu0 0
    %4911 = vmatpush1.bf16.msra.mxu0 0
    %4912 = vmatprep.subr.bf16.mxu0 0
    %4913 = vmatpush1.bf16.msra.mxu0 0
    %4914 = vmatprep.subr.bf16.mxu0 0
    %4915 = vmatpush1.bf16.msra.mxu0 0
    %4916 = vmatprep.subr.bf16.mxu0 0
    %4917 = vmatpush1.bf16.msra.mxu0 0
    %4918 = vmatprep.subr.bf16.mxu0 0
    %4919 = vmatpush1.bf16.msra.mxu0 0
    %4920 = vmatprep.subr.bf16.mxu0 0
    %4921 = vmatpush1.bf16.msra.mxu0 0
    %4922 = vmatprep.subr.bf16.mxu0 0
    %4923 = vmatpush1.bf16.msra.mxu0 0
    %4924 = vmatprep.subr.bf16.mxu0 0
    %4925 = vmatpush1.bf16.msra.mxu0 0
    %4926 = vmatprep.subr.bf16.mxu0 0
    %4927 = vmatpush1.bf16.msra.mxu0 0
    %4928 = vmatprep.subr.bf16.mxu0 0
    %4929 = vmatpush1.bf16.msra.mxu0 0
    %4930 = vmatprep.subr.bf16.mxu0 0
    %4931 = vmatpush1.bf16.msra.mxu0 0
    %4932 = vmatprep.subr.bf16.mxu0 0
    %4933 = vmatpush1.bf16.msra.mxu0 0
    %4934 = vmatprep.subr.bf16.mxu0 0
    %4935 = vmatpush1.bf16.msra.mxu0 0
    %4936 = vmatprep.subr.bf16.mxu0 0
    %4937 = vmatpush1.bf16.msra.mxu0 0
    %4938 = vmatprep.subr.bf16.mxu0 0
    %4939 = vmatpush1.bf16.msra.mxu0 0
    %4940 = vmatprep.mubr.bf16.mxu0 0
    %4941 = vmatmul.mubr.bf16.gmra.mrb[0].mxu0 %v4903
    %v4942 = vpop.f32.mrb[0].mxu0
    %v4943 = vadd.f32 0.0, %v4942
    %v4944 = vpop.f32.mrb[0].mxu0
    %v4945 = vpop.f32.mrb[0].mxu0
    %v4946 = vpop.f32.mrb[0].mxu0
    %4947 = vdwg.mxu0
    %v4949 = vsel %vm609, %v4715, 0
    %v4952 = vsel %vm1077, %v4251, 0
    %4954 = vmatprep.subr.bf16.mxu0 0
    %4955 = vmatpush1.bf16.msra.mxu0 %v4952
    %4956 = vmatprep.subr.bf16.mxu0 0
    %4957 = vmatpush1.bf16.msra.mxu0 0
    %4958 = vmatprep.subr.bf16.mxu0 0
    %4959 = vmatpush1.bf16.msra.mxu0 0
    %4960 = vmatprep.subr.bf16.mxu0 0
    %4961 = vmatpush1.bf16.msra.mxu0 0
    %4962 = vmatprep.subr.bf16.mxu0 0
    %4963 = vmatpush1.bf16.msra.mxu0 0
    %4964 = vmatprep.subr.bf16.mxu0 0
    %4965 = vmatpush1.bf16.msra.mxu0 0
    %4966 = vmatprep.subr.bf16.mxu0 0
    %4967 = vmatpush1.bf16.msra.mxu0 0
    %4968 = vmatprep.subr.bf16.mxu0 0
    %4969 = vmatpush1.bf16.msra.mxu0 0
    %4970 = vmatprep.subr.bf16.mxu0 0
    %4971 = vmatpush1.bf16.msra.mxu0 0
    %4972 = vmatprep.subr.bf16.mxu0 0
    %4973 = vmatpush1.bf16.msra.mxu0 0
    %4974 = vmatprep.subr.bf16.mxu0 0
    %4975 = vmatpush1.bf16.msra.mxu0 0
    %4976 = vmatprep.subr.bf16.mxu0 0
    %4977 = vmatpush1.bf16.msra.mxu0 0
    %4978 = vmatprep.subr.bf16.mxu0 0
    %4979 = vmatpush1.bf16.msra.mxu0 0
    %4980 = vmatprep.subr.bf16.mxu0 0
    %4981 = vmatpush1.bf16.msra.mxu0 0
    %4982 = vmatprep.subr.bf16.mxu0 0
    %4983 = vmatpush1.bf16.msra.mxu0 0
    %4984 = vmatprep.subr.bf16.mxu0 0
    %4985 = vmatpush1.bf16.msra.mxu0 0
    %4986 = vmatprep.mubr.bf16.mxu0 0
    %4987 = vmatmul.mubr.bf16.gmra.mrb[0].mxu0 %v4949
    %v4988 = vpop.f32.mrb[0].mxu0
    %v4989 = vadd.f32 0.0, %v4988
    %v4990 = vpop.f32.mrb[0].mxu0
    %v4991 = vpop.f32.mrb[0].mxu0
    %v4992 = vpop.f32.mrb[0].mxu0
    %4993 = vdwg.mxu0
    %v4995 = vsel %vm609, %v4716, 0
    %v4998 = vsel %vm1077, %v4252, 0
    %5000 = vmatprep.subr.bf16.mxu0 0
    %5001 = vmatpush1.bf16.msra.mxu0 %v4998
    %5002 = vmatprep.subr.bf16.mxu0 0
    %5003 = vmatpush1.bf16.msra.mxu0 0
    %5004 = vmatprep.subr.bf16.mxu0 0
    %5005 = vmatpush1.bf16.msra.mxu0 0
    %5006 = vmatprep.subr.bf16.mxu0 0
    %5007 = vmatpush1.bf16.msra.mxu0 0
    %5008 = vmatprep.subr.bf16.mxu0 0
    %5009 = vmatpush1.bf16.msra.mxu0 0
    %5010 = vmatprep.subr.bf16.mxu0 0
    %5011 = vmatpush1.bf16.msra.mxu0 0
    %5012 = vmatprep.subr.bf16.mxu0 0
    %5013 = vmatpush1.bf16.msra.mxu0 0
    %5014 = vmatprep.subr.bf16.mxu0 0
    %5015 = vmatpush1.bf16.msra.mxu0 0
    %5016 = vmatprep.subr.bf16.mxu0 0
    %5017 = vmatpush1.bf16.msra.mxu0 0
    %5018 = vmatprep.subr.bf16.mxu0 0
    %5019 = vmatpush1.bf16.msra.mxu0 0
    %5020 = vmatprep.subr.bf16.mxu0 0
    %5021 = vmatpush1.bf16.msra.mxu0 0
    %5022 = vmatprep.subr.bf16.mxu0 0
    %5023 = vmatpush1.bf16.msra.mxu0 0
    %5024 = vmatprep.subr.bf16.mxu0 0
    %5025 = vmatpush1.bf16.msra.mxu0 0
    %5026 = vmatprep.subr.bf16.mxu0 0
    %5027 = vmatpush1.bf16.msra.mxu0 0
    %5028 = vmatprep.subr.bf16.mxu0 0
    %5029 = vmatpush1.bf16.msra.mxu0 0
    %5030 = vmatprep.subr.bf16.mxu0 0
    %5031 = vmatpush1.bf16.msra.mxu0 0
    %5032 = vmatprep.mubr.bf16.mxu0 0
    %5033 = vmatmul.mubr.bf16.gmra.mrb[0].mxu0 %v4995
    %v5034 = vpop.f32.mrb[0].mxu0
    %v5035 = vadd.f32 0.0, %v5034
    %v5036 = vpop.f32.mrb[0].mxu0
    %v5037 = vpop.f32.mrb[0].mxu0
    %v5038 = vpop.f32.mrb[0].mxu0
    %5039 = vdwg.mxu0
    %v5041 = vsel %vm609, %v4717, 0
    %v5044 = vsel %vm1077, %v4253, 0
    %5046 = vmatprep.subr.bf16.mxu0 0
    %5047 = vmatpush1.bf16.msra.mxu0 %v5044
    %5048 = vmatprep.subr.bf16.mxu0 0
    %5049 = vmatpush1.bf16.msra.mxu0 0
    %5050 = vmatprep.subr.bf16.mxu0 0
    %5051 = vmatpush1.bf16.msra.mxu0 0
    %5052 = vmatprep.subr.bf16.mxu0 0
    %5053 = vmatpush1.bf16.msra.mxu0 0
    %5054 = vmatprep.subr.bf16.mxu0 0
    %5055 = vmatpush1.bf16.msra.mxu0 0
    %5056 = vmatprep.subr.bf16.mxu0 0
    %5057 = vmatpush1.bf16.msra.mxu0 0
    %5058 = vmatprep.subr.bf16.mxu0 0
    %5059 = vmatpush1.bf16.msra.mxu0 0
    %5060 = vmatprep.subr.bf16.mxu0 0
    %5061 = vmatpush1.bf16.msra.mxu0 0
    %5062 = vmatprep.subr.bf16.mxu0 0
    %5063 = vmatpush1.bf16.msra.mxu0 0
    %5064 = vmatprep.subr.bf16.mxu0 0
    %5065 = vmatpush1.bf16.msra.mxu0 0
    %5066 = vmatprep.subr.bf16.mxu0 0
    %5067 = vmatpush1.bf16.msra.mxu0 0
    %5068 = vmatprep.subr.bf16.mxu0 0
    %5069 = vmatpush1.bf16.msra.mxu0 0
    %5070 = vmatprep.subr.bf16.mxu0 0
    %5071 = vmatpush1.bf16.msra.mxu0 0
    %5072 = vmatprep.subr.bf16.mxu0 0
    %5073 = vmatpush1.bf16.msra.mxu0 0
    %5074 = vmatprep.subr.bf16.mxu0 0
    %5075 = vmatpush1.bf16.msra.mxu0 0
    %5076 = vmatprep.subr.bf16.mxu0 0
    %5077 = vmatpush1.bf16.msra.mxu0 0
    %5078 = vmatprep.mubr.bf16.mxu0 0
    %5079 = vmatmul.mubr.bf16.gmra.mrb[0].mxu0 %v5041
    %v5080 = vpop.f32.mrb[0].mxu0
    %v5081 = vadd.f32 0.0, %v5080
    %v5082 = vpop.f32.mrb[0].mxu0
    %v5083 = vpop.f32.mrb[0].mxu0
    %v5084 = vpop.f32.mrb[0].mxu0
    %5085 = vdwg.mxu0
    %v5086 = vpack.c.bf16 %v4805, %v4759
    %v5087 = vpack.c.bf16 %v4897, %v4851
    %v5088 = vpack.c.bf16 %v4989, %v4943
    %v5089 = vpack.c.bf16 %v5081, %v5035
    %s5090 = scalar_lea.vmem %s3, 12
    %v5091 = vld [vmem:[%s5090] sm:$0xf]
    %v5093 = vsel %vm609, %v5086, 0
    %v5096 = vsel %vm609, %v5087, 0
    %v5099 = vsel %vm609, %v5088, 0
    %v5102 = vsel %vm609, %v5089, 0
    %v5105 = vsel %vm1077, %v5091, 0
    %5107 = vmatprep.subr.bf16.mxu0 0
    %5108 = vmatpush1.bf16.msra.mxu0 %v5105
    %5109 = vmatprep.subr.bf16.mxu0 0
    %5110 = vmatpush1.bf16.msra.mxu0 0
    %5111 = vmatprep.subr.bf16.mxu0 0
    %5112 = vmatpush1.bf16.msra.mxu0 0
    %5113 = vmatprep.subr.bf16.mxu0 0
    %5114 = vmatpush1.bf16.msra.mxu0 0
    %5115 = vmatprep.subr.bf16.mxu0 0
    %5116 = vmatpush1.bf16.msra.mxu0 0
    %5117 = vmatprep.subr.bf16.mxu0 0
    %5118 = vmatpush1.bf16.msra.mxu0 0
    %5119 = vmatprep.subr.bf16.mxu0 0
    %5120 = vmatpush1.bf16.msra.mxu0 0
    %5121 = vmatprep.subr.bf16.mxu0 0
    %5122 = vmatpush1.bf16.msra.mxu0 0
    %5123 = vmatprep.subr.bf16.mxu0 0
    %5124 = vmatpush1.bf16.msra.mxu0 0
    %5125 = vmatprep.subr.bf16.mxu0 0
    %5126 = vmatpush1.bf16.msra.mxu0 0
    %5127 = vmatprep.subr.bf16.mxu0 0
    %5128 = vmatpush1.bf16.msra.mxu0 0
    %5129 = vmatprep.subr.bf16.mxu0 0
    %5130 = vmatpush1.bf16.msra.mxu0 0
    %5131 = vmatprep.subr.bf16.mxu0 0
    %5132 = vmatpush1.bf16.msra.mxu0 0
    %5133 = vmatprep.subr.bf16.mxu0 0
    %5134 = vmatpush1.bf16.msra.mxu0 0
    %5135 = vmatprep.subr.bf16.mxu0 0
    %5136 = vmatpush1.bf16.msra.mxu0 0
    %5137 = vmatprep.subr.bf16.mxu0 0
    %5138 = vmatpush1.bf16.msra.mxu0 0
    %5139 = vmatprep.mubr.bf16.mxu0 0
    %5140 = vmatmul.mubr.bf16.gmra.mrb[0].mxu0 %v5093
    %v5141 = vpop.f32.mrb[0].mxu0
    %v5142 = vadd.f32 0.0, %v5141
    %v5143 = vpop.f32.mrb[0].mxu0
    %v5144 = vpop.f32.mrb[0].mxu0
    %v5145 = vadd.f32 0.0, %v5144
    %v5146 = vpop.f32.mrb[0].mxu0
    %5147 = vmatprep.mubr.bf16.mxu0 0
    %5148 = vmatmul.mubr.bf16.gmra.mrb[0].mxu0 %v5096
    %v5149 = vpop.f32.mrb[0].mxu0
    %v5150 = vadd.f32 0.0, %v5149
    %v5151 = vpop.f32.mrb[0].mxu0
    %v5152 = vpop.f32.mrb[0].mxu0
    %v5153 = vadd.f32 0.0, %v5152
    %v5154 = vpop.f32.mrb[0].mxu0
    %5155 = vmatprep.mubr.bf16.mxu0 0
    %5156 = vmatmul.mubr.bf16.gmra.mrb[0].mxu0 %v5099
    %v5157 = vpop.f32.mrb[0].mxu0
    %v5158 = vadd.f32 0.0, %v5157
    %v5159 = vpop.f32.mrb[0].mxu0
    %v5160 = vpop.f32.mrb[0].mxu0
    %v5161 = vadd.f32 0.0, %v5160
    %v5162 = vpop.f32.mrb[0].mxu0
    %5163 = vmatprep.mubr.bf16.mxu0 0
    %5164 = vmatmul.mubr.bf16.gmra.mrb[0].mxu0 %v5102
    %v5165 = vpop.f32.mrb[0].mxu0
    %v5166 = vadd.f32 0.0, %v5165
    %v5167 = vpop.f32.mrb[0].mxu0
    %v5168 = vpop.f32.mrb[0].mxu0
    %v5169 = vadd.f32 0.0, %v5168
    %v5170 = vpop.f32.mrb[0].mxu0
    %5171 = vdwg.mxu0
    %v5172 = vadd.f32 %v3952, %v5142
    %v5173 = vadd.f32 %v3953, %v5145
    %v5174 = vadd.f32 %v3954, %v5150
    %v5175 = vadd.f32 %v3955, %v5153
    %v5176 = vadd.f32 %v3956, %v5158
    %v5177 = vadd.f32 %v3957, %v5161
    %v5178 = vadd.f32 %v3958, %v5166
    %v5179 = vadd.f32 %v3959, %v5169
    %v5180 = vlaneseq
    %v5181 = vshrl.u32 %v5180, 7
    %v5182 = vsub.s32 0, %v5181
    %v5183 = vrot.slane %v44, %v5182
    %v5184 = vadd.f32 %v5172, %v5183
    %v5185 = vadd.f32 %v5173, %v5183
    %v5186 = vadd.f32 %v5174, %v5183
    %v5187 = vadd.f32 %v5175, %v5183
    %v5188 = vadd.f32 %v5176, %v5183
    %v5189 = vadd.f32 %v5177, %v5183
    %v5190 = vadd.f32 %v5178, %v5183
    %v5191 = vadd.f32 %v5179, %v5183
    %v5192 = vadd.f32 %v5184, %v293
    %v5193 = vadd.f32 %v5185, %v294
    %v5194 = vadd.f32 %v5186, %v295
    %v5195 = vadd.f32 %v5187, %v296
    %v5196 = vadd.f32 %v5188, %v297
    %v5197 = vadd.f32 %v5189, %v298
    %v5198 = vadd.f32 %v5190, %v299
    %v5199 = vadd.f32 %v5191, %v300
    %v5200 = vsel %vm86, %v5192, 0.0
    %5201 = vadd.xlane.f32.xlu0 %v5200
    %v5202 = vpop.xlane.xlu0 %5201
    %v5203 = vsel %vm86, %v5193, 0.0
    %5204 = vadd.xlane.f32.xlu0 %v5203
    %v5205 = vpop.xlane.xlu0 %5204
    %v5206 = vsel %vm86, %v5194, 0.0
    %5207 = vadd.xlane.f32.xlu0 %v5206
    %v5208 = vpop.xlane.xlu0 %5207
    %v5209 = vsel %vm86, %v5195, 0.0
    %5210 = vadd.xlane.f32.xlu0 %v5209
    %v5211 = vpop.xlane.xlu0 %5210
    %v5212 = vsel %vm86, %v5196, 0.0
    %5213 = vadd.xlane.f32.xlu0 %v5212
    %v5214 = vpop.xlane.xlu0 %5213
    %v5215 = vsel %vm86, %v5197, 0.0
    %5216 = vadd.xlane.f32.xlu0 %v5215
    %v5217 = vpop.xlane.xlu0 %5216
    %v5218 = vsel %vm86, %v5198, 0.0
    %5219 = vadd.xlane.f32.xlu0 %v5218
    %v5220 = vpop.xlane.xlu0 %5219
    %v5221 = vsel %vm86, %v5199, 0.0
    %5222 = vadd.xlane.f32.xlu0 %v5221
    %v5223 = vpop.xlane.xlu0 %5222
    %v5224 = vmul.f32 %v5202, %v188
    %v5225 = vmul.f32 %v5205, %v188
    %v5226 = vmul.f32 %v5208, %v188
    %v5227 = vmul.f32 %v5211, %v188
    %v5228 = vmul.f32 %v5214, %v188
    %v5229 = vmul.f32 %v5217, %v188
    %v5230 = vmul.f32 %v5220, %v188
    %v5231 = vmul.f32 %v5223, %v188
    %v5232 = vsub.f32 %v5192, %v5224
    %v5233 = vsub.f32 %v5193, %v5225
    %v5234 = vsub.f32 %v5194, %v5226
    %v5235 = vsub.f32 %v5195, %v5227
    %v5236 = vsub.f32 %v5196, %v5228
    %v5237 = vsub.f32 %v5197, %v5229
    %v5238 = vsub.f32 %v5198, %v5230
    %v5239 = vsub.f32 %v5199, %v5231
    %v5240 = vmul.f32 %v5232, %v5232
    %v5241 = vmul.f32 %v5233, %v5233
    %v5242 = vmul.f32 %v5234, %v5234
    %v5243 = vmul.f32 %v5235, %v5235
    %v5244 = vmul.f32 %v5236, %v5236
    %v5245 = vmul.f32 %v5237, %v5237
    %v5246 = vmul.f32 %v5238, %v5238
    %v5247 = vmul.f32 %v5239, %v5239
    %v5248 = vsel %vm86, %v5240, 0.0
    %5249 = vadd.xlane.f32.xlu0 %v5248
    %v5250 = vpop.xlane.xlu0 %5249
    %v5251 = vsel %vm86, %v5241, 0.0
    %5252 = vadd.xlane.f32.xlu0 %v5251
    %v5253 = vpop.xlane.xlu0 %5252
    %v5254 = vsel %vm86, %v5242, 0.0
    %5255 = vadd.xlane.f32.xlu0 %v5254
    %v5256 = vpop.xlane.xlu0 %5255
    %v5257 = vsel %vm86, %v5243, 0.0
    %5258 = vadd.xlane.f32.xlu0 %v5257
    %v5259 = vpop.xlane.xlu0 %5258
    %v5260 = vsel %vm86, %v5244, 0.0
    %5261 = vadd.xlane.f32.xlu0 %v5260
    %v5262 = vpop.xlane.xlu0 %5261
    %v5263 = vsel %vm86, %v5245, 0.0
    %5264 = vadd.xlane.f32.xlu0 %v5263
    %v5265 = vpop.xlane.xlu0 %5264
    %v5266 = vsel %vm86, %v5246, 0.0
    %5267 = vadd.xlane.f32.xlu0 %v5266
    %v5268 = vpop.xlane.xlu0 %5267
    %v5269 = vsel %vm86, %v5247, 0.0
    %5270 = vadd.xlane.f32.xlu0 %v5269
    %v5271 = vpop.xlane.xlu0 %5270
    %v5272 = vmul.f32 %v5250, %v188
    %v5273 = vmul.f32 %v5253, %v188
    %v5274 = vmul.f32 %v5256, %v188
    %v5275 = vmul.f32 %v5259, %v188
    %v5276 = vmul.f32 %v5262, %v188
    %v5277 = vmul.f32 %v5265, %v188
    %v5278 = vmul.f32 %v5268, %v188
    %v5279 = vmul.f32 %v5271, %v188
    %v5280 = vadd.f32 %v5272, 1e-05
    %v5281 = vadd.f32 %v5273, 1e-05
    %v5282 = vadd.f32 %v5274, 1e-05
    %v5283 = vadd.f32 %v5275, 1e-05
    %v5284 = vadd.f32 %v5276, 1e-05
    %v5285 = vadd.f32 %v5277, 1e-05
    %v5286 = vadd.f32 %v5278, 1e-05
    %v5287 = vadd.f32 %v5279, 1e-05
    %v5288 = vrsqrt.pop %v5280
    %v5289 = vrsqrt.pop %v5281
    %v5290 = vrsqrt.pop %v5282
    %v5291 = vrsqrt.pop %v5283
    %v5292 = vrsqrt.pop %v5284
    %v5293 = vrsqrt.pop %v5285
    %v5294 = vrsqrt.pop %v5286
    %v5295 = vrsqrt.pop %v5287
    %v5296 = vmul.f32 %v5232, %v5288
    %v5297 = vmul.f32 %v5233, %v5289
    %v5298 = vmul.f32 %v5234, %v5290
    %v5299 = vmul.f32 %v5235, %v5291
    %v5300 = vmul.f32 %v5236, %v5292
    %v5301 = vmul.f32 %v5237, %v5293
    %v5302 = vmul.f32 %v5238, %v5294
    %v5303 = vmul.f32 %v5239, %v5295
    %v5304 = vlaneseq
    %v5305 = vshrl.u32 %v5304, 7
    %v5306 = vsub.s32 0, %v5305
    %v5307 = vrot.slane %v45, %v5306
    %v5308 = vmul.f32 %v5296, %v5307
    %v5309 = vmul.f32 %v5297, %v5307
    %v5310 = vmul.f32 %v5298, %v5307
    %v5311 = vmul.f32 %v5299, %v5307
    %v5312 = vmul.f32 %v5300, %v5307
    %v5313 = vmul.f32 %v5301, %v5307
    %v5314 = vmul.f32 %v5302, %v5307
    %v5315 = vmul.f32 %v5303, %v5307
    %v5316 = vlaneseq
    %v5317 = vshrl.u32 %v5316, 7
    %v5318 = vsub.s32 0, %v5317
    %v5319 = vrot.slane %v46, %v5318
    %v5320 = vadd.f32 %v5308, %v5319
    %v5321 = vadd.f32 %v5309, %v5319
    %v5322 = vadd.f32 %v5310, %v5319
    %v5323 = vadd.f32 %v5311, %v5319
    %v5324 = vadd.f32 %v5312, %v5319
    %v5325 = vadd.f32 %v5313, %v5319
    %v5326 = vadd.f32 %v5314, %v5319
    %v5327 = vadd.f32 %v5315, %v5319
    %v5328 = vpack.c.bf16 %v5321, %v5320
    %v5329 = vpack.c.bf16 %v5323, %v5322
    %v5330 = vpack.c.bf16 %v5325, %v5324
    %v5331 = vpack.c.bf16 %v5327, %v5326
    %v5332 = vld [vmem:[%s5] sm:$0xf]
    %v5333 = vld [vmem:[%s5 + $0x4] sm:$0xf]
    %v5334 = vld [vmem:[%s5 + $0x8] sm:$0xf]
    %v5335 = vld [vmem:[%s5 + $0xc] sm:$0xf]
    %v5336 = vlaneseq
    %v5337 = vshrl.u32 %v5336, 7
    %v5338 = vsub.s32 0, %v5337
    %v5339 = vrot.slane %v47, %v5338
    %v5344 = vunpack.c.l.b16 %v5332
    %v5345 = vunpack.c.l.b16 %v5333
    %v5346 = vunpack.c.l.b16 %v5334
    %v5347 = vunpack.c.l.b16 %v5335
    %v5348 = vpack.c.b16 %v5345, %v5344
    %v5349 = vpack.c.b16 %v5347, %v5346
    %v5353 = vsel %vm86, %v5328, 0
    %v5356 = vsel %vm86, %v5329, 0
    %v5359 = vsel %vm86, %v5330, 0
    %v5362 = vsel %vm86, %v5331, 0
    %5364 = vmatprep.subr.bf16.mxu0 0
    %5365 = vmatpush1.bf16.msra.mxu0 %v5348
    %5366 = vmatprep.subr.bf16.mxu0 0
    %5367 = vmatpush1.bf16.msra.mxu0 %v5349
    %5368 = vmatprep.subr.bf16.mxu0 0
    %5369 = vmatpush1.bf16.msra.mxu0 0
    %5370 = vmatprep.subr.bf16.mxu0 0
    %5371 = vmatpush1.bf16.msra.mxu0 0
    %5372 = vmatprep.subr.bf16.mxu0 0
    %5373 = vmatpush1.bf16.msra.mxu0 0
    %5374 = vmatprep.subr.bf16.mxu0 0
    %5375 = vmatpush1.bf16.msra.mxu0 0
    %5376 = vmatprep.subr.bf16.mxu0 0
    %5377 = vmatpush1.bf16.msra.mxu0 0
    %5378 = vmatprep.subr.bf16.mxu0 0
    %5379 = vmatpush1.bf16.msra.mxu0 0
    %5380 = vmatprep.subr.bf16.mxu0 0
    %5381 = vmatpush1.bf16.msra.mxu0 0
    %5382 = vmatprep.subr.bf16.mxu0 0
    %5383 = vmatpush1.bf16.msra.mxu0 0
    %5384 = vmatprep.subr.bf16.mxu0 0
    %5385 = vmatpush1.bf16.msra.mxu0 0
    %5386 = vmatprep.subr.bf16.mxu0 0
    %5387 = vmatpush1.bf16.msra.mxu0 0
    %5388 = vmatprep.subr.bf16.mxu0 0
    %5389 = vmatpush1.bf16.msra.mxu0 0
    %5390 = vmatprep.subr.bf16.mxu0 0
    %5391 = vmatpush1.bf16.msra.mxu0 0
    %5392 = vmatprep.subr.bf16.mxu0 0
    %5393 = vmatpush1.bf16.msra.mxu0 0
    %5394 = vmatprep.subr.bf16.mxu0 0
    %5395 = vmatpush1.bf16.msra.mxu0 0
    %5396 = vmatprep.mubr.bf16.mxu0 0
    %5397 = vmatmul.mubr.bf16.gmra.mrb[0].mxu0 %v5353
    %v5398 = vpop.f32.mrb[0].mxu0
    %v5399 = vadd.f32 %v5339, %v5398
    %v5400 = vpop.f32.mrb[0].mxu0
    %v5401 = vpop.f32.mrb[0].mxu0
    %v5402 = vadd.f32 %v5339, %v5401
    %v5403 = vpop.f32.mrb[0].mxu0
    %5404 = vmatprep.mubr.bf16.mxu0 0
    %5405 = vmatmul.mubr.bf16.gmra.mrb[0].mxu0 %v5356
    %v5406 = vpop.f32.mrb[0].mxu0
    %v5407 = vadd.f32 %v5339, %v5406
    %v5408 = vpop.f32.mrb[0].mxu0
    %v5409 = vpop.f32.mrb[0].mxu0
    %v5410 = vadd.f32 %v5339, %v5409
    %v5411 = vpop.f32.mrb[0].mxu0
    %5412 = vmatprep.mubr.bf16.mxu0 0
    %5413 = vmatmul.mubr.bf16.gmra.mrb[0].mxu0 %v5359
    %v5414 = vpop.f32.mrb[0].mxu0
    %v5415 = vadd.f32 %v5339, %v5414
    %v5416 = vpop.f32.mrb[0].mxu0
    %v5417 = vpop.f32.mrb[0].mxu0
    %v5418 = vadd.f32 %v5339, %v5417
    %v5419 = vpop.f32.mrb[0].mxu0
    %5420 = vmatprep.mubr.bf16.mxu0 0
    %5421 = vmatmul.mubr.bf16.gmra.mrb[0].mxu0 %v5362
    %v5422 = vpop.f32.mrb[0].mxu0
    %v5423 = vadd.f32 %v5339, %v5422
    %v5424 = vpop.f32.mrb[0].mxu0
    %v5425 = vpop.f32.mrb[0].mxu0
    %v5426 = vadd.f32 %v5339, %v5425
    %v5427 = vpop.f32.mrb[0].mxu0
    %5428 = vdwg.mxu0
    %v5429 = vmul.f32 %v5399, 0.5
    %v5430 = vmul.f32 %v5402, 0.5
    %v5431 = vmul.f32 %v5407, 0.5
    %v5432 = vmul.f32 %v5410, 0.5
    %v5433 = vmul.f32 %v5415, 0.5
    %v5434 = vmul.f32 %v5418, 0.5
    %v5435 = vmul.f32 %v5423, 0.5
    %v5436 = vmul.f32 %v5426, 0.5
    %v5437 = vmul.f32 %v5399, 0.70710677
    %v5438 = vmul.f32 %v5402, 0.70710677
    %v5439 = vmul.f32 %v5407, 0.70710677
    %v5440 = vmul.f32 %v5410, 0.70710677
    %v5441 = vmul.f32 %v5415, 0.70710677
    %v5442 = vmul.f32 %v5418, 0.70710677
    %v5443 = vmul.f32 %v5423, 0.70710677
    %v5444 = vmul.f32 %v5426, 0.70710677
    %vm5445 = vcmp.ge.f32.partialorder %v5437, 0.0
    %vm5446 = vcmp.ge.f32.partialorder %v5438, 0.0
    %vm5447 = vcmp.ge.f32.partialorder %v5439, 0.0
    %vm5448 = vcmp.ge.f32.partialorder %v5440, 0.0
    %vm5449 = vcmp.ge.f32.partialorder %v5441, 0.0
    %vm5450 = vcmp.ge.f32.partialorder %v5442, 0.0
    %vm5451 = vcmp.ge.f32.partialorder %v5443, 0.0
    %vm5452 = vcmp.ge.f32.partialorder %v5444, 0.0
    %v5453 = vsel %vm5445, 1.0, -1.0
    %v5454 = vsel %vm5446, 1.0, -1.0
    %v5455 = vsel %vm5447, 1.0, -1.0
    %v5456 = vsel %vm5448, 1.0, -1.0
    %v5457 = vsel %vm5449, 1.0, -1.0
    %v5458 = vsel %vm5450, 1.0, -1.0
    %v5459 = vsel %vm5451, 1.0, -1.0
    %v5460 = vsel %vm5452, 1.0, -1.0
    %v5461 = vand.u32 2147483647, %v5437
    %v5462 = vand.u32 2147483647, %v5438
    %v5463 = vand.u32 2147483647, %v5439
    %v5464 = vand.u32 2147483647, %v5440
    %v5465 = vand.u32 2147483647, %v5441
    %v5466 = vand.u32 2147483647, %v5442
    %v5467 = vand.u32 2147483647, %v5443
    %v5468 = vand.u32 2147483647, %v5444
    %v5469 = vmul.f32 %v5461, 0.3275911
    %v5470 = vmul.f32 %v5462, 0.3275911
    %v5471 = vmul.f32 %v5463, 0.3275911
    %v5472 = vmul.f32 %v5464, 0.3275911
    %v5473 = vmul.f32 %v5465, 0.3275911
    %v5474 = vmul.f32 %v5466, 0.3275911
    %v5475 = vmul.f32 %v5467, 0.3275911
    %v5476 = vmul.f32 %v5468, 0.3275911
    %v5477 = vadd.f32 %v5469, 1.0
    %v5478 = vadd.f32 %v5470, 1.0
    %v5479 = vadd.f32 %v5471, 1.0
    %v5480 = vadd.f32 %v5472, 1.0
    %v5481 = vadd.f32 %v5473, 1.0
    %v5482 = vadd.f32 %v5474, 1.0
    %v5483 = vadd.f32 %v5475, 1.0
    %v5484 = vadd.f32 %v5476, 1.0
    %v5485 = vrcp.pop %v5477
    %v5486 = vmul.f32 1.0, %v5485
    %v5487 = vrcp.pop %v5478
    %v5488 = vmul.f32 1.0, %v5487
    %v5489 = vrcp.pop %v5479
    %v5490 = vmul.f32 1.0, %v5489
    %v5491 = vrcp.pop %v5480
    %v5492 = vmul.f32 1.0, %v5491
    %v5493 = vrcp.pop %v5481
    %v5494 = vmul.f32 1.0, %v5493
    %v5495 = vrcp.pop %v5482
    %v5496 = vmul.f32 1.0, %v5495
    %v5497 = vrcp.pop %v5483
    %v5498 = vmul.f32 1.0, %v5497
    %v5499 = vrcp.pop %v5484
    %v5500 = vmul.f32 1.0, %v5499
    %v5501 = vmul.f32 %v5486, 1.0614054
    %v5502 = vmul.f32 %v5488, 1.0614054
    %v5503 = vmul.f32 %v5490, 1.0614054
    %v5504 = vmul.f32 %v5492, 1.0614054
    %v5505 = vmul.f32 %v5494, 1.0614054
    %v5506 = vmul.f32 %v5496, 1.0614054
    %v5507 = vmul.f32 %v5498, 1.0614054
    %v5508 = vmul.f32 %v5500, 1.0614054
    %v5509 = vadd.f32 %v5501, -1.4531521
    %v5510 = vadd.f32 %v5502, -1.4531521
    %v5511 = vadd.f32 %v5503, -1.4531521
    %v5512 = vadd.f32 %v5504, -1.4531521
    %v5513 = vadd.f32 %v5505, -1.4531521
    %v5514 = vadd.f32 %v5506, -1.4531521
    %v5515 = vadd.f32 %v5507, -1.4531521
    %v5516 = vadd.f32 %v5508, -1.4531521
    %v5517 = vmul.f32 %v5509, %v5486
    %v5518 = vmul.f32 %v5510, %v5488
    %v5519 = vmul.f32 %v5511, %v5490
    %v5520 = vmul.f32 %v5512, %v5492
    %v5521 = vmul.f32 %v5513, %v5494
    %v5522 = vmul.f32 %v5514, %v5496
    %v5523 = vmul.f32 %v5515, %v5498
    %v5524 = vmul.f32 %v5516, %v5500
    %v5525 = vadd.f32 %v5517, 1.4214138
    %v5526 = vadd.f32 %v5518, 1.4214138
    %v5527 = vadd.f32 %v5519, 1.4214138
    %v5528 = vadd.f32 %v5520, 1.4214138
    %v5529 = vadd.f32 %v5521, 1.4214138
    %v5530 = vadd.f32 %v5522, 1.4214138
    %v5531 = vadd.f32 %v5523, 1.4214138
    %v5532 = vadd.f32 %v5524, 1.4214138
    %v5533 = vmul.f32 %v5525, %v5486
    %v5534 = vmul.f32 %v5526, %v5488
    %v5535 = vmul.f32 %v5527, %v5490
    %v5536 = vmul.f32 %v5528, %v5492
    %v5537 = vmul.f32 %v5529, %v5494
    %v5538 = vmul.f32 %v5530, %v5496
    %v5539 = vmul.f32 %v5531, %v5498
    %v5540 = vmul.f32 %v5532, %v5500
    %v5541 = vadd.f32 %v5533, -0.28449672
    %v5542 = vadd.f32 %v5534, -0.28449672
    %v5543 = vadd.f32 %v5535, -0.28449672
    %v5544 = vadd.f32 %v5536, -0.28449672
    %v5545 = vadd.f32 %v5537, -0.28449672
    %v5546 = vadd.f32 %v5538, -0.28449672
    %v5547 = vadd.f32 %v5539, -0.28449672
    %v5548 = vadd.f32 %v5540, -0.28449672
    %v5549 = vmul.f32 %v5541, %v5486
    %v5550 = vmul.f32 %v5542, %v5488
    %v5551 = vmul.f32 %v5543, %v5490
    %v5552 = vmul.f32 %v5544, %v5492
    %v5553 = vmul.f32 %v5545, %v5494
    %v5554 = vmul.f32 %v5546, %v5496
    %v5555 = vmul.f32 %v5547, %v5498
    %v5556 = vmul.f32 %v5548, %v5500
    %v5557 = vadd.f32 %v5549, 0.2548296
    %v5558 = vadd.f32 %v5550, 0.2548296
    %v5559 = vadd.f32 %v5551, 0.2548296
    %v5560 = vadd.f32 %v5552, 0.2548296
    %v5561 = vadd.f32 %v5553, 0.2548296
    %v5562 = vadd.f32 %v5554, 0.2548296
    %v5563 = vadd.f32 %v5555, 0.2548296
    %v5564 = vadd.f32 %v5556, 0.2548296
    %v5565 = vmul.f32 %v5557, %v5486
    %v5566 = vmul.f32 %v5558, %v5488
    %v5567 = vmul.f32 %v5559, %v5490
    %v5568 = vmul.f32 %v5560, %v5492
    %v5569 = vmul.f32 %v5561, %v5494
    %v5570 = vmul.f32 %v5562, %v5496
    %v5571 = vmul.f32 %v5563, %v5498
    %v5572 = vmul.f32 %v5564, %v5500
    %v5573 = vsub.f32 0.0, %v5461
    %v5574 = vsub.f32 0.0, %v5462
    %v5575 = vsub.f32 0.0, %v5463
    %v5576 = vsub.f32 0.0, %v5464
    %v5577 = vsub.f32 0.0, %v5465
    %v5578 = vsub.f32 0.0, %v5466
    %v5579 = vsub.f32 0.0, %v5467
    %v5580 = vsub.f32 0.0, %v5468
    %v5581 = vmul.f32 %v5573, %v5461
    %v5582 = vmul.f32 %v5574, %v5462
    %v5583 = vmul.f32 %v5575, %v5463
    %v5584 = vmul.f32 %v5576, %v5464
    %v5585 = vmul.f32 %v5577, %v5465
    %v5586 = vmul.f32 %v5578, %v5466
    %v5587 = vmul.f32 %v5579, %v5467
    %v5588 = vmul.f32 %v5580, %v5468
    %v5589 = vmul.f32 %v5581, 1.442695
    %v5590 = vpow.pop %v5589
    %v5591 = vmul.f32 %v5582, 1.442695
    %v5592 = vpow.pop %v5591
    %v5593 = vmul.f32 %v5583, 1.442695
    %v5594 = vpow.pop %v5593
    %v5595 = vmul.f32 %v5584, 1.442695
    %v5596 = vpow.pop %v5595
    %v5597 = vmul.f32 %v5585, 1.442695
    %v5598 = vpow.pop %v5597
    %v5599 = vmul.f32 %v5586, 1.442695
    %v5600 = vpow.pop %v5599
    %v5601 = vmul.f32 %v5587, 1.442695
    %v5602 = vpow.pop %v5601
    %v5603 = vmul.f32 %v5588, 1.442695
    %v5604 = vpow.pop %v5603
    %v5605 = vmul.f32 %v5565, %v5590
    %v5606 = vmul.f32 %v5566, %v5592
    %v5607 = vmul.f32 %v5567, %v5594
    %v5608 = vmul.f32 %v5568, %v5596
    %v5609 = vmul.f32 %v5569, %v5598
    %v5610 = vmul.f32 %v5570, %v5600
    %v5611 = vmul.f32 %v5571, %v5602
    %v5612 = vmul.f32 %v5572, %v5604
    %v5613 = vsub.f32 1.0, %v5605
    %v5614 = vsub.f32 1.0, %v5606
    %v5615 = vsub.f32 1.0, %v5607
    %v5616 = vsub.f32 1.0, %v5608
    %v5617 = vsub.f32 1.0, %v5609
    %v5618 = vsub.f32 1.0, %v5610
    %v5619 = vsub.f32 1.0, %v5611
    %v5620 = vsub.f32 1.0, %v5612
    %v5621 = vmul.f32 %v5453, %v5613
    %v5622 = vmul.f32 %v5454, %v5614
    %v5623 = vmul.f32 %v5455, %v5615
    %v5624 = vmul.f32 %v5456, %v5616
    %v5625 = vmul.f32 %v5457, %v5617
    %v5626 = vmul.f32 %v5458, %v5618
    %v5627 = vmul.f32 %v5459, %v5619
    %v5628 = vmul.f32 %v5460, %v5620
    %v5629 = vadd.f32 %v5621, 1.0
    %v5630 = vadd.f32 %v5622, 1.0
    %v5631 = vadd.f32 %v5623, 1.0
    %v5632 = vadd.f32 %v5624, 1.0
    %v5633 = vadd.f32 %v5625, 1.0
    %v5634 = vadd.f32 %v5626, 1.0
    %v5635 = vadd.f32 %v5627, 1.0
    %v5636 = vadd.f32 %v5628, 1.0
    %v5637 = vmul.f32 %v5429, %v5629
    %v5638 = vmul.f32 %v5430, %v5630
    %v5639 = vmul.f32 %v5431, %v5631
    %v5640 = vmul.f32 %v5432, %v5632
    %v5641 = vmul.f32 %v5433, %v5633
    %v5642 = vmul.f32 %v5434, %v5634
    %v5643 = vmul.f32 %v5435, %v5635
    %v5644 = vmul.f32 %v5436, %v5636
    %v5645 = vpack.c.bf16 %v5638, %v5637
    %v5646 = vpack.c.bf16 %v5640, %v5639
    %v5647 = vpack.c.bf16 %v5642, %v5641
    %v5648 = vpack.c.bf16 %v5644, %v5643
    %s5649 = scalar_lea.vmem %s5, 16
    %v5650 = vld [vmem:[%s5649] sm:$0xf]
    %v5651 = vld [vmem:[%s5649 + $0x4] sm:$0xf]
    %v5652 = vld [vmem:[%s5649 + $0x8] sm:$0xf]
    %v5653 = vld [vmem:[%s5649 + $0xc] sm:$0xf]
    %v5654 = vlaneseq
    %v5655 = vshrl.u32 %v5654, 7
    %v5656 = vsub.s32 0, %v5655
    %v5657 = vrot.slane %v48, %v5656
    %v5662 = vunpack.c.l.b16 %v5650
    %v5663 = vunpack.c.l.b16 %v5651
    %v5664 = vunpack.c.l.b16 %v5652
    %v5665 = vunpack.c.l.b16 %v5653
    %v5666 = vpack.c.b16 %v5663, %v5662
    %v5667 = vpack.c.b16 %v5665, %v5664
    %v5671 = vsel %vm86, %v5645, 0
    %v5674 = vsel %vm86, %v5646, 0
    %v5677 = vsel %vm86, %v5647, 0
    %v5680 = vsel %vm86, %v5648, 0
    %5682 = vmatprep.subr.bf16.mxu0 0
    %5683 = vmatpush1.bf16.msra.mxu0 %v5666
    %5684 = vmatprep.subr.bf16.mxu0 0
    %5685 = vmatpush1.bf16.msra.mxu0 %v5667
    %5686 = vmatprep.subr.bf16.mxu0 0
    %5687 = vmatpush1.bf16.msra.mxu0 0
    %5688 = vmatprep.subr.bf16.mxu0 0
    %5689 = vmatpush1.bf16.msra.mxu0 0
    %5690 = vmatprep.subr.bf16.mxu0 0
    %5691 = vmatpush1.bf16.msra.mxu0 0
    %5692 = vmatprep.subr.bf16.mxu0 0
    %5693 = vmatpush1.bf16.msra.mxu0 0
    %5694 = vmatprep.subr.bf16.mxu0 0
    %5695 = vmatpush1.bf16.msra.mxu0 0
    %5696 = vmatprep.subr.bf16.mxu0 0
    %5697 = vmatpush1.bf16.msra.mxu0 0
    %5698 = vmatprep.subr.bf16.mxu0 0
    %5699 = vmatpush1.bf16.msra.mxu0 0
    %5700 = vmatprep.subr.bf16.mxu0 0
    %5701 = vmatpush1.bf16.msra.mxu0 0
    %5702 = vmatprep.subr.bf16.mxu0 0
    %5703 = vmatpush1.bf16.msra.mxu0 0
    %5704 = vmatprep.subr.bf16.mxu0 0
    %5705 = vmatpush1.bf16.msra.mxu0 0
    %5706 = vmatprep.subr.bf16.mxu0 0
    %5707 = vmatpush1.bf16.msra.mxu0 0
    %5708 = vmatprep.subr.bf16.mxu0 0
    %5709 = vmatpush1.bf16.msra.mxu0 0
    %5710 = vmatprep.subr.bf16.mxu0 0
    %5711 = vmatpush1.bf16.msra.mxu0 0
    %5712 = vmatprep.subr.bf16.mxu0 0
    %5713 = vmatpush1.bf16.msra.mxu0 0
    %5714 = vmatprep.mubr.bf16.mxu0 0
    %5715 = vmatmul.mubr.bf16.gmra.mrb[0].mxu0 %v5671
    %v5716 = vpop.f32.mrb[0].mxu0
    %v5717 = vadd.f32 %v5657, %v5716
    %v5718 = vpop.f32.mrb[0].mxu0
    %v5719 = vpop.f32.mrb[0].mxu0
    %v5720 = vadd.f32 %v5657, %v5719
    %v5721 = vpop.f32.mrb[0].mxu0
    %5722 = vmatprep.mubr.bf16.mxu0 0
    %5723 = vmatmul.mubr.bf16.gmra.mrb[0].mxu0 %v5674
    %v5724 = vpop.f32.mrb[0].mxu0
    %v5725 = vadd.f32 %v5657, %v5724
    %v5726 = vpop.f32.mrb[0].mxu0
    %v5727 = vpop.f32.mrb[0].mxu0
    %v5728 = vadd.f32 %v5657, %v5727
    %v5729 = vpop.f32.mrb[0].mxu0
    %5730 = vmatprep.mubr.bf16.mxu0 0
    %5731 = vmatmul.mubr.bf16.gmra.mrb[0].mxu0 %v5677
    %v5732 = vpop.f32.mrb[0].mxu0
    %v5733 = vadd.f32 %v5657, %v5732
    %v5734 = vpop.f32.mrb[0].mxu0
    %v5735 = vpop.f32.mrb[0].mxu0
    %v5736 = vadd.f32 %v5657, %v5735
    %v5737 = vpop.f32.mrb[0].mxu0
    %5738 = vmatprep.mubr.bf16.mxu0 0
    %5739 = vmatmul.mubr.bf16.gmra.mrb[0].mxu0 %v5680
    %v5740 = vpop.f32.mrb[0].mxu0
    %v5741 = vadd.f32 %v5657, %v5740
    %v5742 = vpop.f32.mrb[0].mxu0
    %v5743 = vpop.f32.mrb[0].mxu0
    %v5744 = vadd.f32 %v5657, %v5743
    %v5745 = vpop.f32.mrb[0].mxu0
    %5746 = vdwg.mxu0
    %v5747 = vadd.f32 %v5717, %v5320
    %v5748 = vadd.f32 %v5720, %v5321
    %v5749 = vadd.f32 %v5725, %v5322
    %v5750 = vadd.f32 %v5728, %v5323
    %v5751 = vadd.f32 %v5733, %v5324
    %v5752 = vadd.f32 %v5736, %v5325
    %v5753 = vadd.f32 %v5741, %v5326
    %v5754 = vadd.f32 %v5744, %v5327
    %v5755 = vsel %vm86, %v5747, 0.0
    %5756 = vadd.xlane.f32.xlu0 %v5755
    %v5757 = vpop.xlane.xlu0 %5756
    %v5758 = vsel %vm86, %v5748, 0.0
    %5759 = vadd.xlane.f32.xlu0 %v5758
    %v5760 = vpop.xlane.xlu0 %5759
    %v5761 = vsel %vm86, %v5749, 0.0
    %5762 = vadd.xlane.f32.xlu0 %v5761
    %v5763 = vpop.xlane.xlu0 %5762
    %v5764 = vsel %vm86, %v5750, 0.0
    %5765 = vadd.xlane.f32.xlu0 %v5764
    %v5766 = vpop.xlane.xlu0 %5765
    %v5767 = vsel %vm86, %v5751, 0.0
    %5768 = vadd.xlane.f32.xlu0 %v5767
    %v5769 = vpop.xlane.xlu0 %5768
    %v5770 = vsel %vm86, %v5752, 0.0
    %5771 = vadd.xlane.f32.xlu0 %v5770
    %v5772 = vpop.xlane.xlu0 %5771
    %v5773 = vsel %vm86, %v5753, 0.0
    %5774 = vadd.xlane.f32.xlu0 %v5773
    %v5775 = vpop.xlane.xlu0 %5774
    %v5776 = vsel %vm86, %v5754, 0.0
    %5777 = vadd.xlane.f32.xlu0 %v5776
    %v5778 = vpop.xlane.xlu0 %5777
    %v5779 = vmul.f32 %v5757, %v188
    %v5780 = vmul.f32 %v5760, %v188
    %v5781 = vmul.f32 %v5763, %v188
    %v5782 = vmul.f32 %v5766, %v188
    %v5783 = vmul.f32 %v5769, %v188
    %v5784 = vmul.f32 %v5772, %v188
    %v5785 = vmul.f32 %v5775, %v188
    %v5786 = vmul.f32 %v5778, %v188
    %v5787 = vsub.f32 %v5747, %v5779
    %v5788 = vsub.f32 %v5748, %v5780
    %v5789 = vsub.f32 %v5749, %v5781
    %v5790 = vsub.f32 %v5750, %v5782
    %v5791 = vsub.f32 %v5751, %v5783
    %v5792 = vsub.f32 %v5752, %v5784
    %v5793 = vsub.f32 %v5753, %v5785
    %v5794 = vsub.f32 %v5754, %v5786
    %v5795 = vmul.f32 %v5787, %v5787
    %v5796 = vmul.f32 %v5788, %v5788
    %v5797 = vmul.f32 %v5789, %v5789
    %v5798 = vmul.f32 %v5790, %v5790
    %v5799 = vmul.f32 %v5791, %v5791
    %v5800 = vmul.f32 %v5792, %v5792
    %v5801 = vmul.f32 %v5793, %v5793
    %v5802 = vmul.f32 %v5794, %v5794
    %v5803 = vsel %vm86, %v5795, 0.0
    %5804 = vadd.xlane.f32.xlu0 %v5803
    %v5805 = vpop.xlane.xlu0 %5804
    %v5806 = vsel %vm86, %v5796, 0.0
    %5807 = vadd.xlane.f32.xlu0 %v5806
    %v5808 = vpop.xlane.xlu0 %5807
    %v5809 = vsel %vm86, %v5797, 0.0
    %5810 = vadd.xlane.f32.xlu0 %v5809
    %v5811 = vpop.xlane.xlu0 %5810
    %v5812 = vsel %vm86, %v5798, 0.0
    %5813 = vadd.xlane.f32.xlu0 %v5812
    %v5814 = vpop.xlane.xlu0 %5813
    %v5815 = vsel %vm86, %v5799, 0.0
    %5816 = vadd.xlane.f32.xlu0 %v5815
    %v5817 = vpop.xlane.xlu0 %5816
    %v5818 = vsel %vm86, %v5800, 0.0
    %5819 = vadd.xlane.f32.xlu0 %v5818
    %v5820 = vpop.xlane.xlu0 %5819
    %v5821 = vsel %vm86, %v5801, 0.0
    %5822 = vadd.xlane.f32.xlu0 %v5821
    %v5823 = vpop.xlane.xlu0 %5822
    %v5824 = vsel %vm86, %v5802, 0.0
    %5825 = vadd.xlane.f32.xlu0 %v5824
    %v5826 = vpop.xlane.xlu0 %5825
    %v5827 = vmul.f32 %v5805, %v188
    %v5828 = vmul.f32 %v5808, %v188
    %v5829 = vmul.f32 %v5811, %v188
    %v5830 = vmul.f32 %v5814, %v188
    %v5831 = vmul.f32 %v5817, %v188
    %v5832 = vmul.f32 %v5820, %v188
    %v5833 = vmul.f32 %v5823, %v188
    %v5834 = vmul.f32 %v5826, %v188
    %v5835 = vadd.f32 %v5827, 1e-05
    %v5836 = vadd.f32 %v5828, 1e-05
    %v5837 = vadd.f32 %v5829, 1e-05
    %v5838 = vadd.f32 %v5830, 1e-05
    %v5839 = vadd.f32 %v5831, 1e-05
    %v5840 = vadd.f32 %v5832, 1e-05
    %v5841 = vadd.f32 %v5833, 1e-05
    %v5842 = vadd.f32 %v5834, 1e-05
    %v5843 = vrsqrt.pop %v5835
    %v5844 = vrsqrt.pop %v5836
    %v5845 = vrsqrt.pop %v5837
    %v5846 = vrsqrt.pop %v5838
    %v5847 = vrsqrt.pop %v5839
    %v5848 = vrsqrt.pop %v5840
    %v5849 = vrsqrt.pop %v5841
    %v5850 = vrsqrt.pop %v5842
    %v5851 = vmul.f32 %v5787, %v5843
    %v5852 = vmul.f32 %v5788, %v5844
    %v5853 = vmul.f32 %v5789, %v5845
    %v5854 = vmul.f32 %v5790, %v5846
    %v5855 = vmul.f32 %v5791, %v5847
    %v5856 = vmul.f32 %v5792, %v5848
    %v5857 = vmul.f32 %v5793, %v5849
    %v5858 = vmul.f32 %v5794, %v5850
    %v5859 = vlaneseq
    %v5860 = vshrl.u32 %v5859, 7
    %v5861 = vsub.s32 0, %v5860
    %v5862 = vrot.slane %v49, %v5861
    %v5863 = vmul.f32 %v5851, %v5862
    %v5864 = vmul.f32 %v5852, %v5862
    %v5865 = vmul.f32 %v5853, %v5862
    %v5866 = vmul.f32 %v5854, %v5862
    %v5867 = vmul.f32 %v5855, %v5862
    %v5868 = vmul.f32 %v5856, %v5862
    %v5869 = vmul.f32 %v5857, %v5862
    %v5870 = vmul.f32 %v5858, %v5862
    %v5871 = vlaneseq
    %v5872 = vshrl.u32 %v5871, 7
    %v5873 = vsub.s32 0, %v5872
    %v5874 = vrot.slane %v50, %v5873
    %v5875 = vadd.f32 %v5863, %v5874
    %v5876 = vadd.f32 %v5864, %v5874
    %v5877 = vadd.f32 %v5865, %v5874
    %v5878 = vadd.f32 %v5866, %v5874
    %v5879 = vadd.f32 %v5867, %v5874
    %v5880 = vadd.f32 %v5868, %v5874
    %v5881 = vadd.f32 %v5869, %v5874
    %v5882 = vadd.f32 %v5870, %v5874
    %v5883 = vadd.f32 %v285, %v5875
    %v5884 = vadd.f32 %v286, %v5876
    %v5885 = vadd.f32 %v287, %v5877
    %v5886 = vadd.f32 %v288, %v5878
    %v5887 = vadd.f32 %v289, %v5879
    %v5888 = vadd.f32 %v290, %v5880
    %v5889 = vadd.f32 %v291, %v5881
    %v5890 = vadd.f32 %v292, %v5882
    %v5891 = vsel %vm86, %v5883, 0.0
    %v5892 = vrot.slane %v5891, 4
    %v5893 = vadd.f32 %v5891, %v5892
    %v5894 = vrot.slane %v5893, 2
    %v5895 = vadd.f32 %v5893, %v5894
    %v5896 = vrot.slane %v5895, 1
    %v5897 = vadd.f32 %v5895, %v5896
    %v5898 = vsel %vm86, %v5884, 0.0
    %v5899 = vrot.slane %v5898, 4
    %v5900 = vadd.f32 %v5898, %v5899
    %v5901 = vrot.slane %v5900, 2
    %v5902 = vadd.f32 %v5900, %v5901
    %v5903 = vrot.slane %v5902, 1
    %v5904 = vadd.f32 %v5902, %v5903
    %v5905 = vsel %vm86, %v5885, 0.0
    %v5906 = vrot.slane %v5905, 4
    %v5907 = vadd.f32 %v5905, %v5906
    %v5908 = vrot.slane %v5907, 2
    %v5909 = vadd.f32 %v5907, %v5908
    %v5910 = vrot.slane %v5909, 1
    %v5911 = vadd.f32 %v5909, %v5910
    %v5912 = vsel %vm86, %v5886, 0.0
    %v5913 = vrot.slane %v5912, 4
    %v5914 = vadd.f32 %v5912, %v5913
    %v5915 = vrot.slane %v5914, 2
    %v5916 = vadd.f32 %v5914, %v5915
    %v5917 = vrot.slane %v5916, 1
    %v5918 = vadd.f32 %v5916, %v5917
    %v5919 = vsel %vm86, %v5887, 0.0
    %v5920 = vrot.slane %v5919, 4
    %v5921 = vadd.f32 %v5919, %v5920
    %v5922 = vrot.slane %v5921, 2
    %v5923 = vadd.f32 %v5921, %v5922
    %v5924 = vrot.slane %v5923, 1
    %v5925 = vadd.f32 %v5923, %v5924
    %v5926 = vsel %vm86, %v5888, 0.0
    %v5927 = vrot.slane %v5926, 4
    %v5928 = vadd.f32 %v5926, %v5927
    %v5929 = vrot.slane %v5928, 2
    %v5930 = vadd.f32 %v5928, %v5929
    %v5931 = vrot.slane %v5930, 1
    %v5932 = vadd.f32 %v5930, %v5931
    %v5933 = vsel %vm86, %v5889, 0.0
    %v5934 = vrot.slane %v5933, 4
    %v5935 = vadd.f32 %v5933, %v5934
    %v5936 = vrot.slane %v5935, 2
    %v5937 = vadd.f32 %v5935, %v5936
    %v5938 = vrot.slane %v5937, 1
    %v5939 = vadd.f32 %v5937, %v5938
    %v5940 = vsel %vm86, %v5890, 0.0
    %v5941 = vrot.slane %v5940, 4
    %v5942 = vadd.f32 %v5940, %v5941
    %v5943 = vrot.slane %v5942, 2
    %v5944 = vadd.f32 %v5942, %v5943
    %v5945 = vrot.slane %v5944, 1
    %v5946 = vadd.f32 %v5944, %v5945
    %v5947 = vrcp.pop 8.0
    %v5948 = vmul.f32 %v5897, %v5947
    %v5949 = vmul.f32 %v5904, %v5947
    %v5950 = vmul.f32 %v5911, %v5947
    %v5951 = vmul.f32 %v5918, %v5947
    %v5952 = vmul.f32 %v5925, %v5947
    %v5953 = vmul.f32 %v5932, %v5947
    %v5954 = vmul.f32 %v5939, %v5947
    %v5955 = vmul.f32 %v5946, %v5947
    %v5956 = vpack.c.bf16 %v5948, %v5948
    %v5957 = vpack.c.bf16 %v5949, %v5949
    %v5958 = vpack.c.bf16 %v5950, %v5950
    %v5959 = vpack.c.bf16 %v5951, %v5951
    %v5960 = vpack.c.bf16 %v5952, %v5952
    %v5961 = vpack.c.bf16 %v5953, %v5953
    %v5962 = vpack.c.bf16 %v5954, %v5954
    %v5963 = vpack.c.bf16 %v5955, %v5955
    %v5964 = vld [vmem:[%s6] sm:$0xf]
    %v5965 = vld [vmem:[%s6 + $0x4] sm:$0xf]
    %v5966 = vld [vmem:[%s6 + $0x8] sm:$0xf]
    %v5967 = vld [vmem:[%s6 + $0xc] sm:$0xf]
    %v5968 = vlaneseq
    %v5969 = vshrl.u32 %v5968, 7
    %v5970 = vsub.s32 0, %v5969
    %v5971 = vrot.slane %v51, %v5970
    %v5980 = vunpack.c.l.b16 %v5956
    %v5981 = vunpack.c.l.b16 %v5957
    %v5982 = vunpack.c.l.b16 %v5958
    %v5983 = vunpack.c.l.b16 %v5959
    %v5984 = vunpack.c.l.b16 %v5960
    %v5985 = vunpack.c.l.b16 %v5961
    %v5986 = vunpack.c.l.b16 %v5962
    %v5987 = vunpack.c.l.b16 %v5963
    %vm5988 = vcmask 1041409
    %v5989 = vsel %vm5988, %v5981, %v5980
    %vm5990 = vcmask 1042434
    %v5991 = vsel %vm5990, %v5982, %v5989
    %vm5992 = vcmask 1043459
    %v5993 = vsel %vm5992, %v5983, %v5991
    %vm5994 = vcmask 1044484
    %v5995 = vsel %vm5994, %v5984, %v5993
    %vm5996 = vcmask 1045509
    %v5997 = vsel %vm5996, %v5985, %v5995
    %vm5998 = vcmask 1046534
    %v5999 = vsel %vm5998, %v5986, %v5997
    %vm6000 = vcmask 1047559
    %v6001 = vsel %vm6000, %v5987, %v5999
    %v6002 = vpack.c.b16 %v6001, %v6001
    %v6007 = vunpack.c.l.b16 %v5964
    %v6008 = vunpack.c.l.b16 %v5965
    %v6009 = vunpack.c.l.b16 %v5966
    %v6010 = vunpack.c.l.b16 %v5967
    %v6011 = vpack.c.b16 %v6008, %v6007
    %v6012 = vpack.c.b16 %v6010, %v6009
    %v6016 = vsel %vm86, %v6002, 0
    %6018 = vmatprep.subr.bf16.mxu0 0
    %6019 = vmatpush1.bf16.msra.mxu0 %v6011
    %6020 = vmatprep.subr.bf16.mxu0 0
    %6021 = vmatpush1.bf16.msra.mxu0 %v6012
    %6022 = vmatprep.subr.bf16.mxu0 0
    %6023 = vmatpush1.bf16.msra.mxu0 0
    %6024 = vmatprep.subr.bf16.mxu0 0
    %6025 = vmatpush1.bf16.msra.mxu0 0
    %6026 = vmatprep.subr.bf16.mxu0 0
    %6027 = vmatpush1.bf16.msra.mxu0 0
    %6028 = vmatprep.subr.bf16.mxu0 0
    %6029 = vmatpush1.bf16.msra.mxu0 0
    %6030 = vmatprep.subr.bf16.mxu0 0
    %6031 = vmatpush1.bf16.msra.mxu0 0
    %6032 = vmatprep.subr.bf16.mxu0 0
    %6033 = vmatpush1.bf16.msra.mxu0 0
    %6034 = vmatprep.subr.bf16.mxu0 0
    %6035 = vmatpush1.bf16.msra.mxu0 0
    %6036 = vmatprep.subr.bf16.mxu0 0
    %6037 = vmatpush1.bf16.msra.mxu0 0
    %6038 = vmatprep.subr.bf16.mxu0 0
    %6039 = vmatpush1.bf16.msra.mxu0 0
    %6040 = vmatprep.subr.bf16.mxu0 0
    %6041 = vmatpush1.bf16.msra.mxu0 0
    %6042 = vmatprep.subr.bf16.mxu0 0
    %6043 = vmatpush1.bf16.msra.mxu0 0
    %6044 = vmatprep.subr.bf16.mxu0 0
    %6045 = vmatpush1.bf16.msra.mxu0 0
    %6046 = vmatprep.subr.bf16.mxu0 0
    %6047 = vmatpush1.bf16.msra.mxu0 0
    %6048 = vmatprep.subr.bf16.mxu0 0
    %6049 = vmatpush1.bf16.msra.mxu0 0
    %6050 = vmatprep.mubr.bf16.mxu0 0
    %6051 = vmatmul.mubr.bf16.gmra.mrb[0].mxu0 %v6016
    %v6052 = vpop.f32.mrb[0].mxu0
    %v6053 = vadd.f32 %v5971, %v6052
    %v6054 = vpop.f32.mrb[0].mxu0
    %v6055 = vpop.f32.mrb[0].mxu0
    %v6056 = vpop.f32.mrb[0].mxu0
    %6057 = vdwg.mxu0
    %v6058 = vsel %vm86, %v6053, 0.0
    %6059 = vadd.xlane.f32.xlu0 %v6058
    %v6060 = vpop.xlane.xlu0 %6059
    %v6061 = vmul.f32 %v6060, %v188
    %v6062 = vsub.f32 %v6053, %v6061
    %v6063 = vmul.f32 %v6062, %v6062
    %v6064 = vsel %vm86, %v6063, 0.0
    %6065 = vadd.xlane.f32.xlu0 %v6064
    %v6066 = vpop.xlane.xlu0 %6065
    %v6067 = vmul.f32 %v6066, %v188
    %v6068 = vadd.f32 %v6067, 1e-05
    %v6069 = vrsqrt.pop %v6068
    %v6070 = vmul.f32 %v6062, %v6069
    %v6071 = vlaneseq
    %v6072 = vshrl.u32 %v6071, 7
    %v6073 = vsub.s32 0, %v6072
    %v6074 = vrot.slane %v52, %v6073
    %v6075 = vmul.f32 %v6070, %v6074
    %v6076 = vlaneseq
    %v6077 = vshrl.u32 %v6076, 7
    %v6078 = vsub.s32 0, %v6077
    %v6079 = vrot.slane %v53, %v6078
    %v6080 = vadd.f32 %v6075, %v6079
    %v6081 = vmul.f32 %v6080, 0.5
    %v6082 = vmul.f32 %v6080, 0.70710677
    %vm6083 = vcmp.ge.f32.partialorder %v6082, 0.0
    %v6084 = vsel %vm6083, 1.0, -1.0
    %v6085 = vand.u32 2147483647, %v6082
    %v6086 = vmul.f32 %v6085, 0.3275911
    %v6087 = vadd.f32 %v6086, 1.0
    %v6088 = vrcp.pop %v6087
    %v6089 = vmul.f32 1.0, %v6088
    %v6090 = vmul.f32 %v6089, 1.0614054
    %v6091 = vadd.f32 %v6090, -1.4531521
    %v6092 = vmul.f32 %v6091, %v6089
    %v6093 = vadd.f32 %v6092, 1.4214138
    %v6094 = vmul.f32 %v6093, %v6089
    %v6095 = vadd.f32 %v6094, -0.28449672
    %v6096 = vmul.f32 %v6095, %v6089
    %v6097 = vadd.f32 %v6096, 0.2548296
    %v6098 = vmul.f32 %v6097, %v6089
    %v6099 = vsub.f32 0.0, %v6085
    %v6100 = vmul.f32 %v6099, %v6085
    %v6101 = vmul.f32 %v6100, 1.442695
    %v6102 = vpow.pop %v6101
    %v6103 = vmul.f32 %v6098, %v6102
    %v6104 = vsub.f32 1.0, %v6103
    %v6105 = vmul.f32 %v6084, %v6104
    %v6106 = vadd.f32 %v6105, 1.0
    %v6107 = vmul.f32 %v6081, %v6106
    %v6108 = vpack.c.bf16 %v6107, %v6107
    %v6109 = vld [vmem:[%s7] sm:$0xf]
    %v6110 = vld [vmem:[%s7 + $0x4] sm:$0xf]
    %v6111 = vld [vmem:[%s7 + $0x8] sm:$0xf]
    %v6112 = vld [vmem:[%s7 + $0xc] sm:$0xf]
    %v6113 = vld [vmem:[%s10] sm:$0x1]
    %v6115 = vlaneseq
    %v6116 = vshrl.u32 %v6115, 7
    %v6117 = vsub.s32 0, %v6116
    %v6118 = vrot.slane %v6113, %v6117
    %v6124 = vunpack.c.l.b16 %v6109
    %v6125 = vunpack.c.l.b16 %v6110
    %v6126 = vunpack.c.l.b16 %v6111
    %v6127 = vunpack.c.l.b16 %v6112
    %v6128 = vpack.c.b16 %v6125, %v6124
    %v6129 = vpack.c.b16 %v6127, %v6126
    %v6133 = vsel %vm86, %v6108, 0
    %6135 = vmatprep.subr.bf16.mxu0 0
    %6136 = vmatpush1.bf16.msra.mxu0 %v6128
    %6137 = vmatprep.subr.bf16.mxu0 0
    %6138 = vmatpush1.bf16.msra.mxu0 %v6129
    %6139 = vmatprep.subr.bf16.mxu0 0
    %6140 = vmatpush1.bf16.msra.mxu0 0
    %6141 = vmatprep.subr.bf16.mxu0 0
    %6142 = vmatpush1.bf16.msra.mxu0 0
    %6143 = vmatprep.subr.bf16.mxu0 0
    %6144 = vmatpush1.bf16.msra.mxu0 0
    %6145 = vmatprep.subr.bf16.mxu0 0
    %6146 = vmatpush1.bf16.msra.mxu0 0
    %6147 = vmatprep.subr.bf16.mxu0 0
    %6148 = vmatpush1.bf16.msra.mxu0 0
    %6149 = vmatprep.subr.bf16.mxu0 0
    %6150 = vmatpush1.bf16.msra.mxu0 0
    %6151 = vmatprep.subr.bf16.mxu0 0
    %6152 = vmatpush1.bf16.msra.mxu0 0
    %6153 = vmatprep.subr.bf16.mxu0 0
    %6154 = vmatpush1.bf16.msra.mxu0 0
    %6155 = vmatprep.subr.bf16.mxu0 0
    %6156 = vmatpush1.bf16.msra.mxu0 0
    %6157 = vmatprep.subr.bf16.mxu0 0
    %6158 = vmatpush1.bf16.msra.mxu0 0
    %6159 = vmatprep.subr.bf16.mxu0 0
    %6160 = vmatpush1.bf16.msra.mxu0 0
    %6161 = vmatprep.subr.bf16.mxu0 0
    %6162 = vmatpush1.bf16.msra.mxu0 0
    %6163 = vmatprep.subr.bf16.mxu0 0
    %6164 = vmatpush1.bf16.msra.mxu0 0
    %6165 = vmatprep.subr.bf16.mxu0 0
    %6166 = vmatpush1.bf16.msra.mxu0 0
    %6167 = vmatprep.mubr.bf16.mxu0 0
    %6168 = vmatmul.mubr.bf16.gmra.mrb[0].mxu0 %v6133
    %v6169 = vpop.f32.mrb[0].mxu0
    %v6170 = vadd.f32 %v6118, %v6169
    %v6171 = vpop.f32.mrb[0].mxu0
    %v6172 = vpop.f32.mrb[0].mxu0
    %v6173 = vpop.f32.mrb[0].mxu0
    %6174 = vdwg.mxu0
    %v6175 = vsub.f32 0.0, %v6170
    %v6176 = vmul.f32 %v6175, 1.442695
    %v6177 = vpow.pop %v6176
    %v6178 = vadd.f32 %v6177, 1.0
    %v6179 = vrcp.pop %v6178
    %v6180 = vmul.f32 1.0, %v6179
    %6181 = vst [vmem:[#allocation2] sm:$0xff] %v6180
    // Predicated region
    $region46: #{tpu_custom_call.1} parent=1 // pred_check
      _
    $region47: #{tpu_custom_call.1} parent=1 // pred_check_branch
      %6183 = sbr.rel (0) target = $region49
    $region48: #{tpu_custom_call.1} parent=1 // pred_region
      %s6185 = ssub.s32 128, 128
      %6186 = vsyncadd [#allocation3], %s6185
      %s6188 = sshll.u32 [#allocation2], 4
      %s6189 = int_to_ptr.vmem [resolvable:$true] %s6188
      %6191 = dma.vmem_to_hbm [thread:$0]  %s6189, 128, %s11, [#allocation3]
    $region49: #{tpu_custom_call.1} parent=1 // pred_fallthru
      _
    // Predicated region
    $region50: #{tpu_custom_call.1} parent=1 // pred_check
      _
    $region51: #{tpu_custom_call.1} parent=1 // pred_check_branch
      %6193 = sbr.rel (0) target = $region53
    $region52: #{tpu_custom_call.1} parent=1 // pred_region
      %6194 = dma.done [#allocation3], 128
    $region53: #{tpu_custom_call.1} parent=1 // pred_fallthru
      _
    %6195 = vsyncpa [#allocation3], 1

</llo_original>
